<compile_context>
chip_gen: v7x
topology: tpu7x:2x2x1
jax: 0.10.0
libtpu: 0.0.40
codegen_flags: <defaults>
</compile_context>

<pallas_src>
import jax
import jax.numpy as jnp
from jax.experimental import pallas as pl
from jax.experimental.pallas import tpu as pltpu

N_FILTERS = 32
BN_EPS = 1e-5
L_IN = 352                      # input length (4 stride-2 stages -> 22 positions)
PAD_IN = 2                      # inflow conv: K=5, pad=2 (applied once in wrapper)
N_CONV_LAYERS = 16              # inflow + 5*(2 block convs) + 4 skips + 1x1 head
XCOL_ROWS = 5 * N_FILTERS       # largest im2col: 5 taps * 32 channels


def _stage_kp(i):
    return (5, 2) if i == 1 else (3, 1)


# --------------------------------------------------------------------------
# Fused forward kernel: one grid step == one batch element through the net.
# --------------------------------------------------------------------------
def _resnet1d_kernel(*refs):
    x_ref = refs[0]                                   # (1, 1, L_IN + 2*PAD_IN)
    conv_refs = refs[1:1 + 2 * N_CONV_LAYERS]         # (w_eff, bias) per conv
    fcw_ref = refs[1 + 2 * N_CONV_LAYERS]             # (2, 22) fc weight, NCL order
    fcb_ref = refs[2 + 2 * N_CONV_LAYERS]             # (1, 1)
    o_ref = refs[3 + 2 * N_CONV_LAYERS]               # (1, 1, 1)
    xcol = refs[4 + 2 * N_CONV_LAYERS]                # VMEM scratch (160, 352)

    def conv(x, w_ref, b_ref, K, pad, relu_in=False, relu_out=True,
             residual=None):
        """conv1d ('same' pad) + folded-BN bias + optional input-ReLU /
        residual add / output-ReLU.  Channel-first: x is (C_in, L)."""
        C, L = x.shape
        if relu_in:
            x = jnp.maximum(x, 0.0)
        if K == 1:
            y = jnp.dot(w_ref[...], x, preferred_element_type=jnp.float32)
        else:
            # im2col: row block k of xcol holds x shifted by (pad - k); the
            # zero fill supplies the 'same' padding.  One MXU matmul per conv.
            xcol[...] = jnp.zeros(xcol.shape, jnp.float32)
            for k in range(K):
                s = pad - k
                r0 = k * C
                if s > 0:
                    xcol[r0:r0 + C, s:L] = x[:, :L - s]
                elif s == 0:
                    xcol[r0:r0 + C, :L] = x
                else:
                    xcol[r0:r0 + C, :L + s] = x[:, -s:]
            y = jnp.dot(w_ref[...], xcol[:K * C, :L],
                        preferred_element_type=jnp.float32)
        y = y + b_ref[...]                            # BN scale folded into w
        if residual is not None:
            y = y + residual
        if relu_out:
            y = jnp.maximum(y, 0.0)
        return y

    def subsample2(y):
        """Keep even spatial positions (stride-2), done in-kernel as a matmul
        against an even-position selection matrix (robust lowering; the extra
        FLOPs are negligible at these sizes)."""
        C, L = y.shape
        Lh = L // 2
        li = jax.lax.broadcasted_iota(jnp.int32, (L, Lh), 0)
        mi = jax.lax.broadcasted_iota(jnp.int32, (L, Lh), 1)
        sel = (li == 2 * mi).astype(jnp.float32)
        return jnp.dot(y, sel, preferred_element_type=jnp.float32)

    # ---- inflow: 1 -> 32 channels, K=5 (input pre-padded in the wrapper). ----
    # C_in == 1, so a VPU broadcast-FMA over the 5 taps beats a degenerate MXU
    # matmul; the accumulator is initialised from tap 0 (no zeros + add).
    x0 = x_ref[0]                                     # (1, L_IN + 4)
    w_in = conv_refs[0][...]                          # (32, 5)
    b_in = conv_refs[1][...]                          # (32, 1)
    act = w_in[:, 0:1] * x0[:, 0:L_IN]
    for k in range(1, 5):
        act = act + w_in[:, k:k + 1] * x0[:, k:k + L_IN]
    act = jnp.maximum(act + b_in, 0.0)                # (32, 352)

    # ---- 5 residual stages (stages 1-4 end with a stride-2 skip conv). ----
    idx = 2
    x = act
    for i in range(1, 6):
        K, pad = _stage_kp(i)
        wa, ba = conv_refs[idx], conv_refs[idx + 1]
        wb, bb = conv_refs[idx + 2], conv_refs[idx + 3]
        idx += 4
        h = conv(x, wa, ba, K, pad, relu_out=True)                 # conv+BN+ReLU
        h = conv(h, wb, bb, K, pad, relu_out=False, residual=x)    # conv+BN + skip add
        if i < 5:
            ws, bs = conv_refs[idx], conv_refs[idx + 1]
            idx += 2
            sk = conv(h, ws, bs, 3, 1, relu_in=True, relu_out=True)
            x = subsample2(sk)                        # (32, L/2)
        else:
            x = h                                     # block5's ReLU fused below

    # ---- 1x1 conv to 2 channels (block5's ReLU fused as relu_in). ----
    w1, b1 = conv_refs[idx], conv_refs[idx + 1]
    y = conv(x, w1, b1, 1, 0, relu_in=True, relu_out=True)   # (2, 22)

    # ---- flatten (torch NCL order == row-major over (2, 22)) + Linear(44, 1),
    #      fused as an elementwise multiply + full reduction. ----
    prod = y * fcw_ref[...]
    tot = jnp.sum(jnp.sum(prod, axis=1, keepdims=True), axis=0, keepdims=True)
    # TODO(synk): nn.Dropout is identity at inference; no dropout mask applied.
    o_ref[0] = tot + fcb_ref[...]


# --------------------------------------------------------------------------
# Wrapper: single fused pallas_call over the batch.
# --------------------------------------------------------------------------
def net_forward(x_ncl, params):
    """x_ncl: (B, 1, 352) float32 in PyTorch NCL layout.  Returns (B, 1)."""
    layers, fc_w2d, fc_b2d = params
    B = x_ncl.shape[0]
    # Only out-of-kernel prep: pad the network input once for the K=5 inflow
    # conv.  All later padding / striding happens inside the kernel.
    x_pad = jnp.pad(x_ncl, ((0, 0), (0, 0), (PAD_IN, PAD_IN)))

    flat = []
    for w, b in layers:
        flat.extend([w, b])
    const_args = flat + [fc_w2d, fc_b2d]

    in_specs = [pl.BlockSpec((1, 1, L_IN + 2 * PAD_IN), lambda b: (b, 0, 0))]
    for a in const_args:
        # Full-array blocks, constant index map -> weights stay VMEM-resident.
        in_specs.append(pl.BlockSpec(a.shape, lambda b, n=a.ndim: (0,) * n))

    out = pl.pallas_call(
        _resnet1d_kernel,
        out_shape=jax.ShapeDtypeStruct((B, 1, 1), jnp.float32),
        grid=(B,),
        in_specs=in_specs,
        out_specs=pl.BlockSpec((1, 1, 1), lambda b: (b, 0, 0)),
        scratch_shapes=[pltpu.VMEM((XCOL_ROWS, L_IN), jnp.float32)],
        compiler_params=pltpu.CompilerParams(
            dimension_semantics=("parallel",),        # v7x: 2 TCs split the batch
            vmem_limit_bytes=32 * 1024 * 1024),
    )(x_pad, *const_args)
    return out.reshape(B, 1)


# --------------------------------------------------------------------------
# Parameter construction (deterministic, synthetic) with BN folding.
# --------------------------------------------------------------------------
def conv_bn_params(key, c_in, c_out, K):
    """Synthetic conv + eval-mode BN, folded into the kernel layout:
    w_eff[co, k*c_in + ci] = w[k, ci, co] * bn_scale[co];  bias is (c_out, 1)."""
    k1, k2 = jax.random.split(key)
    w = jax.random.normal(k1, (K, c_in, c_out), jnp.float32) * (2.0 / (c_in * K)) ** 0.5
    conv_b = jax.random.normal(k2, (c_out,), jnp.float32) * 0.01
    gamma = jnp.ones((c_out,), jnp.float32)
    beta = jnp.zeros((c_out,), jnp.float32)
    running_mean = jnp.zeros((c_out,), jnp.float32)
    running_var = jnp.ones((c_out,), jnp.float32)
    scale = gamma / jnp.sqrt(running_var + BN_EPS)
    bias = beta + (conv_b - running_mean) * scale
    w_eff = jnp.transpose(w, (2, 0, 1)).reshape(c_out, K * c_in) * scale[:, None]
    return w_eff, bias.reshape(c_out, 1)


def init_params(key, n_classes=2):
    out_size = 1 if n_classes == 2 else n_classes
    assert out_size == 1, "fused head is written for the binary single-logit case"
    keys = iter(jax.random.split(key, 40))
    layers = [conv_bn_params(next(keys), 1, N_FILTERS, 5)]                  # inflow
    for i in range(1, 6):
        K, _ = _stage_kp(i)
        layers.append(conv_bn_params(next(keys), N_FILTERS, N_FILTERS, K))  # block a
        layers.append(conv_bn_params(next(keys), N_FILTERS, N_FILTERS, K))  # block b
        if i < 5:
            layers.append(conv_bn_params(next(keys), N_FILTERS, N_FILTERS, 3))  # skip
    layers.append(conv_bn_params(next(keys), N_FILTERS, 2, 1))              # 1x1 head
    assert len(layers) == N_CONV_LAYERS
    kw, kb = jax.random.split(next(keys))
    fc_w = jax.random.normal(kw, (44, out_size), jnp.float32) * (1.0 / 44) ** 0.5
    fc_b = jax.random.normal(kb, (out_size,), jnp.float32) * 0.01
    fc_w2d = fc_w[:, 0].reshape(2, 22)   # (C=2, L=22) matches the NCL flatten order
    fc_b2d = fc_b.reshape(1, 1)
    return layers, fc_w2d, fc_b2d


if __name__ == "__main__":
    # Input length must satisfy L / 2**4 == 22 (fc expects 2 ch * 22 pos = 44).
    B, L = 2, L_IN
    key = jax.random.PRNGKey(0)
    params = init_params(key, n_classes=2)
    x = jax.random.normal(jax.random.fold_in(key, 123), (B, 1, L), jnp.float32)

    fwd = jax.jit(net_forward)
    out = jax.block_until_ready(fwd(x, params))
    assert out.shape == (B, 1), out.shape
    print("KERNEL_OK")
</pallas_src>

<mosaic_0001>
module attributes {stable_mosaic.version = 11 : i64} {
  func.func @_resnet1d_kernel(%arg0: i32, %arg1: memref<1x1x356xf32, #tpu.memory_space<vmem>>, %arg2: memref<32x5xf32, #tpu.memory_space<vmem>>, %arg3: memref<32x1xf32, #tpu.memory_space<vmem>>, %arg4: memref<32x160xf32, #tpu.memory_space<vmem>>, %arg5: memref<32x1xf32, #tpu.memory_space<vmem>>, %arg6: memref<32x160xf32, #tpu.memory_space<vmem>>, %arg7: memref<32x1xf32, #tpu.memory_space<vmem>>, %arg8: memref<32x96xf32, #tpu.memory_space<vmem>>, %arg9: memref<32x1xf32, #tpu.memory_space<vmem>>, %arg10: memref<32x96xf32, #tpu.memory_space<vmem>>, %arg11: memref<32x1xf32, #tpu.memory_space<vmem>>, %arg12: memref<32x96xf32, #tpu.memory_space<vmem>>, %arg13: memref<32x1xf32, #tpu.memory_space<vmem>>, %arg14: memref<32x96xf32, #tpu.memory_space<vmem>>, %arg15: memref<32x1xf32, #tpu.memory_space<vmem>>, %arg16: memref<32x96xf32, #tpu.memory_space<vmem>>, %arg17: memref<32x1xf32, #tpu.memory_space<vmem>>, %arg18: memref<32x96xf32, #tpu.memory_space<vmem>>, %arg19: memref<32x1xf32, #tpu.memory_space<vmem>>, %arg20: memref<32x96xf32, #tpu.memory_space<vmem>>, %arg21: memref<32x1xf32, #tpu.memory_space<vmem>>, %arg22: memref<32x96xf32, #tpu.memory_space<vmem>>, %arg23: memref<32x1xf32, #tpu.memory_space<vmem>>, %arg24: memref<32x96xf32, #tpu.memory_space<vmem>>, %arg25: memref<32x1xf32, #tpu.memory_space<vmem>>, %arg26: memref<32x96xf32, #tpu.memory_space<vmem>>, %arg27: memref<32x1xf32, #tpu.memory_space<vmem>>, %arg28: memref<32x96xf32, #tpu.memory_space<vmem>>, %arg29: memref<32x1xf32, #tpu.memory_space<vmem>>, %arg30: memref<32x96xf32, #tpu.memory_space<vmem>>, %arg31: memref<32x1xf32, #tpu.memory_space<vmem>>, %arg32: memref<2x32xf32, #tpu.memory_space<vmem>>, %arg33: memref<2x1xf32, #tpu.memory_space<vmem>>, %arg34: memref<2x22xf32, #tpu.memory_space<vmem>>, %arg35: memref<1x1xf32, #tpu.memory_space<vmem>>, %arg36: memref<1x1x1xf32, #tpu.memory_space<vmem>>, %arg37: memref<160x352xf32, #tpu.memory_space<vmem>>) attributes {dimension_semantics = [#tpu.dimension_semantics<parallel>], iteration_bounds = array<i64: 2>, scalar_prefetch = 0 : i64, scratch_operands = 1 : i64, tpu.core_type = #tpu.core_type<tc>, window_params = [{transform_indices = @transform_0, window_bounds = array<i64: 1, 1, 356>}, {pipeline_mode = #tpu.pipeline_mode<synchronous>, transform_indices = @transform_1, window_bounds = array<i64: 32, 5>}, {pipeline_mode = #tpu.pipeline_mode<synchronous>, transform_indices = @transform_2, window_bounds = array<i64: 32, 1>}, {pipeline_mode = #tpu.pipeline_mode<synchronous>, transform_indices = @transform_3, window_bounds = array<i64: 32, 160>}, {pipeline_mode = #tpu.pipeline_mode<synchronous>, transform_indices = @transform_4, window_bounds = array<i64: 32, 1>}, {pipeline_mode = #tpu.pipeline_mode<synchronous>, transform_indices = @transform_5, window_bounds = array<i64: 32, 160>}, {pipeline_mode = #tpu.pipeline_mode<synchronous>, transform_indices = @transform_6, window_bounds = array<i64: 32, 1>}, {pipeline_mode = #tpu.pipeline_mode<synchronous>, transform_indices = @transform_7, window_bounds = array<i64: 32, 96>}, {pipeline_mode = #tpu.pipeline_mode<synchronous>, transform_indices = @transform_8, window_bounds = array<i64: 32, 1>}, {pipeline_mode = #tpu.pipeline_mode<synchronous>, transform_indices = @transform_9, window_bounds = array<i64: 32, 96>}, {pipeline_mode = #tpu.pipeline_mode<synchronous>, transform_indices = @transform_10, window_bounds = array<i64: 32, 1>}, {pipeline_mode = #tpu.pipeline_mode<synchronous>, transform_indices = @transform_11, window_bounds = array<i64: 32, 96>}, {pipeline_mode = #tpu.pipeline_mode<synchronous>, transform_indices = @transform_12, window_bounds = array<i64: 32, 1>}, {pipeline_mode = #tpu.pipeline_mode<synchronous>, transform_indices = @transform_13, window_bounds = array<i64: 32, 96>}, {pipeline_mode = #tpu.pipeline_mode<synchronous>, transform_indices = @transform_14, window_bounds = array<i64: 32, 1>}, {pipeline_mode = #tpu.pipeline_mode<synchronous>, transform_indices = @transform_15, window_bounds = array<i64: 32, 96>}, {pipeline_mode = #tpu.pipeline_mode<synchronous>, transform_indices = @transform_16, window_bounds = array<i64: 32, 1>}, {pipeline_mode = #tpu.pipeline_mode<synchronous>, transform_indices = @transform_17, window_bounds = array<i64: 32, 96>}, {pipeline_mode = #tpu.pipeline_mode<synchronous>, transform_indices = @transform_18, window_bounds = array<i64: 32, 1>}, {pipeline_mode = #tpu.pipeline_mode<synchronous>, transform_indices = @transform_19, window_bounds = array<i64: 32, 96>}, {pipeline_mode = #tpu.pipeline_mode<synchronous>, transform_indices = @transform_20, window_bounds = array<i64: 32, 1>}, {pipeline_mode = #tpu.pipeline_mode<synchronous>, transform_indices = @transform_21, window_bounds = array<i64: 32, 96>}, {pipeline_mode = #tpu.pipeline_mode<synchronous>, transform_indices = @transform_22, window_bounds = array<i64: 32, 1>}, {pipeline_mode = #tpu.pipeline_mode<synchronous>, transform_indices = @transform_23, window_bounds = array<i64: 32, 96>}, {pipeline_mode = #tpu.pipeline_mode<synchronous>, transform_indices = @transform_24, window_bounds = array<i64: 32, 1>}, {pipeline_mode = #tpu.pipeline_mode<synchronous>, transform_indices = @transform_25, window_bounds = array<i64: 32, 96>}, {pipeline_mode = #tpu.pipeline_mode<synchronous>, transform_indices = @transform_26, window_bounds = array<i64: 32, 1>}, {pipeline_mode = #tpu.pipeline_mode<synchronous>, transform_indices = @transform_27, window_bounds = array<i64: 32, 96>}, {pipeline_mode = #tpu.pipeline_mode<synchronous>, transform_indices = @transform_28, window_bounds = array<i64: 32, 1>}, {pipeline_mode = #tpu.pipeline_mode<synchronous>, transform_indices = @transform_29, window_bounds = array<i64: 32, 96>}, {pipeline_mode = #tpu.pipeline_mode<synchronous>, transform_indices = @transform_30, window_bounds = array<i64: 32, 1>}, {pipeline_mode = #tpu.pipeline_mode<synchronous>, transform_indices = @transform_31, window_bounds = array<i64: 2, 32>}, {pipeline_mode = #tpu.pipeline_mode<synchronous>, transform_indices = @transform_32, window_bounds = array<i64: 2, 1>}, {pipeline_mode = #tpu.pipeline_mode<synchronous>, transform_indices = @transform_33, window_bounds = array<i64: 2, 22>}, {pipeline_mode = #tpu.pipeline_mode<synchronous>, transform_indices = @transform_34, window_bounds = array<i64: 1, 1>}, {transform_indices = @transform_35, window_bounds = array<i64: 1, 1, 1>}]} {
    %c0 = arith.constant 0 : index
    %c0_0 = arith.constant 0 : index
    %c0_1 = arith.constant 0 : index
    %0 = vector.load %arg1[%c0, %c0_0, %c0_1] : memref<1x1x356xf32, #tpu.memory_space<vmem>>, vector<1x1x356xf32>
    %1 = vector.shape_cast %0 : vector<1x1x356xf32> to vector<1x356xf32>
    %c0_2 = arith.constant 0 : index
    %c0_3 = arith.constant 0 : index
    %2 = vector.load %arg2[%c0_2, %c0_3] : memref<32x5xf32, #tpu.memory_space<vmem>>, vector<32x5xf32>
    %c0_4 = arith.constant 0 : index
    %c0_5 = arith.constant 0 : index
    %3 = vector.load %arg3[%c0_4, %c0_5] : memref<32x1xf32, #tpu.memory_space<vmem>>, vector<32x1xf32>
    %4 = vector.extract_strided_slice %2 {offsets = [0, 0], sizes = [32, 1], strides = [1, 1]} : vector<32x5xf32> to vector<32x1xf32>
    %5 = vector.extract_strided_slice %1 {offsets = [0, 0], sizes = [1, 352], strides = [1, 1]} : vector<1x356xf32> to vector<1x352xf32>
    %6 = vector.broadcast %4 : vector<32x1xf32> to vector<32x352xf32>
    %7 = vector.broadcast %5 : vector<1x352xf32> to vector<32x352xf32>
    %8 = arith.mulf %6, %7 : vector<32x352xf32>
    %9 = vector.extract_strided_slice %2 {offsets = [0, 1], sizes = [32, 1], strides = [1, 1]} : vector<32x5xf32> to vector<32x1xf32>
    %10 = vector.extract_strided_slice %1 {offsets = [0, 1], sizes = [1, 352], strides = [1, 1]} : vector<1x356xf32> to vector<1x352xf32>
    %11 = vector.broadcast %9 : vector<32x1xf32> to vector<32x352xf32>
    %12 = vector.broadcast %10 : vector<1x352xf32> to vector<32x352xf32>
    %13 = arith.mulf %11, %12 : vector<32x352xf32>
    %14 = arith.addf %8, %13 : vector<32x352xf32>
    %15 = vector.extract_strided_slice %2 {offsets = [0, 2], sizes = [32, 1], strides = [1, 1]} : vector<32x5xf32> to vector<32x1xf32>
    %16 = vector.extract_strided_slice %1 {offsets = [0, 2], sizes = [1, 352], strides = [1, 1]} : vector<1x356xf32> to vector<1x352xf32>
    %17 = vector.broadcast %15 : vector<32x1xf32> to vector<32x352xf32>
    %18 = vector.broadcast %16 : vector<1x352xf32> to vector<32x352xf32>
    %19 = arith.mulf %17, %18 : vector<32x352xf32>
    %20 = arith.addf %14, %19 : vector<32x352xf32>
    %21 = vector.extract_strided_slice %2 {offsets = [0, 3], sizes = [32, 1], strides = [1, 1]} : vector<32x5xf32> to vector<32x1xf32>
    %22 = vector.extract_strided_slice %1 {offsets = [0, 3], sizes = [1, 352], strides = [1, 1]} : vector<1x356xf32> to vector<1x352xf32>
    %23 = vector.broadcast %21 : vector<32x1xf32> to vector<32x352xf32>
    %24 = vector.broadcast %22 : vector<1x352xf32> to vector<32x352xf32>
    %25 = arith.mulf %23, %24 : vector<32x352xf32>
    %26 = arith.addf %20, %25 : vector<32x352xf32>
    %27 = vector.extract_strided_slice %2 {offsets = [0, 4], sizes = [32, 1], strides = [1, 1]} : vector<32x5xf32> to vector<32x1xf32>
    %28 = vector.extract_strided_slice %1 {offsets = [0, 4], sizes = [1, 352], strides = [1, 1]} : vector<1x356xf32> to vector<1x352xf32>
    %29 = vector.broadcast %27 : vector<32x1xf32> to vector<32x352xf32>
    %30 = vector.broadcast %28 : vector<1x352xf32> to vector<32x352xf32>
    %31 = arith.mulf %29, %30 : vector<32x352xf32>
    %32 = arith.addf %26, %31 : vector<32x352xf32>
    %33 = vector.broadcast %3 : vector<32x1xf32> to vector<32x352xf32>
    %34 = arith.addf %32, %33 : vector<32x352xf32>
    %cst = arith.constant 0.000000e+00 : f32
    %35 = vector.broadcast %cst : f32 to vector<32x352xf32>
    %36 = arith.maximumf %34, %35 : vector<32x352xf32>
    %cst_6 = arith.constant 0.000000e+00 : f32
    %37 = vector.broadcast %cst_6 : f32 to vector<160x352xf32>
    %c0_7 = arith.constant 0 : index
    %c0_8 = arith.constant 0 : index
    %38 = vector.load %arg37[%c0_7, %c0_8] : memref<160x352xf32, #tpu.memory_space<vmem>>, vector<160x352xf32>
    tpu.vector_store %arg37[%c0_7, %c0_8], %37 {strides = array<i32>} : memref<160x352xf32, #tpu.memory_space<vmem>>, vector<160x352xf32>,
    %39 = vector.extract_strided_slice %36 {offsets = [0, 0], sizes = [32, 350], strides = [1, 1]} : vector<32x352xf32> to vector<32x350xf32>
    %c0_9 = arith.constant 0 : index
    %c2 = arith.constant 2 : index
    %40 = vector.load %arg37[%c0_9, %c2] : memref<160x352xf32, #tpu.memory_space<vmem>>, vector<32x350xf32>
    tpu.vector_store %arg37[%c0_9, %c2], %39 {strides = array<i32>} : memref<160x352xf32, #tpu.memory_space<vmem>>, vector<32x350xf32>,
    %41 = vector.extract_strided_slice %36 {offsets = [0, 0], sizes = [32, 351], strides = [1, 1]} : vector<32x352xf32> to vector<32x351xf32>
    %c32 = arith.constant 32 : index
    %c1 = arith.constant 1 : index
    %42 = vector.load %arg37[%c32, %c1] : memref<160x352xf32, #tpu.memory_space<vmem>>, vector<32x351xf32>
    tpu.vector_store %arg37[%c32, %c1], %41 {strides = array<i32>} : memref<160x352xf32, #tpu.memory_space<vmem>>, vector<32x351xf32>,
    %c64 = arith.constant 64 : index
    %c0_10 = arith.constant 0 : index
    %43 = vector.load %arg37[%c64, %c0_10] : memref<160x352xf32, #tpu.memory_space<vmem>>, vector<32x352xf32>
    tpu.vector_store %arg37[%c64, %c0_10], %36 {strides = array<i32>} : memref<160x352xf32, #tpu.memory_space<vmem>>, vector<32x352xf32>,
    %44 = vector.extract_strided_slice %36 {offsets = [0, 1], sizes = [32, 351], strides = [1, 1]} : vector<32x352xf32> to vector<32x351xf32>
    %c96 = arith.constant 96 : index
    %c0_11 = arith.constant 0 : index
    %45 = vector.load %arg37[%c96, %c0_11] : memref<160x352xf32, #tpu.memory_space<vmem>>, vector<32x351xf32>
    tpu.vector_store %arg37[%c96, %c0_11], %44 {strides = array<i32>} : memref<160x352xf32, #tpu.memory_space<vmem>>, vector<32x351xf32>,
    %46 = vector.extract_strided_slice %36 {offsets = [0, 2], sizes = [32, 350], strides = [1, 1]} : vector<32x352xf32> to vector<32x350xf32>
    %c128 = arith.constant 128 : index
    %c0_12 = arith.constant 0 : index
    %47 = vector.load %arg37[%c128, %c0_12] : memref<160x352xf32, #tpu.memory_space<vmem>>, vector<32x350xf32>
    tpu.vector_store %arg37[%c128, %c0_12], %46 {strides = array<i32>} : memref<160x352xf32, #tpu.memory_space<vmem>>, vector<32x350xf32>,
    %c0_13 = arith.constant 0 : index
    %c0_14 = arith.constant 0 : index
    %48 = vector.load %arg4[%c0_13, %c0_14] : memref<32x160xf32, #tpu.memory_space<vmem>>, vector<32x160xf32>
    %c0_15 = arith.constant 0 : index
    %c0_16 = arith.constant 0 : index
    %49 = vector.load %arg37[%c0_15, %c0_16] : memref<160x352xf32, #tpu.memory_space<vmem>>, vector<160x352xf32>
    %cst_17 = arith.constant dense<0.000000e+00> : vector<32x352xf32>
    %50 = tpu.matmul %48, %49, %cst_17 {dimension_numbers = #tpu.dot_dimension_numbers<[1], [0], [0], [1], [0, 0, 1, 1], [], []>} : vector<32x160xf32>, vector<160x352xf32>, vector<32x352xf32> -> vector<32x352xf32>
    %c0_18 = arith.constant 0 : index
    %c0_19 = arith.constant 0 : index
    %51 = vector.load %arg5[%c0_18, %c0_19] : memref<32x1xf32, #tpu.memory_space<vmem>>, vector<32x1xf32>
    %52 = vector.broadcast %51 : vector<32x1xf32> to vector<32x352xf32>
    %53 = arith.addf %50, %52 : vector<32x352xf32>
    %cst_20 = arith.constant 0.000000e+00 : f32
    %54 = vector.broadcast %cst_20 : f32 to vector<32x352xf32>
    %55 = arith.maximumf %53, %54 : vector<32x352xf32>
    %cst_21 = arith.constant 0.000000e+00 : f32
    %56 = vector.broadcast %cst_21 : f32 to vector<160x352xf32>
    %c0_22 = arith.constant 0 : index
    %c0_23 = arith.constant 0 : index
    %57 = vector.load %arg37[%c0_22, %c0_23] : memref<160x352xf32, #tpu.memory_space<vmem>>, vector<160x352xf32>
    tpu.vector_store %arg37[%c0_22, %c0_23], %56 {strides = array<i32>} : memref<160x352xf32, #tpu.memory_space<vmem>>, vector<160x352xf32>,
    %58 = vector.extract_strided_slice %55 {offsets = [0, 0], sizes = [32, 350], strides = [1, 1]} : vector<32x352xf32> to vector<32x350xf32>
    %c0_24 = arith.constant 0 : index
    %c2_25 = arith.constant 2 : index
    %59 = vector.load %arg37[%c0_24, %c2_25] : memref<160x352xf32, #tpu.memory_space<vmem>>, vector<32x350xf32>
    tpu.vector_store %arg37[%c0_24, %c2_25], %58 {strides = array<i32>} : memref<160x352xf32, #tpu.memory_space<vmem>>, vector<32x350xf32>,
    %60 = vector.extract_strided_slice %55 {offsets = [0, 0], sizes = [32, 351], strides = [1, 1]} : vector<32x352xf32> to vector<32x351xf32>
    %c32_26 = arith.constant 32 : index
    %c1_27 = arith.constant 1 : index
    %61 = vector.load %arg37[%c32_26, %c1_27] : memref<160x352xf32, #tpu.memory_space<vmem>>, vector<32x351xf32>
    tpu.vector_store %arg37[%c32_26, %c1_27], %60 {strides = array<i32>} : memref<160x352xf32, #tpu.memory_space<vmem>>, vector<32x351xf32>,
    %c64_28 = arith.constant 64 : index
    %c0_29 = arith.constant 0 : index
    %62 = vector.load %arg37[%c64_28, %c0_29] : memref<160x352xf32, #tpu.memory_space<vmem>>, vector<32x352xf32>
    tpu.vector_store %arg37[%c64_28, %c0_29], %55 {strides = array<i32>} : memref<160x352xf32, #tpu.memory_space<vmem>>, vector<32x352xf32>,
    %63 = vector.extract_strided_slice %55 {offsets = [0, 1], sizes = [32, 351], strides = [1, 1]} : vector<32x352xf32> to vector<32x351xf32>
    %c96_30 = arith.constant 96 : index
    %c0_31 = arith.constant 0 : index
    %64 = vector.load %arg37[%c96_30, %c0_31] : memref<160x352xf32, #tpu.memory_space<vmem>>, vector<32x351xf32>
    tpu.vector_store %arg37[%c96_30, %c0_31], %63 {strides = array<i32>} : memref<160x352xf32, #tpu.memory_space<vmem>>, vector<32x351xf32>,
    %65 = vector.extract_strided_slice %55 {offsets = [0, 2], sizes = [32, 350], strides = [1, 1]} : vector<32x352xf32> to vector<32x350xf32>
    %c128_32 = arith.constant 128 : index
    %c0_33 = arith.constant 0 : index
    %66 = vector.load %arg37[%c128_32, %c0_33] : memref<160x352xf32, #tpu.memory_space<vmem>>, vector<32x350xf32>
    tpu.vector_store %arg37[%c128_32, %c0_33], %65 {strides = array<i32>} : memref<160x352xf32, #tpu.memory_space<vmem>>, vector<32x350xf32>,
    %c0_34 = arith.constant 0 : index
    %c0_35 = arith.constant 0 : index
    %67 = vector.load %arg6[%c0_34, %c0_35] : memref<32x160xf32, #tpu.memory_space<vmem>>, vector<32x160xf32>
    %c0_36 = arith.constant 0 : index
    %c0_37 = arith.constant 0 : index
    %68 = vector.load %arg37[%c0_36, %c0_37] : memref<160x352xf32, #tpu.memory_space<vmem>>, vector<160x352xf32>
    %cst_38 = arith.constant dense<0.000000e+00> : vector<32x352xf32>
    %69 = tpu.matmul %67, %68, %cst_38 {dimension_numbers = #tpu.dot_dimension_numbers<[1], [0], [0], [1], [0, 0, 1, 1], [], []>} : vector<32x160xf32>, vector<160x352xf32>, vector<32x352xf32> -> vector<32x352xf32>
    %c0_39 = arith.constant 0 : index
    %c0_40 = arith.constant 0 : index
    %70 = vector.load %arg7[%c0_39, %c0_40] : memref<32x1xf32, #tpu.memory_space<vmem>>, vector<32x1xf32>
    %71 = vector.broadcast %70 : vector<32x1xf32> to vector<32x352xf32>
    %72 = arith.addf %69, %71 : vector<32x352xf32>
    %73 = arith.addf %72, %36 : vector<32x352xf32>
    %cst_41 = arith.constant 0.000000e+00 : f32
    %74 = vector.broadcast %cst_41 : f32 to vector<32x352xf32>
    %75 = arith.maximumf %73, %74 : vector<32x352xf32>
    %cst_42 = arith.constant 0.000000e+00 : f32
    %76 = vector.broadcast %cst_42 : f32 to vector<160x352xf32>
    %c0_43 = arith.constant 0 : index
    %c0_44 = arith.constant 0 : index
    %77 = vector.load %arg37[%c0_43, %c0_44] : memref<160x352xf32, #tpu.memory_space<vmem>>, vector<160x352xf32>
    tpu.vector_store %arg37[%c0_43, %c0_44], %76 {strides = array<i32>} : memref<160x352xf32, #tpu.memory_space<vmem>>, vector<160x352xf32>,
    %78 = vector.extract_strided_slice %75 {offsets = [0, 0], sizes = [32, 351], strides = [1, 1]} : vector<32x352xf32> to vector<32x351xf32>
    %c0_45 = arith.constant 0 : index
    %c1_46 = arith.constant 1 : index
    %79 = vector.load %arg37[%c0_45, %c1_46] : memref<160x352xf32, #tpu.memory_space<vmem>>, vector<32x351xf32>
    tpu.vector_store %arg37[%c0_45, %c1_46], %78 {strides = array<i32>} : memref<160x352xf32, #tpu.memory_space<vmem>>, vector<32x351xf32>,
    %c32_47 = arith.constant 32 : index
    %c0_48 = arith.constant 0 : index
    %80 = vector.load %arg37[%c32_47, %c0_48] : memref<160x352xf32, #tpu.memory_space<vmem>>, vector<32x352xf32>
    tpu.vector_store %arg37[%c32_47, %c0_48], %75 {strides = array<i32>} : memref<160x352xf32, #tpu.memory_space<vmem>>, vector<32x352xf32>,
    %81 = vector.extract_strided_slice %75 {offsets = [0, 1], sizes = [32, 351], strides = [1, 1]} : vector<32x352xf32> to vector<32x351xf32>
    %c64_49 = arith.constant 64 : index
    %c0_50 = arith.constant 0 : index
    %82 = vector.load %arg37[%c64_49, %c0_50] : memref<160x352xf32, #tpu.memory_space<vmem>>, vector<32x351xf32>
    tpu.vector_store %arg37[%c64_49, %c0_50], %81 {strides = array<i32>} : memref<160x352xf32, #tpu.memory_space<vmem>>, vector<32x351xf32>,
    %c0_51 = arith.constant 0 : index
    %c0_52 = arith.constant 0 : index
    %83 = vector.load %arg8[%c0_51, %c0_52] : memref<32x96xf32, #tpu.memory_space<vmem>>, vector<32x96xf32>
    %c0_53 = arith.constant 0 : index
    %c0_54 = arith.constant 0 : index
    %84 = vector.load %arg37[%c0_53, %c0_54] : memref<160x352xf32, #tpu.memory_space<vmem>>, vector<96x352xf32>
    %cst_55 = arith.constant dense<0.000000e+00> : vector<32x352xf32>
    %85 = tpu.matmul %83, %84, %cst_55 {dimension_numbers = #tpu.dot_dimension_numbers<[1], [0], [0], [1], [0, 0, 1, 1], [], []>} : vector<32x96xf32>, vector<96x352xf32>, vector<32x352xf32> -> vector<32x352xf32>
    %c0_56 = arith.constant 0 : index
    %c0_57 = arith.constant 0 : index
    %86 = vector.load %arg9[%c0_56, %c0_57] : memref<32x1xf32, #tpu.memory_space<vmem>>, vector<32x1xf32>
    %87 = vector.broadcast %86 : vector<32x1xf32> to vector<32x352xf32>
    %88 = arith.addf %85, %87 : vector<32x352xf32>
    %cst_58 = arith.constant 0.000000e+00 : f32
    %89 = vector.broadcast %cst_58 : f32 to vector<32x352xf32>
    %90 = arith.maximumf %88, %89 : vector<32x352xf32>
    %91 = tpu.iota {dimensions = array<i32: 0>} : vector<352x176xi32>
    %92 = tpu.iota {dimensions = array<i32: 1>} : vector<352x176xi32>
    %c2_i32 = arith.constant 2 : i32
    %93 = vector.broadcast %c2_i32 : i32 to vector<352x176xi32>
    %94 = arith.muli %93, %92 : vector<352x176xi32>
    %95 = arith.cmpi eq, %91, %94 : vector<352x176xi32>
    %96 = arith.extui %95 : vector<352x176xi1> to vector<352x176xi32>
    %97 = arith.sitofp %96 : vector<352x176xi32> to vector<352x176xf32>
    %cst_59 = arith.constant dense<0.000000e+00> : vector<32x176xf32>
    %98 = tpu.matmul %90, %97, %cst_59 {dimension_numbers = #tpu.dot_dimension_numbers<[1], [0], [0], [1], [0, 0, 1, 1], [], []>} : vector<32x352xf32>, vector<352x176xf32>, vector<32x176xf32> -> vector<32x176xf32>
    %cst_60 = arith.constant 0.000000e+00 : f32
    %99 = vector.broadcast %cst_60 : f32 to vector<160x352xf32>
    %c0_61 = arith.constant 0 : index
    %c0_62 = arith.constant 0 : index
    %100 = vector.load %arg37[%c0_61, %c0_62] : memref<160x352xf32, #tpu.memory_space<vmem>>, vector<160x352xf32>
    tpu.vector_store %arg37[%c0_61, %c0_62], %99 {strides = array<i32>} : memref<160x352xf32, #tpu.memory_space<vmem>>, vector<160x352xf32>,
    %101 = vector.extract_strided_slice %98 {offsets = [0, 0], sizes = [32, 175], strides = [1, 1]} : vector<32x176xf32> to vector<32x175xf32>
    %c0_63 = arith.constant 0 : index
    %c1_64 = arith.constant 1 : index
    %102 = vector.load %arg37[%c0_63, %c1_64] : memref<160x352xf32, #tpu.memory_space<vmem>>, vector<32x175xf32>
    tpu.vector_store %arg37[%c0_63, %c1_64], %101 {strides = array<i32>} : memref<160x352xf32, #tpu.memory_space<vmem>>, vector<32x175xf32>,
    %c32_65 = arith.constant 32 : index
    %c0_66 = arith.constant 0 : index
    %103 = vector.load %arg37[%c32_65, %c0_66] : memref<160x352xf32, #tpu.memory_space<vmem>>, vector<32x176xf32>
    tpu.vector_store %arg37[%c32_65, %c0_66], %98 {strides = array<i32>} : memref<160x352xf32, #tpu.memory_space<vmem>>, vector<32x176xf32>,
    %104 = vector.extract_strided_slice %98 {offsets = [0, 1], sizes = [32, 175], strides = [1, 1]} : vector<32x176xf32> to vector<32x175xf32>
    %c64_67 = arith.constant 64 : index
    %c0_68 = arith.constant 0 : index
    %105 = vector.load %arg37[%c64_67, %c0_68] : memref<160x352xf32, #tpu.memory_space<vmem>>, vector<32x175xf32>
    tpu.vector_store %arg37[%c64_67, %c0_68], %104 {strides = array<i32>} : memref<160x352xf32, #tpu.memory_space<vmem>>, vector<32x175xf32>,
    %c0_69 = arith.constant 0 : index
    %c0_70 = arith.constant 0 : index
    %106 = vector.load %arg10[%c0_69, %c0_70] : memref<32x96xf32, #tpu.memory_space<vmem>>, vector<32x96xf32>
    %c0_71 = arith.constant 0 : index
    %c0_72 = arith.constant 0 : index
    %107 = vector.load %arg37[%c0_71, %c0_72] : memref<160x352xf32, #tpu.memory_space<vmem>>, vector<96x176xf32>
    %cst_73 = arith.constant dense<0.000000e+00> : vector<32x176xf32>
    %108 = tpu.matmul %106, %107, %cst_73 {dimension_numbers = #tpu.dot_dimension_numbers<[1], [0], [0], [1], [0, 0, 1, 1], [], []>} : vector<32x96xf32>, vector<96x176xf32>, vector<32x176xf32> -> vector<32x176xf32>
    %c0_74 = arith.constant 0 : index
    %c0_75 = arith.constant 0 : index
    %109 = vector.load %arg11[%c0_74, %c0_75] : memref<32x1xf32, #tpu.memory_space<vmem>>, vector<32x1xf32>
    %110 = vector.broadcast %109 : vector<32x1xf32> to vector<32x176xf32>
    %111 = arith.addf %108, %110 : vector<32x176xf32>
    %cst_76 = arith.constant 0.000000e+00 : f32
    %112 = vector.broadcast %cst_76 : f32 to vector<32x176xf32>
    %113 = arith.maximumf %111, %112 : vector<32x176xf32>
    %cst_77 = arith.constant 0.000000e+00 : f32
    %114 = vector.broadcast %cst_77 : f32 to vector<160x352xf32>
    %c0_78 = arith.constant 0 : index
    %c0_79 = arith.constant 0 : index
    %115 = vector.load %arg37[%c0_78, %c0_79] : memref<160x352xf32, #tpu.memory_space<vmem>>, vector<160x352xf32>
    tpu.vector_store %arg37[%c0_78, %c0_79], %114 {strides = array<i32>} : memref<160x352xf32, #tpu.memory_space<vmem>>, vector<160x352xf32>,
    %116 = vector.extract_strided_slice %113 {offsets = [0, 0], sizes = [32, 175], strides = [1, 1]} : vector<32x176xf32> to vector<32x175xf32>
    %c0_80 = arith.constant 0 : index
    %c1_81 = arith.constant 1 : index
    %117 = vector.load %arg37[%c0_80, %c1_81] : memref<160x352xf32, #tpu.memory_space<vmem>>, vector<32x175xf32>
    tpu.vector_store %arg37[%c0_80, %c1_81], %116 {strides = array<i32>} : memref<160x352xf32, #tpu.memory_space<vmem>>, vector<32x175xf32>,
    %c32_82 = arith.constant 32 : index
    %c0_83 = arith.constant 0 : index
    %118 = vector.load %arg37[%c32_82, %c0_83] : memref<160x352xf32, #tpu.memory_space<vmem>>, vector<32x176xf32>
    tpu.vector_store %arg37[%c32_82, %c0_83], %113 {strides = array<i32>} : memref<160x352xf32, #tpu.memory_space<vmem>>, vector<32x176xf32>,
    %119 = vector.extract_strided_slice %113 {offsets = [0, 1], sizes = [32, 175], strides = [1, 1]} : vector<32x176xf32> to vector<32x175xf32>
    %c64_84 = arith.constant 64 : index
    %c0_85 = arith.constant 0 : index
    %120 = vector.load %arg37[%c64_84, %c0_85] : memref<160x352xf32, #tpu.memory_space<vmem>>, vector<32x175xf32>
    tpu.vector_store %arg37[%c64_84, %c0_85], %119 {strides = array<i32>} : memref<160x352xf32, #tpu.memory_space<vmem>>, vector<32x175xf32>,
    %c0_86 = arith.constant 0 : index
    %c0_87 = arith.constant 0 : index
    %121 = vector.load %arg12[%c0_86, %c0_87] : memref<32x96xf32, #tpu.memory_space<vmem>>, vector<32x96xf32>
    %c0_88 = arith.constant 0 : index
    %c0_89 = arith.constant 0 : index
    %122 = vector.load %arg37[%c0_88, %c0_89] : memref<160x352xf32, #tpu.memory_space<vmem>>, vector<96x176xf32>
    %cst_90 = arith.constant dense<0.000000e+00> : vector<32x176xf32>
    %123 = tpu.matmul %121, %122, %cst_90 {dimension_numbers = #tpu.dot_dimension_numbers<[1], [0], [0], [1], [0, 0, 1, 1], [], []>} : vector<32x96xf32>, vector<96x176xf32>, vector<32x176xf32> -> vector<32x176xf32>
    %c0_91 = arith.constant 0 : index
    %c0_92 = arith.constant 0 : index
    %124 = vector.load %arg13[%c0_91, %c0_92] : memref<32x1xf32, #tpu.memory_space<vmem>>, vector<32x1xf32>
    %125 = vector.broadcast %124 : vector<32x1xf32> to vector<32x176xf32>
    %126 = arith.addf %123, %125 : vector<32x176xf32>
    %127 = arith.addf %126, %98 : vector<32x176xf32>
    %cst_93 = arith.constant 0.000000e+00 : f32
    %128 = vector.broadcast %cst_93 : f32 to vector<32x176xf32>
    %129 = arith.maximumf %127, %128 : vector<32x176xf32>
    %cst_94 = arith.constant 0.000000e+00 : f32
    %130 = vector.broadcast %cst_94 : f32 to vector<160x352xf32>
    %c0_95 = arith.constant 0 : index
    %c0_96 = arith.constant 0 : index
    %131 = vector.load %arg37[%c0_95, %c0_96] : memref<160x352xf32, #tpu.memory_space<vmem>>, vector<160x352xf32>
    tpu.vector_store %arg37[%c0_95, %c0_96], %130 {strides = array<i32>} : memref<160x352xf32, #tpu.memory_space<vmem>>, vector<160x352xf32>,
    %132 = vector.extract_strided_slice %129 {offsets = [0, 0], sizes = [32, 175], strides = [1, 1]} : vector<32x176xf32> to vector<32x175xf32>
    %c0_97 = arith.constant 0 : index
    %c1_98 = arith.constant 1 : index
    %133 = vector.load %arg37[%c0_97, %c1_98] : memref<160x352xf32, #tpu.memory_space<vmem>>, vector<32x175xf32>
    tpu.vector_store %arg37[%c0_97, %c1_98], %132 {strides = array<i32>} : memref<160x352xf32, #tpu.memory_space<vmem>>, vector<32x175xf32>,
    %c32_99 = arith.constant 32 : index
    %c0_100 = arith.constant 0 : index
    %134 = vector.load %arg37[%c32_99, %c0_100] : memref<160x352xf32, #tpu.memory_space<vmem>>, vector<32x176xf32>
    tpu.vector_store %arg37[%c32_99, %c0_100], %129 {strides = array<i32>} : memref<160x352xf32, #tpu.memory_space<vmem>>, vector<32x176xf32>,
    %135 = vector.extract_strided_slice %129 {offsets = [0, 1], sizes = [32, 175], strides = [1, 1]} : vector<32x176xf32> to vector<32x175xf32>
    %c64_101 = arith.constant 64 : index
    %c0_102 = arith.constant 0 : index
    %136 = vector.load %arg37[%c64_101, %c0_102] : memref<160x352xf32, #tpu.memory_space<vmem>>, vector<32x175xf32>
    tpu.vector_store %arg37[%c64_101, %c0_102], %135 {strides = array<i32>} : memref<160x352xf32, #tpu.memory_space<vmem>>, vector<32x175xf32>,
    %c0_103 = arith.constant 0 : index
    %c0_104 = arith.constant 0 : index
    %137 = vector.load %arg14[%c0_103, %c0_104] : memref<32x96xf32, #tpu.memory_space<vmem>>, vector<32x96xf32>
    %c0_105 = arith.constant 0 : index
    %c0_106 = arith.constant 0 : index
    %138 = vector.load %arg37[%c0_105, %c0_106] : memref<160x352xf32, #tpu.memory_space<vmem>>, vector<96x176xf32>
    %cst_107 = arith.constant dense<0.000000e+00> : vector<32x176xf32>
    %139 = tpu.matmul %137, %138, %cst_107 {dimension_numbers = #tpu.dot_dimension_numbers<[1], [0], [0], [1], [0, 0, 1, 1], [], []>} : vector<32x96xf32>, vector<96x176xf32>, vector<32x176xf32> -> vector<32x176xf32>
    %c0_108 = arith.constant 0 : index
    %c0_109 = arith.constant 0 : index
    %140 = vector.load %arg15[%c0_108, %c0_109] : memref<32x1xf32, #tpu.memory_space<vmem>>, vector<32x1xf32>
    %141 = vector.broadcast %140 : vector<32x1xf32> to vector<32x176xf32>
    %142 = arith.addf %139, %141 : vector<32x176xf32>
    %cst_110 = arith.constant 0.000000e+00 : f32
    %143 = vector.broadcast %cst_110 : f32 to vector<32x176xf32>
    %144 = arith.maximumf %142, %143 : vector<32x176xf32>
    %145 = tpu.iota {dimensions = array<i32: 0>} : vector<176x88xi32>
    %146 = tpu.iota {dimensions = array<i32: 1>} : vector<176x88xi32>
    %c2_i32_111 = arith.constant 2 : i32
    %147 = vector.broadcast %c2_i32_111 : i32 to vector<176x88xi32>
    %148 = arith.muli %147, %146 : vector<176x88xi32>
    %149 = arith.cmpi eq, %145, %148 : vector<176x88xi32>
    %150 = arith.extui %149 : vector<176x88xi1> to vector<176x88xi32>
    %151 = arith.sitofp %150 : vector<176x88xi32> to vector<176x88xf32>
    %cst_112 = arith.constant dense<0.000000e+00> : vector<32x88xf32>
    %152 = tpu.matmul %144, %151, %cst_112 {dimension_numbers = #tpu.dot_dimension_numbers<[1], [0], [0], [1], [0, 0, 1, 1], [], []>} : vector<32x176xf32>, vector<176x88xf32>, vector<32x88xf32> -> vector<32x88xf32>
    %cst_113 = arith.constant 0.000000e+00 : f32
    %153 = vector.broadcast %cst_113 : f32 to vector<160x352xf32>
    %c0_114 = arith.constant 0 : index
    %c0_115 = arith.constant 0 : index
    %154 = vector.load %arg37[%c0_114, %c0_115] : memref<160x352xf32, #tpu.memory_space<vmem>>, vector<160x352xf32>
    tpu.vector_store %arg37[%c0_114, %c0_115], %153 {strides = array<i32>} : memref<160x352xf32, #tpu.memory_space<vmem>>, vector<160x352xf32>,
    %155 = vector.extract_strided_slice %152 {offsets = [0, 0], sizes = [32, 87], strides = [1, 1]} : vector<32x88xf32> to vector<32x87xf32>
    %c0_116 = arith.constant 0 : index
    %c1_117 = arith.constant 1 : index
    %156 = vector.load %arg37[%c0_116, %c1_117] : memref<160x352xf32, #tpu.memory_space<vmem>>, vector<32x87xf32>
    tpu.vector_store %arg37[%c0_116, %c1_117], %155 {strides = array<i32>} : memref<160x352xf32, #tpu.memory_space<vmem>>, vector<32x87xf32>,
    %c32_118 = arith.constant 32 : index
    %c0_119 = arith.constant 0 : index
    %157 = vector.load %arg37[%c32_118, %c0_119] : memref<160x352xf32, #tpu.memory_space<vmem>>, vector<32x88xf32>
    tpu.vector_store %arg37[%c32_118, %c0_119], %152 {strides = array<i32>} : memref<160x352xf32, #tpu.memory_space<vmem>>, vector<32x88xf32>,
    %158 = vector.extract_strided_slice %152 {offsets = [0, 1], sizes = [32, 87], strides = [1, 1]} : vector<32x88xf32> to vector<32x87xf32>
    %c64_120 = arith.constant 64 : index
    %c0_121 = arith.constant 0 : index
    %159 = vector.load %arg37[%c64_120, %c0_121] : memref<160x352xf32, #tpu.memory_space<vmem>>, vector<32x87xf32>
    tpu.vector_store %arg37[%c64_120, %c0_121], %158 {strides = array<i32>} : memref<160x352xf32, #tpu.memory_space<vmem>>, vector<32x87xf32>,
    %c0_122 = arith.constant 0 : index
    %c0_123 = arith.constant 0 : index
    %160 = vector.load %arg16[%c0_122, %c0_123] : memref<32x96xf32, #tpu.memory_space<vmem>>, vector<32x96xf32>
    %c0_124 = arith.constant 0 : index
    %c0_125 = arith.constant 0 : index
    %161 = vector.load %arg37[%c0_124, %c0_125] : memref<160x352xf32, #tpu.memory_space<vmem>>, vector<96x88xf32>
    %cst_126 = arith.constant dense<0.000000e+00> : vector<32x88xf32>
    %162 = tpu.matmul %160, %161, %cst_126 {dimension_numbers = #tpu.dot_dimension_numbers<[1], [0], [0], [1], [0, 0, 1, 1], [], []>} : vector<32x96xf32>, vector<96x88xf32>, vector<32x88xf32> -> vector<32x88xf32>
    %c0_127 = arith.constant 0 : index
    %c0_128 = arith.constant 0 : index
    %163 = vector.load %arg17[%c0_127, %c0_128] : memref<32x1xf32, #tpu.memory_space<vmem>>, vector<32x1xf32>
    %164 = vector.broadcast %163 : vector<32x1xf32> to vector<32x88xf32>
    %165 = arith.addf %162, %164 : vector<32x88xf32>
    %cst_129 = arith.constant 0.000000e+00 : f32
    %166 = vector.broadcast %cst_129 : f32 to vector<32x88xf32>
    %167 = arith.maximumf %165, %166 : vector<32x88xf32>
    %cst_130 = arith.constant 0.000000e+00 : f32
    %168 = vector.broadcast %cst_130 : f32 to vector<160x352xf32>
    %c0_131 = arith.constant 0 : index
    %c0_132 = arith.constant 0 : index
    %169 = vector.load %arg37[%c0_131, %c0_132] : memref<160x352xf32, #tpu.memory_space<vmem>>, vector<160x352xf32>
    tpu.vector_store %arg37[%c0_131, %c0_132], %168 {strides = array<i32>} : memref<160x352xf32, #tpu.memory_space<vmem>>, vector<160x352xf32>,
    %170 = vector.extract_strided_slice %167 {offsets = [0, 0], sizes = [32, 87], strides = [1, 1]} : vector<32x88xf32> to vector<32x87xf32>
    %c0_133 = arith.constant 0 : index
    %c1_134 = arith.constant 1 : index
    %171 = vector.load %arg37[%c0_133, %c1_134] : memref<160x352xf32, #tpu.memory_space<vmem>>, vector<32x87xf32>
    tpu.vector_store %arg37[%c0_133, %c1_134], %170 {strides = array<i32>} : memref<160x352xf32, #tpu.memory_space<vmem>>, vector<32x87xf32>,
    %c32_135 = arith.constant 32 : index
    %c0_136 = arith.constant 0 : index
    %172 = vector.load %arg37[%c32_135, %c0_136] : memref<160x352xf32, #tpu.memory_space<vmem>>, vector<32x88xf32>
    tpu.vector_store %arg37[%c32_135, %c0_136], %167 {strides = array<i32>} : memref<160x352xf32, #tpu.memory_space<vmem>>, vector<32x88xf32>,
    %173 = vector.extract_strided_slice %167 {offsets = [0, 1], sizes = [32, 87], strides = [1, 1]} : vector<32x88xf32> to vector<32x87xf32>
    %c64_137 = arith.constant 64 : index
    %c0_138 = arith.constant 0 : index
    %174 = vector.load %arg37[%c64_137, %c0_138] : memref<160x352xf32, #tpu.memory_space<vmem>>, vector<32x87xf32>
    tpu.vector_store %arg37[%c64_137, %c0_138], %173 {strides = array<i32>} : memref<160x352xf32, #tpu.memory_space<vmem>>, vector<32x87xf32>,
    %c0_139 = arith.constant 0 : index
    %c0_140 = arith.constant 0 : index
    %175 = vector.load %arg18[%c0_139, %c0_140] : memref<32x96xf32, #tpu.memory_space<vmem>>, vector<32x96xf32>
    %c0_141 = arith.constant 0 : index
    %c0_142 = arith.constant 0 : index
    %176 = vector.load %arg37[%c0_141, %c0_142] : memref<160x352xf32, #tpu.memory_space<vmem>>, vector<96x88xf32>
    %cst_143 = arith.constant dense<0.000000e+00> : vector<32x88xf32>
    %177 = tpu.matmul %175, %176, %cst_143 {dimension_numbers = #tpu.dot_dimension_numbers<[1], [0], [0], [1], [0, 0, 1, 1], [], []>} : vector<32x96xf32>, vector<96x88xf32>, vector<32x88xf32> -> vector<32x88xf32>
    %c0_144 = arith.constant 0 : index
    %c0_145 = arith.constant 0 : index
    %178 = vector.load %arg19[%c0_144, %c0_145] : memref<32x1xf32, #tpu.memory_space<vmem>>, vector<32x1xf32>
    %179 = vector.broadcast %178 : vector<32x1xf32> to vector<32x88xf32>
    %180 = arith.addf %177, %179 : vector<32x88xf32>
    %181 = arith.addf %180, %152 : vector<32x88xf32>
    %cst_146 = arith.constant 0.000000e+00 : f32
    %182 = vector.broadcast %cst_146 : f32 to vector<32x88xf32>
    %183 = arith.maximumf %181, %182 : vector<32x88xf32>
    %cst_147 = arith.constant 0.000000e+00 : f32
    %184 = vector.broadcast %cst_147 : f32 to vector<160x352xf32>
    %c0_148 = arith.constant 0 : index
    %c0_149 = arith.constant 0 : index
    %185 = vector.load %arg37[%c0_148, %c0_149] : memref<160x352xf32, #tpu.memory_space<vmem>>, vector<160x352xf32>
    tpu.vector_store %arg37[%c0_148, %c0_149], %184 {strides = array<i32>} : memref<160x352xf32, #tpu.memory_space<vmem>>, vector<160x352xf32>,
    %186 = vector.extract_strided_slice %183 {offsets = [0, 0], sizes = [32, 87], strides = [1, 1]} : vector<32x88xf32> to vector<32x87xf32>
    %c0_150 = arith.constant 0 : index
    %c1_151 = arith.constant 1 : index
    %187 = vector.load %arg37[%c0_150, %c1_151] : memref<160x352xf32, #tpu.memory_space<vmem>>, vector<32x87xf32>
    tpu.vector_store %arg37[%c0_150, %c1_151], %186 {strides = array<i32>} : memref<160x352xf32, #tpu.memory_space<vmem>>, vector<32x87xf32>,
    %c32_152 = arith.constant 32 : index
    %c0_153 = arith.constant 0 : index
    %188 = vector.load %arg37[%c32_152, %c0_153] : memref<160x352xf32, #tpu.memory_space<vmem>>, vector<32x88xf32>
    tpu.vector_store %arg37[%c32_152, %c0_153], %183 {strides = array<i32>} : memref<160x352xf32, #tpu.memory_space<vmem>>, vector<32x88xf32>,
    %189 = vector.extract_strided_slice %183 {offsets = [0, 1], sizes = [32, 87], strides = [1, 1]} : vector<32x88xf32> to vector<32x87xf32>
    %c64_154 = arith.constant 64 : index
    %c0_155 = arith.constant 0 : index
    %190 = vector.load %arg37[%c64_154, %c0_155] : memref<160x352xf32, #tpu.memory_space<vmem>>, vector<32x87xf32>
    tpu.vector_store %arg37[%c64_154, %c0_155], %189 {strides = array<i32>} : memref<160x352xf32, #tpu.memory_space<vmem>>, vector<32x87xf32>,
    %c0_156 = arith.constant 0 : index
    %c0_157 = arith.constant 0 : index
    %191 = vector.load %arg20[%c0_156, %c0_157] : memref<32x96xf32, #tpu.memory_space<vmem>>, vector<32x96xf32>
    %c0_158 = arith.constant 0 : index
    %c0_159 = arith.constant 0 : index
    %192 = vector.load %arg37[%c0_158, %c0_159] : memref<160x352xf32, #tpu.memory_space<vmem>>, vector<96x88xf32>
    %cst_160 = arith.constant dense<0.000000e+00> : vector<32x88xf32>
    %193 = tpu.matmul %191, %192, %cst_160 {dimension_numbers = #tpu.dot_dimension_numbers<[1], [0], [0], [1], [0, 0, 1, 1], [], []>} : vector<32x96xf32>, vector<96x88xf32>, vector<32x88xf32> -> vector<32x88xf32>
    %c0_161 = arith.constant 0 : index
    %c0_162 = arith.constant 0 : index
    %194 = vector.load %arg21[%c0_161, %c0_162] : memref<32x1xf32, #tpu.memory_space<vmem>>, vector<32x1xf32>
    %195 = vector.broadcast %194 : vector<32x1xf32> to vector<32x88xf32>
    %196 = arith.addf %193, %195 : vector<32x88xf32>
    %cst_163 = arith.constant 0.000000e+00 : f32
    %197 = vector.broadcast %cst_163 : f32 to vector<32x88xf32>
    %198 = arith.maximumf %196, %197 : vector<32x88xf32>
    %199 = tpu.iota {dimensions = array<i32: 0>} : vector<88x44xi32>
    %200 = tpu.iota {dimensions = array<i32: 1>} : vector<88x44xi32>
    %c2_i32_164 = arith.constant 2 : i32
    %201 = vector.broadcast %c2_i32_164 : i32 to vector<88x44xi32>
    %202 = arith.muli %201, %200 : vector<88x44xi32>
    %203 = arith.cmpi eq, %199, %202 : vector<88x44xi32>
    %204 = arith.extui %203 : vector<88x44xi1> to vector<88x44xi32>
    %205 = arith.sitofp %204 : vector<88x44xi32> to vector<88x44xf32>
    %cst_165 = arith.constant dense<0.000000e+00> : vector<32x44xf32>
    %206 = tpu.matmul %198, %205, %cst_165 {dimension_numbers = #tpu.dot_dimension_numbers<[1], [0], [0], [1], [0, 0, 1, 1], [], []>} : vector<32x88xf32>, vector<88x44xf32>, vector<32x44xf32> -> vector<32x44xf32>
    %cst_166 = arith.constant 0.000000e+00 : f32
    %207 = vector.broadcast %cst_166 : f32 to vector<160x352xf32>
    %c0_167 = arith.constant 0 : index
    %c0_168 = arith.constant 0 : index
    %208 = vector.load %arg37[%c0_167, %c0_168] : memref<160x352xf32, #tpu.memory_space<vmem>>, vector<160x352xf32>
    tpu.vector_store %arg37[%c0_167, %c0_168], %207 {strides = array<i32>} : memref<160x352xf32, #tpu.memory_space<vmem>>, vector<160x352xf32>,
    %209 = vector.extract_strided_slice %206 {offsets = [0, 0], sizes = [32, 43], strides = [1, 1]} : vector<32x44xf32> to vector<32x43xf32>
    %c0_169 = arith.constant 0 : index
    %c1_170 = arith.constant 1 : index
    %210 = vector.load %arg37[%c0_169, %c1_170] : memref<160x352xf32, #tpu.memory_space<vmem>>, vector<32x43xf32>
    tpu.vector_store %arg37[%c0_169, %c1_170], %209 {strides = array<i32>} : memref<160x352xf32, #tpu.memory_space<vmem>>, vector<32x43xf32>,
    %c32_171 = arith.constant 32 : index
    %c0_172 = arith.constant 0 : index
    %211 = vector.load %arg37[%c32_171, %c0_172] : memref<160x352xf32, #tpu.memory_space<vmem>>, vector<32x44xf32>
    tpu.vector_store %arg37[%c32_171, %c0_172], %206 {strides = array<i32>} : memref<160x352xf32, #tpu.memory_space<vmem>>, vector<32x44xf32>,
    %212 = vector.extract_strided_slice %206 {offsets = [0, 1], sizes = [32, 43], strides = [1, 1]} : vector<32x44xf32> to vector<32x43xf32>
    %c64_173 = arith.constant 64 : index
    %c0_174 = arith.constant 0 : index
    %213 = vector.load %arg37[%c64_173, %c0_174] : memref<160x352xf32, #tpu.memory_space<vmem>>, vector<32x43xf32>
    tpu.vector_store %arg37[%c64_173, %c0_174], %212 {strides = array<i32>} : memref<160x352xf32, #tpu.memory_space<vmem>>, vector<32x43xf32>,
    %c0_175 = arith.constant 0 : index
    %c0_176 = arith.constant 0 : index
    %214 = vector.load %arg22[%c0_175, %c0_176] : memref<32x96xf32, #tpu.memory_space<vmem>>, vector<32x96xf32>
    %c0_177 = arith.constant 0 : index
    %c0_178 = arith.constant 0 : index
    %215 = vector.load %arg37[%c0_177, %c0_178] : memref<160x352xf32, #tpu.memory_space<vmem>>, vector<96x44xf32>
    %cst_179 = arith.constant dense<0.000000e+00> : vector<32x44xf32>
    %216 = tpu.matmul %214, %215, %cst_179 {dimension_numbers = #tpu.dot_dimension_numbers<[1], [0], [0], [1], [0, 0, 1, 1], [], []>} : vector<32x96xf32>, vector<96x44xf32>, vector<32x44xf32> -> vector<32x44xf32>
    %c0_180 = arith.constant 0 : index
    %c0_181 = arith.constant 0 : index
    %217 = vector.load %arg23[%c0_180, %c0_181] : memref<32x1xf32, #tpu.memory_space<vmem>>, vector<32x1xf32>
    %218 = vector.broadcast %217 : vector<32x1xf32> to vector<32x44xf32>
    %219 = arith.addf %216, %218 : vector<32x44xf32>
    %cst_182 = arith.constant 0.000000e+00 : f32
    %220 = vector.broadcast %cst_182 : f32 to vector<32x44xf32>
    %221 = arith.maximumf %219, %220 : vector<32x44xf32>
    %cst_183 = arith.constant 0.000000e+00 : f32
    %222 = vector.broadcast %cst_183 : f32 to vector<160x352xf32>
    %c0_184 = arith.constant 0 : index
    %c0_185 = arith.constant 0 : index
    %223 = vector.load %arg37[%c0_184, %c0_185] : memref<160x352xf32, #tpu.memory_space<vmem>>, vector<160x352xf32>
    tpu.vector_store %arg37[%c0_184, %c0_185], %222 {strides = array<i32>} : memref<160x352xf32, #tpu.memory_space<vmem>>, vector<160x352xf32>,
    %224 = vector.extract_strided_slice %221 {offsets = [0, 0], sizes = [32, 43], strides = [1, 1]} : vector<32x44xf32> to vector<32x43xf32>
    %c0_186 = arith.constant 0 : index
    %c1_187 = arith.constant 1 : index
    %225 = vector.load %arg37[%c0_186, %c1_187] : memref<160x352xf32, #tpu.memory_space<vmem>>, vector<32x43xf32>
    tpu.vector_store %arg37[%c0_186, %c1_187], %224 {strides = array<i32>} : memref<160x352xf32, #tpu.memory_space<vmem>>, vector<32x43xf32>,
    %c32_188 = arith.constant 32 : index
    %c0_189 = arith.constant 0 : index
    %226 = vector.load %arg37[%c32_188, %c0_189] : memref<160x352xf32, #tpu.memory_space<vmem>>, vector<32x44xf32>
    tpu.vector_store %arg37[%c32_188, %c0_189], %221 {strides = array<i32>} : memref<160x352xf32, #tpu.memory_space<vmem>>, vector<32x44xf32>,
    %227 = vector.extract_strided_slice %221 {offsets = [0, 1], sizes = [32, 43], strides = [1, 1]} : vector<32x44xf32> to vector<32x43xf32>
    %c64_190 = arith.constant 64 : index
    %c0_191 = arith.constant 0 : index
    %228 = vector.load %arg37[%c64_190, %c0_191] : memref<160x352xf32, #tpu.memory_space<vmem>>, vector<32x43xf32>
    tpu.vector_store %arg37[%c64_190, %c0_191], %227 {strides = array<i32>} : memref<160x352xf32, #tpu.memory_space<vmem>>, vector<32x43xf32>,
    %c0_192 = arith.constant 0 : index
    %c0_193 = arith.constant 0 : index
    %229 = vector.load %arg24[%c0_192, %c0_193] : memref<32x96xf32, #tpu.memory_space<vmem>>, vector<32x96xf32>
    %c0_194 = arith.constant 0 : index
    %c0_195 = arith.constant 0 : index
    %230 = vector.load %arg37[%c0_194, %c0_195] : memref<160x352xf32, #tpu.memory_space<vmem>>, vector<96x44xf32>
    %cst_196 = arith.constant dense<0.000000e+00> : vector<32x44xf32>
    %231 = tpu.matmul %229, %230, %cst_196 {dimension_numbers = #tpu.dot_dimension_numbers<[1], [0], [0], [1], [0, 0, 1, 1], [], []>} : vector<32x96xf32>, vector<96x44xf32>, vector<32x44xf32> -> vector<32x44xf32>
    %c0_197 = arith.constant 0 : index
    %c0_198 = arith.constant 0 : index
    %232 = vector.load %arg25[%c0_197, %c0_198] : memref<32x1xf32, #tpu.memory_space<vmem>>, vector<32x1xf32>
    %233 = vector.broadcast %232 : vector<32x1xf32> to vector<32x44xf32>
    %234 = arith.addf %231, %233 : vector<32x44xf32>
    %235 = arith.addf %234, %206 : vector<32x44xf32>
    %cst_199 = arith.constant 0.000000e+00 : f32
    %236 = vector.broadcast %cst_199 : f32 to vector<32x44xf32>
    %237 = arith.maximumf %235, %236 : vector<32x44xf32>
    %cst_200 = arith.constant 0.000000e+00 : f32
    %238 = vector.broadcast %cst_200 : f32 to vector<160x352xf32>
    %c0_201 = arith.constant 0 : index
    %c0_202 = arith.constant 0 : index
    %239 = vector.load %arg37[%c0_201, %c0_202] : memref<160x352xf32, #tpu.memory_space<vmem>>, vector<160x352xf32>
    tpu.vector_store %arg37[%c0_201, %c0_202], %238 {strides = array<i32>} : memref<160x352xf32, #tpu.memory_space<vmem>>, vector<160x352xf32>,
    %240 = vector.extract_strided_slice %237 {offsets = [0, 0], sizes = [32, 43], strides = [1, 1]} : vector<32x44xf32> to vector<32x43xf32>
    %c0_203 = arith.constant 0 : index
    %c1_204 = arith.constant 1 : index
    %241 = vector.load %arg37[%c0_203, %c1_204] : memref<160x352xf32, #tpu.memory_space<vmem>>, vector<32x43xf32>
    tpu.vector_store %arg37[%c0_203, %c1_204], %240 {strides = array<i32>} : memref<160x352xf32, #tpu.memory_space<vmem>>, vector<32x43xf32>,
    %c32_205 = arith.constant 32 : index
    %c0_206 = arith.constant 0 : index
    %242 = vector.load %arg37[%c32_205, %c0_206] : memref<160x352xf32, #tpu.memory_space<vmem>>, vector<32x44xf32>
    tpu.vector_store %arg37[%c32_205, %c0_206], %237 {strides = array<i32>} : memref<160x352xf32, #tpu.memory_space<vmem>>, vector<32x44xf32>,
    %243 = vector.extract_strided_slice %237 {offsets = [0, 1], sizes = [32, 43], strides = [1, 1]} : vector<32x44xf32> to vector<32x43xf32>
    %c64_207 = arith.constant 64 : index
    %c0_208 = arith.constant 0 : index
    %244 = vector.load %arg37[%c64_207, %c0_208] : memref<160x352xf32, #tpu.memory_space<vmem>>, vector<32x43xf32>
    tpu.vector_store %arg37[%c64_207, %c0_208], %243 {strides = array<i32>} : memref<160x352xf32, #tpu.memory_space<vmem>>, vector<32x43xf32>,
    %c0_209 = arith.constant 0 : index
    %c0_210 = arith.constant 0 : index
    %245 = vector.load %arg26[%c0_209, %c0_210] : memref<32x96xf32, #tpu.memory_space<vmem>>, vector<32x96xf32>
    %c0_211 = arith.constant 0 : index
    %c0_212 = arith.constant 0 : index
    %246 = vector.load %arg37[%c0_211, %c0_212] : memref<160x352xf32, #tpu.memory_space<vmem>>, vector<96x44xf32>
    %cst_213 = arith.constant dense<0.000000e+00> : vector<32x44xf32>
    %247 = tpu.matmul %245, %246, %cst_213 {dimension_numbers = #tpu.dot_dimension_numbers<[1], [0], [0], [1], [0, 0, 1, 1], [], []>} : vector<32x96xf32>, vector<96x44xf32>, vector<32x44xf32> -> vector<32x44xf32>
    %c0_214 = arith.constant 0 : index
    %c0_215 = arith.constant 0 : index
    %248 = vector.load %arg27[%c0_214, %c0_215] : memref<32x1xf32, #tpu.memory_space<vmem>>, vector<32x1xf32>
    %249 = vector.broadcast %248 : vector<32x1xf32> to vector<32x44xf32>
    %250 = arith.addf %247, %249 : vector<32x44xf32>
    %cst_216 = arith.constant 0.000000e+00 : f32
    %251 = vector.broadcast %cst_216 : f32 to vector<32x44xf32>
    %252 = arith.maximumf %250, %251 : vector<32x44xf32>
    %253 = tpu.iota {dimensions = array<i32: 0>} : vector<44x22xi32>
    %254 = tpu.iota {dimensions = array<i32: 1>} : vector<44x22xi32>
    %c2_i32_217 = arith.constant 2 : i32
    %255 = vector.broadcast %c2_i32_217 : i32 to vector<44x22xi32>
    %256 = arith.muli %255, %254 : vector<44x22xi32>
    %257 = arith.cmpi eq, %253, %256 : vector<44x22xi32>
    %258 = arith.extui %257 : vector<44x22xi1> to vector<44x22xi32>
    %259 = arith.sitofp %258 : vector<44x22xi32> to vector<44x22xf32>
    %cst_218 = arith.constant dense<0.000000e+00> : vector<32x22xf32>
    %260 = tpu.matmul %252, %259, %cst_218 {dimension_numbers = #tpu.dot_dimension_numbers<[1], [0], [0], [1], [0, 0, 1, 1], [], []>} : vector<32x44xf32>, vector<44x22xf32>, vector<32x22xf32> -> vector<32x22xf32>
    %cst_219 = arith.constant 0.000000e+00 : f32
    %261 = vector.broadcast %cst_219 : f32 to vector<160x352xf32>
    %c0_220 = arith.constant 0 : index
    %c0_221 = arith.constant 0 : index
    %262 = vector.load %arg37[%c0_220, %c0_221] : memref<160x352xf32, #tpu.memory_space<vmem>>, vector<160x352xf32>
    tpu.vector_store %arg37[%c0_220, %c0_221], %261 {strides = array<i32>} : memref<160x352xf32, #tpu.memory_space<vmem>>, vector<160x352xf32>,
    %263 = vector.extract_strided_slice %260 {offsets = [0, 0], sizes = [32, 21], strides = [1, 1]} : vector<32x22xf32> to vector<32x21xf32>
    %c0_222 = arith.constant 0 : index
    %c1_223 = arith.constant 1 : index
    %264 = vector.load %arg37[%c0_222, %c1_223] : memref<160x352xf32, #tpu.memory_space<vmem>>, vector<32x21xf32>
    tpu.vector_store %arg37[%c0_222, %c1_223], %263 {strides = array<i32>} : memref<160x352xf32, #tpu.memory_space<vmem>>, vector<32x21xf32>,
    %c32_224 = arith.constant 32 : index
    %c0_225 = arith.constant 0 : index
    %265 = vector.load %arg37[%c32_224, %c0_225] : memref<160x352xf32, #tpu.memory_space<vmem>>, vector<32x22xf32>
    tpu.vector_store %arg37[%c32_224, %c0_225], %260 {strides = array<i32>} : memref<160x352xf32, #tpu.memory_space<vmem>>, vector<32x22xf32>,
    %266 = vector.extract_strided_slice %260 {offsets = [0, 1], sizes = [32, 21], strides = [1, 1]} : vector<32x22xf32> to vector<32x21xf32>
    %c64_226 = arith.constant 64 : index
    %c0_227 = arith.constant 0 : index
    %267 = vector.load %arg37[%c64_226, %c0_227] : memref<160x352xf32, #tpu.memory_space<vmem>>, vector<32x21xf32>
    tpu.vector_store %arg37[%c64_226, %c0_227], %266 {strides = array<i32>} : memref<160x352xf32, #tpu.memory_space<vmem>>, vector<32x21xf32>,
    %c0_228 = arith.constant 0 : index
    %c0_229 = arith.constant 0 : index
    %268 = vector.load %arg28[%c0_228, %c0_229] : memref<32x96xf32, #tpu.memory_space<vmem>>, vector<32x96xf32>
    %c0_230 = arith.constant 0 : index
    %c0_231 = arith.constant 0 : index
    %269 = vector.load %arg37[%c0_230, %c0_231] : memref<160x352xf32, #tpu.memory_space<vmem>>, vector<96x22xf32>
    %cst_232 = arith.constant dense<0.000000e+00> : vector<32x22xf32>
    %270 = tpu.matmul %268, %269, %cst_232 {dimension_numbers = #tpu.dot_dimension_numbers<[1], [0], [0], [1], [0, 0, 1, 1], [], []>} : vector<32x96xf32>, vector<96x22xf32>, vector<32x22xf32> -> vector<32x22xf32>
    %c0_233 = arith.constant 0 : index
    %c0_234 = arith.constant 0 : index
    %271 = vector.load %arg29[%c0_233, %c0_234] : memref<32x1xf32, #tpu.memory_space<vmem>>, vector<32x1xf32>
    %272 = vector.broadcast %271 : vector<32x1xf32> to vector<32x22xf32>
    %273 = arith.addf %270, %272 : vector<32x22xf32>
    %cst_235 = arith.constant 0.000000e+00 : f32
    %274 = vector.broadcast %cst_235 : f32 to vector<32x22xf32>
    %275 = arith.maximumf %273, %274 : vector<32x22xf32>
    %cst_236 = arith.constant 0.000000e+00 : f32
    %276 = vector.broadcast %cst_236 : f32 to vector<160x352xf32>
    %c0_237 = arith.constant 0 : index
    %c0_238 = arith.constant 0 : index
    %277 = vector.load %arg37[%c0_237, %c0_238] : memref<160x352xf32, #tpu.memory_space<vmem>>, vector<160x352xf32>
    tpu.vector_store %arg37[%c0_237, %c0_238], %276 {strides = array<i32>} : memref<160x352xf32, #tpu.memory_space<vmem>>, vector<160x352xf32>,
    %278 = vector.extract_strided_slice %275 {offsets = [0, 0], sizes = [32, 21], strides = [1, 1]} : vector<32x22xf32> to vector<32x21xf32>
    %c0_239 = arith.constant 0 : index
    %c1_240 = arith.constant 1 : index
    %279 = vector.load %arg37[%c0_239, %c1_240] : memref<160x352xf32, #tpu.memory_space<vmem>>, vector<32x21xf32>
    tpu.vector_store %arg37[%c0_239, %c1_240], %278 {strides = array<i32>} : memref<160x352xf32, #tpu.memory_space<vmem>>, vector<32x21xf32>,
    %c32_241 = arith.constant 32 : index
    %c0_242 = arith.constant 0 : index
    %280 = vector.load %arg37[%c32_241, %c0_242] : memref<160x352xf32, #tpu.memory_space<vmem>>, vector<32x22xf32>
    tpu.vector_store %arg37[%c32_241, %c0_242], %275 {strides = array<i32>} : memref<160x352xf32, #tpu.memory_space<vmem>>, vector<32x22xf32>,
    %281 = vector.extract_strided_slice %275 {offsets = [0, 1], sizes = [32, 21], strides = [1, 1]} : vector<32x22xf32> to vector<32x21xf32>
    %c64_243 = arith.constant 64 : index
    %c0_244 = arith.constant 0 : index
    %282 = vector.load %arg37[%c64_243, %c0_244] : memref<160x352xf32, #tpu.memory_space<vmem>>, vector<32x21xf32>
    tpu.vector_store %arg37[%c64_243, %c0_244], %281 {strides = array<i32>} : memref<160x352xf32, #tpu.memory_space<vmem>>, vector<32x21xf32>,
    %c0_245 = arith.constant 0 : index
    %c0_246 = arith.constant 0 : index
    %283 = vector.load %arg30[%c0_245, %c0_246] : memref<32x96xf32, #tpu.memory_space<vmem>>, vector<32x96xf32>
    %c0_247 = arith.constant 0 : index
    %c0_248 = arith.constant 0 : index
    %284 = vector.load %arg37[%c0_247, %c0_248] : memref<160x352xf32, #tpu.memory_space<vmem>>, vector<96x22xf32>
    %cst_249 = arith.constant dense<0.000000e+00> : vector<32x22xf32>
    %285 = tpu.matmul %283, %284, %cst_249 {dimension_numbers = #tpu.dot_dimension_numbers<[1], [0], [0], [1], [0, 0, 1, 1], [], []>} : vector<32x96xf32>, vector<96x22xf32>, vector<32x22xf32> -> vector<32x22xf32>
    %c0_250 = arith.constant 0 : index
    %c0_251 = arith.constant 0 : index
    %286 = vector.load %arg31[%c0_250, %c0_251] : memref<32x1xf32, #tpu.memory_space<vmem>>, vector<32x1xf32>
    %287 = vector.broadcast %286 : vector<32x1xf32> to vector<32x22xf32>
    %288 = arith.addf %285, %287 : vector<32x22xf32>
    %289 = arith.addf %288, %260 : vector<32x22xf32>
    %cst_252 = arith.constant 0.000000e+00 : f32
    %290 = vector.broadcast %cst_252 : f32 to vector<32x22xf32>
    %291 = arith.maximumf %289, %290 : vector<32x22xf32>
    %c0_253 = arith.constant 0 : index
    %c0_254 = arith.constant 0 : index
    %292 = vector.load %arg32[%c0_253, %c0_254] : memref<2x32xf32, #tpu.memory_space<vmem>>, vector<2x32xf32>
    %cst_255 = arith.constant dense<0.000000e+00> : vector<2x22xf32>
    %293 = tpu.matmul %292, %291, %cst_255 {dimension_numbers = #tpu.dot_dimension_numbers<[1], [0], [0], [1], [0, 0, 1, 1], [], []>} : vector<2x32xf32>, vector<32x22xf32>, vector<2x22xf32> -> vector<2x22xf32>
    %c0_256 = arith.constant 0 : index
    %c0_257 = arith.constant 0 : index
    %294 = vector.load %arg33[%c0_256, %c0_257] : memref<2x1xf32, #tpu.memory_space<vmem>>, vector<2x1xf32>
    %295 = vector.broadcast %294 : vector<2x1xf32> to vector<2x22xf32>
    %296 = arith.addf %293, %295 : vector<2x22xf32>
    %cst_258 = arith.constant 0.000000e+00 : f32
    %297 = vector.broadcast %cst_258 : f32 to vector<2x22xf32>
    %298 = arith.maximumf %296, %297 : vector<2x22xf32>
    %c0_259 = arith.constant 0 : index
    %c0_260 = arith.constant 0 : index
    %299 = vector.load %arg34[%c0_259, %c0_260] : memref<2x22xf32, #tpu.memory_space<vmem>>, vector<2x22xf32>
    %300 = arith.mulf %298, %299 : vector<2x22xf32>
    %cst_261 = arith.constant dense<0.000000e+00> : vector<2xf32>
    %301 = vector.multi_reduction <add>, %300, %cst_261 [1] : vector<2x22xf32> to vector<2xf32>
    %302 = vector.shape_cast %301 : vector<2xf32> to vector<2x1xf32>
    %cst_262 = arith.constant dense<0.000000e+00> : vector<1xf32>
    %303 = vector.multi_reduction <add>, %302, %cst_262 [0] : vector<2x1xf32> to vector<1xf32>
    %304 = vector.shape_cast %303 : vector<1xf32> to vector<1x1xf32>
    %c0_263 = arith.constant 0 : index
    %c0_264 = arith.constant 0 : index
    %305 = vector.load %arg35[%c0_263, %c0_264] : memref<1x1xf32, #tpu.memory_space<vmem>>, vector<1x1xf32>
    %306 = arith.addf %304, %305 : vector<1x1xf32>
    %c0_265 = arith.constant 0 : index
    %c0_266 = arith.constant 0 : index
    %c0_267 = arith.constant 0 : index
    %307 = vector.load %arg36[%c0_265, %c0_266, %c0_267] : memref<1x1x1xf32, #tpu.memory_space<vmem>>, vector<1x1x1xf32>
    %308 = vector.shape_cast %307 : vector<1x1x1xf32> to vector<1x1xf32>
    %309 = vector.shape_cast %306 : vector<1x1xf32> to vector<1x1x1xf32>
    tpu.vector_store %arg36[%c0_265, %c0_266, %c0_267], %309 {strides = array<i32>} : memref<1x1x1xf32, #tpu.memory_space<vmem>>, vector<1x1x1xf32>,
    return
  }
  func.func @transform_0(%arg0: i32) -> (i32, i32, i32) {
    %c0_i32 = arith.constant 0 : i32
    %c0_i32_0 = arith.constant 0 : i32
    %c0_i32_1 = arith.constant 0 : i32
    return %arg0, %c0_i32, %c0_i32_0 : i32, i32, i32
  }
  func.func @transform_1(%arg0: i32) -> (i32, i32) {
    %c0_i32 = arith.constant 0 : i32
    %c0_i32_0 = arith.constant 0 : i32
    %c0_i32_1 = arith.constant 0 : i32
    return %c0_i32, %c0_i32_0 : i32, i32
  }
  func.func @transform_2(%arg0: i32) -> (i32, i32) {
    %c0_i32 = arith.constant 0 : i32
    %c0_i32_0 = arith.constant 0 : i32
    %c0_i32_1 = arith.constant 0 : i32
    return %c0_i32, %c0_i32_0 : i32, i32
  }
  func.func @transform_3(%arg0: i32) -> (i32, i32) {
    %c0_i32 = arith.constant 0 : i32
    %c0_i32_0 = arith.constant 0 : i32
    %c0_i32_1 = arith.constant 0 : i32
    return %c0_i32, %c0_i32_0 : i32, i32
  }
  func.func @transform_4(%arg0: i32) -> (i32, i32) {
    %c0_i32 = arith.constant 0 : i32
    %c0_i32_0 = arith.constant 0 : i32
    %c0_i32_1 = arith.constant 0 : i32
    return %c0_i32, %c0_i32_0 : i32, i32
  }
  func.func @transform_5(%arg0: i32) -> (i32, i32) {
    %c0_i32 = arith.constant 0 : i32
    %c0_i32_0 = arith.constant 0 : i32
    %c0_i32_1 = arith.constant 0 : i32
    return %c0_i32, %c0_i32_0 : i32, i32
  }
  func.func @transform_6(%arg0: i32) -> (i32, i32) {
    %c0_i32 = arith.constant 0 : i32
    %c0_i32_0 = arith.constant 0 : i32
    %c0_i32_1 = arith.constant 0 : i32
    return %c0_i32, %c0_i32_0 : i32, i32
  }
  func.func @transform_7(%arg0: i32) -> (i32, i32) {
    %c0_i32 = arith.constant 0 : i32
    %c0_i32_0 = arith.constant 0 : i32
    %c0_i32_1 = arith.constant 0 : i32
    return %c0_i32, %c0_i32_0 : i32, i32
  }
  func.func @transform_8(%arg0: i32) -> (i32, i32) {
    %c0_i32 = arith.constant 0 : i32
    %c0_i32_0 = arith.constant 0 : i32
    %c0_i32_1 = arith.constant 0 : i32
    return %c0_i32, %c0_i32_0 : i32, i32
  }
  func.func @transform_9(%arg0: i32) -> (i32, i32) {
    %c0_i32 = arith.constant 0 : i32
    %c0_i32_0 = arith.constant 0 : i32
    %c0_i32_1 = arith.constant 0 : i32
    return %c0_i32, %c0_i32_0 : i32, i32
  }
  func.func @transform_10(%arg0: i32) -> (i32, i32) {
    %c0_i32 = arith.constant 0 : i32
    %c0_i32_0 = arith.constant 0 : i32
    %c0_i32_1 = arith.constant 0 : i32
    return %c0_i32, %c0_i32_0 : i32, i32
  }
  func.func @transform_11(%arg0: i32) -> (i32, i32) {
    %c0_i32 = arith.constant 0 : i32
    %c0_i32_0 = arith.constant 0 : i32
    %c0_i32_1 = arith.constant 0 : i32
    return %c0_i32, %c0_i32_0 : i32, i32
  }
  func.func @transform_12(%arg0: i32) -> (i32, i32) {
    %c0_i32 = arith.constant 0 : i32
    %c0_i32_0 = arith.constant 0 : i32
    %c0_i32_1 = arith.constant 0 : i32
    return %c0_i32, %c0_i32_0 : i32, i32
  }
  func.func @transform_13(%arg0: i32) -> (i32, i32) {
    %c0_i32 = arith.constant 0 : i32
    %c0_i32_0 = arith.constant 0 : i32
    %c0_i32_1 = arith.constant 0 : i32
    return %c0_i32, %c0_i32_0 : i32, i32
  }
  func.func @transform_14(%arg0: i32) -> (i32, i32) {
    %c0_i32 = arith.constant 0 : i32
    %c0_i32_0 = arith.constant 0 : i32
    %c0_i32_1 = arith.constant 0 : i32
    return %c0_i32, %c0_i32_0 : i32, i32
  }
  func.func @transform_15(%arg0: i32) -> (i32, i32) {
    %c0_i32 = arith.constant 0 : i32
    %c0_i32_0 = arith.constant 0 : i32
    %c0_i32_1 = arith.constant 0 : i32
    return %c0_i32, %c0_i32_0 : i32, i32
  }
  func.func @transform_16(%arg0: i32) -> (i32, i32) {
    %c0_i32 = arith.constant 0 : i32
    %c0_i32_0 = arith.constant 0 : i32
    %c0_i32_1 = arith.constant 0 : i32
    return %c0_i32, %c0_i32_0 : i32, i32
  }
  func.func @transform_17(%arg0: i32) -> (i32, i32) {
    %c0_i32 = arith.constant 0 : i32
    %c0_i32_0 = arith.constant 0 : i32
    %c0_i32_1 = arith.constant 0 : i32
    return %c0_i32, %c0_i32_0 : i32, i32
  }
  func.func @transform_18(%arg0: i32) -> (i32, i32) {
    %c0_i32 = arith.constant 0 : i32
    %c0_i32_0 = arith.constant 0 : i32
    %c0_i32_1 = arith.constant 0 : i32
    return %c0_i32, %c0_i32_0 : i32, i32
  }
  func.func @transform_19(%arg0: i32) -> (i32, i32) {
    %c0_i32 = arith.constant 0 : i32
    %c0_i32_0 = arith.constant 0 : i32
    %c0_i32_1 = arith.constant 0 : i32
    return %c0_i32, %c0_i32_0 : i32, i32
  }
  func.func @transform_20(%arg0: i32) -> (i32, i32) {
    %c0_i32 = arith.constant 0 : i32
    %c0_i32_0 = arith.constant 0 : i32
    %c0_i32_1 = arith.constant 0 : i32
    return %c0_i32, %c0_i32_0 : i32, i32
  }
  func.func @transform_21(%arg0: i32) -> (i32, i32) {
    %c0_i32 = arith.constant 0 : i32
    %c0_i32_0 = arith.constant 0 : i32
    %c0_i32_1 = arith.constant 0 : i32
    return %c0_i32, %c0_i32_0 : i32, i32
  }
  func.func @transform_22(%arg0: i32) -> (i32, i32) {
    %c0_i32 = arith.constant 0 : i32
    %c0_i32_0 = arith.constant 0 : i32
    %c0_i32_1 = arith.constant 0 : i32
    return %c0_i32, %c0_i32_0 : i32, i32
  }
  func.func @transform_23(%arg0: i32) -> (i32, i32) {
    %c0_i32 = arith.constant 0 : i32
    %c0_i32_0 = arith.constant 0 : i32
    %c0_i32_1 = arith.constant 0 : i32
    return %c0_i32, %c0_i32_0 : i32, i32
  }
  func.func @transform_24(%arg0: i32) -> (i32, i32) {
    %c0_i32 = arith.constant 0 : i32
    %c0_i32_0 = arith.constant 0 : i32
    %c0_i32_1 = arith.constant 0 : i32
    return %c0_i32, %c0_i32_0 : i32, i32
  }
  func.func @transform_25(%arg0: i32) -> (i32, i32) {
    %c0_i32 = arith.constant 0 : i32
    %c0_i32_0 = arith.constant 0 : i32
    %c0_i32_1 = arith.constant 0 : i32
    return %c0_i32, %c0_i32_0 : i32, i32
  }
  func.func @transform_26(%arg0: i32) -> (i32, i32) {
    %c0_i32 = arith.constant 0 : i32
    %c0_i32_0 = arith.constant 0 : i32
    %c0_i32_1 = arith.constant 0 : i32
    return %c0_i32, %c0_i32_0 : i32, i32
  }
  func.func @transform_27(%arg0: i32) -> (i32, i32) {
    %c0_i32 = arith.constant 0 : i32
    %c0_i32_0 = arith.constant 0 : i32
    %c0_i32_1 = arith.constant 0 : i32
    return %c0_i32, %c0_i32_0 : i32, i32
  }
  func.func @transform_28(%arg0: i32) -> (i32, i32) {
    %c0_i32 = arith.constant 0 : i32
    %c0_i32_0 = arith.constant 0 : i32
    %c0_i32_1 = arith.constant 0 : i32
    return %c0_i32, %c0_i32_0 : i32, i32
  }
  func.func @transform_29(%arg0: i32) -> (i32, i32) {
    %c0_i32 = arith.constant 0 : i32
    %c0_i32_0 = arith.constant 0 : i32
    %c0_i32_1 = arith.constant 0 : i32
    return %c0_i32, %c0_i32_0 : i32, i32
  }
  func.func @transform_30(%arg0: i32) -> (i32, i32) {
    %c0_i32 = arith.constant 0 : i32
    %c0_i32_0 = arith.constant 0 : i32
    %c0_i32_1 = arith.constant 0 : i32
    return %c0_i32, %c0_i32_0 : i32, i32
  }
  func.func @transform_31(%arg0: i32) -> (i32, i32) {
    %c0_i32 = arith.constant 0 : i32
    %c0_i32_0 = arith.constant 0 : i32
    %c0_i32_1 = arith.constant 0 : i32
    return %c0_i32, %c0_i32_0 : i32, i32
  }
  func.func @transform_32(%arg0: i32) -> (i32, i32) {
    %c0_i32 = arith.constant 0 : i32
    %c0_i32_0 = arith.constant 0 : i32
    %c0_i32_1 = arith.constant 0 : i32
    return %c0_i32, %c0_i32_0 : i32, i32
  }
  func.func @transform_33(%arg0: i32) -> (i32, i32) {
    %c0_i32 = arith.constant 0 : i32
    %c0_i32_0 = arith.constant 0 : i32
    %c0_i32_1 = arith.constant 0 : i32
    return %c0_i32, %c0_i32_0 : i32, i32
  }
  func.func @transform_34(%arg0: i32) -> (i32, i32) {
    %c0_i32 = arith.constant 0 : i32
    %c0_i32_0 = arith.constant 0 : i32
    %c0_i32_1 = arith.constant 0 : i32
    return %c0_i32, %c0_i32_0 : i32, i32
  }
  func.func @transform_35(%arg0: i32) -> (i32, i32, i32) {
    %c0_i32 = arith.constant 0 : i32
    %c0_i32_0 = arith.constant 0 : i32
    %c0_i32_1 = arith.constant 0 : i32
    return %arg0, %c0_i32, %c0_i32_0 : i32, i32, i32
  }
}

</mosaic_0001>

<llo_original>
// kernel: net_forward.1
$region0: #{net_forward.1}
  #allocation0 [shape = 'u32[]', space=smem, size = 0x4, offset = 0x4, fixed_abs, tag = 'smem constant byte address 0x4 - core index']
  #allocation1 [shape = 'u32[144,128]{1,0:T(1,128)}', space=vmem, size = 0x12000, scoped, tag = 'internal scratch']
  #allocation2 [shape = 'f32[160,352]{1,0:T(8,128)}', space=vmem, size = 0x3c000, scoped, tag = 'scratch operand']
  #allocation3 [shape = 'f32[1,1]{1,0:T(1,128)S(1)}', space=vmem, size = 0x200, scoped, tag = 'scoped memory for net_forward.1']
  %s0 = inlined_call_operand.smem [shape: u32[36], index: -1, kind: input, shape index: {}]
  %s1 = sld [smem:[%s0]]
  %s2 = scalar_lea.smem %s0, 1
  %s3 = sld [smem:[%s2]]
  %s4 = scalar_lea.smem %s0, 2
  %s5 = sld [smem:[%s4]]
  %s6 = scalar_lea.smem %s0, 3
  %s7 = sld [smem:[%s6]]
  %s8 = scalar_lea.smem %s0, 4
  %s9 = sld [smem:[%s8]]
  %s10 = scalar_lea.smem %s0, 5
  %s11 = sld [smem:[%s10]]
  %s12 = scalar_lea.smem %s0, 6
  %s13 = sld [smem:[%s12]]
  %s14 = scalar_lea.smem %s0, 7
  %s15 = sld [smem:[%s14]]
  %s16 = scalar_lea.smem %s0, 8
  %s17 = sld [smem:[%s16]]
  %s18 = scalar_lea.smem %s0, 9
  %s19 = sld [smem:[%s18]]
  %s20 = scalar_lea.smem %s0, 10
  %s21 = sld [smem:[%s20]]
  %s22 = scalar_lea.smem %s0, 11
  %s23 = sld [smem:[%s22]]
  %s24 = scalar_lea.smem %s0, 12
  %s25 = sld [smem:[%s24]]
  %s26 = scalar_lea.smem %s0, 13
  %s27 = sld [smem:[%s26]]
  %s28 = scalar_lea.smem %s0, 14
  %s29 = sld [smem:[%s28]]
  %s30 = scalar_lea.smem %s0, 15
  %s31 = sld [smem:[%s30]]
  %s32 = scalar_lea.smem %s0, 16
  %s33 = sld [smem:[%s32]]
  %s34 = scalar_lea.smem %s0, 17
  %s35 = sld [smem:[%s34]]
  %s36 = scalar_lea.smem %s0, 18
  %s37 = sld [smem:[%s36]]
  %s38 = scalar_lea.smem %s0, 19
  %s39 = sld [smem:[%s38]]
  %s40 = scalar_lea.smem %s0, 20
  %s41 = sld [smem:[%s40]]
  %s42 = scalar_lea.smem %s0, 21
  %s43 = sld [smem:[%s42]]
  %s44 = scalar_lea.smem %s0, 22
  %s45 = sld [smem:[%s44]]
  %s46 = scalar_lea.smem %s0, 23
  %s47 = sld [smem:[%s46]]
  %s48 = scalar_lea.smem %s0, 24
  %s49 = sld [smem:[%s48]]
  %s50 = scalar_lea.smem %s0, 25
  %s51 = sld [smem:[%s50]]
  %s52 = scalar_lea.smem %s0, 26
  %s53 = sld [smem:[%s52]]
  %s54 = scalar_lea.smem %s0, 27
  %s55 = sld [smem:[%s54]]
  %s56 = scalar_lea.smem %s0, 28
  %s57 = sld [smem:[%s56]]
  %s58 = scalar_lea.smem %s0, 29
  %s59 = sld [smem:[%s58]]
  %s60 = scalar_lea.smem %s0, 30
  %s61 = sld [smem:[%s60]]
  %s62 = scalar_lea.smem %s0, 31
  %s63 = sld [smem:[%s62]]
  %s64 = scalar_lea.smem %s0, 32
  %s65 = sld [smem:[%s64]]
  %s66 = scalar_lea.smem %s0, 33
  %s67 = sld [smem:[%s66]]
  %s68 = scalar_lea.smem %s0, 34
  %s69 = sld [smem:[%s68]]
  %s70 = scalar_lea.smem %s0, 35
  %s71 = sld [smem:[%s70]]
  %s72 = sld [smem:[#allocation0]]
  $region173: #{net_forward.1} parent=0
    _
  %s74 = ssub.s32 1, %s72
  %s75 = scalar_select 0, %s74, %s72
  %v76 = vstv %s69
  %77 = vst [vmem:[#allocation3] sm:$0x1] %v76
  loop: start=0, step=1, limit=4
  $region2: #{net_forward.1} parent=0 // loop_pre_header
    _
  $region3: #{net_forward.1} parent=0 // loop_header
    %s79 = sphi 0, %s83
    %p80 = scmp.ge.s32.totalorder %s79, 4
    %s89 = sphi 0, %s91
    %s92 = sphi 0, %s89
    %s93 = sphi 0, %s92
    %s109 = sphi 0, %s93
    %s113 = sphi 0, %s113
    %s115 = sphi 0, %s113
    %s116 = sphi 0, %s115
    %s130 = sphi 0, %s116
    %s134 = sphi 0, %s134
    %s136 = sphi 0, %s134
    %s137 = sphi 0, %s136
    %s151 = sphi 0, %s137
    %s155 = sphi 0, %s155
    %s157 = sphi 0, %s155
    %s158 = sphi 0, %s157
    %s172 = sphi 0, %s158
    %s176 = sphi 0, %s176
    %s178 = sphi 0, %s176
    %s179 = sphi 0, %s178
    %s193 = sphi 0, %s179
    %s197 = sphi 0, %s197
    %s199 = sphi 0, %s197
    %s200 = sphi 0, %s199
    %s214 = sphi 0, %s200
    %s218 = sphi 0, %s218
    %s220 = sphi 0, %s218
    %s221 = sphi 0, %s220
    %s235 = sphi 0, %s221
    %s239 = sphi 0, %s239
    %s241 = sphi 0, %s239
    %s242 = sphi 0, %s241
    %s256 = sphi 0, %s242
    %s260 = sphi 0, %s260
    %s262 = sphi 0, %s260
    %s263 = sphi 0, %s262
    %s277 = sphi 0, %s263
    %s281 = sphi 0, %s281
    %s283 = sphi 0, %s281
    %s284 = sphi 0, %s283
    %s298 = sphi 0, %s284
    %s302 = sphi 0, %s302
    %s304 = sphi 0, %s302
    %s305 = sphi 0, %s304
    %s319 = sphi 0, %s305
    %s323 = sphi 0, %s323
    %s325 = sphi 0, %s323
    %s326 = sphi 0, %s325
    %s340 = sphi 0, %s326
    %s344 = sphi 0, %s344
    %s346 = sphi 0, %s344
    %s347 = sphi 0, %s346
    %s361 = sphi 0, %s347
    %s365 = sphi 0, %s365
    %s367 = sphi 0, %s365
    %s368 = sphi 0, %s367
    %s382 = sphi 0, %s368
    %s386 = sphi 0, %s386
    %s388 = sphi 0, %s386
    %s389 = sphi 0, %s388
    %s403 = sphi 0, %s389
    %s407 = sphi 0, %s407
    %s409 = sphi 0, %s407
    %s410 = sphi 0, %s409
    %s424 = sphi 0, %s410
    %s428 = sphi 0, %s428
    %s430 = sphi 0, %s428
    %s431 = sphi 0, %s430
    %s445 = sphi 0, %s431
    %s449 = sphi 0, %s449
    %s451 = sphi 0, %s449
    %s452 = sphi 0, %s451
    %s466 = sphi 0, %s452
    %s470 = sphi 0, %s470
    %s472 = sphi 0, %s470
    %s473 = sphi 0, %s472
    %s487 = sphi 0, %s473
    %s491 = sphi 0, %s491
    %s493 = sphi 0, %s491
    %s494 = sphi 0, %s493
    %s508 = sphi 0, %s494
    %s512 = sphi 0, %s512
    %s514 = sphi 0, %s512
    %s515 = sphi 0, %s514
    %s529 = sphi 0, %s515
    %s533 = sphi 0, %s533
    %s535 = sphi 0, %s533
    %s536 = sphi 0, %s535
    %s550 = sphi 0, %s536
    %s554 = sphi 0, %s554
    %s556 = sphi 0, %s554
    %s557 = sphi 0, %s556
    %s571 = sphi 0, %s557
    %s575 = sphi 0, %s575
    %s577 = sphi 0, %s575
    %s578 = sphi 0, %s577
    %s592 = sphi 0, %s578
    %s596 = sphi 0, %s596
    %s598 = sphi 0, %s596
    %s599 = sphi 0, %s598
    %s613 = sphi 0, %s599
    %s617 = sphi 0, %s617
    %s619 = sphi 0, %s617
    %s620 = sphi 0, %s619
    %s634 = sphi 0, %s620
    %s638 = sphi 0, %s638
    %s640 = sphi 0, %s638
    %s641 = sphi 0, %s640
    %s655 = sphi 0, %s641
    %s659 = sphi 0, %s659
    %s661 = sphi 0, %s659
    %s662 = sphi 0, %s661
    %s676 = sphi 0, %s662
    %s680 = sphi 0, %s680
    %s682 = sphi 0, %s680
    %s683 = sphi 0, %s682
    %s697 = sphi 0, %s683
    %s701 = sphi 0, %s701
    %s703 = sphi 0, %s701
    %s704 = sphi 0, %s703
    %s718 = sphi 0, %s704
    %s722 = sphi 0, %s722
    %s724 = sphi 0, %s722
    %s725 = sphi 0, %s724
    %s739 = sphi 0, %s725
    %s743 = sphi 0, %s743
    %s745 = sphi 0, %s743
    %s746 = sphi 0, %s745
    %s760 = sphi 0, %s746
    %s764 = sphi 0, %s764
    %s766 = sphi 0, %s764
    %s767 = sphi 0, %s766
    %s781 = sphi 0, %s767
    %s785 = sphi 0, %s785
    %s787 = sphi 0, %s785
    %s788 = sphi 0, %s787
    %s802 = sphi 0, %s788
    %s806 = sphi 0, %s806
    %s808 = sphi 0, %s806
    %s809 = sphi 0, %s808
    %s823 = sphi 0, %s809
    %s829 = sphi 0, %s831
    %s832 = sphi 0, %s829
    %s833 = sphi 0, %s832
    %s849 = sphi 0, %s833
  $region4: #{net_forward.1} parent=0 // loop_header_branch
    %82 = sbr.rel (%p80) target = $region8
  $region5: #{net_forward.1} parent=0 // loop_body
    %s84 = ssub.s32 %s79, 1
    %s85 = ssub.s32 %s79, 2
    %s86 = sadd.s32 %s79, 1
    %s87 = ssub.s32 %s79, %s86
    %p88 = scmp.eq.s32.totalorder %s87, 0
    %s90 = sadd.s32 %s89, 1
    %s91 = scalar_select %p88, %s89, %s90
    %p94 = pneg %p88
    %p95 = scmp.eq.s32.totalorder %s79, 1
    %p96 = por %p94, %p95
    %p97 = scmp.ne.s32.totalorder %s89, %s92
    %p98 = scmp.eq.s32.totalorder %s79, 0
    %p99 = por %p97, %p98
    %p100 = scmp.ne.s32.totalorder %s89, %s92
    %p101 = scmp.eq.s32.totalorder %s84, 1
    %p102 = por %p100, %p101
    %p103 = scmp.ne.s32.totalorder %s92, %s93
    %p104 = scmp.eq.s32.totalorder %s84, 0
    %p105 = por %p103, %p104
    %p106 = scmp.ne.s32.totalorder %s92, %s93
    %p107 = scmp.eq.s32.totalorder %s85, 1
    %p108 = por %p106, %p107
    %p110 = scmp.ne.s32.totalorder %s93, %s109
    %p111 = scmp.eq.s32.totalorder %s85, 0
    %p112 = por %p110, %p111
    %s114 = sadd.s32 %s113, 1
    %p117 = scmp.eq.s32.totalorder %s79, 1
    %p118 = scmp.ne.s32.totalorder %s113, %s115
    %p119 = scmp.eq.s32.totalorder %s79, 0
    %p120 = por %p118, %p119
    %p121 = scmp.ne.s32.totalorder %s113, %s115
    %p122 = scmp.eq.s32.totalorder %s84, 1
    %p123 = por %p121, %p122
    %p124 = scmp.ne.s32.totalorder %s115, %s116
    %p125 = scmp.eq.s32.totalorder %s84, 0
    %p126 = por %p124, %p125
    %p127 = scmp.ne.s32.totalorder %s115, %s116
    %p128 = scmp.eq.s32.totalorder %s85, 1
    %p129 = por %p127, %p128
    %p131 = scmp.ne.s32.totalorder %s116, %s130
    %p132 = scmp.eq.s32.totalorder %s85, 0
    %p133 = por %p131, %p132
    %s135 = sadd.s32 %s134, 1
    %p138 = scmp.eq.s32.totalorder %s79, 1
    %p139 = scmp.ne.s32.totalorder %s134, %s136
    %p140 = scmp.eq.s32.totalorder %s79, 0
    %p141 = por %p139, %p140
    %p142 = scmp.ne.s32.totalorder %s134, %s136
    %p143 = scmp.eq.s32.totalorder %s84, 1
    %p144 = por %p142, %p143
    %p145 = scmp.ne.s32.totalorder %s136, %s137
    %p146 = scmp.eq.s32.totalorder %s84, 0
    %p147 = por %p145, %p146
    %p148 = scmp.ne.s32.totalorder %s136, %s137
    %p149 = scmp.eq.s32.totalorder %s85, 1
    %p150 = por %p148, %p149
    %p152 = scmp.ne.s32.totalorder %s137, %s151
    %p153 = scmp.eq.s32.totalorder %s85, 0
    %p154 = por %p152, %p153
    %s156 = sadd.s32 %s155, 1
    %p159 = scmp.eq.s32.totalorder %s79, 1
    %p160 = scmp.ne.s32.totalorder %s155, %s157
    %p161 = scmp.eq.s32.totalorder %s79, 0
    %p162 = por %p160, %p161
    %p163 = scmp.ne.s32.totalorder %s155, %s157
    %p164 = scmp.eq.s32.totalorder %s84, 1
    %p165 = por %p163, %p164
    %p166 = scmp.ne.s32.totalorder %s157, %s158
    %p167 = scmp.eq.s32.totalorder %s84, 0
    %p168 = por %p166, %p167
    %p169 = scmp.ne.s32.totalorder %s157, %s158
    %p170 = scmp.eq.s32.totalorder %s85, 1
    %p171 = por %p169, %p170
    %p173 = scmp.ne.s32.totalorder %s158, %s172
    %p174 = scmp.eq.s32.totalorder %s85, 0
    %p175 = por %p173, %p174
    %s177 = sadd.s32 %s176, 1
    %p180 = scmp.eq.s32.totalorder %s79, 1
    %p181 = scmp.ne.s32.totalorder %s176, %s178
    %p182 = scmp.eq.s32.totalorder %s79, 0
    %p183 = por %p181, %p182
    %p184 = scmp.ne.s32.totalorder %s176, %s178
    %p185 = scmp.eq.s32.totalorder %s84, 1
    %p186 = por %p184, %p185
    %p187 = scmp.ne.s32.totalorder %s178, %s179
    %p188 = scmp.eq.s32.totalorder %s84, 0
    %p189 = por %p187, %p188
    %p190 = scmp.ne.s32.totalorder %s178, %s179
    %p191 = scmp.eq.s32.totalorder %s85, 1
    %p192 = por %p190, %p191
    %p194 = scmp.ne.s32.totalorder %s179, %s193
    %p195 = scmp.eq.s32.totalorder %s85, 0
    %p196 = por %p194, %p195
    %s198 = sadd.s32 %s197, 1
    %p201 = scmp.eq.s32.totalorder %s79, 1
    %p202 = scmp.ne.s32.totalorder %s197, %s199
    %p203 = scmp.eq.s32.totalorder %s79, 0
    %p204 = por %p202, %p203
    %p205 = scmp.ne.s32.totalorder %s197, %s199
    %p206 = scmp.eq.s32.totalorder %s84, 1
    %p207 = por %p205, %p206
    %p208 = scmp.ne.s32.totalorder %s199, %s200
    %p209 = scmp.eq.s32.totalorder %s84, 0
    %p210 = por %p208, %p209
    %p211 = scmp.ne.s32.totalorder %s199, %s200
    %p212 = scmp.eq.s32.totalorder %s85, 1
    %p213 = por %p211, %p212
    %p215 = scmp.ne.s32.totalorder %s200, %s214
    %p216 = scmp.eq.s32.totalorder %s85, 0
    %p217 = por %p215, %p216
    %s219 = sadd.s32 %s218, 1
    %p222 = scmp.eq.s32.totalorder %s79, 1
    %p223 = scmp.ne.s32.totalorder %s218, %s220
    %p224 = scmp.eq.s32.totalorder %s79, 0
    %p225 = por %p223, %p224
    %p226 = scmp.ne.s32.totalorder %s218, %s220
    %p227 = scmp.eq.s32.totalorder %s84, 1
    %p228 = por %p226, %p227
    %p229 = scmp.ne.s32.totalorder %s220, %s221
    %p230 = scmp.eq.s32.totalorder %s84, 0
    %p231 = por %p229, %p230
    %p232 = scmp.ne.s32.totalorder %s220, %s221
    %p233 = scmp.eq.s32.totalorder %s85, 1
    %p234 = por %p232, %p233
    %p236 = scmp.ne.s32.totalorder %s221, %s235
    %p237 = scmp.eq.s32.totalorder %s85, 0
    %p238 = por %p236, %p237
    %s240 = sadd.s32 %s239, 1
    %p243 = scmp.eq.s32.totalorder %s79, 1
    %p244 = scmp.ne.s32.totalorder %s239, %s241
    %p245 = scmp.eq.s32.totalorder %s79, 0
    %p246 = por %p244, %p245
    %p247 = scmp.ne.s32.totalorder %s239, %s241
    %p248 = scmp.eq.s32.totalorder %s84, 1
    %p249 = por %p247, %p248
    %p250 = scmp.ne.s32.totalorder %s241, %s242
    %p251 = scmp.eq.s32.totalorder %s84, 0
    %p252 = por %p250, %p251
    %p253 = scmp.ne.s32.totalorder %s241, %s242
    %p254 = scmp.eq.s32.totalorder %s85, 1
    %p255 = por %p253, %p254
    %p257 = scmp.ne.s32.totalorder %s242, %s256
    %p258 = scmp.eq.s32.totalorder %s85, 0
    %p259 = por %p257, %p258
    %s261 = sadd.s32 %s260, 1
    %p264 = scmp.eq.s32.totalorder %s79, 1
    %p265 = scmp.ne.s32.totalorder %s260, %s262
    %p266 = scmp.eq.s32.totalorder %s79, 0
    %p267 = por %p265, %p266
    %p268 = scmp.ne.s32.totalorder %s260, %s262
    %p269 = scmp.eq.s32.totalorder %s84, 1
    %p270 = por %p268, %p269
    %p271 = scmp.ne.s32.totalorder %s262, %s263
    %p272 = scmp.eq.s32.totalorder %s84, 0
    %p273 = por %p271, %p272
    %p274 = scmp.ne.s32.totalorder %s262, %s263
    %p275 = scmp.eq.s32.totalorder %s85, 1
    %p276 = por %p274, %p275
    %p278 = scmp.ne.s32.totalorder %s263, %s277
    %p279 = scmp.eq.s32.totalorder %s85, 0
    %p280 = por %p278, %p279
    %s282 = sadd.s32 %s281, 1
    %p285 = scmp.eq.s32.totalorder %s79, 1
    %p286 = scmp.ne.s32.totalorder %s281, %s283
    %p287 = scmp.eq.s32.totalorder %s79, 0
    %p288 = por %p286, %p287
    %p289 = scmp.ne.s32.totalorder %s281, %s283
    %p290 = scmp.eq.s32.totalorder %s84, 1
    %p291 = por %p289, %p290
    %p292 = scmp.ne.s32.totalorder %s283, %s284
    %p293 = scmp.eq.s32.totalorder %s84, 0
    %p294 = por %p292, %p293
    %p295 = scmp.ne.s32.totalorder %s283, %s284
    %p296 = scmp.eq.s32.totalorder %s85, 1
    %p297 = por %p295, %p296
    %p299 = scmp.ne.s32.totalorder %s284, %s298
    %p300 = scmp.eq.s32.totalorder %s85, 0
    %p301 = por %p299, %p300
    %s303 = sadd.s32 %s302, 1
    %p306 = scmp.eq.s32.totalorder %s79, 1
    %p307 = scmp.ne.s32.totalorder %s302, %s304
    %p308 = scmp.eq.s32.totalorder %s79, 0
    %p309 = por %p307, %p308
    %p310 = scmp.ne.s32.totalorder %s302, %s304
    %p311 = scmp.eq.s32.totalorder %s84, 1
    %p312 = por %p310, %p311
    %p313 = scmp.ne.s32.totalorder %s304, %s305
    %p314 = scmp.eq.s32.totalorder %s84, 0
    %p315 = por %p313, %p314
    %p316 = scmp.ne.s32.totalorder %s304, %s305
    %p317 = scmp.eq.s32.totalorder %s85, 1
    %p318 = por %p316, %p317
    %p320 = scmp.ne.s32.totalorder %s305, %s319
    %p321 = scmp.eq.s32.totalorder %s85, 0
    %p322 = por %p320, %p321
    %s324 = sadd.s32 %s323, 1
    %p327 = scmp.eq.s32.totalorder %s79, 1
    %p328 = scmp.ne.s32.totalorder %s323, %s325
    %p329 = scmp.eq.s32.totalorder %s79, 0
    %p330 = por %p328, %p329
    %p331 = scmp.ne.s32.totalorder %s323, %s325
    %p332 = scmp.eq.s32.totalorder %s84, 1
    %p333 = por %p331, %p332
    %p334 = scmp.ne.s32.totalorder %s325, %s326
    %p335 = scmp.eq.s32.totalorder %s84, 0
    %p336 = por %p334, %p335
    %p337 = scmp.ne.s32.totalorder %s325, %s326
    %p338 = scmp.eq.s32.totalorder %s85, 1
    %p339 = por %p337, %p338
    %p341 = scmp.ne.s32.totalorder %s326, %s340
    %p342 = scmp.eq.s32.totalorder %s85, 0
    %p343 = por %p341, %p342
    %s345 = sadd.s32 %s344, 1
    %p348 = scmp.eq.s32.totalorder %s79, 1
    %p349 = scmp.ne.s32.totalorder %s344, %s346
    %p350 = scmp.eq.s32.totalorder %s79, 0
    %p351 = por %p349, %p350
    %p352 = scmp.ne.s32.totalorder %s344, %s346
    %p353 = scmp.eq.s32.totalorder %s84, 1
    %p354 = por %p352, %p353
    %p355 = scmp.ne.s32.totalorder %s346, %s347
    %p356 = scmp.eq.s32.totalorder %s84, 0
    %p357 = por %p355, %p356
    %p358 = scmp.ne.s32.totalorder %s346, %s347
    %p359 = scmp.eq.s32.totalorder %s85, 1
    %p360 = por %p358, %p359
    %p362 = scmp.ne.s32.totalorder %s347, %s361
    %p363 = scmp.eq.s32.totalorder %s85, 0
    %p364 = por %p362, %p363
    %s366 = sadd.s32 %s365, 1
    %p369 = scmp.eq.s32.totalorder %s79, 1
    %p370 = scmp.ne.s32.totalorder %s365, %s367
    %p371 = scmp.eq.s32.totalorder %s79, 0
    %p372 = por %p370, %p371
    %p373 = scmp.ne.s32.totalorder %s365, %s367
    %p374 = scmp.eq.s32.totalorder %s84, 1
    %p375 = por %p373, %p374
    %p376 = scmp.ne.s32.totalorder %s367, %s368
    %p377 = scmp.eq.s32.totalorder %s84, 0
    %p378 = por %p376, %p377
    %p379 = scmp.ne.s32.totalorder %s367, %s368
    %p380 = scmp.eq.s32.totalorder %s85, 1
    %p381 = por %p379, %p380
    %p383 = scmp.ne.s32.totalorder %s368, %s382
    %p384 = scmp.eq.s32.totalorder %s85, 0
    %p385 = por %p383, %p384
    %s387 = sadd.s32 %s386, 1
    %p390 = scmp.eq.s32.totalorder %s79, 1
    %p391 = scmp.ne.s32.totalorder %s386, %s388
    %p392 = scmp.eq.s32.totalorder %s79, 0
    %p393 = por %p391, %p392
    %p394 = scmp.ne.s32.totalorder %s386, %s388
    %p395 = scmp.eq.s32.totalorder %s84, 1
    %p396 = por %p394, %p395
    %p397 = scmp.ne.s32.totalorder %s388, %s389
    %p398 = scmp.eq.s32.totalorder %s84, 0
    %p399 = por %p397, %p398
    %p400 = scmp.ne.s32.totalorder %s388, %s389
    %p401 = scmp.eq.s32.totalorder %s85, 1
    %p402 = por %p400, %p401
    %p404 = scmp.ne.s32.totalorder %s389, %s403
    %p405 = scmp.eq.s32.totalorder %s85, 0
    %p406 = por %p404, %p405
    %s408 = sadd.s32 %s407, 1
    %p411 = scmp.eq.s32.totalorder %s79, 1
    %p412 = scmp.ne.s32.totalorder %s407, %s409
    %p413 = scmp.eq.s32.totalorder %s79, 0
    %p414 = por %p412, %p413
    %p415 = scmp.ne.s32.totalorder %s407, %s409
    %p416 = scmp.eq.s32.totalorder %s84, 1
    %p417 = por %p415, %p416
    %p418 = scmp.ne.s32.totalorder %s409, %s410
    %p419 = scmp.eq.s32.totalorder %s84, 0
    %p420 = por %p418, %p419
    %p421 = scmp.ne.s32.totalorder %s409, %s410
    %p422 = scmp.eq.s32.totalorder %s85, 1
    %p423 = por %p421, %p422
    %p425 = scmp.ne.s32.totalorder %s410, %s424
    %p426 = scmp.eq.s32.totalorder %s85, 0
    %p427 = por %p425, %p426
    %s429 = sadd.s32 %s428, 1
    %p432 = scmp.eq.s32.totalorder %s79, 1
    %p433 = scmp.ne.s32.totalorder %s428, %s430
    %p434 = scmp.eq.s32.totalorder %s79, 0
    %p435 = por %p433, %p434
    %p436 = scmp.ne.s32.totalorder %s428, %s430
    %p437 = scmp.eq.s32.totalorder %s84, 1
    %p438 = por %p436, %p437
    %p439 = scmp.ne.s32.totalorder %s430, %s431
    %p440 = scmp.eq.s32.totalorder %s84, 0
    %p441 = por %p439, %p440
    %p442 = scmp.ne.s32.totalorder %s430, %s431
    %p443 = scmp.eq.s32.totalorder %s85, 1
    %p444 = por %p442, %p443
    %p446 = scmp.ne.s32.totalorder %s431, %s445
    %p447 = scmp.eq.s32.totalorder %s85, 0
    %p448 = por %p446, %p447
    %s450 = sadd.s32 %s449, 1
    %p453 = scmp.eq.s32.totalorder %s79, 1
    %p454 = scmp.ne.s32.totalorder %s449, %s451
    %p455 = scmp.eq.s32.totalorder %s79, 0
    %p456 = por %p454, %p455
    %p457 = scmp.ne.s32.totalorder %s449, %s451
    %p458 = scmp.eq.s32.totalorder %s84, 1
    %p459 = por %p457, %p458
    %p460 = scmp.ne.s32.totalorder %s451, %s452
    %p461 = scmp.eq.s32.totalorder %s84, 0
    %p462 = por %p460, %p461
    %p463 = scmp.ne.s32.totalorder %s451, %s452
    %p464 = scmp.eq.s32.totalorder %s85, 1
    %p465 = por %p463, %p464
    %p467 = scmp.ne.s32.totalorder %s452, %s466
    %p468 = scmp.eq.s32.totalorder %s85, 0
    %p469 = por %p467, %p468
    %s471 = sadd.s32 %s470, 1
    %p474 = scmp.eq.s32.totalorder %s79, 1
    %p475 = scmp.ne.s32.totalorder %s470, %s472
    %p476 = scmp.eq.s32.totalorder %s79, 0
    %p477 = por %p475, %p476
    %p478 = scmp.ne.s32.totalorder %s470, %s472
    %p479 = scmp.eq.s32.totalorder %s84, 1
    %p480 = por %p478, %p479
    %p481 = scmp.ne.s32.totalorder %s472, %s473
    %p482 = scmp.eq.s32.totalorder %s84, 0
    %p483 = por %p481, %p482
    %p484 = scmp.ne.s32.totalorder %s472, %s473
    %p485 = scmp.eq.s32.totalorder %s85, 1
    %p486 = por %p484, %p485
    %p488 = scmp.ne.s32.totalorder %s473, %s487
    %p489 = scmp.eq.s32.totalorder %s85, 0
    %p490 = por %p488, %p489
    %s492 = sadd.s32 %s491, 1
    %p495 = scmp.eq.s32.totalorder %s79, 1
    %p496 = scmp.ne.s32.totalorder %s491, %s493
    %p497 = scmp.eq.s32.totalorder %s79, 0
    %p498 = por %p496, %p497
    %p499 = scmp.ne.s32.totalorder %s491, %s493
    %p500 = scmp.eq.s32.totalorder %s84, 1
    %p501 = por %p499, %p500
    %p502 = scmp.ne.s32.totalorder %s493, %s494
    %p503 = scmp.eq.s32.totalorder %s84, 0
    %p504 = por %p502, %p503
    %p505 = scmp.ne.s32.totalorder %s493, %s494
    %p506 = scmp.eq.s32.totalorder %s85, 1
    %p507 = por %p505, %p506
    %p509 = scmp.ne.s32.totalorder %s494, %s508
    %p510 = scmp.eq.s32.totalorder %s85, 0
    %p511 = por %p509, %p510
    %s513 = sadd.s32 %s512, 1
    %p516 = scmp.eq.s32.totalorder %s79, 1
    %p517 = scmp.ne.s32.totalorder %s512, %s514
    %p518 = scmp.eq.s32.totalorder %s79, 0
    %p519 = por %p517, %p518
    %p520 = scmp.ne.s32.totalorder %s512, %s514
    %p521 = scmp.eq.s32.totalorder %s84, 1
    %p522 = por %p520, %p521
    %p523 = scmp.ne.s32.totalorder %s514, %s515
    %p524 = scmp.eq.s32.totalorder %s84, 0
    %p525 = por %p523, %p524
    %p526 = scmp.ne.s32.totalorder %s514, %s515
    %p527 = scmp.eq.s32.totalorder %s85, 1
    %p528 = por %p526, %p527
    %p530 = scmp.ne.s32.totalorder %s515, %s529
    %p531 = scmp.eq.s32.totalorder %s85, 0
    %p532 = por %p530, %p531
    %s534 = sadd.s32 %s533, 1
    %p537 = scmp.eq.s32.totalorder %s79, 1
    %p538 = scmp.ne.s32.totalorder %s533, %s535
    %p539 = scmp.eq.s32.totalorder %s79, 0
    %p540 = por %p538, %p539
    %p541 = scmp.ne.s32.totalorder %s533, %s535
    %p542 = scmp.eq.s32.totalorder %s84, 1
    %p543 = por %p541, %p542
    %p544 = scmp.ne.s32.totalorder %s535, %s536
    %p545 = scmp.eq.s32.totalorder %s84, 0
    %p546 = por %p544, %p545
    %p547 = scmp.ne.s32.totalorder %s535, %s536
    %p548 = scmp.eq.s32.totalorder %s85, 1
    %p549 = por %p547, %p548
    %p551 = scmp.ne.s32.totalorder %s536, %s550
    %p552 = scmp.eq.s32.totalorder %s85, 0
    %p553 = por %p551, %p552
    %s555 = sadd.s32 %s554, 1
    %p558 = scmp.eq.s32.totalorder %s79, 1
    %p559 = scmp.ne.s32.totalorder %s554, %s556
    %p560 = scmp.eq.s32.totalorder %s79, 0
    %p561 = por %p559, %p560
    %p562 = scmp.ne.s32.totalorder %s554, %s556
    %p563 = scmp.eq.s32.totalorder %s84, 1
    %p564 = por %p562, %p563
    %p565 = scmp.ne.s32.totalorder %s556, %s557
    %p566 = scmp.eq.s32.totalorder %s84, 0
    %p567 = por %p565, %p566
    %p568 = scmp.ne.s32.totalorder %s556, %s557
    %p569 = scmp.eq.s32.totalorder %s85, 1
    %p570 = por %p568, %p569
    %p572 = scmp.ne.s32.totalorder %s557, %s571
    %p573 = scmp.eq.s32.totalorder %s85, 0
    %p574 = por %p572, %p573
    %s576 = sadd.s32 %s575, 1
    %p579 = scmp.eq.s32.totalorder %s79, 1
    %p580 = scmp.ne.s32.totalorder %s575, %s577
    %p581 = scmp.eq.s32.totalorder %s79, 0
    %p582 = por %p580, %p581
    %p583 = scmp.ne.s32.totalorder %s575, %s577
    %p584 = scmp.eq.s32.totalorder %s84, 1
    %p585 = por %p583, %p584
    %p586 = scmp.ne.s32.totalorder %s577, %s578
    %p587 = scmp.eq.s32.totalorder %s84, 0
    %p588 = por %p586, %p587
    %p589 = scmp.ne.s32.totalorder %s577, %s578
    %p590 = scmp.eq.s32.totalorder %s85, 1
    %p591 = por %p589, %p590
    %p593 = scmp.ne.s32.totalorder %s578, %s592
    %p594 = scmp.eq.s32.totalorder %s85, 0
    %p595 = por %p593, %p594
    %s597 = sadd.s32 %s596, 1
    %p600 = scmp.eq.s32.totalorder %s79, 1
    %p601 = scmp.ne.s32.totalorder %s596, %s598
    %p602 = scmp.eq.s32.totalorder %s79, 0
    %p603 = por %p601, %p602
    %p604 = scmp.ne.s32.totalorder %s596, %s598
    %p605 = scmp.eq.s32.totalorder %s84, 1
    %p606 = por %p604, %p605
    %p607 = scmp.ne.s32.totalorder %s598, %s599
    %p608 = scmp.eq.s32.totalorder %s84, 0
    %p609 = por %p607, %p608
    %p610 = scmp.ne.s32.totalorder %s598, %s599
    %p611 = scmp.eq.s32.totalorder %s85, 1
    %p612 = por %p610, %p611
    %p614 = scmp.ne.s32.totalorder %s599, %s613
    %p615 = scmp.eq.s32.totalorder %s85, 0
    %p616 = por %p614, %p615
    %s618 = sadd.s32 %s617, 1
    %p621 = scmp.eq.s32.totalorder %s79, 1
    %p622 = scmp.ne.s32.totalorder %s617, %s619
    %p623 = scmp.eq.s32.totalorder %s79, 0
    %p624 = por %p622, %p623
    %p625 = scmp.ne.s32.totalorder %s617, %s619
    %p626 = scmp.eq.s32.totalorder %s84, 1
    %p627 = por %p625, %p626
    %p628 = scmp.ne.s32.totalorder %s619, %s620
    %p629 = scmp.eq.s32.totalorder %s84, 0
    %p630 = por %p628, %p629
    %p631 = scmp.ne.s32.totalorder %s619, %s620
    %p632 = scmp.eq.s32.totalorder %s85, 1
    %p633 = por %p631, %p632
    %p635 = scmp.ne.s32.totalorder %s620, %s634
    %p636 = scmp.eq.s32.totalorder %s85, 0
    %p637 = por %p635, %p636
    %s639 = sadd.s32 %s638, 1
    %p642 = scmp.eq.s32.totalorder %s79, 1
    %p643 = scmp.ne.s32.totalorder %s638, %s640
    %p644 = scmp.eq.s32.totalorder %s79, 0
    %p645 = por %p643, %p644
    %p646 = scmp.ne.s32.totalorder %s638, %s640
    %p647 = scmp.eq.s32.totalorder %s84, 1
    %p648 = por %p646, %p647
    %p649 = scmp.ne.s32.totalorder %s640, %s641
    %p650 = scmp.eq.s32.totalorder %s84, 0
    %p651 = por %p649, %p650
    %p652 = scmp.ne.s32.totalorder %s640, %s641
    %p653 = scmp.eq.s32.totalorder %s85, 1
    %p654 = por %p652, %p653
    %p656 = scmp.ne.s32.totalorder %s641, %s655
    %p657 = scmp.eq.s32.totalorder %s85, 0
    %p658 = por %p656, %p657
    %s660 = sadd.s32 %s659, 1
    %p663 = scmp.eq.s32.totalorder %s79, 1
    %p664 = scmp.ne.s32.totalorder %s659, %s661
    %p665 = scmp.eq.s32.totalorder %s79, 0
    %p666 = por %p664, %p665
    %p667 = scmp.ne.s32.totalorder %s659, %s661
    %p668 = scmp.eq.s32.totalorder %s84, 1
    %p669 = por %p667, %p668
    %p670 = scmp.ne.s32.totalorder %s661, %s662
    %p671 = scmp.eq.s32.totalorder %s84, 0
    %p672 = por %p670, %p671
    %p673 = scmp.ne.s32.totalorder %s661, %s662
    %p674 = scmp.eq.s32.totalorder %s85, 1
    %p675 = por %p673, %p674
    %p677 = scmp.ne.s32.totalorder %s662, %s676
    %p678 = scmp.eq.s32.totalorder %s85, 0
    %p679 = por %p677, %p678
    %s681 = sadd.s32 %s680, 1
    %p684 = scmp.eq.s32.totalorder %s79, 1
    %p685 = scmp.ne.s32.totalorder %s680, %s682
    %p686 = scmp.eq.s32.totalorder %s79, 0
    %p687 = por %p685, %p686
    %p688 = scmp.ne.s32.totalorder %s680, %s682
    %p689 = scmp.eq.s32.totalorder %s84, 1
    %p690 = por %p688, %p689
    %p691 = scmp.ne.s32.totalorder %s682, %s683
    %p692 = scmp.eq.s32.totalorder %s84, 0
    %p693 = por %p691, %p692
    %p694 = scmp.ne.s32.totalorder %s682, %s683
    %p695 = scmp.eq.s32.totalorder %s85, 1
    %p696 = por %p694, %p695
    %p698 = scmp.ne.s32.totalorder %s683, %s697
    %p699 = scmp.eq.s32.totalorder %s85, 0
    %p700 = por %p698, %p699
    %s702 = sadd.s32 %s701, 1
    %p705 = scmp.eq.s32.totalorder %s79, 1
    %p706 = scmp.ne.s32.totalorder %s701, %s703
    %p707 = scmp.eq.s32.totalorder %s79, 0
    %p708 = por %p706, %p707
    %p709 = scmp.ne.s32.totalorder %s701, %s703
    %p710 = scmp.eq.s32.totalorder %s84, 1
    %p711 = por %p709, %p710
    %p712 = scmp.ne.s32.totalorder %s703, %s704
    %p713 = scmp.eq.s32.totalorder %s84, 0
    %p714 = por %p712, %p713
    %p715 = scmp.ne.s32.totalorder %s703, %s704
    %p716 = scmp.eq.s32.totalorder %s85, 1
    %p717 = por %p715, %p716
    %p719 = scmp.ne.s32.totalorder %s704, %s718
    %p720 = scmp.eq.s32.totalorder %s85, 0
    %p721 = por %p719, %p720
    %s723 = sadd.s32 %s722, 1
    %p726 = scmp.eq.s32.totalorder %s79, 1
    %p727 = scmp.ne.s32.totalorder %s722, %s724
    %p728 = scmp.eq.s32.totalorder %s79, 0
    %p729 = por %p727, %p728
    %p730 = scmp.ne.s32.totalorder %s722, %s724
    %p731 = scmp.eq.s32.totalorder %s84, 1
    %p732 = por %p730, %p731
    %p733 = scmp.ne.s32.totalorder %s724, %s725
    %p734 = scmp.eq.s32.totalorder %s84, 0
    %p735 = por %p733, %p734
    %p736 = scmp.ne.s32.totalorder %s724, %s725
    %p737 = scmp.eq.s32.totalorder %s85, 1
    %p738 = por %p736, %p737
    %p740 = scmp.ne.s32.totalorder %s725, %s739
    %p741 = scmp.eq.s32.totalorder %s85, 0
    %p742 = por %p740, %p741
    %s744 = sadd.s32 %s743, 1
    %p747 = scmp.eq.s32.totalorder %s79, 1
    %p748 = scmp.ne.s32.totalorder %s743, %s745
    %p749 = scmp.eq.s32.totalorder %s79, 0
    %p750 = por %p748, %p749
    %p751 = scmp.ne.s32.totalorder %s743, %s745
    %p752 = scmp.eq.s32.totalorder %s84, 1
    %p753 = por %p751, %p752
    %p754 = scmp.ne.s32.totalorder %s745, %s746
    %p755 = scmp.eq.s32.totalorder %s84, 0
    %p756 = por %p754, %p755
    %p757 = scmp.ne.s32.totalorder %s745, %s746
    %p758 = scmp.eq.s32.totalorder %s85, 1
    %p759 = por %p757, %p758
    %p761 = scmp.ne.s32.totalorder %s746, %s760
    %p762 = scmp.eq.s32.totalorder %s85, 0
    %p763 = por %p761, %p762
    %s765 = sadd.s32 %s764, 1
    %p768 = scmp.eq.s32.totalorder %s79, 1
    %p769 = scmp.ne.s32.totalorder %s764, %s766
    %p770 = scmp.eq.s32.totalorder %s79, 0
    %p771 = por %p769, %p770
    %p772 = scmp.ne.s32.totalorder %s764, %s766
    %p773 = scmp.eq.s32.totalorder %s84, 1
    %p774 = por %p772, %p773
    %p775 = scmp.ne.s32.totalorder %s766, %s767
    %p776 = scmp.eq.s32.totalorder %s84, 0
    %p777 = por %p775, %p776
    %p778 = scmp.ne.s32.totalorder %s766, %s767
    %p779 = scmp.eq.s32.totalorder %s85, 1
    %p780 = por %p778, %p779
    %p782 = scmp.ne.s32.totalorder %s767, %s781
    %p783 = scmp.eq.s32.totalorder %s85, 0
    %p784 = por %p782, %p783
    %s786 = sadd.s32 %s785, 1
    %p789 = scmp.eq.s32.totalorder %s79, 1
    %p790 = scmp.ne.s32.totalorder %s785, %s787
    %p791 = scmp.eq.s32.totalorder %s79, 0
    %p792 = por %p790, %p791
    %p793 = scmp.ne.s32.totalorder %s785, %s787
    %p794 = scmp.eq.s32.totalorder %s84, 1
    %p795 = por %p793, %p794
    %p796 = scmp.ne.s32.totalorder %s787, %s788
    %p797 = scmp.eq.s32.totalorder %s84, 0
    %p798 = por %p796, %p797
    %p799 = scmp.ne.s32.totalorder %s787, %s788
    %p800 = scmp.eq.s32.totalorder %s85, 1
    %p801 = por %p799, %p800
    %p803 = scmp.ne.s32.totalorder %s788, %s802
    %p804 = scmp.eq.s32.totalorder %s85, 0
    %p805 = por %p803, %p804
    %s807 = sadd.s32 %s806, 1
    %p810 = scmp.eq.s32.totalorder %s79, 1
    %p811 = scmp.ne.s32.totalorder %s806, %s808
    %p812 = scmp.eq.s32.totalorder %s79, 0
    %p813 = por %p811, %p812
    %p814 = scmp.ne.s32.totalorder %s806, %s808
    %p815 = scmp.eq.s32.totalorder %s84, 1
    %p816 = por %p814, %p815
    %p817 = scmp.ne.s32.totalorder %s808, %s809
    %p818 = scmp.eq.s32.totalorder %s84, 0
    %p819 = por %p817, %p818
    %p820 = scmp.ne.s32.totalorder %s808, %s809
    %p821 = scmp.eq.s32.totalorder %s85, 1
    %p822 = por %p820, %p821
    %p824 = scmp.ne.s32.totalorder %s809, %s823
    %p825 = scmp.eq.s32.totalorder %s85, 0
    %p826 = por %p824, %p825
    %s827 = ssub.s32 %s79, %s86
    %p828 = scmp.eq.s32.totalorder %s827, 0
    %s830 = sadd.s32 %s829, 1
    %s831 = scalar_select %p828, %s829, %s830
    %p834 = pneg %p828
    %p835 = scmp.eq.s32.totalorder %s79, 1
    %p836 = por %p834, %p835
    %p837 = scmp.ne.s32.totalorder %s829, %s832
    %p838 = scmp.eq.s32.totalorder %s79, 0
    %p839 = por %p837, %p838
    %p840 = scmp.ne.s32.totalorder %s829, %s832
    %p841 = scmp.eq.s32.totalorder %s84, 1
    %p842 = por %p840, %p841
    %p843 = scmp.ne.s32.totalorder %s832, %s833
    %p844 = scmp.eq.s32.totalorder %s84, 0
    %p845 = por %p843, %p844
    %p846 = scmp.ne.s32.totalorder %s832, %s833
    %p847 = scmp.eq.s32.totalorder %s85, 1
    %p848 = por %p846, %p847
    %p850 = scmp.ne.s32.totalorder %s833, %s849
    %p851 = scmp.eq.s32.totalorder %s85, 0
    %p852 = por %p850, %p851
    %p853 = scmp.le.s32.totalorder 1, %s79
    %p854 = scmp.lt.s32.totalorder %s79, 3
    %p855 = pnand %p853, %p854
    %p856 = pneg %p855
    // Predicated region
    $region9: #{net_forward.1} parent=5 // pred_check
      _
    $region10: #{net_forward.1} parent=5 // pred_check_branch
      %858 = sbr.rel (%p855) target = $region12
    $region11: #{net_forward.1} parent=5 // pred_region
      %s859 = ssub.s32 %s79, 1
      // Predicated region
      $region13: #{net_forward.1} parent=11 // pred_check
        %p860 = pneg %p126
      $region14: #{net_forward.1} parent=11 // pred_check_branch
        %862 = sbr.rel (%p860) target = $region16
      $region15: #{net_forward.1} parent=11 // pred_region
        _
      $region16: #{net_forward.1} parent=11 // pred_fallthru
        _
      // Predicated region
      $region17: #{net_forward.1} parent=11 // pred_check
        %p863 = pneg %p147
      $region18: #{net_forward.1} parent=11 // pred_check_branch
        %865 = sbr.rel (%p863) target = $region20
      $region19: #{net_forward.1} parent=11 // pred_region
        _
      $region20: #{net_forward.1} parent=11 // pred_fallthru
        _
      // Predicated region
      $region21: #{net_forward.1} parent=11 // pred_check
        %p866 = pneg %p168
      $region22: #{net_forward.1} parent=11 // pred_check_branch
        %868 = sbr.rel (%p866) target = $region24
      $region23: #{net_forward.1} parent=11 // pred_region
        _
      $region24: #{net_forward.1} parent=11 // pred_fallthru
        _
      // Predicated region
      $region25: #{net_forward.1} parent=11 // pred_check
        %p869 = pneg %p189
      $region26: #{net_forward.1} parent=11 // pred_check_branch
        %871 = sbr.rel (%p869) target = $region28
      $region27: #{net_forward.1} parent=11 // pred_region
        _
      $region28: #{net_forward.1} parent=11 // pred_fallthru
        _
      // Predicated region
      $region29: #{net_forward.1} parent=11 // pred_check
        %p872 = pneg %p210
      $region30: #{net_forward.1} parent=11 // pred_check_branch
        %874 = sbr.rel (%p872) target = $region32
      $region31: #{net_forward.1} parent=11 // pred_region
        _
      $region32: #{net_forward.1} parent=11 // pred_fallthru
        _
      // Predicated region
      $region33: #{net_forward.1} parent=11 // pred_check
        %p875 = pneg %p231
      $region34: #{net_forward.1} parent=11 // pred_check_branch
        %877 = sbr.rel (%p875) target = $region36
      $region35: #{net_forward.1} parent=11 // pred_region
        _
      $region36: #{net_forward.1} parent=11 // pred_fallthru
        _
      // Predicated region
      $region37: #{net_forward.1} parent=11 // pred_check
        %p878 = pneg %p252
      $region38: #{net_forward.1} parent=11 // pred_check_branch
        %880 = sbr.rel (%p878) target = $region40
      $region39: #{net_forward.1} parent=11 // pred_region
        _
      $region40: #{net_forward.1} parent=11 // pred_fallthru
        _
      // Predicated region
      $region41: #{net_forward.1} parent=11 // pred_check
        %p881 = pneg %p273
      $region42: #{net_forward.1} parent=11 // pred_check_branch
        %883 = sbr.rel (%p881) target = $region44
      $region43: #{net_forward.1} parent=11 // pred_region
        _
      $region44: #{net_forward.1} parent=11 // pred_fallthru
        _
      // Predicated region
      $region45: #{net_forward.1} parent=11 // pred_check
        %p884 = pneg %p294
      $region46: #{net_forward.1} parent=11 // pred_check_branch
        %886 = sbr.rel (%p884) target = $region48
      $region47: #{net_forward.1} parent=11 // pred_region
        _
      $region48: #{net_forward.1} parent=11 // pred_fallthru
        _
      // Predicated region
      $region49: #{net_forward.1} parent=11 // pred_check
        %p887 = pneg %p315
      $region50: #{net_forward.1} parent=11 // pred_check_branch
        %889 = sbr.rel (%p887) target = $region52
      $region51: #{net_forward.1} parent=11 // pred_region
        _
      $region52: #{net_forward.1} parent=11 // pred_fallthru
        _
      // Predicated region
      $region53: #{net_forward.1} parent=11 // pred_check
        %p890 = pneg %p336
      $region54: #{net_forward.1} parent=11 // pred_check_branch
        %892 = sbr.rel (%p890) target = $region56
      $region55: #{net_forward.1} parent=11 // pred_region
        _
      $region56: #{net_forward.1} parent=11 // pred_fallthru
        _
      // Predicated region
      $region57: #{net_forward.1} parent=11 // pred_check
        %p893 = pneg %p357
      $region58: #{net_forward.1} parent=11 // pred_check_branch
        %895 = sbr.rel (%p893) target = $region60
      $region59: #{net_forward.1} parent=11 // pred_region
        _
      $region60: #{net_forward.1} parent=11 // pred_fallthru
        _
      // Predicated region
      $region61: #{net_forward.1} parent=11 // pred_check
        %p896 = pneg %p378
      $region62: #{net_forward.1} parent=11 // pred_check_branch
        %898 = sbr.rel (%p896) target = $region64
      $region63: #{net_forward.1} parent=11 // pred_region
        _
      $region64: #{net_forward.1} parent=11 // pred_fallthru
        _
      // Predicated region
      $region65: #{net_forward.1} parent=11 // pred_check
        %p899 = pneg %p399
      $region66: #{net_forward.1} parent=11 // pred_check_branch
        %901 = sbr.rel (%p899) target = $region68
      $region67: #{net_forward.1} parent=11 // pred_region
        _
      $region68: #{net_forward.1} parent=11 // pred_fallthru
        _
      // Predicated region
      $region69: #{net_forward.1} parent=11 // pred_check
        %p902 = pneg %p420
      $region70: #{net_forward.1} parent=11 // pred_check_branch
        %904 = sbr.rel (%p902) target = $region72
      $region71: #{net_forward.1} parent=11 // pred_region
        _
      $region72: #{net_forward.1} parent=11 // pred_fallthru
        _
      // Predicated region
      $region73: #{net_forward.1} parent=11 // pred_check
        %p905 = pneg %p441
      $region74: #{net_forward.1} parent=11 // pred_check_branch
        %907 = sbr.rel (%p905) target = $region76
      $region75: #{net_forward.1} parent=11 // pred_region
        _
      $region76: #{net_forward.1} parent=11 // pred_fallthru
        _
      // Predicated region
      $region77: #{net_forward.1} parent=11 // pred_check
        %p908 = pneg %p462
      $region78: #{net_forward.1} parent=11 // pred_check_branch
        %910 = sbr.rel (%p908) target = $region80
      $region79: #{net_forward.1} parent=11 // pred_region
        _
      $region80: #{net_forward.1} parent=11 // pred_fallthru
        _
      // Predicated region
      $region81: #{net_forward.1} parent=11 // pred_check
        %p911 = pneg %p483
      $region82: #{net_forward.1} parent=11 // pred_check_branch
        %913 = sbr.rel (%p911) target = $region84
      $region83: #{net_forward.1} parent=11 // pred_region
        _
      $region84: #{net_forward.1} parent=11 // pred_fallthru
        _
      // Predicated region
      $region85: #{net_forward.1} parent=11 // pred_check
        %p914 = pneg %p504
      $region86: #{net_forward.1} parent=11 // pred_check_branch
        %916 = sbr.rel (%p914) target = $region88
      $region87: #{net_forward.1} parent=11 // pred_region
        _
      $region88: #{net_forward.1} parent=11 // pred_fallthru
        _
      // Predicated region
      $region89: #{net_forward.1} parent=11 // pred_check
        %p917 = pneg %p525
      $region90: #{net_forward.1} parent=11 // pred_check_branch
        %919 = sbr.rel (%p917) target = $region92
      $region91: #{net_forward.1} parent=11 // pred_region
        _
      $region92: #{net_forward.1} parent=11 // pred_fallthru
        _
      // Predicated region
      $region93: #{net_forward.1} parent=11 // pred_check
        %p920 = pneg %p546
      $region94: #{net_forward.1} parent=11 // pred_check_branch
        %922 = sbr.rel (%p920) target = $region96
      $region95: #{net_forward.1} parent=11 // pred_region
        _
      $region96: #{net_forward.1} parent=11 // pred_fallthru
        _
      // Predicated region
      $region97: #{net_forward.1} parent=11 // pred_check
        %p923 = pneg %p567
      $region98: #{net_forward.1} parent=11 // pred_check_branch
        %925 = sbr.rel (%p923) target = $region100
      $region99: #{net_forward.1} parent=11 // pred_region
        _
      $region100: #{net_forward.1} parent=11 // pred_fallthru
        _
      // Predicated region
      $region101: #{net_forward.1} parent=11 // pred_check
        %p926 = pneg %p588
      $region102: #{net_forward.1} parent=11 // pred_check_branch
        %928 = sbr.rel (%p926) target = $region104
      $region103: #{net_forward.1} parent=11 // pred_region
        _
      $region104: #{net_forward.1} parent=11 // pred_fallthru
        _
      // Predicated region
      $region105: #{net_forward.1} parent=11 // pred_check
        %p929 = pneg %p609
      $region106: #{net_forward.1} parent=11 // pred_check_branch
        %931 = sbr.rel (%p929) target = $region108
      $region107: #{net_forward.1} parent=11 // pred_region
        _
      $region108: #{net_forward.1} parent=11 // pred_fallthru
        _
      // Predicated region
      $region109: #{net_forward.1} parent=11 // pred_check
        %p932 = pneg %p630
      $region110: #{net_forward.1} parent=11 // pred_check_branch
        %934 = sbr.rel (%p932) target = $region112
      $region111: #{net_forward.1} parent=11 // pred_region
        _
      $region112: #{net_forward.1} parent=11 // pred_fallthru
        _
      // Predicated region
      $region113: #{net_forward.1} parent=11 // pred_check
        %p935 = pneg %p651
      $region114: #{net_forward.1} parent=11 // pred_check_branch
        %937 = sbr.rel (%p935) target = $region116
      $region115: #{net_forward.1} parent=11 // pred_region
        _
      $region116: #{net_forward.1} parent=11 // pred_fallthru
        _
      // Predicated region
      $region117: #{net_forward.1} parent=11 // pred_check
        %p938 = pneg %p672
      $region118: #{net_forward.1} parent=11 // pred_check_branch
        %940 = sbr.rel (%p938) target = $region120
      $region119: #{net_forward.1} parent=11 // pred_region
        _
      $region120: #{net_forward.1} parent=11 // pred_fallthru
        _
      // Predicated region
      $region121: #{net_forward.1} parent=11 // pred_check
        %p941 = pneg %p693
      $region122: #{net_forward.1} parent=11 // pred_check_branch
        %943 = sbr.rel (%p941) target = $region124
      $region123: #{net_forward.1} parent=11 // pred_region
        _
      $region124: #{net_forward.1} parent=11 // pred_fallthru
        _
      // Predicated region
      $region125: #{net_forward.1} parent=11 // pred_check
        %p944 = pneg %p714
      $region126: #{net_forward.1} parent=11 // pred_check_branch
        %946 = sbr.rel (%p944) target = $region128
      $region127: #{net_forward.1} parent=11 // pred_region
        _
      $region128: #{net_forward.1} parent=11 // pred_fallthru
        _
      // Predicated region
      $region129: #{net_forward.1} parent=11 // pred_check
        %p947 = pneg %p735
      $region130: #{net_forward.1} parent=11 // pred_check_branch
        %949 = sbr.rel (%p947) target = $region132
      $region131: #{net_forward.1} parent=11 // pred_region
        _
      $region132: #{net_forward.1} parent=11 // pred_fallthru
        _
      // Predicated region
      $region133: #{net_forward.1} parent=11 // pred_check
        %p950 = pneg %p756
      $region134: #{net_forward.1} parent=11 // pred_check_branch
        %952 = sbr.rel (%p950) target = $region136
      $region135: #{net_forward.1} parent=11 // pred_region
        _
      $region136: #{net_forward.1} parent=11 // pred_fallthru
        _
      // Predicated region
      $region137: #{net_forward.1} parent=11 // pred_check
        %p953 = pneg %p777
      $region138: #{net_forward.1} parent=11 // pred_check_branch
        %955 = sbr.rel (%p953) target = $region140
      $region139: #{net_forward.1} parent=11 // pred_region
        _
      $region140: #{net_forward.1} parent=11 // pred_fallthru
        _
      // Predicated region
      $region141: #{net_forward.1} parent=11 // pred_check
        %p956 = pneg %p798
      $region142: #{net_forward.1} parent=11 // pred_check_branch
        %958 = sbr.rel (%p956) target = $region144
      $region143: #{net_forward.1} parent=11 // pred_region
        _
      $region144: #{net_forward.1} parent=11 // pred_fallthru
        _
      // Predicated region
      $region145: #{net_forward.1} parent=11 // pred_check
        %p959 = pneg %p819
      $region146: #{net_forward.1} parent=11 // pred_check_branch
        %961 = sbr.rel (%p959) target = $region148
      $region147: #{net_forward.1} parent=11 // pred_region
        _
      $region148: #{net_forward.1} parent=11 // pred_fallthru
        _
    $region12: #{net_forward.1} parent=5 // pred_fallthru
      _
    %p962 = scmp.lt.s32.totalorder %s79, 2
    // Predicated region
    $region149: #{net_forward.1} parent=5 // pred_check
      %p963 = pneg %p962
    $region150: #{net_forward.1} parent=5 // pred_check_branch
      %965 = sbr.rel (%p963) target = $region152
    $region151: #{net_forward.1} parent=5 // pred_region
      // Predicated region
      $region153: #{net_forward.1} parent=151 // pred_check
        %p966 = pneg %p99
      $region154: #{net_forward.1} parent=151 // pred_check_branch
        %968 = sbr.rel (%p966) target = $region156
      $region155: #{net_forward.1} parent=151 // pred_region
        %p969 = scmp.lt.s32.totalorder %s79, 1
        %s970 = scalar_select %p969, %s79, 1
        %s971 = smul.addr %s970, 3
        %s972 = scalar_lea.vmem %s1, %s971
      $region156: #{net_forward.1} parent=151 // pred_fallthru
        _
    $region152: #{net_forward.1} parent=5 // pred_fallthru
      _
    %p973 = scmp.le.s32.totalorder 1, %s79
    %p974 = scmp.lt.s32.totalorder %s79, 3
    %p975 = pnand %p973, %p974
    %p976 = pneg %p975
    // Predicated region
    $region157: #{net_forward.1} parent=5 // pred_check
      _
    $region158: #{net_forward.1} parent=5 // pred_check_branch
      %978 = sbr.rel (%p975) target = $region160
    $region159: #{net_forward.1} parent=5 // pred_region
      %s979 = ssub.s32 %s79, 1
      %p980 = scmp.lt.s32.totalorder %s84, 1
      %s981 = scalar_select %p980, %s84, 1
      %s982 = smul.addr %s981, 3
      %s983 = scalar_lea.vmem %s1, %s982
      %p984 = pneg %p105
      %p985 = pneg %p102
      %p986 = pneg %p126
      %p987 = pneg %p123
      %p988 = pneg %p147
      %p989 = pneg %p144
      %p990 = pneg %p168
      %p991 = pneg %p165
      %p992 = pneg %p189
      %p993 = pneg %p186
      %p994 = pneg %p210
      %p995 = pneg %p207
      %p996 = pneg %p231
      %p997 = pneg %p228
      %p998 = pneg %p252
      %p999 = pneg %p249
      %p1000 = pneg %p273
      %p1001 = pneg %p270
      %p1002 = pneg %p294
      %p1003 = pneg %p291
      %p1004 = pneg %p315
      %p1005 = pneg %p312
      %p1006 = pneg %p336
      %p1007 = pneg %p333
      %p1008 = pneg %p357
      %p1009 = pneg %p354
      %p1010 = pneg %p378
      %p1011 = pneg %p375
      %p1012 = pneg %p399
      %p1013 = pneg %p396
      %p1014 = pneg %p420
      %p1015 = pneg %p417
      %p1016 = pneg %p441
      %p1017 = pneg %p438
      %p1018 = pneg %p462
      %p1019 = pneg %p459
      %p1020 = pneg %p483
      %p1021 = pneg %p480
      %p1022 = pneg %p504
      %p1023 = pneg %p501
      %p1024 = pneg %p525
      %p1025 = pneg %p522
      %p1026 = pneg %p546
      %p1027 = pneg %p543
      %p1028 = pneg %p567
      %p1029 = pneg %p564
      %p1030 = pneg %p588
      %p1031 = pneg %p585
      %p1032 = pneg %p609
      %p1033 = pneg %p606
      %p1034 = pneg %p630
      %p1035 = pneg %p627
      %p1036 = pneg %p651
      %p1037 = pneg %p648
      %p1038 = pneg %p672
      %p1039 = pneg %p669
      %p1040 = pneg %p693
      %p1041 = pneg %p690
      %p1042 = pneg %p714
      %p1043 = pneg %p711
      %p1044 = pneg %p735
      %p1045 = pneg %p732
      %p1046 = pneg %p756
      %p1047 = pneg %p753
      %p1048 = pneg %p777
      %p1049 = pneg %p774
      %p1050 = pneg %p798
      %p1051 = pneg %p795
      %p1052 = pneg %p819
      %p1053 = pneg %p816
      %p1054 = pneg %p845
      %p1055 = pneg %p842
      %p1056 = scmp.lt.s32.totalorder %s84, 1
      %s1057 = scalar_select %p1056, %s84, 1
      %s1058 = scalar_lea.vmem %s71, %s1057
      %p1059 = scmp.lt.s32.totalorder %s84, 1
      %s1060 = scalar_select %p1059, %s84, 1
      %s1061 = smul.addr %s1060, 3
      %s1062 = scalar_lea.vmem %s1, %s1061
      %p1063 = scmp.lt.s32.totalorder %s84, 1
      %s1064 = scalar_select %p1063, %s84, 1
      %s1065 = scalar_lea.vmem %s71, %s1064
      %v1066 = vld [vmem:[%s1062] sm:$0x7]
      %v1067 = vld [vmem:[%s3] sm:$0xff]
      %v1068 = vld [vmem:[%s3 + $0x8] sm:$0xff]
      %v1069 = vld [vmem:[%s3 + $0x10] sm:$0xff]
      %v1070 = vld [vmem:[%s3 + $0x18] sm:$0xff]
      %v1071 = vld [vmem:[%s5] sm:$0xff]
      %v1072 = vld [vmem:[%s5 + $0x8] sm:$0xff]
      %v1073 = vld [vmem:[%s5 + $0x10] sm:$0xff]
      %v1074 = vld [vmem:[%s5 + $0x18] sm:$0xff]
      %1076 = vset.pattern.permute.xlu0 0
      %1077 = vperm.xlu0 %1076, %v1067
      %v1078 = vpop.permute.xlu0 %1077
      %1081 = vset.pattern.permute.xlu0 0
      %1082 = vperm.xlu0 %1081, %v1068
      %v1083 = vpop.permute.xlu0 %1082
      %1086 = vset.pattern.permute.xlu0 0
      %1087 = vperm.xlu0 %1086, %v1069
      %v1088 = vpop.permute.xlu0 %1087
      %1091 = vset.pattern.permute.xlu0 0
      %1092 = vperm.xlu0 %1091, %v1070
      %v1093 = vpop.permute.xlu0 %1092
      %v1096 = vlaneseq
      %v1097 = vshrl.u32 %v1096, 7
      %v1098 = vsub.s32 0, %v1097
      %v1099 = vrot.slane %v1066, %v1098
      %v1100 = vlaneseq
      %v1101 = vshrl.u32 %v1100, 7
      %v1102 = vsub.s32 1, %v1101
      %v1103 = vrot.slane %v1066, %v1102
      %v1104 = vlaneseq
      %v1105 = vshrl.u32 %v1104, 7
      %v1106 = vsub.s32 2, %v1105
      %v1107 = vrot.slane %v1066, %v1106
      %v1111 = vmul.f32 %v1078, %v1099
      %v1112 = vmul.f32 %v1078, %v1103
      %v1113 = vmul.f32 %v1078, %v1107
      %v1114 = vmul.f32 %v1083, %v1099
      %v1115 = vmul.f32 %v1083, %v1103
      %v1116 = vmul.f32 %v1083, %v1107
      %v1117 = vmul.f32 %v1088, %v1099
      %v1118 = vmul.f32 %v1088, %v1103
      %v1119 = vmul.f32 %v1088, %v1107
      %v1120 = vmul.f32 %v1093, %v1099
      %v1121 = vmul.f32 %v1093, %v1103
      %v1122 = vmul.f32 %v1093, %v1107
      %1123 = vset.pattern.permute.xlu0 1
      %1124 = vperm.xlu0 %1123, %v1067
      %v1125 = vpop.permute.xlu0 %1124
      %1127 = vset.pattern.permute.xlu0 1
      %1128 = vperm.xlu0 %1127, %v1068
      %v1129 = vpop.permute.xlu0 %1128
      %1131 = vset.pattern.permute.xlu0 1
      %1132 = vperm.xlu0 %1131, %v1069
      %v1133 = vpop.permute.xlu0 %1132
      %1135 = vset.pattern.permute.xlu0 1
      %1136 = vperm.xlu0 %1135, %v1070
      %v1137 = vpop.permute.xlu0 %1136
      %v1139 = vmul.f32 %v1125, %v1099
      %v1140 = vmul.f32 %v1125, %v1103
      %v1141 = vmul.f32 %v1125, %v1107
      %v1142 = vmul.f32 %v1129, %v1099
      %v1143 = vmul.f32 %v1129, %v1103
      %v1144 = vmul.f32 %v1129, %v1107
      %v1145 = vmul.f32 %v1133, %v1099
      %v1146 = vmul.f32 %v1133, %v1103
      %v1147 = vmul.f32 %v1133, %v1107
      %v1148 = vmul.f32 %v1137, %v1099
      %v1149 = vmul.f32 %v1137, %v1103
      %v1150 = vmul.f32 %v1137, %v1107
      %1163 = vrot.lane.b32.xlu0 %v1139, 127
      %v1164 = vpop.permute.xlu0 %1163
      %1165 = vrot.lane.b32.xlu0 %v1140, 127
      %v1166 = vpop.permute.xlu0 %1165
      %1167 = vrot.lane.b32.xlu0 %v1141, 127
      %v1168 = vpop.permute.xlu0 %1167
      %1169 = vrot.lane.b32.xlu0 %v1142, 127
      %v1170 = vpop.permute.xlu0 %1169
      %1171 = vrot.lane.b32.xlu0 %v1143, 127
      %v1172 = vpop.permute.xlu0 %1171
      %1173 = vrot.lane.b32.xlu0 %v1144, 127
      %v1174 = vpop.permute.xlu0 %1173
      %1175 = vrot.lane.b32.xlu0 %v1145, 127
      %v1176 = vpop.permute.xlu0 %1175
      %1177 = vrot.lane.b32.xlu0 %v1146, 127
      %v1178 = vpop.permute.xlu0 %1177
      %1179 = vrot.lane.b32.xlu0 %v1147, 127
      %v1180 = vpop.permute.xlu0 %1179
      %1181 = vrot.lane.b32.xlu0 %v1148, 127
      %v1182 = vpop.permute.xlu0 %1181
      %1183 = vrot.lane.b32.xlu0 %v1149, 127
      %v1184 = vpop.permute.xlu0 %1183
      %1185 = vrot.lane.b32.xlu0 %v1150, 127
      %v1186 = vpop.permute.xlu0 %1185
      %vm1187 = vcmask 1039360
      %v1188 = vsel %vm1187, %v1164, %v1166
      %v1189 = vsel %vm1187, %v1166, %v1168
      %v1190 = vsel %vm1187, %v1170, %v1172
      %v1191 = vsel %vm1187, %v1172, %v1174
      %v1192 = vsel %vm1187, %v1176, %v1178
      %v1193 = vsel %vm1187, %v1178, %v1180
      %v1194 = vsel %vm1187, %v1182, %v1184
      %v1195 = vsel %vm1187, %v1184, %v1186
      %v1208 = vadd.f32 %v1111, %v1188
      %v1209 = vadd.f32 %v1112, %v1189
      %v1210 = vadd.f32 %v1113, %v1168
      %v1211 = vadd.f32 %v1114, %v1190
      %v1212 = vadd.f32 %v1115, %v1191
      %v1213 = vadd.f32 %v1116, %v1174
      %v1214 = vadd.f32 %v1117, %v1192
      %v1215 = vadd.f32 %v1118, %v1193
      %v1216 = vadd.f32 %v1119, %v1180
      %v1217 = vadd.f32 %v1120, %v1194
      %v1218 = vadd.f32 %v1121, %v1195
      %v1219 = vadd.f32 %v1122, %v1186
      %1220 = vset.pattern.permute.xlu0 2
      %1221 = vperm.xlu0 %1220, %v1067
      %v1222 = vpop.permute.xlu0 %1221
      %1224 = vset.pattern.permute.xlu0 2
      %1225 = vperm.xlu0 %1224, %v1068
      %v1226 = vpop.permute.xlu0 %1225
      %1228 = vset.pattern.permute.xlu0 2
      %1229 = vperm.xlu0 %1228, %v1069
      %v1230 = vpop.permute.xlu0 %1229
      %1232 = vset.pattern.permute.xlu0 2
      %1233 = vperm.xlu0 %1232, %v1070
      %v1234 = vpop.permute.xlu0 %1233
      %v1236 = vmul.f32 %v1222, %v1099
      %v1237 = vmul.f32 %v1222, %v1103
      %v1238 = vmul.f32 %v1222, %v1107
      %v1239 = vmul.f32 %v1226, %v1099
      %v1240 = vmul.f32 %v1226, %v1103
      %v1241 = vmul.f32 %v1226, %v1107
      %v1242 = vmul.f32 %v1230, %v1099
      %v1243 = vmul.f32 %v1230, %v1103
      %v1244 = vmul.f32 %v1230, %v1107
      %v1245 = vmul.f32 %v1234, %v1099
      %v1246 = vmul.f32 %v1234, %v1103
      %v1247 = vmul.f32 %v1234, %v1107
      %1260 = vrot.lane.b32.xlu0 %v1236, 126
      %v1261 = vpop.permute.xlu0 %1260
      %1262 = vrot.lane.b32.xlu0 %v1237, 126
      %v1263 = vpop.permute.xlu0 %1262
      %1264 = vrot.lane.b32.xlu0 %v1238, 126
      %v1265 = vpop.permute.xlu0 %1264
      %1266 = vrot.lane.b32.xlu0 %v1239, 126
      %v1267 = vpop.permute.xlu0 %1266
      %1268 = vrot.lane.b32.xlu0 %v1240, 126
      %v1269 = vpop.permute.xlu0 %1268
      %1270 = vrot.lane.b32.xlu0 %v1241, 126
      %v1271 = vpop.permute.xlu0 %1270
      %1272 = vrot.lane.b32.xlu0 %v1242, 126
      %v1273 = vpop.permute.xlu0 %1272
      %1274 = vrot.lane.b32.xlu0 %v1243, 126
      %v1275 = vpop.permute.xlu0 %1274
      %1276 = vrot.lane.b32.xlu0 %v1244, 126
      %v1277 = vpop.permute.xlu0 %1276
      %1278 = vrot.lane.b32.xlu0 %v1245, 126
      %v1279 = vpop.permute.xlu0 %1278
      %1280 = vrot.lane.b32.xlu0 %v1246, 126
      %v1281 = vpop.permute.xlu0 %1280
      %1282 = vrot.lane.b32.xlu0 %v1247, 126
      %v1283 = vpop.permute.xlu0 %1282
      %vm1284 = vcmask 1031168
      %v1285 = vsel %vm1284, %v1261, %v1263
      %v1286 = vsel %vm1284, %v1263, %v1265
      %v1287 = vsel %vm1284, %v1267, %v1269
      %v1288 = vsel %vm1284, %v1269, %v1271
      %v1289 = vsel %vm1284, %v1273, %v1275
      %v1290 = vsel %vm1284, %v1275, %v1277
      %v1291 = vsel %vm1284, %v1279, %v1281
      %v1292 = vsel %vm1284, %v1281, %v1283
      %v1305 = vadd.f32 %v1208, %v1285
      %v1306 = vadd.f32 %v1209, %v1286
      %v1307 = vadd.f32 %v1210, %v1265
      %v1308 = vadd.f32 %v1211, %v1287
      %v1309 = vadd.f32 %v1212, %v1288
      %v1310 = vadd.f32 %v1213, %v1271
      %v1311 = vadd.f32 %v1214, %v1289
      %v1312 = vadd.f32 %v1215, %v1290
      %v1313 = vadd.f32 %v1216, %v1277
      %v1314 = vadd.f32 %v1217, %v1291
      %v1315 = vadd.f32 %v1218, %v1292
      %v1316 = vadd.f32 %v1219, %v1283
      %1317 = vset.pattern.permute.xlu0 3
      %1318 = vperm.xlu0 %1317, %v1067
      %v1319 = vpop.permute.xlu0 %1318
      %1321 = vset.pattern.permute.xlu0 3
      %1322 = vperm.xlu0 %1321, %v1068
      %v1323 = vpop.permute.xlu0 %1322
      %1325 = vset.pattern.permute.xlu0 3
      %1326 = vperm.xlu0 %1325, %v1069
      %v1327 = vpop.permute.xlu0 %1326
      %1329 = vset.pattern.permute.xlu0 3
      %1330 = vperm.xlu0 %1329, %v1070
      %v1331 = vpop.permute.xlu0 %1330
      %v1333 = vmul.f32 %v1319, %v1099
      %v1334 = vmul.f32 %v1319, %v1103
      %v1335 = vmul.f32 %v1319, %v1107
      %v1336 = vmul.f32 %v1323, %v1099
      %v1337 = vmul.f32 %v1323, %v1103
      %v1338 = vmul.f32 %v1323, %v1107
      %v1339 = vmul.f32 %v1327, %v1099
      %v1340 = vmul.f32 %v1327, %v1103
      %v1341 = vmul.f32 %v1327, %v1107
      %v1342 = vmul.f32 %v1331, %v1099
      %v1343 = vmul.f32 %v1331, %v1103
      %v1344 = vmul.f32 %v1331, %v1107
      %1357 = vrot.lane.b32.xlu0 %v1333, 125
      %v1358 = vpop.permute.xlu0 %1357
      %1359 = vrot.lane.b32.xlu0 %v1334, 125
      %v1360 = vpop.permute.xlu0 %1359
      %1361 = vrot.lane.b32.xlu0 %v1335, 125
      %v1362 = vpop.permute.xlu0 %1361
      %1363 = vrot.lane.b32.xlu0 %v1336, 125
      %v1364 = vpop.permute.xlu0 %1363
      %1365 = vrot.lane.b32.xlu0 %v1337, 125
      %v1366 = vpop.permute.xlu0 %1365
      %1367 = vrot.lane.b32.xlu0 %v1338, 125
      %v1368 = vpop.permute.xlu0 %1367
      %1369 = vrot.lane.b32.xlu0 %v1339, 125
      %v1370 = vpop.permute.xlu0 %1369
      %1371 = vrot.lane.b32.xlu0 %v1340, 125
      %v1372 = vpop.permute.xlu0 %1371
      %1373 = vrot.lane.b32.xlu0 %v1341, 125
      %v1374 = vpop.permute.xlu0 %1373
      %1375 = vrot.lane.b32.xlu0 %v1342, 125
      %v1376 = vpop.permute.xlu0 %1375
      %1377 = vrot.lane.b32.xlu0 %v1343, 125
      %v1378 = vpop.permute.xlu0 %1377
      %1379 = vrot.lane.b32.xlu0 %v1344, 125
      %v1380 = vpop.permute.xlu0 %1379
      %vm1381 = vcmask 1022976
      %v1382 = vsel %vm1381, %v1358, %v1360
      %v1383 = vsel %vm1381, %v1360, %v1362
      %v1384 = vsel %vm1381, %v1364, %v1366
      %v1385 = vsel %vm1381, %v1366, %v1368
      %v1386 = vsel %vm1381, %v1370, %v1372
      %v1387 = vsel %vm1381, %v1372, %v1374
      %v1388 = vsel %vm1381, %v1376, %v1378
      %v1389 = vsel %vm1381, %v1378, %v1380
      %v1402 = vadd.f32 %v1305, %v1382
      %v1403 = vadd.f32 %v1306, %v1383
      %v1404 = vadd.f32 %v1307, %v1362
      %v1405 = vadd.f32 %v1308, %v1384
      %v1406 = vadd.f32 %v1309, %v1385
      %v1407 = vadd.f32 %v1310, %v1368
      %v1408 = vadd.f32 %v1311, %v1386
      %v1409 = vadd.f32 %v1312, %v1387
      %v1410 = vadd.f32 %v1313, %v1374
      %v1411 = vadd.f32 %v1314, %v1388
      %v1412 = vadd.f32 %v1315, %v1389
      %v1413 = vadd.f32 %v1316, %v1380
      %1414 = vset.pattern.permute.xlu0 4
      %1415 = vperm.xlu0 %1414, %v1067
      %v1416 = vpop.permute.xlu0 %1415
      %1418 = vset.pattern.permute.xlu0 4
      %1419 = vperm.xlu0 %1418, %v1068
      %v1420 = vpop.permute.xlu0 %1419
      %1422 = vset.pattern.permute.xlu0 4
      %1423 = vperm.xlu0 %1422, %v1069
      %v1424 = vpop.permute.xlu0 %1423
      %1426 = vset.pattern.permute.xlu0 4
      %1427 = vperm.xlu0 %1426, %v1070
      %v1428 = vpop.permute.xlu0 %1427
      %v1430 = vmul.f32 %v1416, %v1099
      %v1431 = vmul.f32 %v1416, %v1103
      %v1432 = vmul.f32 %v1416, %v1107
      %v1433 = vmul.f32 %v1420, %v1099
      %v1434 = vmul.f32 %v1420, %v1103
      %v1435 = vmul.f32 %v1420, %v1107
      %v1436 = vmul.f32 %v1424, %v1099
      %v1437 = vmul.f32 %v1424, %v1103
      %v1438 = vmul.f32 %v1424, %v1107
      %v1439 = vmul.f32 %v1428, %v1099
      %v1440 = vmul.f32 %v1428, %v1103
      %v1441 = vmul.f32 %v1428, %v1107
      %1454 = vrot.lane.b32.xlu0 %v1430, 124
      %v1455 = vpop.permute.xlu0 %1454
      %1456 = vrot.lane.b32.xlu0 %v1431, 124
      %v1457 = vpop.permute.xlu0 %1456
      %1458 = vrot.lane.b32.xlu0 %v1432, 124
      %v1459 = vpop.permute.xlu0 %1458
      %1460 = vrot.lane.b32.xlu0 %v1433, 124
      %v1461 = vpop.permute.xlu0 %1460
      %1462 = vrot.lane.b32.xlu0 %v1434, 124
      %v1463 = vpop.permute.xlu0 %1462
      %1464 = vrot.lane.b32.xlu0 %v1435, 124
      %v1465 = vpop.permute.xlu0 %1464
      %1466 = vrot.lane.b32.xlu0 %v1436, 124
      %v1467 = vpop.permute.xlu0 %1466
      %1468 = vrot.lane.b32.xlu0 %v1437, 124
      %v1469 = vpop.permute.xlu0 %1468
      %1470 = vrot.lane.b32.xlu0 %v1438, 124
      %v1471 = vpop.permute.xlu0 %1470
      %1472 = vrot.lane.b32.xlu0 %v1439, 124
      %v1473 = vpop.permute.xlu0 %1472
      %1474 = vrot.lane.b32.xlu0 %v1440, 124
      %v1475 = vpop.permute.xlu0 %1474
      %1476 = vrot.lane.b32.xlu0 %v1441, 124
      %v1477 = vpop.permute.xlu0 %1476
      %vm1478 = vcmask 1014784
      %v1479 = vsel %vm1478, %v1455, %v1457
      %v1480 = vsel %vm1478, %v1457, %v1459
      %v1481 = vsel %vm1478, %v1461, %v1463
      %v1482 = vsel %vm1478, %v1463, %v1465
      %v1483 = vsel %vm1478, %v1467, %v1469
      %v1484 = vsel %vm1478, %v1469, %v1471
      %v1485 = vsel %vm1478, %v1473, %v1475
      %v1486 = vsel %vm1478, %v1475, %v1477
      %v1499 = vadd.f32 %v1402, %v1479
      %v1500 = vadd.f32 %v1403, %v1480
      %v1501 = vadd.f32 %v1404, %v1459
      %v1502 = vadd.f32 %v1405, %v1481
      %v1503 = vadd.f32 %v1406, %v1482
      %v1504 = vadd.f32 %v1407, %v1465
      %v1505 = vadd.f32 %v1408, %v1483
      %v1506 = vadd.f32 %v1409, %v1484
      %v1507 = vadd.f32 %v1410, %v1471
      %v1508 = vadd.f32 %v1411, %v1485
      %v1509 = vadd.f32 %v1412, %v1486
      %v1510 = vadd.f32 %v1413, %v1477
      %1512 = vset.pattern.permute.xlu0 0
      %1513 = vperm.xlu0 %1512, %v1071
      %v1514 = vpop.permute.xlu0 %1513
      %1517 = vset.pattern.permute.xlu0 0
      %1518 = vperm.xlu0 %1517, %v1072
      %v1519 = vpop.permute.xlu0 %1518
      %1522 = vset.pattern.permute.xlu0 0
      %1523 = vperm.xlu0 %1522, %v1073
      %v1524 = vpop.permute.xlu0 %1523
      %1527 = vset.pattern.permute.xlu0 0
      %1528 = vperm.xlu0 %1527, %v1074
      %v1529 = vpop.permute.xlu0 %1528
      %v1531 = vadd.f32 %v1499, %v1514
      %v1532 = vadd.f32 %v1500, %v1514
      %v1533 = vadd.f32 %v1501, %v1514
      %v1534 = vadd.f32 %v1502, %v1519
      %v1535 = vadd.f32 %v1503, %v1519
      %v1536 = vadd.f32 %v1504, %v1519
      %v1537 = vadd.f32 %v1505, %v1524
      %v1538 = vadd.f32 %v1506, %v1524
      %v1539 = vadd.f32 %v1507, %v1524
      %v1540 = vadd.f32 %v1508, %v1529
      %v1541 = vadd.f32 %v1509, %v1529
      %v1542 = vadd.f32 %v1510, %v1529
      %v1543 = vmax.f32 %v1531, 0.0
      %v1544 = vmax.f32 %v1532, 0.0
      %v1545 = vmax.f32 %v1533, 0.0
      %v1546 = vmax.f32 %v1534, 0.0
      %v1547 = vmax.f32 %v1535, 0.0
      %v1548 = vmax.f32 %v1536, 0.0
      %v1549 = vmax.f32 %v1537, 0.0
      %v1550 = vmax.f32 %v1538, 0.0
      %v1551 = vmax.f32 %v1539, 0.0
      %v1552 = vmax.f32 %v1540, 0.0
      %v1553 = vmax.f32 %v1541, 0.0
      %v1554 = vmax.f32 %v1542, 0.0
      %1555 = vst [vmem:[#allocation2] sm:$0xff] 0.0
      %1556 = vst [vmem:[#allocation2 + $0x8] sm:$0xff] 0.0
      %vm1557 = vcmask 785408
      %1558 = vst.msk [vmem:[#allocation2 + $0x10] sm:$0xff] %vm1557, 0.0
      %1559 = vst [vmem:[#allocation2 + $0x18] sm:$0xff] 0.0
      %1560 = vst [vmem:[#allocation2 + $0x20] sm:$0xff] 0.0
      %1561 = vst.msk [vmem:[#allocation2 + $0x28] sm:$0xff] %vm1557, 0.0
      %1562 = vst [vmem:[#allocation2 + $0x30] sm:$0xff] 0.0
      %1563 = vst [vmem:[#allocation2 + $0x38] sm:$0xff] 0.0
      %1564 = vst.msk [vmem:[#allocation2 + $0x40] sm:$0xff] %vm1557, 0.0
      %1565 = vst [vmem:[#allocation2 + $0x48] sm:$0xff] 0.0
      %1566 = vst [vmem:[#allocation2 + $0x50] sm:$0xff] 0.0
      %1567 = vst.msk [vmem:[#allocation2 + $0x58] sm:$0xff] %vm1557, 0.0
      %1568 = vst [vmem:[#allocation2 + $0x60] sm:$0xff] 0.0
      %1569 = vst [vmem:[#allocation2 + $0x68] sm:$0xff] 0.0
      %1570 = vst.msk [vmem:[#allocation2 + $0x70] sm:$0xff] %vm1557, 0.0
      %1571 = vst [vmem:[#allocation2 + $0x78] sm:$0xff] 0.0
      %1572 = vst [vmem:[#allocation2 + $0x80] sm:$0xff] 0.0
      %1573 = vst.msk [vmem:[#allocation2 + $0x88] sm:$0xff] %vm1557, 0.0
      %1574 = vst [vmem:[#allocation2 + $0x90] sm:$0xff] 0.0
      %1575 = vst [vmem:[#allocation2 + $0x98] sm:$0xff] 0.0
      %1576 = vst.msk [vmem:[#allocation2 + $0xa0] sm:$0xff] %vm1557, 0.0
      %1577 = vst [vmem:[#allocation2 + $0xa8] sm:$0xff] 0.0
      %1578 = vst [vmem:[#allocation2 + $0xb0] sm:$0xff] 0.0
      %1579 = vst.msk [vmem:[#allocation2 + $0xb8] sm:$0xff] %vm1557, 0.0
      %1580 = vst [vmem:[#allocation2 + $0xc0] sm:$0xff] 0.0
      %1581 = vst [vmem:[#allocation2 + $0xc8] sm:$0xff] 0.0
      %1582 = vst.msk [vmem:[#allocation2 + $0xd0] sm:$0xff] %vm1557, 0.0
      %1583 = vst [vmem:[#allocation2 + $0xd8] sm:$0xff] 0.0
      %1584 = vst [vmem:[#allocation2 + $0xe0] sm:$0xff] 0.0
      %1585 = vst.msk [vmem:[#allocation2 + $0xe8] sm:$0xff] %vm1557, 0.0
      %1586 = vst [vmem:[#allocation2 + $0xf0] sm:$0xff] 0.0
      %1587 = vst [vmem:[#allocation2 + $0xf8] sm:$0xff] 0.0
      %1588 = vst.msk [vmem:[#allocation2 + $0x100] sm:$0xff] %vm1557, 0.0
      %1589 = vst [vmem:[#allocation2 + $0x108] sm:$0xff] 0.0
      %1590 = vst [vmem:[#allocation2 + $0x110] sm:$0xff] 0.0
      %1591 = vst.msk [vmem:[#allocation2 + $0x118] sm:$0xff] %vm1557, 0.0
      %1592 = vst [vmem:[#allocation2 + $0x120] sm:$0xff] 0.0
      %1593 = vst [vmem:[#allocation2 + $0x128] sm:$0xff] 0.0
      %1594 = vst.msk [vmem:[#allocation2 + $0x130] sm:$0xff] %vm1557, 0.0
      %1595 = vst [vmem:[#allocation2 + $0x138] sm:$0xff] 0.0
      %1596 = vst [vmem:[#allocation2 + $0x140] sm:$0xff] 0.0
      %1597 = vst.msk [vmem:[#allocation2 + $0x148] sm:$0xff] %vm1557, 0.0
      %1598 = vst [vmem:[#allocation2 + $0x150] sm:$0xff] 0.0
      %1599 = vst [vmem:[#allocation2 + $0x158] sm:$0xff] 0.0
      %1600 = vst.msk [vmem:[#allocation2 + $0x160] sm:$0xff] %vm1557, 0.0
      %1601 = vst [vmem:[#allocation2 + $0x168] sm:$0xff] 0.0
      %1602 = vst [vmem:[#allocation2 + $0x170] sm:$0xff] 0.0
      %1603 = vst.msk [vmem:[#allocation2 + $0x178] sm:$0xff] %vm1557, 0.0
      %1604 = vst [vmem:[#allocation2 + $0x180] sm:$0xff] 0.0
      %1605 = vst [vmem:[#allocation2 + $0x188] sm:$0xff] 0.0
      %1606 = vst.msk [vmem:[#allocation2 + $0x190] sm:$0xff] %vm1557, 0.0
      %1607 = vst [vmem:[#allocation2 + $0x198] sm:$0xff] 0.0
      %1608 = vst [vmem:[#allocation2 + $0x1a0] sm:$0xff] 0.0
      %1609 = vst.msk [vmem:[#allocation2 + $0x1a8] sm:$0xff] %vm1557, 0.0
      %1610 = vst [vmem:[#allocation2 + $0x1b0] sm:$0xff] 0.0
      %1611 = vst [vmem:[#allocation2 + $0x1b8] sm:$0xff] 0.0
      %1612 = vst.msk [vmem:[#allocation2 + $0x1c0] sm:$0xff] %vm1557, 0.0
      %1613 = vst [vmem:[#allocation2 + $0x1c8] sm:$0xff] 0.0
      %1614 = vst [vmem:[#allocation2 + $0x1d0] sm:$0xff] 0.0
      %1615 = vst.msk [vmem:[#allocation2 + $0x1d8] sm:$0xff] %vm1557, 0.0
      %1628 = vrot.lane.b32.xlu0 %v1543, 2
      %v1629 = vpop.permute.xlu0 %1628
      %1630 = vrot.lane.b32.xlu0 %v1544, 2
      %v1631 = vpop.permute.xlu0 %1630
      %1632 = vrot.lane.b32.xlu0 %v1545, 2
      %v1633 = vpop.permute.xlu0 %1632
      %1634 = vrot.lane.b32.xlu0 %v1546, 2
      %v1635 = vpop.permute.xlu0 %1634
      %1636 = vrot.lane.b32.xlu0 %v1547, 2
      %v1637 = vpop.permute.xlu0 %1636
      %1638 = vrot.lane.b32.xlu0 %v1548, 2
      %v1639 = vpop.permute.xlu0 %1638
      %1640 = vrot.lane.b32.xlu0 %v1549, 2
      %v1641 = vpop.permute.xlu0 %1640
      %1642 = vrot.lane.b32.xlu0 %v1550, 2
      %v1643 = vpop.permute.xlu0 %1642
      %1644 = vrot.lane.b32.xlu0 %v1551, 2
      %v1645 = vpop.permute.xlu0 %1644
      %1646 = vrot.lane.b32.xlu0 %v1552, 2
      %v1647 = vpop.permute.xlu0 %1646
      %1648 = vrot.lane.b32.xlu0 %v1553, 2
      %v1649 = vpop.permute.xlu0 %1648
      %1650 = vrot.lane.b32.xlu0 %v1554, 2
      %v1651 = vpop.permute.xlu0 %1650
      %vm1652 = vcmask 15360
      %v1653 = vsel %vm1652, %v1629, %v1631
      %v1654 = vsel %vm1652, %v1631, %v1633
      %v1655 = vsel %vm1652, %v1635, %v1637
      %v1656 = vsel %vm1652, %v1637, %v1639
      %v1657 = vsel %vm1652, %v1641, %v1643
      %v1658 = vsel %vm1652, %v1643, %v1645
      %v1659 = vsel %vm1652, %v1647, %v1649
      %v1660 = vsel %vm1652, %v1649, %v1651
      %vm1673 = vcmask 1047568
      %1674 = vst.msk [vmem:[#allocation2] sm:$0xff] %vm1673, %v1629
      %1675 = vst [vmem:[#allocation2 + $0x8] sm:$0xff] %v1653
      %1676 = vst.msk [vmem:[#allocation2 + $0x10] sm:$0xff] %vm1557, %v1654
      %1677 = vst.msk [vmem:[#allocation2 + $0x18] sm:$0xff] %vm1673, %v1635
      %1678 = vst [vmem:[#allocation2 + $0x20] sm:$0xff] %v1655
      %1679 = vst.msk [vmem:[#allocation2 + $0x28] sm:$0xff] %vm1557, %v1656
      %1680 = vst.msk [vmem:[#allocation2 + $0x30] sm:$0xff] %vm1673, %v1641
      %1681 = vst [vmem:[#allocation2 + $0x38] sm:$0xff] %v1657
      %1682 = vst.msk [vmem:[#allocation2 + $0x40] sm:$0xff] %vm1557, %v1658
      %1683 = vst.msk [vmem:[#allocation2 + $0x48] sm:$0xff] %vm1673, %v1647
      %1684 = vst [vmem:[#allocation2 + $0x50] sm:$0xff] %v1659
      %1685 = vst.msk [vmem:[#allocation2 + $0x58] sm:$0xff] %vm1557, %v1660
      %1686 = vrot.lane.b32.xlu0 %v1543, 1
      %v1687 = vpop.permute.xlu0 %1686
      %1688 = vrot.lane.b32.xlu0 %v1544, 1
      %v1689 = vpop.permute.xlu0 %1688
      %1690 = vrot.lane.b32.xlu0 %v1545, 1
      %v1691 = vpop.permute.xlu0 %1690
      %1692 = vrot.lane.b32.xlu0 %v1546, 1
      %v1693 = vpop.permute.xlu0 %1692
      %1694 = vrot.lane.b32.xlu0 %v1547, 1
      %v1695 = vpop.permute.xlu0 %1694
      %1696 = vrot.lane.b32.xlu0 %v1548, 1
      %v1697 = vpop.permute.xlu0 %1696
      %1698 = vrot.lane.b32.xlu0 %v1549, 1
      %v1699 = vpop.permute.xlu0 %1698
      %1700 = vrot.lane.b32.xlu0 %v1550, 1
      %v1701 = vpop.permute.xlu0 %1700
      %1702 = vrot.lane.b32.xlu0 %v1551, 1
      %v1703 = vpop.permute.xlu0 %1702
      %1704 = vrot.lane.b32.xlu0 %v1552, 1
      %v1705 = vpop.permute.xlu0 %1704
      %1706 = vrot.lane.b32.xlu0 %v1553, 1
      %v1707 = vpop.permute.xlu0 %1706
      %1708 = vrot.lane.b32.xlu0 %v1554, 1
      %v1709 = vpop.permute.xlu0 %1708
      %vm1710 = vcmask 7168
      %v1711 = vsel %vm1710, %v1687, %v1689
      %v1712 = vsel %vm1710, %v1689, %v1691
      %v1713 = vsel %vm1710, %v1693, %v1695
      %v1714 = vsel %vm1710, %v1695, %v1697
      %v1715 = vsel %vm1710, %v1699, %v1701
      %v1716 = vsel %vm1710, %v1701, %v1703
      %v1717 = vsel %vm1710, %v1705, %v1707
      %v1718 = vsel %vm1710, %v1707, %v1709
      %vm1731 = vcmask 1047560
      %1732 = vst.msk [vmem:[#allocation2 + $0x60] sm:$0xff] %vm1731, %v1687
      %1733 = vst [vmem:[#allocation2 + $0x68] sm:$0xff] %v1711
      %1734 = vst.msk [vmem:[#allocation2 + $0x70] sm:$0xff] %vm1557, %v1712
      %1735 = vst.msk [vmem:[#allocation2 + $0x78] sm:$0xff] %vm1731, %v1693
      %1736 = vst [vmem:[#allocation2 + $0x80] sm:$0xff] %v1713
      %1737 = vst.msk [vmem:[#allocation2 + $0x88] sm:$0xff] %vm1557, %v1714
      %1738 = vst.msk [vmem:[#allocation2 + $0x90] sm:$0xff] %vm1731, %v1699
      %1739 = vst [vmem:[#allocation2 + $0x98] sm:$0xff] %v1715
      %1740 = vst.msk [vmem:[#allocation2 + $0xa0] sm:$0xff] %vm1557, %v1716
      %1741 = vst.msk [vmem:[#allocation2 + $0xa8] sm:$0xff] %vm1731, %v1705
      %1742 = vst [vmem:[#allocation2 + $0xb0] sm:$0xff] %v1717
      %1743 = vst.msk [vmem:[#allocation2 + $0xb8] sm:$0xff] %vm1557, %v1718
      %1744 = vst [vmem:[#allocation2 + $0xc0] sm:$0xff] %v1543
      %1745 = vst [vmem:[#allocation2 + $0xc8] sm:$0xff] %v1544
      %1746 = vst.msk [vmem:[#allocation2 + $0xd0] sm:$0xff] %vm1557, %v1545
      %1747 = vst [vmem:[#allocation2 + $0xd8] sm:$0xff] %v1546
      %1748 = vst [vmem:[#allocation2 + $0xe0] sm:$0xff] %v1547
      %1749 = vst.msk [vmem:[#allocation2 + $0xe8] sm:$0xff] %vm1557, %v1548
      %1750 = vst [vmem:[#allocation2 + $0xf0] sm:$0xff] %v1549
      %1751 = vst [vmem:[#allocation2 + $0xf8] sm:$0xff] %v1550
      %1752 = vst.msk [vmem:[#allocation2 + $0x100] sm:$0xff] %vm1557, %v1551
      %1753 = vst [vmem:[#allocation2 + $0x108] sm:$0xff] %v1552
      %1754 = vst [vmem:[#allocation2 + $0x110] sm:$0xff] %v1553
      %1755 = vst.msk [vmem:[#allocation2 + $0x118] sm:$0xff] %vm1557, %v1554
      %1756 = vrot.lane.b32.xlu0 %v1543, 127
      %v1757 = vpop.permute.xlu0 %1756
      %1758 = vrot.lane.b32.xlu0 %v1544, 127
      %v1759 = vpop.permute.xlu0 %1758
      %1760 = vrot.lane.b32.xlu0 %v1545, 127
      %v1761 = vpop.permute.xlu0 %1760
      %1762 = vrot.lane.b32.xlu0 %v1546, 127
      %v1763 = vpop.permute.xlu0 %1762
      %1764 = vrot.lane.b32.xlu0 %v1547, 127
      %v1765 = vpop.permute.xlu0 %1764
      %1766 = vrot.lane.b32.xlu0 %v1548, 127
      %v1767 = vpop.permute.xlu0 %1766
      %1768 = vrot.lane.b32.xlu0 %v1549, 127
      %v1769 = vpop.permute.xlu0 %1768
      %1770 = vrot.lane.b32.xlu0 %v1550, 127
      %v1771 = vpop.permute.xlu0 %1770
      %1772 = vrot.lane.b32.xlu0 %v1551, 127
      %v1773 = vpop.permute.xlu0 %1772
      %1774 = vrot.lane.b32.xlu0 %v1552, 127
      %v1775 = vpop.permute.xlu0 %1774
      %1776 = vrot.lane.b32.xlu0 %v1553, 127
      %v1777 = vpop.permute.xlu0 %1776
      %1778 = vrot.lane.b32.xlu0 %v1554, 127
      %v1779 = vpop.permute.xlu0 %1778
      %v1780 = vsel %vm1187, %v1757, %v1759
      %v1781 = vsel %vm1187, %v1759, %v1761
      %v1782 = vsel %vm1187, %v1763, %v1765
      %v1783 = vsel %vm1187, %v1765, %v1767
      %v1784 = vsel %vm1187, %v1769, %v1771
      %v1785 = vsel %vm1187, %v1771, %v1773
      %v1786 = vsel %vm1187, %v1775, %v1777
      %v1787 = vsel %vm1187, %v1777, %v1779
      %1800 = vst [vmem:[#allocation2 + $0x120] sm:$0xff] %v1780
      %1801 = vst [vmem:[#allocation2 + $0x128] sm:$0xff] %v1781
      %vm1802 = vcmask 777216
      %1803 = vst.msk [vmem:[#allocation2 + $0x130] sm:$0xff] %vm1802, %v1761
      %1804 = vst [vmem:[#allocation2 + $0x138] sm:$0xff] %v1782
      %1805 = vst [vmem:[#allocation2 + $0x140] sm:$0xff] %v1783
      %1806 = vst.msk [vmem:[#allocation2 + $0x148] sm:$0xff] %vm1802, %v1767
      %1807 = vst [vmem:[#allocation2 + $0x150] sm:$0xff] %v1784
      %1808 = vst [vmem:[#allocation2 + $0x158] sm:$0xff] %v1785
      %1809 = vst.msk [vmem:[#allocation2 + $0x160] sm:$0xff] %vm1802, %v1773
      %1810 = vst [vmem:[#allocation2 + $0x168] sm:$0xff] %v1786
      %1811 = vst [vmem:[#allocation2 + $0x170] sm:$0xff] %v1787
      %1812 = vst.msk [vmem:[#allocation2 + $0x178] sm:$0xff] %vm1802, %v1779
      %1813 = vrot.lane.b32.xlu0 %v1543, 126
      %v1814 = vpop.permute.xlu0 %1813
      %1815 = vrot.lane.b32.xlu0 %v1544, 126
      %v1816 = vpop.permute.xlu0 %1815
      %1817 = vrot.lane.b32.xlu0 %v1545, 126
      %v1818 = vpop.permute.xlu0 %1817
      %1819 = vrot.lane.b32.xlu0 %v1546, 126
      %v1820 = vpop.permute.xlu0 %1819
      %1821 = vrot.lane.b32.xlu0 %v1547, 126
      %v1822 = vpop.permute.xlu0 %1821
      %1823 = vrot.lane.b32.xlu0 %v1548, 126
      %v1824 = vpop.permute.xlu0 %1823
      %1825 = vrot.lane.b32.xlu0 %v1549, 126
      %v1826 = vpop.permute.xlu0 %1825
      %1827 = vrot.lane.b32.xlu0 %v1550, 126
      %v1828 = vpop.permute.xlu0 %1827
      %1829 = vrot.lane.b32.xlu0 %v1551, 126
      %v1830 = vpop.permute.xlu0 %1829
      %1831 = vrot.lane.b32.xlu0 %v1552, 126
      %v1832 = vpop.permute.xlu0 %1831
      %1833 = vrot.lane.b32.xlu0 %v1553, 126
      %v1834 = vpop.permute.xlu0 %1833
      %1835 = vrot.lane.b32.xlu0 %v1554, 126
      %v1836 = vpop.permute.xlu0 %1835
      %v1837 = vsel %vm1284, %v1814, %v1816
      %v1838 = vsel %vm1284, %v1816, %v1818
      %v1839 = vsel %vm1284, %v1820, %v1822
      %v1840 = vsel %vm1284, %v1822, %v1824
      %v1841 = vsel %vm1284, %v1826, %v1828
      %v1842 = vsel %vm1284, %v1828, %v1830
      %v1843 = vsel %vm1284, %v1832, %v1834
      %v1844 = vsel %vm1284, %v1834, %v1836
      %1857 = vst [vmem:[#allocation2 + $0x180] sm:$0xff] %v1837
      %1858 = vst [vmem:[#allocation2 + $0x188] sm:$0xff] %v1838
      %vm1859 = vcmask 769024
      %1860 = vst.msk [vmem:[#allocation2 + $0x190] sm:$0xff] %vm1859, %v1818
      %1861 = vst [vmem:[#allocation2 + $0x198] sm:$0xff] %v1839
      %1862 = vst [vmem:[#allocation2 + $0x1a0] sm:$0xff] %v1840
      %1863 = vst.msk [vmem:[#allocation2 + $0x1a8] sm:$0xff] %vm1859, %v1824
      %1864 = vst [vmem:[#allocation2 + $0x1b0] sm:$0xff] %v1841
      %1865 = vst [vmem:[#allocation2 + $0x1b8] sm:$0xff] %v1842
      %1866 = vst.msk [vmem:[#allocation2 + $0x1c0] sm:$0xff] %vm1859, %v1830
      %1867 = vst [vmem:[#allocation2 + $0x1c8] sm:$0xff] %v1843
      %1868 = vst [vmem:[#allocation2 + $0x1d0] sm:$0xff] %v1844
      %1869 = vst.msk [vmem:[#allocation2 + $0x1d8] sm:$0xff] %vm1859, %v1836
      %v1870 = vld [vmem:[%s7] sm:$0xff]
      %v1871 = vld [vmem:[%s7 + $0x8] sm:$0xff]
      %v1872 = vld [vmem:[%s7 + $0x10] sm:$0xff]
      %v1873 = vld [vmem:[%s7 + $0x18] sm:$0xff]
      %v1874 = vld [vmem:[%s7 + $0x20] sm:$0xff]
      %v1875 = vld [vmem:[%s7 + $0x28] sm:$0xff]
      %v1876 = vld [vmem:[%s7 + $0x30] sm:$0xff]
      %v1877 = vld [vmem:[%s7 + $0x38] sm:$0xff]
      %v1878 = vld [vmem:[#allocation2] sm:$0xff]
      %v1879 = vld [vmem:[#allocation2 + $0x8] sm:$0xff]
      %v1880 = vld [vmem:[#allocation2 + $0x10] sm:$0xff]
      %v1881 = vld [vmem:[#allocation2 + $0x18] sm:$0xff]
      %v1882 = vld [vmem:[#allocation2 + $0x20] sm:$0xff]
      %v1883 = vld [vmem:[#allocation2 + $0x28] sm:$0xff]
      %v1884 = vld [vmem:[#allocation2 + $0x30] sm:$0xff]
      %v1885 = vld [vmem:[#allocation2 + $0x38] sm:$0xff]
      %v1886 = vld [vmem:[#allocation2 + $0x40] sm:$0xff]
      %v1887 = vld [vmem:[#allocation2 + $0x48] sm:$0xff]
      %v1888 = vld [vmem:[#allocation2 + $0x50] sm:$0xff]
      %v1889 = vld [vmem:[#allocation2 + $0x58] sm:$0xff]
      %v1890 = vld [vmem:[#allocation2 + $0x60] sm:$0xff]
      %v1891 = vld [vmem:[#allocation2 + $0x68] sm:$0xff]
      %v1892 = vld [vmem:[#allocation2 + $0x70] sm:$0xff]
      %v1893 = vld [vmem:[#allocation2 + $0x78] sm:$0xff]
      %v1894 = vld [vmem:[#allocation2 + $0x80] sm:$0xff]
      %v1895 = vld [vmem:[#allocation2 + $0x88] sm:$0xff]
      %v1896 = vld [vmem:[#allocation2 + $0x90] sm:$0xff]
      %v1897 = vld [vmem:[#allocation2 + $0x98] sm:$0xff]
      %v1898 = vld [vmem:[#allocation2 + $0xa0] sm:$0xff]
      %v1899 = vld [vmem:[#allocation2 + $0xa8] sm:$0xff]
      %v1900 = vld [vmem:[#allocation2 + $0xb0] sm:$0xff]
      %v1901 = vld [vmem:[#allocation2 + $0xb8] sm:$0xff]
      %v1902 = vld [vmem:[#allocation2 + $0xc0] sm:$0xff]
      %v1903 = vld [vmem:[#allocation2 + $0xc8] sm:$0xff]
      %v1904 = vld [vmem:[#allocation2 + $0xd0] sm:$0xff]
      %v1905 = vld [vmem:[#allocation2 + $0xd8] sm:$0xff]
      %v1906 = vld [vmem:[#allocation2 + $0xe0] sm:$0xff]
      %v1907 = vld [vmem:[#allocation2 + $0xe8] sm:$0xff]
      %v1908 = vld [vmem:[#allocation2 + $0xf0] sm:$0xff]
      %v1909 = vld [vmem:[#allocation2 + $0xf8] sm:$0xff]
      %v1910 = vld [vmem:[#allocation2 + $0x100] sm:$0xff]
      %v1911 = vld [vmem:[#allocation2 + $0x108] sm:$0xff]
      %v1912 = vld [vmem:[#allocation2 + $0x110] sm:$0xff]
      %v1913 = vld [vmem:[#allocation2 + $0x118] sm:$0xff]
      %v1914 = vld [vmem:[#allocation2 + $0x120] sm:$0xff]
      %v1915 = vld [vmem:[#allocation2 + $0x128] sm:$0xff]
      %v1916 = vld [vmem:[#allocation2 + $0x130] sm:$0xff]
      %v1917 = vld [vmem:[#allocation2 + $0x138] sm:$0xff]
      %v1918 = vld [vmem:[#allocation2 + $0x140] sm:$0xff]
      %v1919 = vld [vmem:[#allocation2 + $0x148] sm:$0xff]
      %v1920 = vld [vmem:[#allocation2 + $0x150] sm:$0xff]
      %v1921 = vld [vmem:[#allocation2 + $0x158] sm:$0xff]
      %v1922 = vld [vmem:[#allocation2 + $0x160] sm:$0xff]
      %v1923 = vld [vmem:[#allocation2 + $0x168] sm:$0xff]
      %v1924 = vld [vmem:[#allocation2 + $0x170] sm:$0xff]
      %v1925 = vld [vmem:[#allocation2 + $0x178] sm:$0xff]
      %v1926 = vld [vmem:[#allocation2 + $0x180] sm:$0xff]
      %v1927 = vld [vmem:[#allocation2 + $0x188] sm:$0xff]
      %v1928 = vld [vmem:[#allocation2 + $0x190] sm:$0xff]
      %v1929 = vld [vmem:[#allocation2 + $0x198] sm:$0xff]
      %v1930 = vld [vmem:[#allocation2 + $0x1a0] sm:$0xff]
      %v1931 = vld [vmem:[#allocation2 + $0x1a8] sm:$0xff]
      %v1932 = vld [vmem:[#allocation2 + $0x1b0] sm:$0xff]
      %v1933 = vld [vmem:[#allocation2 + $0x1b8] sm:$0xff]
      %v1934 = vld [vmem:[#allocation2 + $0x1c0] sm:$0xff]
      %v1935 = vld [vmem:[#allocation2 + $0x1c8] sm:$0xff]
      %v1936 = vld [vmem:[#allocation2 + $0x1d0] sm:$0xff]
      %v1937 = vld [vmem:[#allocation2 + $0x1d8] sm:$0xff]
      %v1938 = vld [vmem:[%s9] sm:$0xff]
      %v1939 = vld [vmem:[%s9 + $0x8] sm:$0xff]
      %v1940 = vld [vmem:[%s9 + $0x10] sm:$0xff]
      %v1941 = vld [vmem:[%s9 + $0x18] sm:$0xff]
      %1943 = vset.pattern.permute.xlu0 0
      %1944 = vperm.xlu0 %1943, %v1938
      %v1945 = vpop.permute.xlu0 %1944
      %1948 = vset.pattern.permute.xlu0 0
      %1949 = vperm.xlu0 %1948, %v1939
      %v1950 = vpop.permute.xlu0 %1949
      %1953 = vset.pattern.permute.xlu0 0
      %1954 = vperm.xlu0 %1953, %v1940
      %v1955 = vpop.permute.xlu0 %1954
      %1958 = vset.pattern.permute.xlu0 0
      %1959 = vperm.xlu0 %1958, %v1941
      %v1960 = vpop.permute.xlu0 %1959
      %vm1962 = vcmask 261120
      %v1964 = vsel %vm1962, %v1871, 0
      %v1967 = vsel %vm1962, %v1873, 0
      %v1970 = vsel %vm1962, %v1875, 0
      %v1973 = vsel %vm1962, %v1877, 0
      %1975 = vmatprep.subr.mxu0 %v1879
      %1976 = vmatpush1.msra.mxu0 %v1878
      %1977 = vmatprep.subr.mxu0 %v1882
      %1978 = vmatpush1.msra.mxu0 %v1881
      %1979 = vmatprep.subr.mxu0 %v1885
      %1980 = vmatpush1.msra.mxu0 %v1884
      %1981 = vmatprep.subr.mxu0 %v1888
      %1982 = vmatpush1.msra.mxu0 %v1887
      %1983 = vmatprep.subr.mxu0 %v1891
      %1984 = vmatpush1.msra.mxu0 %v1890
      %1985 = vmatprep.subr.mxu0 %v1894
      %1986 = vmatpush1.msra.mxu0 %v1893
      %1987 = vmatprep.subr.mxu0 %v1897
      %1988 = vmatpush1.msra.mxu0 %v1896
      %1989 = vmatprep.subr.mxu0 %v1900
      %1990 = vmatpush1.msra.mxu0 %v1899
      %1991 = vmatprep.subr.mxu0 %v1903
      %1992 = vmatpush1.msra.mxu0 %v1902
      %1993 = vmatprep.subr.mxu0 %v1906
      %1994 = vmatpush1.msra.mxu0 %v1905
      %1995 = vmatprep.subr.mxu0 %v1909
      %1996 = vmatpush1.msra.mxu0 %v1908
      %1997 = vmatprep.subr.mxu0 %v1912
      %1998 = vmatpush1.msra.mxu0 %v1911
      %1999 = vmatprep.subr.mxu0 %v1915
      %2000 = vmatpush1.msra.mxu0 %v1914
      %2001 = vmatprep.subr.mxu0 %v1918
      %2002 = vmatpush1.msra.mxu0 %v1917
      %2003 = vmatprep.subr.mxu0 %v1921
      %2004 = vmatpush1.msra.mxu0 %v1920
      %2005 = vmatprep.subr.mxu0 %v1924
      %2006 = vmatpush1.msra.mxu0 %v1923
      %2007 = vmatprep.subr.mxu0 %v1927
      %2008 = vmatpush1.msra.mxu0 %v1926
      %2009 = vmatprep.subr.mxu0 %v1930
      %2010 = vmatpush1.msra.mxu0 %v1929
      %2011 = vmatprep.subr.mxu0 %v1933
      %2012 = vmatpush1.msra.mxu0 %v1932
      %2013 = vmatprep.subr.mxu0 %v1936
      %2014 = vmatpush1.msra.mxu0 %v1935
      %2015 = vmatprep.subr.mxu0 0.0
      %2016 = vmatpush1.msra.mxu0 0.0
      %2017 = vmatprep.subr.mxu0 0.0
      %2018 = vmatpush1.msra.mxu0 0.0
      %2019 = vmatprep.subr.mxu0 0.0
      %2020 = vmatpush1.msra.mxu0 0.0
      %2021 = vmatprep.subr.mxu0 0.0
      %2022 = vmatpush1.msra.mxu0 0.0
      %2023 = vmatprep.subr.mxu0 0.0
      %2024 = vmatpush1.msra.mxu0 0.0
      %2025 = vmatprep.subr.mxu0 0.0
      %2026 = vmatpush1.msra.mxu0 0.0
      %2027 = vmatprep.subr.mxu0 0.0
      %2028 = vmatpush1.msra.mxu0 0.0
      %2029 = vmatprep.subr.mxu0 0.0
      %2030 = vmatpush1.msra.mxu0 0.0
      %2031 = vmatprep.subr.mxu0 0.0
      %2032 = vmatpush1.msra.mxu0 0.0
      %2033 = vmatprep.subr.mxu0 0.0
      %2034 = vmatpush1.msra.mxu0 0.0
      %2035 = vmatprep.subr.mxu0 0.0
      %2036 = vmatpush1.msra.mxu0 0.0
      %2037 = vmatprep.subr.mxu0 0.0
      %2038 = vmatpush1.msra.mxu0 0.0
      %2039 = vmatprep.mubr.f32.mxu0 %v1964
      %2040 = vmatmul.mubr.f32.gmra.mrb[0].mxu0 %v1870
      %v2041 = vpop.f32.mrb[0].mxu0
      %v2042 = vadd.f32 %v1945, %v2041
      %v2043 = vpop.f32.mrb[0].mxu0
      %v2044 = vadd.f32 %v1945, %v2043
      %2045 = vmatprep.mubr.f32.mxu0 %v1967
      %2046 = vmatmul.mubr.f32.gmra.mrb[0].mxu0 %v1872
      %v2047 = vpop.f32.mrb[0].mxu0
      %v2048 = vadd.f32 %v1950, %v2047
      %v2049 = vpop.f32.mrb[0].mxu0
      %v2050 = vadd.f32 %v1950, %v2049
      %2051 = vmatprep.mubr.f32.mxu0 %v1970
      %2052 = vmatmul.mubr.f32.gmra.mrb[0].mxu0 %v1874
      %v2053 = vpop.f32.mrb[0].mxu0
      %v2054 = vadd.f32 %v1955, %v2053
      %v2055 = vpop.f32.mrb[0].mxu0
      %v2056 = vadd.f32 %v1955, %v2055
      %2057 = vmatprep.mubr.f32.mxu0 %v1973
      %2058 = vmatmul.mubr.f32.gmra.mrb[0].mxu0 %v1876
      %v2059 = vpop.f32.mrb[0].mxu0
      %v2060 = vadd.f32 %v1960, %v2059
      %v2061 = vpop.f32.mrb[0].mxu0
      %v2062 = vadd.f32 %v1960, %v2061
      %2063 = vdwg.mxu0
      %2064 = vmatprep.subr.mxu0 0.0
      %2065 = vmatpush1.msra.mxu0 %v1880
      %2066 = vmatprep.subr.mxu0 0.0
      %2067 = vmatpush1.msra.mxu0 %v1883
      %2068 = vmatprep.subr.mxu0 0.0
      %2069 = vmatpush1.msra.mxu0 %v1886
      %2070 = vmatprep.subr.mxu0 0.0
      %2071 = vmatpush1.msra.mxu0 %v1889
      %2072 = vmatprep.subr.mxu0 0.0
      %2073 = vmatpush1.msra.mxu0 %v1892
      %2074 = vmatprep.subr.mxu0 0.0
      %2075 = vmatpush1.msra.mxu0 %v1895
      %2076 = vmatprep.subr.mxu0 0.0
      %2077 = vmatpush1.msra.mxu0 %v1898
      %2078 = vmatprep.subr.mxu0 0.0
      %2079 = vmatpush1.msra.mxu0 %v1901
      %2080 = vmatprep.subr.mxu0 0.0
      %2081 = vmatpush1.msra.mxu0 %v1904
      %2082 = vmatprep.subr.mxu0 0.0
      %2083 = vmatpush1.msra.mxu0 %v1907
      %2084 = vmatprep.subr.mxu0 0.0
      %2085 = vmatpush1.msra.mxu0 %v1910
      %2086 = vmatprep.subr.mxu0 0.0
      %2087 = vmatpush1.msra.mxu0 %v1913
      %2088 = vmatprep.subr.mxu0 0.0
      %2089 = vmatpush1.msra.mxu0 %v1916
      %2090 = vmatprep.subr.mxu0 0.0
      %2091 = vmatpush1.msra.mxu0 %v1919
      %2092 = vmatprep.subr.mxu0 0.0
      %2093 = vmatpush1.msra.mxu0 %v1922
      %2094 = vmatprep.subr.mxu0 0.0
      %2095 = vmatpush1.msra.mxu0 %v1925
      %2096 = vmatprep.subr.mxu0 0.0
      %2097 = vmatpush1.msra.mxu0 %v1928
      %2098 = vmatprep.subr.mxu0 0.0
      %2099 = vmatpush1.msra.mxu0 %v1931
      %2100 = vmatprep.subr.mxu0 0.0
      %2101 = vmatpush1.msra.mxu0 %v1934
      %2102 = vmatprep.subr.mxu0 0.0
      %2103 = vmatpush1.msra.mxu0 %v1937
      %2104 = vmatprep.subr.mxu0 0.0
      %2105 = vmatpush1.msra.mxu0 0.0
      %2106 = vmatprep.subr.mxu0 0.0
      %2107 = vmatpush1.msra.mxu0 0.0
      %2108 = vmatprep.subr.mxu0 0.0
      %2109 = vmatpush1.msra.mxu0 0.0
      %2110 = vmatprep.subr.mxu0 0.0
      %2111 = vmatpush1.msra.mxu0 0.0
      %2112 = vmatprep.subr.mxu0 0.0
      %2113 = vmatpush1.msra.mxu0 0.0
      %2114 = vmatprep.subr.mxu0 0.0
      %2115 = vmatpush1.msra.mxu0 0.0
      %2116 = vmatprep.subr.mxu0 0.0
      %2117 = vmatpush1.msra.mxu0 0.0
      %2118 = vmatprep.subr.mxu0 0.0
      %2119 = vmatpush1.msra.mxu0 0.0
      %2120 = vmatprep.subr.mxu0 0.0
      %2121 = vmatpush1.msra.mxu0 0.0
      %2122 = vmatprep.subr.mxu0 0.0
      %2123 = vmatpush1.msra.mxu0 0.0
      %2124 = vmatprep.subr.mxu0 0.0
      %2125 = vmatpush1.msra.mxu0 0.0
      %2126 = vmatprep.subr.mxu0 0.0
      %2127 = vmatpush1.msra.mxu0 0.0
      %2128 = vmatprep.mubr.f32.mxu0 %v1964
      %2129 = vmatmul.mubr.f32.gmra.mrb[0].mxu0 %v1870
      %v2130 = vpop.f32.mrb[0].mxu0
      %v2131 = vadd.f32 %v1945, %v2130
      %v2132 = vpop.f32.mrb[0].mxu0
      %2133 = vmatprep.mubr.f32.mxu0 %v1967
      %2134 = vmatmul.mubr.f32.gmra.mrb[0].mxu0 %v1872
      %v2135 = vpop.f32.mrb[0].mxu0
      %v2136 = vadd.f32 %v1950, %v2135
      %v2137 = vpop.f32.mrb[0].mxu0
      %2138 = vmatprep.mubr.f32.mxu0 %v1970
      %2139 = vmatmul.mubr.f32.gmra.mrb[0].mxu0 %v1874
      %v2140 = vpop.f32.mrb[0].mxu0
      %v2141 = vadd.f32 %v1955, %v2140
      %v2142 = vpop.f32.mrb[0].mxu0
      %2143 = vmatprep.mubr.f32.mxu0 %v1973
      %2144 = vmatmul.mubr.f32.gmra.mrb[0].mxu0 %v1876
      %v2145 = vpop.f32.mrb[0].mxu0
      %v2146 = vadd.f32 %v1960, %v2145
      %v2147 = vpop.f32.mrb[0].mxu0
      %2148 = vdwg.mxu0
      %v2149 = vmax.f32 %v2042, 0.0
      %v2150 = vmax.f32 %v2044, 0.0
      %v2151 = vmax.f32 %v2131, 0.0
      %v2152 = vmax.f32 %v2048, 0.0
      %v2153 = vmax.f32 %v2050, 0.0
      %v2154 = vmax.f32 %v2136, 0.0
      %v2155 = vmax.f32 %v2054, 0.0
      %v2156 = vmax.f32 %v2056, 0.0
      %v2157 = vmax.f32 %v2141, 0.0
      %v2158 = vmax.f32 %v2060, 0.0
      %v2159 = vmax.f32 %v2062, 0.0
      %v2160 = vmax.f32 %v2146, 0.0
      %2161 = vst [vmem:[#allocation2] sm:$0xff] 0.0
      %2162 = vst [vmem:[#allocation2 + $0x8] sm:$0xff] 0.0
      %2163 = vst.msk [vmem:[#allocation2 + $0x10] sm:$0xff] %vm1557, 0.0
      %2164 = vst [vmem:[#allocation2 + $0x18] sm:$0xff] 0.0
      %2165 = vst [vmem:[#allocation2 + $0x20] sm:$0xff] 0.0
      %2166 = vst.msk [vmem:[#allocation2 + $0x28] sm:$0xff] %vm1557, 0.0
      %2167 = vst [vmem:[#allocation2 + $0x30] sm:$0xff] 0.0
      %2168 = vst [vmem:[#allocation2 + $0x38] sm:$0xff] 0.0
      %2169 = vst.msk [vmem:[#allocation2 + $0x40] sm:$0xff] %vm1557, 0.0
      %2170 = vst [vmem:[#allocation2 + $0x48] sm:$0xff] 0.0
      %2171 = vst [vmem:[#allocation2 + $0x50] sm:$0xff] 0.0
      %2172 = vst.msk [vmem:[#allocation2 + $0x58] sm:$0xff] %vm1557, 0.0
      %2173 = vst [vmem:[#allocation2 + $0x60] sm:$0xff] 0.0
      %2174 = vst [vmem:[#allocation2 + $0x68] sm:$0xff] 0.0
      %2175 = vst.msk [vmem:[#allocation2 + $0x70] sm:$0xff] %vm1557, 0.0
      %2176 = vst [vmem:[#allocation2 + $0x78] sm:$0xff] 0.0
      %2177 = vst [vmem:[#allocation2 + $0x80] sm:$0xff] 0.0
      %2178 = vst.msk [vmem:[#allocation2 + $0x88] sm:$0xff] %vm1557, 0.0
      %2179 = vst [vmem:[#allocation2 + $0x90] sm:$0xff] 0.0
      %2180 = vst [vmem:[#allocation2 + $0x98] sm:$0xff] 0.0
      %2181 = vst.msk [vmem:[#allocation2 + $0xa0] sm:$0xff] %vm1557, 0.0
      %2182 = vst [vmem:[#allocation2 + $0xa8] sm:$0xff] 0.0
      %2183 = vst [vmem:[#allocation2 + $0xb0] sm:$0xff] 0.0
      %2184 = vst.msk [vmem:[#allocation2 + $0xb8] sm:$0xff] %vm1557, 0.0
      %2185 = vst [vmem:[#allocation2 + $0xc0] sm:$0xff] 0.0
      %2186 = vst [vmem:[#allocation2 + $0xc8] sm:$0xff] 0.0
      %2187 = vst.msk [vmem:[#allocation2 + $0xd0] sm:$0xff] %vm1557, 0.0
      %2188 = vst [vmem:[#allocation2 + $0xd8] sm:$0xff] 0.0
      %2189 = vst [vmem:[#allocation2 + $0xe0] sm:$0xff] 0.0
      %2190 = vst.msk [vmem:[#allocation2 + $0xe8] sm:$0xff] %vm1557, 0.0
      %2191 = vst [vmem:[#allocation2 + $0xf0] sm:$0xff] 0.0
      %2192 = vst [vmem:[#allocation2 + $0xf8] sm:$0xff] 0.0
      %2193 = vst.msk [vmem:[#allocation2 + $0x100] sm:$0xff] %vm1557, 0.0
      %2194 = vst [vmem:[#allocation2 + $0x108] sm:$0xff] 0.0
      %2195 = vst [vmem:[#allocation2 + $0x110] sm:$0xff] 0.0
      %2196 = vst.msk [vmem:[#allocation2 + $0x118] sm:$0xff] %vm1557, 0.0
      %2197 = vst [vmem:[#allocation2 + $0x120] sm:$0xff] 0.0
      %2198 = vst [vmem:[#allocation2 + $0x128] sm:$0xff] 0.0
      %2199 = vst.msk [vmem:[#allocation2 + $0x130] sm:$0xff] %vm1557, 0.0
      %2200 = vst [vmem:[#allocation2 + $0x138] sm:$0xff] 0.0
      %2201 = vst [vmem:[#allocation2 + $0x140] sm:$0xff] 0.0
      %2202 = vst.msk [vmem:[#allocation2 + $0x148] sm:$0xff] %vm1557, 0.0
      %2203 = vst [vmem:[#allocation2 + $0x150] sm:$0xff] 0.0
      %2204 = vst [vmem:[#allocation2 + $0x158] sm:$0xff] 0.0
      %2205 = vst.msk [vmem:[#allocation2 + $0x160] sm:$0xff] %vm1557, 0.0
      %2206 = vst [vmem:[#allocation2 + $0x168] sm:$0xff] 0.0
      %2207 = vst [vmem:[#allocation2 + $0x170] sm:$0xff] 0.0
      %2208 = vst.msk [vmem:[#allocation2 + $0x178] sm:$0xff] %vm1557, 0.0
      %2209 = vst [vmem:[#allocation2 + $0x180] sm:$0xff] 0.0
      %2210 = vst [vmem:[#allocation2 + $0x188] sm:$0xff] 0.0
      %2211 = vst.msk [vmem:[#allocation2 + $0x190] sm:$0xff] %vm1557, 0.0
      %2212 = vst [vmem:[#allocation2 + $0x198] sm:$0xff] 0.0
      %2213 = vst [vmem:[#allocation2 + $0x1a0] sm:$0xff] 0.0
      %2214 = vst.msk [vmem:[#allocation2 + $0x1a8] sm:$0xff] %vm1557, 0.0
      %2215 = vst [vmem:[#allocation2 + $0x1b0] sm:$0xff] 0.0
      %2216 = vst [vmem:[#allocation2 + $0x1b8] sm:$0xff] 0.0
      %2217 = vst.msk [vmem:[#allocation2 + $0x1c0] sm:$0xff] %vm1557, 0.0
      %2218 = vst [vmem:[#allocation2 + $0x1c8] sm:$0xff] 0.0
      %2219 = vst [vmem:[#allocation2 + $0x1d0] sm:$0xff] 0.0
      %2220 = vst.msk [vmem:[#allocation2 + $0x1d8] sm:$0xff] %vm1557, 0.0
      %2233 = vrot.lane.b32.xlu0 %v2149, 2
      %v2234 = vpop.permute.xlu0 %2233
      %2235 = vrot.lane.b32.xlu0 %v2150, 2
      %v2236 = vpop.permute.xlu0 %2235
      %2237 = vrot.lane.b32.xlu0 %v2151, 2
      %v2238 = vpop.permute.xlu0 %2237
      %2239 = vrot.lane.b32.xlu0 %v2152, 2
      %v2240 = vpop.permute.xlu0 %2239
      %2241 = vrot.lane.b32.xlu0 %v2153, 2
      %v2242 = vpop.permute.xlu0 %2241
      %2243 = vrot.lane.b32.xlu0 %v2154, 2
      %v2244 = vpop.permute.xlu0 %2243
      %2245 = vrot.lane.b32.xlu0 %v2155, 2
      %v2246 = vpop.permute.xlu0 %2245
      %2247 = vrot.lane.b32.xlu0 %v2156, 2
      %v2248 = vpop.permute.xlu0 %2247
      %2249 = vrot.lane.b32.xlu0 %v2157, 2
      %v2250 = vpop.permute.xlu0 %2249
      %2251 = vrot.lane.b32.xlu0 %v2158, 2
      %v2252 = vpop.permute.xlu0 %2251
      %2253 = vrot.lane.b32.xlu0 %v2159, 2
      %v2254 = vpop.permute.xlu0 %2253
      %2255 = vrot.lane.b32.xlu0 %v2160, 2
      %v2256 = vpop.permute.xlu0 %2255
      %v2257 = vsel %vm1652, %v2234, %v2236
      %v2258 = vsel %vm1652, %v2236, %v2238
      %v2259 = vsel %vm1652, %v2240, %v2242
      %v2260 = vsel %vm1652, %v2242, %v2244
      %v2261 = vsel %vm1652, %v2246, %v2248
      %v2262 = vsel %vm1652, %v2248, %v2250
      %v2263 = vsel %vm1652, %v2252, %v2254
      %v2264 = vsel %vm1652, %v2254, %v2256
      %2277 = vst.msk [vmem:[#allocation2] sm:$0xff] %vm1673, %v2234
      %2278 = vst [vmem:[#allocation2 + $0x8] sm:$0xff] %v2257
      %2279 = vst.msk [vmem:[#allocation2 + $0x10] sm:$0xff] %vm1557, %v2258
      %2280 = vst.msk [vmem:[#allocation2 + $0x18] sm:$0xff] %vm1673, %v2240
      %2281 = vst [vmem:[#allocation2 + $0x20] sm:$0xff] %v2259
      %2282 = vst.msk [vmem:[#allocation2 + $0x28] sm:$0xff] %vm1557, %v2260
      %2283 = vst.msk [vmem:[#allocation2 + $0x30] sm:$0xff] %vm1673, %v2246
      %2284 = vst [vmem:[#allocation2 + $0x38] sm:$0xff] %v2261
      %2285 = vst.msk [vmem:[#allocation2 + $0x40] sm:$0xff] %vm1557, %v2262
      %2286 = vst.msk [vmem:[#allocation2 + $0x48] sm:$0xff] %vm1673, %v2252
      %2287 = vst [vmem:[#allocation2 + $0x50] sm:$0xff] %v2263
      %2288 = vst.msk [vmem:[#allocation2 + $0x58] sm:$0xff] %vm1557, %v2264
      %2289 = vrot.lane.b32.xlu0 %v2149, 1
      %v2290 = vpop.permute.xlu0 %2289
      %2291 = vrot.lane.b32.xlu0 %v2150, 1
      %v2292 = vpop.permute.xlu0 %2291
      %2293 = vrot.lane.b32.xlu0 %v2151, 1
      %v2294 = vpop.permute.xlu0 %2293
      %2295 = vrot.lane.b32.xlu0 %v2152, 1
      %v2296 = vpop.permute.xlu0 %2295
      %2297 = vrot.lane.b32.xlu0 %v2153, 1
      %v2298 = vpop.permute.xlu0 %2297
      %2299 = vrot.lane.b32.xlu0 %v2154, 1
      %v2300 = vpop.permute.xlu0 %2299
      %2301 = vrot.lane.b32.xlu0 %v2155, 1
      %v2302 = vpop.permute.xlu0 %2301
      %2303 = vrot.lane.b32.xlu0 %v2156, 1
      %v2304 = vpop.permute.xlu0 %2303
      %2305 = vrot.lane.b32.xlu0 %v2157, 1
      %v2306 = vpop.permute.xlu0 %2305
      %2307 = vrot.lane.b32.xlu0 %v2158, 1
      %v2308 = vpop.permute.xlu0 %2307
      %2309 = vrot.lane.b32.xlu0 %v2159, 1
      %v2310 = vpop.permute.xlu0 %2309
      %2311 = vrot.lane.b32.xlu0 %v2160, 1
      %v2312 = vpop.permute.xlu0 %2311
      %v2313 = vsel %vm1710, %v2290, %v2292
      %v2314 = vsel %vm1710, %v2292, %v2294
      %v2315 = vsel %vm1710, %v2296, %v2298
      %v2316 = vsel %vm1710, %v2298, %v2300
      %v2317 = vsel %vm1710, %v2302, %v2304
      %v2318 = vsel %vm1710, %v2304, %v2306
      %v2319 = vsel %vm1710, %v2308, %v2310
      %v2320 = vsel %vm1710, %v2310, %v2312
      %2333 = vst.msk [vmem:[#allocation2 + $0x60] sm:$0xff] %vm1731, %v2290
      %2334 = vst [vmem:[#allocation2 + $0x68] sm:$0xff] %v2313
      %2335 = vst.msk [vmem:[#allocation2 + $0x70] sm:$0xff] %vm1557, %v2314
      %2336 = vst.msk [vmem:[#allocation2 + $0x78] sm:$0xff] %vm1731, %v2296
      %2337 = vst [vmem:[#allocation2 + $0x80] sm:$0xff] %v2315
      %2338 = vst.msk [vmem:[#allocation2 + $0x88] sm:$0xff] %vm1557, %v2316
      %2339 = vst.msk [vmem:[#allocation2 + $0x90] sm:$0xff] %vm1731, %v2302
      %2340 = vst [vmem:[#allocation2 + $0x98] sm:$0xff] %v2317
      %2341 = vst.msk [vmem:[#allocation2 + $0xa0] sm:$0xff] %vm1557, %v2318
      %2342 = vst.msk [vmem:[#allocation2 + $0xa8] sm:$0xff] %vm1731, %v2308
      %2343 = vst [vmem:[#allocation2 + $0xb0] sm:$0xff] %v2319
      %2344 = vst.msk [vmem:[#allocation2 + $0xb8] sm:$0xff] %vm1557, %v2320
      %2345 = vst [vmem:[#allocation2 + $0xc0] sm:$0xff] %v2149
      %2346 = vst [vmem:[#allocation2 + $0xc8] sm:$0xff] %v2150
      %2347 = vst.msk [vmem:[#allocation2 + $0xd0] sm:$0xff] %vm1557, %v2151
      %2348 = vst [vmem:[#allocation2 + $0xd8] sm:$0xff] %v2152
      %2349 = vst [vmem:[#allocation2 + $0xe0] sm:$0xff] %v2153
      %2350 = vst.msk [vmem:[#allocation2 + $0xe8] sm:$0xff] %vm1557, %v2154
      %2351 = vst [vmem:[#allocation2 + $0xf0] sm:$0xff] %v2155
      %2352 = vst [vmem:[#allocation2 + $0xf8] sm:$0xff] %v2156
      %2353 = vst.msk [vmem:[#allocation2 + $0x100] sm:$0xff] %vm1557, %v2157
      %2354 = vst [vmem:[#allocation2 + $0x108] sm:$0xff] %v2158
      %2355 = vst [vmem:[#allocation2 + $0x110] sm:$0xff] %v2159
      %2356 = vst.msk [vmem:[#allocation2 + $0x118] sm:$0xff] %vm1557, %v2160
      %2357 = vrot.lane.b32.xlu0 %v2149, 127
      %v2358 = vpop.permute.xlu0 %2357
      %2359 = vrot.lane.b32.xlu0 %v2150, 127
      %v2360 = vpop.permute.xlu0 %2359
      %2361 = vrot.lane.b32.xlu0 %v2151, 127
      %v2362 = vpop.permute.xlu0 %2361
      %2363 = vrot.lane.b32.xlu0 %v2152, 127
      %v2364 = vpop.permute.xlu0 %2363
      %2365 = vrot.lane.b32.xlu0 %v2153, 127
      %v2366 = vpop.permute.xlu0 %2365
      %2367 = vrot.lane.b32.xlu0 %v2154, 127
      %v2368 = vpop.permute.xlu0 %2367
      %2369 = vrot.lane.b32.xlu0 %v2155, 127
      %v2370 = vpop.permute.xlu0 %2369
      %2371 = vrot.lane.b32.xlu0 %v2156, 127
      %v2372 = vpop.permute.xlu0 %2371
      %2373 = vrot.lane.b32.xlu0 %v2157, 127
      %v2374 = vpop.permute.xlu0 %2373
      %2375 = vrot.lane.b32.xlu0 %v2158, 127
      %v2376 = vpop.permute.xlu0 %2375
      %2377 = vrot.lane.b32.xlu0 %v2159, 127
      %v2378 = vpop.permute.xlu0 %2377
      %2379 = vrot.lane.b32.xlu0 %v2160, 127
      %v2380 = vpop.permute.xlu0 %2379
      %v2381 = vsel %vm1187, %v2358, %v2360
      %v2382 = vsel %vm1187, %v2360, %v2362
      %v2383 = vsel %vm1187, %v2364, %v2366
      %v2384 = vsel %vm1187, %v2366, %v2368
      %v2385 = vsel %vm1187, %v2370, %v2372
      %v2386 = vsel %vm1187, %v2372, %v2374
      %v2387 = vsel %vm1187, %v2376, %v2378
      %v2388 = vsel %vm1187, %v2378, %v2380
      %2401 = vst [vmem:[#allocation2 + $0x120] sm:$0xff] %v2381
      %2402 = vst [vmem:[#allocation2 + $0x128] sm:$0xff] %v2382
      %2403 = vst.msk [vmem:[#allocation2 + $0x130] sm:$0xff] %vm1802, %v2362
      %2404 = vst [vmem:[#allocation2 + $0x138] sm:$0xff] %v2383
      %2405 = vst [vmem:[#allocation2 + $0x140] sm:$0xff] %v2384
      %2406 = vst.msk [vmem:[#allocation2 + $0x148] sm:$0xff] %vm1802, %v2368
      %2407 = vst [vmem:[#allocation2 + $0x150] sm:$0xff] %v2385
      %2408 = vst [vmem:[#allocation2 + $0x158] sm:$0xff] %v2386
      %2409 = vst.msk [vmem:[#allocation2 + $0x160] sm:$0xff] %vm1802, %v2374
      %2410 = vst [vmem:[#allocation2 + $0x168] sm:$0xff] %v2387
      %2411 = vst [vmem:[#allocation2 + $0x170] sm:$0xff] %v2388
      %2412 = vst.msk [vmem:[#allocation2 + $0x178] sm:$0xff] %vm1802, %v2380
      %2413 = vrot.lane.b32.xlu0 %v2149, 126
      %v2414 = vpop.permute.xlu0 %2413
      %2415 = vrot.lane.b32.xlu0 %v2150, 126
      %v2416 = vpop.permute.xlu0 %2415
      %2417 = vrot.lane.b32.xlu0 %v2151, 126
      %v2418 = vpop.permute.xlu0 %2417
      %2419 = vrot.lane.b32.xlu0 %v2152, 126
      %v2420 = vpop.permute.xlu0 %2419
      %2421 = vrot.lane.b32.xlu0 %v2153, 126
      %v2422 = vpop.permute.xlu0 %2421
      %2423 = vrot.lane.b32.xlu0 %v2154, 126
      %v2424 = vpop.permute.xlu0 %2423
      %2425 = vrot.lane.b32.xlu0 %v2155, 126
      %v2426 = vpop.permute.xlu0 %2425
      %2427 = vrot.lane.b32.xlu0 %v2156, 126
      %v2428 = vpop.permute.xlu0 %2427
      %2429 = vrot.lane.b32.xlu0 %v2157, 126
      %v2430 = vpop.permute.xlu0 %2429
      %2431 = vrot.lane.b32.xlu0 %v2158, 126
      %v2432 = vpop.permute.xlu0 %2431
      %2433 = vrot.lane.b32.xlu0 %v2159, 126
      %v2434 = vpop.permute.xlu0 %2433
      %2435 = vrot.lane.b32.xlu0 %v2160, 126
      %v2436 = vpop.permute.xlu0 %2435
      %v2437 = vsel %vm1284, %v2414, %v2416
      %v2438 = vsel %vm1284, %v2416, %v2418
      %v2439 = vsel %vm1284, %v2420, %v2422
      %v2440 = vsel %vm1284, %v2422, %v2424
      %v2441 = vsel %vm1284, %v2426, %v2428
      %v2442 = vsel %vm1284, %v2428, %v2430
      %v2443 = vsel %vm1284, %v2432, %v2434
      %v2444 = vsel %vm1284, %v2434, %v2436
      %2457 = vst [vmem:[#allocation2 + $0x180] sm:$0xff] %v2437
      %2458 = vst [vmem:[#allocation2 + $0x188] sm:$0xff] %v2438
      %2459 = vst.msk [vmem:[#allocation2 + $0x190] sm:$0xff] %vm1859, %v2418
      %2460 = vst [vmem:[#allocation2 + $0x198] sm:$0xff] %v2439
      %2461 = vst [vmem:[#allocation2 + $0x1a0] sm:$0xff] %v2440
      %2462 = vst.msk [vmem:[#allocation2 + $0x1a8] sm:$0xff] %vm1859, %v2424
      %2463 = vst [vmem:[#allocation2 + $0x1b0] sm:$0xff] %v2441
      %2464 = vst [vmem:[#allocation2 + $0x1b8] sm:$0xff] %v2442
      %2465 = vst.msk [vmem:[#allocation2 + $0x1c0] sm:$0xff] %vm1859, %v2430
      %2466 = vst [vmem:[#allocation2 + $0x1c8] sm:$0xff] %v2443
      %2467 = vst [vmem:[#allocation2 + $0x1d0] sm:$0xff] %v2444
      %2468 = vst.msk [vmem:[#allocation2 + $0x1d8] sm:$0xff] %vm1859, %v2436
      %v2469 = vld [vmem:[%s11] sm:$0xff]
      %v2470 = vld [vmem:[%s11 + $0x8] sm:$0xff]
      %v2471 = vld [vmem:[%s11 + $0x10] sm:$0xff]
      %v2472 = vld [vmem:[%s11 + $0x18] sm:$0xff]
      %v2473 = vld [vmem:[%s11 + $0x20] sm:$0xff]
      %v2474 = vld [vmem:[%s11 + $0x28] sm:$0xff]
      %v2475 = vld [vmem:[%s11 + $0x30] sm:$0xff]
      %v2476 = vld [vmem:[%s11 + $0x38] sm:$0xff]
      %v2477 = vld [vmem:[#allocation2] sm:$0xff]
      %v2478 = vld [vmem:[#allocation2 + $0x8] sm:$0xff]
      %v2479 = vld [vmem:[#allocation2 + $0x10] sm:$0xff]
      %v2480 = vld [vmem:[#allocation2 + $0x18] sm:$0xff]
      %v2481 = vld [vmem:[#allocation2 + $0x20] sm:$0xff]
      %v2482 = vld [vmem:[#allocation2 + $0x28] sm:$0xff]
      %v2483 = vld [vmem:[#allocation2 + $0x30] sm:$0xff]
      %v2484 = vld [vmem:[#allocation2 + $0x38] sm:$0xff]
      %v2485 = vld [vmem:[#allocation2 + $0x40] sm:$0xff]
      %v2486 = vld [vmem:[#allocation2 + $0x48] sm:$0xff]
      %v2487 = vld [vmem:[#allocation2 + $0x50] sm:$0xff]
      %v2488 = vld [vmem:[#allocation2 + $0x58] sm:$0xff]
      %v2489 = vld [vmem:[#allocation2 + $0x60] sm:$0xff]
      %v2490 = vld [vmem:[#allocation2 + $0x68] sm:$0xff]
      %v2491 = vld [vmem:[#allocation2 + $0x70] sm:$0xff]
      %v2492 = vld [vmem:[#allocation2 + $0x78] sm:$0xff]
      %v2493 = vld [vmem:[#allocation2 + $0x80] sm:$0xff]
      %v2494 = vld [vmem:[#allocation2 + $0x88] sm:$0xff]
      %v2495 = vld [vmem:[#allocation2 + $0x90] sm:$0xff]
      %v2496 = vld [vmem:[#allocation2 + $0x98] sm:$0xff]
      %v2497 = vld [vmem:[#allocation2 + $0xa0] sm:$0xff]
      %v2498 = vld [vmem:[#allocation2 + $0xa8] sm:$0xff]
      %v2499 = vld [vmem:[#allocation2 + $0xb0] sm:$0xff]
      %v2500 = vld [vmem:[#allocation2 + $0xb8] sm:$0xff]
      %v2501 = vld [vmem:[#allocation2 + $0xc0] sm:$0xff]
      %v2502 = vld [vmem:[#allocation2 + $0xc8] sm:$0xff]
      %v2503 = vld [vmem:[#allocation2 + $0xd0] sm:$0xff]
      %v2504 = vld [vmem:[#allocation2 + $0xd8] sm:$0xff]
      %v2505 = vld [vmem:[#allocation2 + $0xe0] sm:$0xff]
      %v2506 = vld [vmem:[#allocation2 + $0xe8] sm:$0xff]
      %v2507 = vld [vmem:[#allocation2 + $0xf0] sm:$0xff]
      %v2508 = vld [vmem:[#allocation2 + $0xf8] sm:$0xff]
      %v2509 = vld [vmem:[#allocation2 + $0x100] sm:$0xff]
      %v2510 = vld [vmem:[#allocation2 + $0x108] sm:$0xff]
      %v2511 = vld [vmem:[#allocation2 + $0x110] sm:$0xff]
      %v2512 = vld [vmem:[#allocation2 + $0x118] sm:$0xff]
      %v2513 = vld [vmem:[#allocation2 + $0x120] sm:$0xff]
      %v2514 = vld [vmem:[#allocation2 + $0x128] sm:$0xff]
      %v2515 = vld [vmem:[#allocation2 + $0x130] sm:$0xff]
      %v2516 = vld [vmem:[#allocation2 + $0x138] sm:$0xff]
      %v2517 = vld [vmem:[#allocation2 + $0x140] sm:$0xff]
      %v2518 = vld [vmem:[#allocation2 + $0x148] sm:$0xff]
      %v2519 = vld [vmem:[#allocation2 + $0x150] sm:$0xff]
      %v2520 = vld [vmem:[#allocation2 + $0x158] sm:$0xff]
      %v2521 = vld [vmem:[#allocation2 + $0x160] sm:$0xff]
      %v2522 = vld [vmem:[#allocation2 + $0x168] sm:$0xff]
      %v2523 = vld [vmem:[#allocation2 + $0x170] sm:$0xff]
      %v2524 = vld [vmem:[#allocation2 + $0x178] sm:$0xff]
      %v2525 = vld [vmem:[#allocation2 + $0x180] sm:$0xff]
      %v2526 = vld [vmem:[#allocation2 + $0x188] sm:$0xff]
      %v2527 = vld [vmem:[#allocation2 + $0x190] sm:$0xff]
      %v2528 = vld [vmem:[#allocation2 + $0x198] sm:$0xff]
      %v2529 = vld [vmem:[#allocation2 + $0x1a0] sm:$0xff]
      %v2530 = vld [vmem:[#allocation2 + $0x1a8] sm:$0xff]
      %v2531 = vld [vmem:[#allocation2 + $0x1b0] sm:$0xff]
      %v2532 = vld [vmem:[#allocation2 + $0x1b8] sm:$0xff]
      %v2533 = vld [vmem:[#allocation2 + $0x1c0] sm:$0xff]
      %v2534 = vld [vmem:[#allocation2 + $0x1c8] sm:$0xff]
      %v2535 = vld [vmem:[#allocation2 + $0x1d0] sm:$0xff]
      %v2536 = vld [vmem:[#allocation2 + $0x1d8] sm:$0xff]
      %v2537 = vld [vmem:[%s13] sm:$0xff]
      %v2538 = vld [vmem:[%s13 + $0x8] sm:$0xff]
      %v2539 = vld [vmem:[%s13 + $0x10] sm:$0xff]
      %v2540 = vld [vmem:[%s13 + $0x18] sm:$0xff]
      %2542 = vset.pattern.permute.xlu0 0
      %2543 = vperm.xlu0 %2542, %v2537
      %v2544 = vpop.permute.xlu0 %2543
      %2547 = vset.pattern.permute.xlu0 0
      %2548 = vperm.xlu0 %2547, %v2538
      %v2549 = vpop.permute.xlu0 %2548
      %2552 = vset.pattern.permute.xlu0 0
      %2553 = vperm.xlu0 %2552, %v2539
      %v2554 = vpop.permute.xlu0 %2553
      %2557 = vset.pattern.permute.xlu0 0
      %2558 = vperm.xlu0 %2557, %v2540
      %v2559 = vpop.permute.xlu0 %2558
      %v2562 = vsel %vm1962, %v2470, 0
      %v2565 = vsel %vm1962, %v2472, 0
      %v2568 = vsel %vm1962, %v2474, 0
      %v2571 = vsel %vm1962, %v2476, 0
      %2573 = vmatprep.subr.mxu0 %v2478
      %2574 = vmatpush1.msra.mxu0 %v2477
      %2575 = vmatprep.subr.mxu0 %v2481
      %2576 = vmatpush1.msra.mxu0 %v2480
      %2577 = vmatprep.subr.mxu0 %v2484
      %2578 = vmatpush1.msra.mxu0 %v2483
      %2579 = vmatprep.subr.mxu0 %v2487
      %2580 = vmatpush1.msra.mxu0 %v2486
      %2581 = vmatprep.subr.mxu0 %v2490
      %2582 = vmatpush1.msra.mxu0 %v2489
      %2583 = vmatprep.subr.mxu0 %v2493
      %2584 = vmatpush1.msra.mxu0 %v2492
      %2585 = vmatprep.subr.mxu0 %v2496
      %2586 = vmatpush1.msra.mxu0 %v2495
      %2587 = vmatprep.subr.mxu0 %v2499
      %2588 = vmatpush1.msra.mxu0 %v2498
      %2589 = vmatprep.subr.mxu0 %v2502
      %2590 = vmatpush1.msra.mxu0 %v2501
      %2591 = vmatprep.subr.mxu0 %v2505
      %2592 = vmatpush1.msra.mxu0 %v2504
      %2593 = vmatprep.subr.mxu0 %v2508
      %2594 = vmatpush1.msra.mxu0 %v2507
      %2595 = vmatprep.subr.mxu0 %v2511
      %2596 = vmatpush1.msra.mxu0 %v2510
      %2597 = vmatprep.subr.mxu0 %v2514
      %2598 = vmatpush1.msra.mxu0 %v2513
      %2599 = vmatprep.subr.mxu0 %v2517
      %2600 = vmatpush1.msra.mxu0 %v2516
      %2601 = vmatprep.subr.mxu0 %v2520
      %2602 = vmatpush1.msra.mxu0 %v2519
      %2603 = vmatprep.subr.mxu0 %v2523
      %2604 = vmatpush1.msra.mxu0 %v2522
      %2605 = vmatprep.subr.mxu0 %v2526
      %2606 = vmatpush1.msra.mxu0 %v2525
      %2607 = vmatprep.subr.mxu0 %v2529
      %2608 = vmatpush1.msra.mxu0 %v2528
      %2609 = vmatprep.subr.mxu0 %v2532
      %2610 = vmatpush1.msra.mxu0 %v2531
      %2611 = vmatprep.subr.mxu0 %v2535
      %2612 = vmatpush1.msra.mxu0 %v2534
      %2613 = vmatprep.subr.mxu0 0.0
      %2614 = vmatpush1.msra.mxu0 0.0
      %2615 = vmatprep.subr.mxu0 0.0
      %2616 = vmatpush1.msra.mxu0 0.0
      %2617 = vmatprep.subr.mxu0 0.0
      %2618 = vmatpush1.msra.mxu0 0.0
      %2619 = vmatprep.subr.mxu0 0.0
      %2620 = vmatpush1.msra.mxu0 0.0
      %2621 = vmatprep.subr.mxu0 0.0
      %2622 = vmatpush1.msra.mxu0 0.0
      %2623 = vmatprep.subr.mxu0 0.0
      %2624 = vmatpush1.msra.mxu0 0.0
      %2625 = vmatprep.subr.mxu0 0.0
      %2626 = vmatpush1.msra.mxu0 0.0
      %2627 = vmatprep.subr.mxu0 0.0
      %2628 = vmatpush1.msra.mxu0 0.0
      %2629 = vmatprep.subr.mxu0 0.0
      %2630 = vmatpush1.msra.mxu0 0.0
      %2631 = vmatprep.subr.mxu0 0.0
      %2632 = vmatpush1.msra.mxu0 0.0
      %2633 = vmatprep.subr.mxu0 0.0
      %2634 = vmatpush1.msra.mxu0 0.0
      %2635 = vmatprep.subr.mxu0 0.0
      %2636 = vmatpush1.msra.mxu0 0.0
      %2637 = vmatprep.mubr.f32.mxu0 %v2562
      %2638 = vmatmul.mubr.f32.gmra.mrb[0].mxu0 %v2469
      %v2639 = vpop.f32.mrb[0].mxu0
      %v2640 = vadd.f32 %v2544, %v2639
      %v2641 = vpop.f32.mrb[0].mxu0
      %v2642 = vadd.f32 %v2544, %v2641
      %2643 = vmatprep.mubr.f32.mxu0 %v2565
      %2644 = vmatmul.mubr.f32.gmra.mrb[0].mxu0 %v2471
      %v2645 = vpop.f32.mrb[0].mxu0
      %v2646 = vadd.f32 %v2549, %v2645
      %v2647 = vpop.f32.mrb[0].mxu0
      %v2648 = vadd.f32 %v2549, %v2647
      %2649 = vmatprep.mubr.f32.mxu0 %v2568
      %2650 = vmatmul.mubr.f32.gmra.mrb[0].mxu0 %v2473
      %v2651 = vpop.f32.mrb[0].mxu0
      %v2652 = vadd.f32 %v2554, %v2651
      %v2653 = vpop.f32.mrb[0].mxu0
      %v2654 = vadd.f32 %v2554, %v2653
      %2655 = vmatprep.mubr.f32.mxu0 %v2571
      %2656 = vmatmul.mubr.f32.gmra.mrb[0].mxu0 %v2475
      %v2657 = vpop.f32.mrb[0].mxu0
      %v2658 = vadd.f32 %v2559, %v2657
      %v2659 = vpop.f32.mrb[0].mxu0
      %v2660 = vadd.f32 %v2559, %v2659
      %2661 = vdwg.mxu0
      %2662 = vmatprep.subr.mxu0 0.0
      %2663 = vmatpush1.msra.mxu0 %v2479
      %2664 = vmatprep.subr.mxu0 0.0
      %2665 = vmatpush1.msra.mxu0 %v2482
      %2666 = vmatprep.subr.mxu0 0.0
      %2667 = vmatpush1.msra.mxu0 %v2485
      %2668 = vmatprep.subr.mxu0 0.0
      %2669 = vmatpush1.msra.mxu0 %v2488
      %2670 = vmatprep.subr.mxu0 0.0
      %2671 = vmatpush1.msra.mxu0 %v2491
      %2672 = vmatprep.subr.mxu0 0.0
      %2673 = vmatpush1.msra.mxu0 %v2494
      %2674 = vmatprep.subr.mxu0 0.0
      %2675 = vmatpush1.msra.mxu0 %v2497
      %2676 = vmatprep.subr.mxu0 0.0
      %2677 = vmatpush1.msra.mxu0 %v2500
      %2678 = vmatprep.subr.mxu0 0.0
      %2679 = vmatpush1.msra.mxu0 %v2503
      %2680 = vmatprep.subr.mxu0 0.0
      %2681 = vmatpush1.msra.mxu0 %v2506
      %2682 = vmatprep.subr.mxu0 0.0
      %2683 = vmatpush1.msra.mxu0 %v2509
      %2684 = vmatprep.subr.mxu0 0.0
      %2685 = vmatpush1.msra.mxu0 %v2512
      %2686 = vmatprep.subr.mxu0 0.0
      %2687 = vmatpush1.msra.mxu0 %v2515
      %2688 = vmatprep.subr.mxu0 0.0
      %2689 = vmatpush1.msra.mxu0 %v2518
      %2690 = vmatprep.subr.mxu0 0.0
      %2691 = vmatpush1.msra.mxu0 %v2521
      %2692 = vmatprep.subr.mxu0 0.0
      %2693 = vmatpush1.msra.mxu0 %v2524
      %2694 = vmatprep.subr.mxu0 0.0
      %2695 = vmatpush1.msra.mxu0 %v2527
      %2696 = vmatprep.subr.mxu0 0.0
      %2697 = vmatpush1.msra.mxu0 %v2530
      %2698 = vmatprep.subr.mxu0 0.0
      %2699 = vmatpush1.msra.mxu0 %v2533
      %2700 = vmatprep.subr.mxu0 0.0
      %2701 = vmatpush1.msra.mxu0 %v2536
      %2702 = vmatprep.subr.mxu0 0.0
      %2703 = vmatpush1.msra.mxu0 0.0
      %2704 = vmatprep.subr.mxu0 0.0
      %2705 = vmatpush1.msra.mxu0 0.0
      %2706 = vmatprep.subr.mxu0 0.0
      %2707 = vmatpush1.msra.mxu0 0.0
      %2708 = vmatprep.subr.mxu0 0.0
      %2709 = vmatpush1.msra.mxu0 0.0
      %2710 = vmatprep.subr.mxu0 0.0
      %2711 = vmatpush1.msra.mxu0 0.0
      %2712 = vmatprep.subr.mxu0 0.0
      %2713 = vmatpush1.msra.mxu0 0.0
      %2714 = vmatprep.subr.mxu0 0.0
      %2715 = vmatpush1.msra.mxu0 0.0
      %2716 = vmatprep.subr.mxu0 0.0
      %2717 = vmatpush1.msra.mxu0 0.0
      %2718 = vmatprep.subr.mxu0 0.0
      %2719 = vmatpush1.msra.mxu0 0.0
      %2720 = vmatprep.subr.mxu0 0.0
      %2721 = vmatpush1.msra.mxu0 0.0
      %2722 = vmatprep.subr.mxu0 0.0
      %2723 = vmatpush1.msra.mxu0 0.0
      %2724 = vmatprep.subr.mxu0 0.0
      %2725 = vmatpush1.msra.mxu0 0.0
      %2726 = vmatprep.mubr.f32.mxu0 %v2562
      %2727 = vmatmul.mubr.f32.gmra.mrb[0].mxu0 %v2469
      %v2728 = vpop.f32.mrb[0].mxu0
      %v2729 = vadd.f32 %v2544, %v2728
      %v2730 = vpop.f32.mrb[0].mxu0
      %2731 = vmatprep.mubr.f32.mxu0 %v2565
      %2732 = vmatmul.mubr.f32.gmra.mrb[0].mxu0 %v2471
      %v2733 = vpop.f32.mrb[0].mxu0
      %v2734 = vadd.f32 %v2549, %v2733
      %v2735 = vpop.f32.mrb[0].mxu0
      %2736 = vmatprep.mubr.f32.mxu0 %v2568
      %2737 = vmatmul.mubr.f32.gmra.mrb[0].mxu0 %v2473
      %v2738 = vpop.f32.mrb[0].mxu0
      %v2739 = vadd.f32 %v2554, %v2738
      %v2740 = vpop.f32.mrb[0].mxu0
      %2741 = vmatprep.mubr.f32.mxu0 %v2571
      %2742 = vmatmul.mubr.f32.gmra.mrb[0].mxu0 %v2475
      %v2743 = vpop.f32.mrb[0].mxu0
      %v2744 = vadd.f32 %v2559, %v2743
      %v2745 = vpop.f32.mrb[0].mxu0
      %2746 = vdwg.mxu0
      %v2747 = vadd.f32 %v2640, %v1543
      %v2748 = vadd.f32 %v2642, %v1544
      %v2749 = vadd.f32 %v2729, %v1545
      %v2750 = vadd.f32 %v2646, %v1546
      %v2751 = vadd.f32 %v2648, %v1547
      %v2752 = vadd.f32 %v2734, %v1548
      %v2753 = vadd.f32 %v2652, %v1549
      %v2754 = vadd.f32 %v2654, %v1550
      %v2755 = vadd.f32 %v2739, %v1551
      %v2756 = vadd.f32 %v2658, %v1552
      %v2757 = vadd.f32 %v2660, %v1553
      %v2758 = vadd.f32 %v2744, %v1554
      %v2759 = vmax.f32 %v2747, 0.0
      %v2760 = vmax.f32 %v2748, 0.0
      %v2761 = vmax.f32 %v2749, 0.0
      %v2762 = vmax.f32 %v2750, 0.0
      %v2763 = vmax.f32 %v2751, 0.0
      %v2764 = vmax.f32 %v2752, 0.0
      %v2765 = vmax.f32 %v2753, 0.0
      %v2766 = vmax.f32 %v2754, 0.0
      %v2767 = vmax.f32 %v2755, 0.0
      %v2768 = vmax.f32 %v2756, 0.0
      %v2769 = vmax.f32 %v2757, 0.0
      %v2770 = vmax.f32 %v2758, 0.0
      %2771 = vst [vmem:[#allocation2] sm:$0xff] 0.0
      %2772 = vst [vmem:[#allocation2 + $0x8] sm:$0xff] 0.0
      %2773 = vst.msk [vmem:[#allocation2 + $0x10] sm:$0xff] %vm1557, 0.0
      %2774 = vst [vmem:[#allocation2 + $0x18] sm:$0xff] 0.0
      %2775 = vst [vmem:[#allocation2 + $0x20] sm:$0xff] 0.0
      %2776 = vst.msk [vmem:[#allocation2 + $0x28] sm:$0xff] %vm1557, 0.0
      %2777 = vst [vmem:[#allocation2 + $0x30] sm:$0xff] 0.0
      %2778 = vst [vmem:[#allocation2 + $0x38] sm:$0xff] 0.0
      %2779 = vst.msk [vmem:[#allocation2 + $0x40] sm:$0xff] %vm1557, 0.0
      %2780 = vst [vmem:[#allocation2 + $0x48] sm:$0xff] 0.0
      %2781 = vst [vmem:[#allocation2 + $0x50] sm:$0xff] 0.0
      %2782 = vst.msk [vmem:[#allocation2 + $0x58] sm:$0xff] %vm1557, 0.0
      %2783 = vst [vmem:[#allocation2 + $0x60] sm:$0xff] 0.0
      %2784 = vst [vmem:[#allocation2 + $0x68] sm:$0xff] 0.0
      %2785 = vst.msk [vmem:[#allocation2 + $0x70] sm:$0xff] %vm1557, 0.0
      %2786 = vst [vmem:[#allocation2 + $0x78] sm:$0xff] 0.0
      %2787 = vst [vmem:[#allocation2 + $0x80] sm:$0xff] 0.0
      %2788 = vst.msk [vmem:[#allocation2 + $0x88] sm:$0xff] %vm1557, 0.0
      %2789 = vst [vmem:[#allocation2 + $0x90] sm:$0xff] 0.0
      %2790 = vst [vmem:[#allocation2 + $0x98] sm:$0xff] 0.0
      %2791 = vst.msk [vmem:[#allocation2 + $0xa0] sm:$0xff] %vm1557, 0.0
      %2792 = vst [vmem:[#allocation2 + $0xa8] sm:$0xff] 0.0
      %2793 = vst [vmem:[#allocation2 + $0xb0] sm:$0xff] 0.0
      %2794 = vst.msk [vmem:[#allocation2 + $0xb8] sm:$0xff] %vm1557, 0.0
      %2795 = vst [vmem:[#allocation2 + $0xc0] sm:$0xff] 0.0
      %2796 = vst [vmem:[#allocation2 + $0xc8] sm:$0xff] 0.0
      %2797 = vst.msk [vmem:[#allocation2 + $0xd0] sm:$0xff] %vm1557, 0.0
      %2798 = vst [vmem:[#allocation2 + $0xd8] sm:$0xff] 0.0
      %2799 = vst [vmem:[#allocation2 + $0xe0] sm:$0xff] 0.0
      %2800 = vst.msk [vmem:[#allocation2 + $0xe8] sm:$0xff] %vm1557, 0.0
      %2801 = vst [vmem:[#allocation2 + $0xf0] sm:$0xff] 0.0
      %2802 = vst [vmem:[#allocation2 + $0xf8] sm:$0xff] 0.0
      %2803 = vst.msk [vmem:[#allocation2 + $0x100] sm:$0xff] %vm1557, 0.0
      %2804 = vst [vmem:[#allocation2 + $0x108] sm:$0xff] 0.0
      %2805 = vst [vmem:[#allocation2 + $0x110] sm:$0xff] 0.0
      %2806 = vst.msk [vmem:[#allocation2 + $0x118] sm:$0xff] %vm1557, 0.0
      %2807 = vst [vmem:[#allocation2 + $0x120] sm:$0xff] 0.0
      %2808 = vst [vmem:[#allocation2 + $0x128] sm:$0xff] 0.0
      %2809 = vst.msk [vmem:[#allocation2 + $0x130] sm:$0xff] %vm1557, 0.0
      %2810 = vst [vmem:[#allocation2 + $0x138] sm:$0xff] 0.0
      %2811 = vst [vmem:[#allocation2 + $0x140] sm:$0xff] 0.0
      %2812 = vst.msk [vmem:[#allocation2 + $0x148] sm:$0xff] %vm1557, 0.0
      %2813 = vst [vmem:[#allocation2 + $0x150] sm:$0xff] 0.0
      %2814 = vst [vmem:[#allocation2 + $0x158] sm:$0xff] 0.0
      %2815 = vst.msk [vmem:[#allocation2 + $0x160] sm:$0xff] %vm1557, 0.0
      %2816 = vst [vmem:[#allocation2 + $0x168] sm:$0xff] 0.0
      %2817 = vst [vmem:[#allocation2 + $0x170] sm:$0xff] 0.0
      %2818 = vst.msk [vmem:[#allocation2 + $0x178] sm:$0xff] %vm1557, 0.0
      %2819 = vst [vmem:[#allocation2 + $0x180] sm:$0xff] 0.0
      %2820 = vst [vmem:[#allocation2 + $0x188] sm:$0xff] 0.0
      %2821 = vst.msk [vmem:[#allocation2 + $0x190] sm:$0xff] %vm1557, 0.0
      %2822 = vst [vmem:[#allocation2 + $0x198] sm:$0xff] 0.0
      %2823 = vst [vmem:[#allocation2 + $0x1a0] sm:$0xff] 0.0
      %2824 = vst.msk [vmem:[#allocation2 + $0x1a8] sm:$0xff] %vm1557, 0.0
      %2825 = vst [vmem:[#allocation2 + $0x1b0] sm:$0xff] 0.0
      %2826 = vst [vmem:[#allocation2 + $0x1b8] sm:$0xff] 0.0
      %2827 = vst.msk [vmem:[#allocation2 + $0x1c0] sm:$0xff] %vm1557, 0.0
      %2828 = vst [vmem:[#allocation2 + $0x1c8] sm:$0xff] 0.0
      %2829 = vst [vmem:[#allocation2 + $0x1d0] sm:$0xff] 0.0
      %2830 = vst.msk [vmem:[#allocation2 + $0x1d8] sm:$0xff] %vm1557, 0.0
      %2843 = vrot.lane.b32.xlu0 %v2759, 1
      %v2844 = vpop.permute.xlu0 %2843
      %2845 = vrot.lane.b32.xlu0 %v2760, 1
      %v2846 = vpop.permute.xlu0 %2845
      %2847 = vrot.lane.b32.xlu0 %v2761, 1
      %v2848 = vpop.permute.xlu0 %2847
      %2849 = vrot.lane.b32.xlu0 %v2762, 1
      %v2850 = vpop.permute.xlu0 %2849
      %2851 = vrot.lane.b32.xlu0 %v2763, 1
      %v2852 = vpop.permute.xlu0 %2851
      %2853 = vrot.lane.b32.xlu0 %v2764, 1
      %v2854 = vpop.permute.xlu0 %2853
      %2855 = vrot.lane.b32.xlu0 %v2765, 1
      %v2856 = vpop.permute.xlu0 %2855
      %2857 = vrot.lane.b32.xlu0 %v2766, 1
      %v2858 = vpop.permute.xlu0 %2857
      %2859 = vrot.lane.b32.xlu0 %v2767, 1
      %v2860 = vpop.permute.xlu0 %2859
      %2861 = vrot.lane.b32.xlu0 %v2768, 1
      %v2862 = vpop.permute.xlu0 %2861
      %2863 = vrot.lane.b32.xlu0 %v2769, 1
      %v2864 = vpop.permute.xlu0 %2863
      %2865 = vrot.lane.b32.xlu0 %v2770, 1
      %v2866 = vpop.permute.xlu0 %2865
      %v2867 = vsel %vm1710, %v2844, %v2846
      %v2868 = vsel %vm1710, %v2846, %v2848
      %v2869 = vsel %vm1710, %v2850, %v2852
      %v2870 = vsel %vm1710, %v2852, %v2854
      %v2871 = vsel %vm1710, %v2856, %v2858
      %v2872 = vsel %vm1710, %v2858, %v2860
      %v2873 = vsel %vm1710, %v2862, %v2864
      %v2874 = vsel %vm1710, %v2864, %v2866
      %2887 = vst.msk [vmem:[#allocation2] sm:$0xff] %vm1731, %v2844
      %2888 = vst [vmem:[#allocation2 + $0x8] sm:$0xff] %v2867
      %2889 = vst.msk [vmem:[#allocation2 + $0x10] sm:$0xff] %vm1557, %v2868
      %2890 = vst.msk [vmem:[#allocation2 + $0x18] sm:$0xff] %vm1731, %v2850
      %2891 = vst [vmem:[#allocation2 + $0x20] sm:$0xff] %v2869
      %2892 = vst.msk [vmem:[#allocation2 + $0x28] sm:$0xff] %vm1557, %v2870
      %2893 = vst.msk [vmem:[#allocation2 + $0x30] sm:$0xff] %vm1731, %v2856
      %2894 = vst [vmem:[#allocation2 + $0x38] sm:$0xff] %v2871
      %2895 = vst.msk [vmem:[#allocation2 + $0x40] sm:$0xff] %vm1557, %v2872
      %2896 = vst.msk [vmem:[#allocation2 + $0x48] sm:$0xff] %vm1731, %v2862
      %2897 = vst [vmem:[#allocation2 + $0x50] sm:$0xff] %v2873
      %2898 = vst.msk [vmem:[#allocation2 + $0x58] sm:$0xff] %vm1557, %v2874
      %2899 = vst [vmem:[#allocation2 + $0x60] sm:$0xff] %v2759
      %2900 = vst [vmem:[#allocation2 + $0x68] sm:$0xff] %v2760
      %2901 = vst.msk [vmem:[#allocation2 + $0x70] sm:$0xff] %vm1557, %v2761
      %2902 = vst [vmem:[#allocation2 + $0x78] sm:$0xff] %v2762
      %2903 = vst [vmem:[#allocation2 + $0x80] sm:$0xff] %v2763
      %2904 = vst.msk [vmem:[#allocation2 + $0x88] sm:$0xff] %vm1557, %v2764
      %2905 = vst [vmem:[#allocation2 + $0x90] sm:$0xff] %v2765
      %2906 = vst [vmem:[#allocation2 + $0x98] sm:$0xff] %v2766
      %2907 = vst.msk [vmem:[#allocation2 + $0xa0] sm:$0xff] %vm1557, %v2767
      %2908 = vst [vmem:[#allocation2 + $0xa8] sm:$0xff] %v2768
      %2909 = vst [vmem:[#allocation2 + $0xb0] sm:$0xff] %v2769
      %2910 = vst.msk [vmem:[#allocation2 + $0xb8] sm:$0xff] %vm1557, %v2770
      %2911 = vrot.lane.b32.xlu0 %v2759, 127
      %v2912 = vpop.permute.xlu0 %2911
      %2913 = vrot.lane.b32.xlu0 %v2760, 127
      %v2914 = vpop.permute.xlu0 %2913
      %2915 = vrot.lane.b32.xlu0 %v2761, 127
      %v2916 = vpop.permute.xlu0 %2915
      %2917 = vrot.lane.b32.xlu0 %v2762, 127
      %v2918 = vpop.permute.xlu0 %2917
      %2919 = vrot.lane.b32.xlu0 %v2763, 127
      %v2920 = vpop.permute.xlu0 %2919
      %2921 = vrot.lane.b32.xlu0 %v2764, 127
      %v2922 = vpop.permute.xlu0 %2921
      %2923 = vrot.lane.b32.xlu0 %v2765, 127
      %v2924 = vpop.permute.xlu0 %2923
      %2925 = vrot.lane.b32.xlu0 %v2766, 127
      %v2926 = vpop.permute.xlu0 %2925
      %2927 = vrot.lane.b32.xlu0 %v2767, 127
      %v2928 = vpop.permute.xlu0 %2927
      %2929 = vrot.lane.b32.xlu0 %v2768, 127
      %v2930 = vpop.permute.xlu0 %2929
      %2931 = vrot.lane.b32.xlu0 %v2769, 127
      %v2932 = vpop.permute.xlu0 %2931
      %2933 = vrot.lane.b32.xlu0 %v2770, 127
      %v2934 = vpop.permute.xlu0 %2933
      %v2935 = vsel %vm1187, %v2912, %v2914
      %v2936 = vsel %vm1187, %v2914, %v2916
      %v2937 = vsel %vm1187, %v2918, %v2920
      %v2938 = vsel %vm1187, %v2920, %v2922
      %v2939 = vsel %vm1187, %v2924, %v2926
      %v2940 = vsel %vm1187, %v2926, %v2928
      %v2941 = vsel %vm1187, %v2930, %v2932
      %v2942 = vsel %vm1187, %v2932, %v2934
      %2955 = vst [vmem:[#allocation2 + $0xc0] sm:$0xff] %v2935
      %2956 = vst [vmem:[#allocation2 + $0xc8] sm:$0xff] %v2936
      %2957 = vst.msk [vmem:[#allocation2 + $0xd0] sm:$0xff] %vm1802, %v2916
      %2958 = vst [vmem:[#allocation2 + $0xd8] sm:$0xff] %v2937
      %2959 = vst [vmem:[#allocation2 + $0xe0] sm:$0xff] %v2938
      %2960 = vst.msk [vmem:[#allocation2 + $0xe8] sm:$0xff] %vm1802, %v2922
      %2961 = vst [vmem:[#allocation2 + $0xf0] sm:$0xff] %v2939
      %2962 = vst [vmem:[#allocation2 + $0xf8] sm:$0xff] %v2940
      %2963 = vst.msk [vmem:[#allocation2 + $0x100] sm:$0xff] %vm1802, %v2928
      %2964 = vst [vmem:[#allocation2 + $0x108] sm:$0xff] %v2941
      %2965 = vst [vmem:[#allocation2 + $0x110] sm:$0xff] %v2942
      %2966 = vst.msk [vmem:[#allocation2 + $0x118] sm:$0xff] %vm1802, %v2934
      %v2967 = vld [vmem:[%s15] sm:$0xff]
      %v2968 = vld [vmem:[%s15 + $0x8] sm:$0xff]
      %v2969 = vld [vmem:[%s15 + $0x10] sm:$0xff]
      %v2970 = vld [vmem:[%s15 + $0x18] sm:$0xff]
      %v2971 = vld [vmem:[#allocation2] sm:$0xff]
      %v2972 = vld [vmem:[#allocation2 + $0x8] sm:$0xff]
      %v2973 = vld [vmem:[#allocation2 + $0x10] sm:$0xff]
      %v2974 = vld [vmem:[#allocation2 + $0x18] sm:$0xff]
      %v2975 = vld [vmem:[#allocation2 + $0x20] sm:$0xff]
      %v2976 = vld [vmem:[#allocation2 + $0x28] sm:$0xff]
      %v2977 = vld [vmem:[#allocation2 + $0x30] sm:$0xff]
      %v2978 = vld [vmem:[#allocation2 + $0x38] sm:$0xff]
      %v2979 = vld [vmem:[#allocation2 + $0x40] sm:$0xff]
      %v2980 = vld [vmem:[#allocation2 + $0x48] sm:$0xff]
      %v2981 = vld [vmem:[#allocation2 + $0x50] sm:$0xff]
      %v2982 = vld [vmem:[#allocation2 + $0x58] sm:$0xff]
      %v2983 = vld [vmem:[#allocation2 + $0x60] sm:$0xff]
      %v2984 = vld [vmem:[#allocation2 + $0x68] sm:$0xff]
      %v2985 = vld [vmem:[#allocation2 + $0x70] sm:$0xff]
      %v2986 = vld [vmem:[#allocation2 + $0x78] sm:$0xff]
      %v2987 = vld [vmem:[#allocation2 + $0x80] sm:$0xff]
      %v2988 = vld [vmem:[#allocation2 + $0x88] sm:$0xff]
      %v2989 = vld [vmem:[#allocation2 + $0x90] sm:$0xff]
      %v2990 = vld [vmem:[#allocation2 + $0x98] sm:$0xff]
      %v2991 = vld [vmem:[#allocation2 + $0xa0] sm:$0xff]
      %v2992 = vld [vmem:[#allocation2 + $0xa8] sm:$0xff]
      %v2993 = vld [vmem:[#allocation2 + $0xb0] sm:$0xff]
      %v2994 = vld [vmem:[#allocation2 + $0xb8] sm:$0xff]
      %v2995 = vld [vmem:[#allocation2 + $0xc0] sm:$0xff]
      %v2996 = vld [vmem:[#allocation2 + $0xc8] sm:$0xff]
      %v2997 = vld [vmem:[#allocation2 + $0xd0] sm:$0xff]
      %v2998 = vld [vmem:[#allocation2 + $0xd8] sm:$0xff]
      %v2999 = vld [vmem:[#allocation2 + $0xe0] sm:$0xff]
      %v3000 = vld [vmem:[#allocation2 + $0xe8] sm:$0xff]
      %v3001 = vld [vmem:[#allocation2 + $0xf0] sm:$0xff]
      %v3002 = vld [vmem:[#allocation2 + $0xf8] sm:$0xff]
      %v3003 = vld [vmem:[#allocation2 + $0x100] sm:$0xff]
      %v3004 = vld [vmem:[#allocation2 + $0x108] sm:$0xff]
      %v3005 = vld [vmem:[#allocation2 + $0x110] sm:$0xff]
      %v3006 = vld [vmem:[#allocation2 + $0x118] sm:$0xff]
      %v3007 = vld [vmem:[%s17] sm:$0xff]
      %v3008 = vld [vmem:[%s17 + $0x8] sm:$0xff]
      %v3009 = vld [vmem:[%s17 + $0x10] sm:$0xff]
      %v3010 = vld [vmem:[%s17 + $0x18] sm:$0xff]
      %3012 = vset.pattern.permute.xlu0 0
      %3013 = vperm.xlu0 %3012, %v3007
      %v3014 = vpop.permute.xlu0 %3013
      %3017 = vset.pattern.permute.xlu0 0
      %3018 = vperm.xlu0 %3017, %v3008
      %v3019 = vpop.permute.xlu0 %3018
      %3022 = vset.pattern.permute.xlu0 0
      %3023 = vperm.xlu0 %3022, %v3009
      %v3024 = vpop.permute.xlu0 %3023
      %3027 = vset.pattern.permute.xlu0 0
      %3028 = vperm.xlu0 %3027, %v3010
      %v3029 = vpop.permute.xlu0 %3028
      %v3032 = vsel %vm1557, %v2967, 0
      %v3035 = vsel %vm1557, %v2968, 0
      %v3038 = vsel %vm1557, %v2969, 0
      %v3041 = vsel %vm1557, %v2970, 0
      %3043 = vmatprep.subr.mxu0 %v2972
      %3044 = vmatpush1.msra.mxu0 %v2971
      %3045 = vmatprep.subr.mxu0 %v2975
      %3046 = vmatpush1.msra.mxu0 %v2974
      %3047 = vmatprep.subr.mxu0 %v2978
      %3048 = vmatpush1.msra.mxu0 %v2977
      %3049 = vmatprep.subr.mxu0 %v2981
      %3050 = vmatpush1.msra.mxu0 %v2980
      %3051 = vmatprep.subr.mxu0 %v2984
      %3052 = vmatpush1.msra.mxu0 %v2983
      %3053 = vmatprep.subr.mxu0 %v2987
      %3054 = vmatpush1.msra.mxu0 %v2986
      %3055 = vmatprep.subr.mxu0 %v2990
      %3056 = vmatpush1.msra.mxu0 %v2989
      %3057 = vmatprep.subr.mxu0 %v2993
      %3058 = vmatpush1.msra.mxu0 %v2992
      %3059 = vmatprep.subr.mxu0 %v2996
      %3060 = vmatpush1.msra.mxu0 %v2995
      %3061 = vmatprep.subr.mxu0 %v2999
      %3062 = vmatpush1.msra.mxu0 %v2998
      %3063 = vmatprep.subr.mxu0 %v3002
      %3064 = vmatpush1.msra.mxu0 %v3001
      %3065 = vmatprep.subr.mxu0 %v3005
      %3066 = vmatpush1.msra.mxu0 %v3004
      %3067 = vmatprep.subr.mxu0 0.0
      %3068 = vmatpush1.msra.mxu0 0.0
      %3069 = vmatprep.subr.mxu0 0.0
      %3070 = vmatpush1.msra.mxu0 0.0
      %3071 = vmatprep.subr.mxu0 0.0
      %3072 = vmatpush1.msra.mxu0 0.0
      %3073 = vmatprep.subr.mxu0 0.0
      %3074 = vmatpush1.msra.mxu0 0.0
      %3075 = vmatprep.subr.mxu0 0.0
      %3076 = vmatpush1.msra.mxu0 0.0
      %3077 = vmatprep.subr.mxu0 0.0
      %3078 = vmatpush1.msra.mxu0 0.0
      %3079 = vmatprep.subr.mxu0 0.0
      %3080 = vmatpush1.msra.mxu0 0.0
      %3081 = vmatprep.subr.mxu0 0.0
      %3082 = vmatpush1.msra.mxu0 0.0
      %3083 = vmatprep.subr.mxu0 0.0
      %3084 = vmatpush1.msra.mxu0 0.0
      %3085 = vmatprep.subr.mxu0 0.0
      %3086 = vmatpush1.msra.mxu0 0.0
      %3087 = vmatprep.subr.mxu0 0.0
      %3088 = vmatpush1.msra.mxu0 0.0
      %3089 = vmatprep.subr.mxu0 0.0
      %3090 = vmatpush1.msra.mxu0 0.0
      %3091 = vmatprep.subr.mxu0 0.0
      %3092 = vmatpush1.msra.mxu0 0.0
      %3093 = vmatprep.subr.mxu0 0.0
      %3094 = vmatpush1.msra.mxu0 0.0
      %3095 = vmatprep.subr.mxu0 0.0
      %3096 = vmatpush1.msra.mxu0 0.0
      %3097 = vmatprep.subr.mxu0 0.0
      %3098 = vmatpush1.msra.mxu0 0.0
      %3099 = vmatprep.subr.mxu0 0.0
      %3100 = vmatpush1.msra.mxu0 0.0
      %3101 = vmatprep.subr.mxu0 0.0
      %3102 = vmatpush1.msra.mxu0 0.0
      %3103 = vmatprep.subr.mxu0 0.0
      %3104 = vmatpush1.msra.mxu0 0.0
      %3105 = vmatprep.subr.mxu0 0.0
      %3106 = vmatpush1.msra.mxu0 0.0
      %3107 = vmatprep.mubr.f32.mxu0 0.0
      %3108 = vmatmul.mubr.f32.gmra.mrb[0].mxu0 %v3032
      %v3109 = vpop.f32.mrb[0].mxu0
      %v3110 = vadd.f32 %v3014, %v3109
      %v3111 = vpop.f32.mrb[0].mxu0
      %v3112 = vadd.f32 %v3014, %v3111
      %3113 = vmatprep.mubr.f32.mxu0 0.0
      %3114 = vmatmul.mubr.f32.gmra.mrb[0].mxu0 %v3035
      %v3115 = vpop.f32.mrb[0].mxu0
      %v3116 = vadd.f32 %v3019, %v3115
      %v3117 = vpop.f32.mrb[0].mxu0
      %v3118 = vadd.f32 %v3019, %v3117
      %3119 = vmatprep.mubr.f32.mxu0 0.0
      %3120 = vmatmul.mubr.f32.gmra.mrb[0].mxu0 %v3038
      %v3121 = vpop.f32.mrb[0].mxu0
      %v3122 = vadd.f32 %v3024, %v3121
      %v3123 = vpop.f32.mrb[0].mxu0
      %v3124 = vadd.f32 %v3024, %v3123
      %3125 = vmatprep.mubr.f32.mxu0 0.0
      %3126 = vmatmul.mubr.f32.gmra.mrb[0].mxu0 %v3041
      %v3127 = vpop.f32.mrb[0].mxu0
      %v3128 = vadd.f32 %v3029, %v3127
      %v3129 = vpop.f32.mrb[0].mxu0
      %v3130 = vadd.f32 %v3029, %v3129
      %3131 = vdwg.mxu0
      %3132 = vmatprep.subr.mxu0 0.0
      %3133 = vmatpush1.msra.mxu0 %v2973
      %3134 = vmatprep.subr.mxu0 0.0
      %3135 = vmatpush1.msra.mxu0 %v2976
      %3136 = vmatprep.subr.mxu0 0.0
      %3137 = vmatpush1.msra.mxu0 %v2979
      %3138 = vmatprep.subr.mxu0 0.0
      %3139 = vmatpush1.msra.mxu0 %v2982
      %3140 = vmatprep.subr.mxu0 0.0
      %3141 = vmatpush1.msra.mxu0 %v2985
      %3142 = vmatprep.subr.mxu0 0.0
      %3143 = vmatpush1.msra.mxu0 %v2988
      %3144 = vmatprep.subr.mxu0 0.0
      %3145 = vmatpush1.msra.mxu0 %v2991
      %3146 = vmatprep.subr.mxu0 0.0
      %3147 = vmatpush1.msra.mxu0 %v2994
      %3148 = vmatprep.subr.mxu0 0.0
      %3149 = vmatpush1.msra.mxu0 %v2997
      %3150 = vmatprep.subr.mxu0 0.0
      %3151 = vmatpush1.msra.mxu0 %v3000
      %3152 = vmatprep.subr.mxu0 0.0
      %3153 = vmatpush1.msra.mxu0 %v3003
      %3154 = vmatprep.subr.mxu0 0.0
      %3155 = vmatpush1.msra.mxu0 %v3006
      %3156 = vmatprep.subr.mxu0 0.0
      %3157 = vmatpush1.msra.mxu0 0.0
      %3158 = vmatprep.subr.mxu0 0.0
      %3159 = vmatpush1.msra.mxu0 0.0
      %3160 = vmatprep.subr.mxu0 0.0
      %3161 = vmatpush1.msra.mxu0 0.0
      %3162 = vmatprep.subr.mxu0 0.0
      %3163 = vmatpush1.msra.mxu0 0.0
      %3164 = vmatprep.subr.mxu0 0.0
      %3165 = vmatpush1.msra.mxu0 0.0
      %3166 = vmatprep.subr.mxu0 0.0
      %3167 = vmatpush1.msra.mxu0 0.0
      %3168 = vmatprep.subr.mxu0 0.0
      %3169 = vmatpush1.msra.mxu0 0.0
      %3170 = vmatprep.subr.mxu0 0.0
      %3171 = vmatpush1.msra.mxu0 0.0
      %3172 = vmatprep.subr.mxu0 0.0
      %3173 = vmatpush1.msra.mxu0 0.0
      %3174 = vmatprep.subr.mxu0 0.0
      %3175 = vmatpush1.msra.mxu0 0.0
      %3176 = vmatprep.subr.mxu0 0.0
      %3177 = vmatpush1.msra.mxu0 0.0
      %3178 = vmatprep.subr.mxu0 0.0
      %3179 = vmatpush1.msra.mxu0 0.0
      %3180 = vmatprep.subr.mxu0 0.0
      %3181 = vmatpush1.msra.mxu0 0.0
      %3182 = vmatprep.subr.mxu0 0.0
      %3183 = vmatpush1.msra.mxu0 0.0
      %3184 = vmatprep.subr.mxu0 0.0
      %3185 = vmatpush1.msra.mxu0 0.0
      %3186 = vmatprep.subr.mxu0 0.0
      %3187 = vmatpush1.msra.mxu0 0.0
      %3188 = vmatprep.subr.mxu0 0.0
      %3189 = vmatpush1.msra.mxu0 0.0
      %3190 = vmatprep.subr.mxu0 0.0
      %3191 = vmatpush1.msra.mxu0 0.0
      %3192 = vmatprep.subr.mxu0 0.0
      %3193 = vmatpush1.msra.mxu0 0.0
      %3194 = vmatprep.subr.mxu0 0.0
      %3195 = vmatpush1.msra.mxu0 0.0
      %3196 = vmatprep.mubr.f32.mxu0 0.0
      %3197 = vmatmul.mubr.f32.gmra.mrb[0].mxu0 %v3032
      %v3198 = vpop.f32.mrb[0].mxu0
      %v3199 = vadd.f32 %v3014, %v3198
      %v3200 = vpop.f32.mrb[0].mxu0
      %3201 = vmatprep.mubr.f32.mxu0 0.0
      %3202 = vmatmul.mubr.f32.gmra.mrb[0].mxu0 %v3035
      %v3203 = vpop.f32.mrb[0].mxu0
      %v3204 = vadd.f32 %v3019, %v3203
      %v3205 = vpop.f32.mrb[0].mxu0
      %3206 = vmatprep.mubr.f32.mxu0 0.0
      %3207 = vmatmul.mubr.f32.gmra.mrb[0].mxu0 %v3038
      %v3208 = vpop.f32.mrb[0].mxu0
      %v3209 = vadd.f32 %v3024, %v3208
      %v3210 = vpop.f32.mrb[0].mxu0
      %3211 = vmatprep.mubr.f32.mxu0 0.0
      %3212 = vmatmul.mubr.f32.gmra.mrb[0].mxu0 %v3041
      %v3213 = vpop.f32.mrb[0].mxu0
      %v3214 = vadd.f32 %v3029, %v3213
      %v3215 = vpop.f32.mrb[0].mxu0
      %3216 = vdwg.mxu0
      %v3217 = vmax.f32 %v3110, 0.0
      %v3218 = vmax.f32 %v3112, 0.0
      %v3219 = vmax.f32 %v3199, 0.0
      %v3220 = vmax.f32 %v3116, 0.0
      %v3221 = vmax.f32 %v3118, 0.0
      %v3222 = vmax.f32 %v3204, 0.0
      %v3223 = vmax.f32 %v3122, 0.0
      %v3224 = vmax.f32 %v3124, 0.0
      %v3225 = vmax.f32 %v3209, 0.0
      %v3226 = vmax.f32 %v3128, 0.0
      %v3227 = vmax.f32 %v3130, 0.0
      %v3228 = vmax.f32 %v3214, 0.0
      %v3229 = vlaneseq
      %v3230 = vshrl.u32 %v3229, 7
      %v3231 = vadd.s32 %v3230, 8
      %v3232 = vadd.s32 %v3230, 16
      %v3233 = vadd.s32 %v3230, 24
      %v3234 = vadd.s32 %v3230, 32
      %v3235 = vadd.s32 %v3230, 40
      %v3236 = vadd.s32 %v3230, 48
      %v3237 = vadd.s32 %v3230, 56
      %v3238 = vadd.s32 %v3230, 64
      %v3239 = vadd.s32 %v3230, 72
      %v3240 = vadd.s32 %v3230, 80
      %v3241 = vadd.s32 %v3230, 88
      %v3242 = vadd.s32 %v3230, 96
      %v3243 = vadd.s32 %v3230, 104
      %v3244 = vadd.s32 %v3230, 112
      %v3245 = vadd.s32 %v3230, 120
      %v3246 = vadd.s32 %v3230, 128
      %v3247 = vadd.s32 %v3230, 136
      %v3248 = vadd.s32 %v3230, 144
      %v3249 = vadd.s32 %v3230, 152
      %v3250 = vadd.s32 %v3230, 160
      %v3251 = vadd.s32 %v3230, 168
      %v3252 = vadd.s32 %v3230, 176
      %v3253 = vadd.s32 %v3230, 184
      %v3254 = vadd.s32 %v3230, 192
      %v3255 = vadd.s32 %v3230, 200
      %v3256 = vadd.s32 %v3230, 208
      %v3257 = vadd.s32 %v3230, 216
      %v3258 = vadd.s32 %v3230, 224
      %v3259 = vadd.s32 %v3230, 232
      %v3260 = vadd.s32 %v3230, 240
      %v3261 = vadd.s32 %v3230, 248
      %v3262 = vadd.s32 %v3230, 256
      %v3263 = vadd.s32 %v3230, 264
      %v3264 = vadd.s32 %v3230, 272
      %v3265 = vadd.s32 %v3230, 280
      %v3266 = vadd.s32 %v3230, 288
      %v3267 = vadd.s32 %v3230, 296
      %v3268 = vadd.s32 %v3230, 304
      %v3269 = vadd.s32 %v3230, 312
      %v3270 = vadd.s32 %v3230, 320
      %v3271 = vadd.s32 %v3230, 328
      %v3272 = vadd.s32 %v3230, 336
      %v3273 = vadd.s32 %v3230, 344
      %v3274 = vlaneseq
      %v3275 = vand.u32 %v3274, 127
      %v3276 = vadd.s32 %v3275, 128
      %v3277 = vmul.u32 %v3275, 2
      %v3278 = vmul.u32 %v3276, 2
      %vm3279 = vcmp.eq.s32.totalorder %v3230, %v3277
      %vm3280 = vcmp.eq.s32.totalorder %v3230, %v3278
      %vm3281 = vcmp.eq.s32.totalorder %v3231, %v3277
      %vm3282 = vcmp.eq.s32.totalorder %v3231, %v3278
      %vm3283 = vcmp.eq.s32.totalorder %v3232, %v3277
      %vm3284 = vcmp.eq.s32.totalorder %v3232, %v3278
      %vm3285 = vcmp.eq.s32.totalorder %v3233, %v3277
      %vm3286 = vcmp.eq.s32.totalorder %v3233, %v3278
      %vm3287 = vcmp.eq.s32.totalorder %v3234, %v3277
      %vm3288 = vcmp.eq.s32.totalorder %v3234, %v3278
      %vm3289 = vcmp.eq.s32.totalorder %v3235, %v3277
      %vm3290 = vcmp.eq.s32.totalorder %v3235, %v3278
      %vm3291 = vcmp.eq.s32.totalorder %v3236, %v3277
      %vm3292 = vcmp.eq.s32.totalorder %v3236, %v3278
      %vm3293 = vcmp.eq.s32.totalorder %v3237, %v3277
      %vm3294 = vcmp.eq.s32.totalorder %v3237, %v3278
      %vm3295 = vcmp.eq.s32.totalorder %v3238, %v3277
      %vm3296 = vcmp.eq.s32.totalorder %v3238, %v3278
      %vm3297 = vcmp.eq.s32.totalorder %v3239, %v3277
      %vm3298 = vcmp.eq.s32.totalorder %v3239, %v3278
      %vm3299 = vcmp.eq.s32.totalorder %v3240, %v3277
      %vm3300 = vcmp.eq.s32.totalorder %v3240, %v3278
      %vm3301 = vcmp.eq.s32.totalorder %v3241, %v3277
      %vm3302 = vcmp.eq.s32.totalorder %v3241, %v3278
      %vm3303 = vcmp.eq.s32.totalorder %v3242, %v3277
      %vm3304 = vcmp.eq.s32.totalorder %v3242, %v3278
      %vm3305 = vcmp.eq.s32.totalorder %v3243, %v3277
      %vm3306 = vcmp.eq.s32.totalorder %v3243, %v3278
      %vm3307 = vcmp.eq.s32.totalorder %v3244, %v3277
      %vm3308 = vcmp.eq.s32.totalorder %v3244, %v3278
      %vm3309 = vcmp.eq.s32.totalorder %v3245, %v3277
      %vm3310 = vcmp.eq.s32.totalorder %v3245, %v3278
      %vm3311 = vcmp.eq.s32.totalorder %v3246, %v3277
      %vm3312 = vcmp.eq.s32.totalorder %v3246, %v3278
      %vm3313 = vcmp.eq.s32.totalorder %v3247, %v3277
      %vm3314 = vcmp.eq.s32.totalorder %v3247, %v3278
      %vm3315 = vcmp.eq.s32.totalorder %v3248, %v3277
      %vm3316 = vcmp.eq.s32.totalorder %v3248, %v3278
      %vm3317 = vcmp.eq.s32.totalorder %v3249, %v3277
      %vm3318 = vcmp.eq.s32.totalorder %v3249, %v3278
      %vm3319 = vcmp.eq.s32.totalorder %v3250, %v3277
      %vm3320 = vcmp.eq.s32.totalorder %v3250, %v3278
      %vm3321 = vcmp.eq.s32.totalorder %v3251, %v3277
      %vm3322 = vcmp.eq.s32.totalorder %v3251, %v3278
      %vm3323 = vcmp.eq.s32.totalorder %v3252, %v3277
      %vm3324 = vcmp.eq.s32.totalorder %v3252, %v3278
      %vm3325 = vcmp.eq.s32.totalorder %v3253, %v3277
      %vm3326 = vcmp.eq.s32.totalorder %v3253, %v3278
      %vm3327 = vcmp.eq.s32.totalorder %v3254, %v3277
      %vm3328 = vcmp.eq.s32.totalorder %v3254, %v3278
      %vm3329 = vcmp.eq.s32.totalorder %v3255, %v3277
      %vm3330 = vcmp.eq.s32.totalorder %v3255, %v3278
      %vm3331 = vcmp.eq.s32.totalorder %v3256, %v3277
      %vm3332 = vcmp.eq.s32.totalorder %v3256, %v3278
      %vm3333 = vcmp.eq.s32.totalorder %v3257, %v3277
      %vm3334 = vcmp.eq.s32.totalorder %v3257, %v3278
      %vm3335 = vcmp.eq.s32.totalorder %v3258, %v3277
      %vm3336 = vcmp.eq.s32.totalorder %v3258, %v3278
      %vm3337 = vcmp.eq.s32.totalorder %v3259, %v3277
      %vm3338 = vcmp.eq.s32.totalorder %v3259, %v3278
      %vm3339 = vcmp.eq.s32.totalorder %v3260, %v3277
      %vm3340 = vcmp.eq.s32.totalorder %v3260, %v3278
      %vm3341 = vcmp.eq.s32.totalorder %v3261, %v3277
      %vm3342 = vcmp.eq.s32.totalorder %v3261, %v3278
      %vm3343 = vcmp.eq.s32.totalorder %v3262, %v3277
      %vm3344 = vcmp.eq.s32.totalorder %v3262, %v3278
      %vm3345 = vcmp.eq.s32.totalorder %v3263, %v3277
      %vm3346 = vcmp.eq.s32.totalorder %v3263, %v3278
      %vm3347 = vcmp.eq.s32.totalorder %v3264, %v3277
      %vm3348 = vcmp.eq.s32.totalorder %v3264, %v3278
      %vm3349 = vcmp.eq.s32.totalorder %v3265, %v3277
      %vm3350 = vcmp.eq.s32.totalorder %v3265, %v3278
      %vm3351 = vcmp.eq.s32.totalorder %v3266, %v3277
      %vm3352 = vcmp.eq.s32.totalorder %v3266, %v3278
      %vm3353 = vcmp.eq.s32.totalorder %v3267, %v3277
      %vm3354 = vcmp.eq.s32.totalorder %v3267, %v3278
      %vm3355 = vcmp.eq.s32.totalorder %v3268, %v3277
      %vm3356 = vcmp.eq.s32.totalorder %v3268, %v3278
      %vm3357 = vcmp.eq.s32.totalorder %v3269, %v3277
      %vm3358 = vcmp.eq.s32.totalorder %v3269, %v3278
      %vm3359 = vcmp.eq.s32.totalorder %v3270, %v3277
      %vm3360 = vcmp.eq.s32.totalorder %v3270, %v3278
      %vm3361 = vcmp.eq.s32.totalorder %v3271, %v3277
      %vm3362 = vcmp.eq.s32.totalorder %v3271, %v3278
      %vm3363 = vcmp.eq.s32.totalorder %v3272, %v3277
      %vm3364 = vcmp.eq.s32.totalorder %v3272, %v3278
      %vm3365 = vcmp.eq.s32.totalorder %v3273, %v3277
      %vm3366 = vcmp.eq.s32.totalorder %v3273, %v3278
      %v3367 = vsel %vm3279, 1, 0
      %v3368 = vsel %vm3280, 1, 0
      %v3369 = vsel %vm3281, 1, 0
      %v3370 = vsel %vm3282, 1, 0
      %v3371 = vsel %vm3283, 1, 0
      %v3372 = vsel %vm3284, 1, 0
      %v3373 = vsel %vm3285, 1, 0
      %v3374 = vsel %vm3286, 1, 0
      %v3375 = vsel %vm3287, 1, 0
      %v3376 = vsel %vm3288, 1, 0
      %v3377 = vsel %vm3289, 1, 0
      %v3378 = vsel %vm3290, 1, 0
      %v3379 = vsel %vm3291, 1, 0
      %v3380 = vsel %vm3292, 1, 0
      %v3381 = vsel %vm3293, 1, 0
      %v3382 = vsel %vm3294, 1, 0
      %v3383 = vsel %vm3295, 1, 0
      %v3384 = vsel %vm3296, 1, 0
      %v3385 = vsel %vm3297, 1, 0
      %v3386 = vsel %vm3298, 1, 0
      %v3387 = vsel %vm3299, 1, 0
      %v3388 = vsel %vm3300, 1, 0
      %v3389 = vsel %vm3301, 1, 0
      %v3390 = vsel %vm3302, 1, 0
      %v3391 = vsel %vm3303, 1, 0
      %v3392 = vsel %vm3304, 1, 0
      %v3393 = vsel %vm3305, 1, 0
      %v3394 = vsel %vm3306, 1, 0
      %v3395 = vsel %vm3307, 1, 0
      %v3396 = vsel %vm3308, 1, 0
      %v3397 = vsel %vm3309, 1, 0
      %v3398 = vsel %vm3310, 1, 0
      %v3399 = vsel %vm3311, 1, 0
      %v3400 = vsel %vm3312, 1, 0
      %v3401 = vsel %vm3313, 1, 0
      %v3402 = vsel %vm3314, 1, 0
      %v3403 = vsel %vm3315, 1, 0
      %v3404 = vsel %vm3316, 1, 0
      %v3405 = vsel %vm3317, 1, 0
      %v3406 = vsel %vm3318, 1, 0
      %v3407 = vsel %vm3319, 1, 0
      %v3408 = vsel %vm3320, 1, 0
      %v3409 = vsel %vm3321, 1, 0
      %v3410 = vsel %vm3322, 1, 0
      %v3411 = vsel %vm3323, 1, 0
      %v3412 = vsel %vm3324, 1, 0
      %v3413 = vsel %vm3325, 1, 0
      %v3414 = vsel %vm3326, 1, 0
      %v3415 = vsel %vm3327, 1, 0
      %v3416 = vsel %vm3328, 1, 0
      %v3417 = vsel %vm3329, 1, 0
      %v3418 = vsel %vm3330, 1, 0
      %v3419 = vsel %vm3331, 1, 0
      %v3420 = vsel %vm3332, 1, 0
      %v3421 = vsel %vm3333, 1, 0
      %v3422 = vsel %vm3334, 1, 0
      %v3423 = vsel %vm3335, 1, 0
      %v3424 = vsel %vm3336, 1, 0
      %v3425 = vsel %vm3337, 1, 0
      %v3426 = vsel %vm3338, 1, 0
      %v3427 = vsel %vm3339, 1, 0
      %v3428 = vsel %vm3340, 1, 0
      %v3429 = vsel %vm3341, 1, 0
      %v3430 = vsel %vm3342, 1, 0
      %v3431 = vsel %vm3343, 1, 0
      %v3432 = vsel %vm3344, 1, 0
      %v3433 = vsel %vm3345, 1, 0
      %v3434 = vsel %vm3346, 1, 0
      %v3435 = vsel %vm3347, 1, 0
      %v3436 = vsel %vm3348, 1, 0
      %v3437 = vsel %vm3349, 1, 0
      %v3438 = vsel %vm3350, 1, 0
      %v3439 = vsel %vm3351, 1, 0
      %v3440 = vsel %vm3352, 1, 0
      %v3441 = vsel %vm3353, 1, 0
      %v3442 = vsel %vm3354, 1, 0
      %v3443 = vsel %vm3355, 1, 0
      %v3444 = vsel %vm3356, 1, 0
      %v3445 = vsel %vm3357, 1, 0
      %v3446 = vsel %vm3358, 1, 0
      %v3447 = vsel %vm3359, 1, 0
      %v3448 = vsel %vm3360, 1, 0
      %v3449 = vsel %vm3361, 1, 0
      %v3450 = vsel %vm3362, 1, 0
      %v3451 = vsel %vm3363, 1, 0
      %v3452 = vsel %vm3364, 1, 0
      %v3453 = vsel %vm3365, 1, 0
      %v3454 = vsel %vm3366, 1, 0
      %v3455 = vcvt.s32.f32 %v3367
      %v3456 = vcvt.s32.f32 %v3368
      %v3457 = vcvt.s32.f32 %v3369
      %v3458 = vcvt.s32.f32 %v3370
      %v3459 = vcvt.s32.f32 %v3371
      %v3460 = vcvt.s32.f32 %v3372
      %v3461 = vcvt.s32.f32 %v3373
      %v3462 = vcvt.s32.f32 %v3374
      %v3463 = vcvt.s32.f32 %v3375
      %v3464 = vcvt.s32.f32 %v3376
      %v3465 = vcvt.s32.f32 %v3377
      %v3466 = vcvt.s32.f32 %v3378
      %v3467 = vcvt.s32.f32 %v3379
      %v3468 = vcvt.s32.f32 %v3380
      %v3469 = vcvt.s32.f32 %v3381
      %v3470 = vcvt.s32.f32 %v3382
      %v3471 = vcvt.s32.f32 %v3383
      %v3472 = vcvt.s32.f32 %v3384
      %v3473 = vcvt.s32.f32 %v3385
      %v3474 = vcvt.s32.f32 %v3386
      %v3475 = vcvt.s32.f32 %v3387
      %v3476 = vcvt.s32.f32 %v3388
      %v3477 = vcvt.s32.f32 %v3389
      %v3478 = vcvt.s32.f32 %v3390
      %v3479 = vcvt.s32.f32 %v3391
      %v3480 = vcvt.s32.f32 %v3392
      %v3481 = vcvt.s32.f32 %v3393
      %v3482 = vcvt.s32.f32 %v3394
      %v3483 = vcvt.s32.f32 %v3395
      %v3484 = vcvt.s32.f32 %v3396
      %v3485 = vcvt.s32.f32 %v3397
      %v3486 = vcvt.s32.f32 %v3398
      %v3487 = vcvt.s32.f32 %v3399
      %v3488 = vcvt.s32.f32 %v3400
      %v3489 = vcvt.s32.f32 %v3401
      %v3490 = vcvt.s32.f32 %v3402
      %v3491 = vcvt.s32.f32 %v3403
      %v3492 = vcvt.s32.f32 %v3404
      %v3493 = vcvt.s32.f32 %v3405
      %v3494 = vcvt.s32.f32 %v3406
      %v3495 = vcvt.s32.f32 %v3407
      %v3496 = vcvt.s32.f32 %v3408
      %v3497 = vcvt.s32.f32 %v3409
      %v3498 = vcvt.s32.f32 %v3410
      %v3499 = vcvt.s32.f32 %v3411
      %v3500 = vcvt.s32.f32 %v3412
      %v3501 = vcvt.s32.f32 %v3413
      %v3502 = vcvt.s32.f32 %v3414
      %v3503 = vcvt.s32.f32 %v3415
      %v3504 = vcvt.s32.f32 %v3416
      %v3505 = vcvt.s32.f32 %v3417
      %v3506 = vcvt.s32.f32 %v3418
      %v3507 = vcvt.s32.f32 %v3419
      %v3508 = vcvt.s32.f32 %v3420
      %v3509 = vcvt.s32.f32 %v3421
      %v3510 = vcvt.s32.f32 %v3422
      %v3511 = vcvt.s32.f32 %v3423
      %v3512 = vcvt.s32.f32 %v3424
      %v3513 = vcvt.s32.f32 %v3425
      %v3514 = vcvt.s32.f32 %v3426
      %v3515 = vcvt.s32.f32 %v3427
      %v3516 = vcvt.s32.f32 %v3428
      %v3517 = vcvt.s32.f32 %v3429
      %v3518 = vcvt.s32.f32 %v3430
      %v3519 = vcvt.s32.f32 %v3431
      %v3520 = vcvt.s32.f32 %v3432
      %v3521 = vcvt.s32.f32 %v3433
      %v3522 = vcvt.s32.f32 %v3434
      %v3523 = vcvt.s32.f32 %v3435
      %v3524 = vcvt.s32.f32 %v3436
      %v3525 = vcvt.s32.f32 %v3437
      %v3526 = vcvt.s32.f32 %v3438
      %v3527 = vcvt.s32.f32 %v3439
      %v3528 = vcvt.s32.f32 %v3440
      %v3529 = vcvt.s32.f32 %v3441
      %v3530 = vcvt.s32.f32 %v3442
      %v3531 = vcvt.s32.f32 %v3443
      %v3532 = vcvt.s32.f32 %v3444
      %v3533 = vcvt.s32.f32 %v3445
      %v3534 = vcvt.s32.f32 %v3446
      %v3535 = vcvt.s32.f32 %v3447
      %v3536 = vcvt.s32.f32 %v3448
      %v3537 = vcvt.s32.f32 %v3449
      %v3538 = vcvt.s32.f32 %v3450
      %v3539 = vcvt.s32.f32 %v3451
      %v3540 = vcvt.s32.f32 %v3452
      %v3541 = vcvt.s32.f32 %v3453
      %v3542 = vcvt.s32.f32 %v3454
      %v3544 = vsel %vm1557, %v3219, 0
      %v3547 = vsel %vm1557, %v3222, 0
      %v3550 = vsel %vm1557, %v3225, 0
      %v3553 = vsel %vm1557, %v3228, 0
      %3555 = vmatprep.subr.mxu0 %v3456
      %3556 = vmatpush1.msra.mxu0 %v3455
      %3557 = vmatprep.subr.mxu0 %v3458
      %3558 = vmatpush1.msra.mxu0 %v3457
      %3559 = vmatprep.subr.mxu0 %v3460
      %3560 = vmatpush1.msra.mxu0 %v3459
      %3561 = vmatprep.subr.mxu0 %v3462
      %3562 = vmatpush1.msra.mxu0 %v3461
      %3563 = vmatprep.subr.mxu0 %v3464
      %3564 = vmatpush1.msra.mxu0 %v3463
      %3565 = vmatprep.subr.mxu0 %v3466
      %3566 = vmatpush1.msra.mxu0 %v3465
      %3567 = vmatprep.subr.mxu0 %v3468
      %3568 = vmatpush1.msra.mxu0 %v3467
      %3569 = vmatprep.subr.mxu0 %v3470
      %3570 = vmatpush1.msra.mxu0 %v3469
      %3571 = vmatprep.subr.mxu0 %v3472
      %3572 = vmatpush1.msra.mxu0 %v3471
      %3573 = vmatprep.subr.mxu0 %v3474
      %3574 = vmatpush1.msra.mxu0 %v3473
      %3575 = vmatprep.subr.mxu0 %v3476
      %3576 = vmatpush1.msra.mxu0 %v3475
      %3577 = vmatprep.subr.mxu0 %v3478
      %3578 = vmatpush1.msra.mxu0 %v3477
      %3579 = vmatprep.subr.mxu0 %v3480
      %3580 = vmatpush1.msra.mxu0 %v3479
      %3581 = vmatprep.subr.mxu0 %v3482
      %3582 = vmatpush1.msra.mxu0 %v3481
      %3583 = vmatprep.subr.mxu0 %v3484
      %3584 = vmatpush1.msra.mxu0 %v3483
      %3585 = vmatprep.subr.mxu0 %v3486
      %3586 = vmatpush1.msra.mxu0 %v3485
      %3587 = vmatprep.subr.mxu0 %v3488
      %3588 = vmatpush1.msra.mxu0 %v3487
      %3589 = vmatprep.subr.mxu0 %v3490
      %3590 = vmatpush1.msra.mxu0 %v3489
      %3591 = vmatprep.subr.mxu0 %v3492
      %3592 = vmatpush1.msra.mxu0 %v3491
      %3593 = vmatprep.subr.mxu0 %v3494
      %3594 = vmatpush1.msra.mxu0 %v3493
      %3595 = vmatprep.subr.mxu0 %v3496
      %3596 = vmatpush1.msra.mxu0 %v3495
      %3597 = vmatprep.subr.mxu0 %v3498
      %3598 = vmatpush1.msra.mxu0 %v3497
      %3599 = vmatprep.subr.mxu0 %v3500
      %3600 = vmatpush1.msra.mxu0 %v3499
      %3601 = vmatprep.subr.mxu0 %v3502
      %3602 = vmatpush1.msra.mxu0 %v3501
      %3603 = vmatprep.subr.mxu0 %v3504
      %3604 = vmatpush1.msra.mxu0 %v3503
      %3605 = vmatprep.subr.mxu0 %v3506
      %3606 = vmatpush1.msra.mxu0 %v3505
      %3607 = vmatprep.subr.mxu0 %v3508
      %3608 = vmatpush1.msra.mxu0 %v3507
      %3609 = vmatprep.subr.mxu0 %v3510
      %3610 = vmatpush1.msra.mxu0 %v3509
      %3611 = vmatprep.subr.mxu0 %v3512
      %3612 = vmatpush1.msra.mxu0 %v3511
      %3613 = vmatprep.subr.mxu0 %v3514
      %3614 = vmatpush1.msra.mxu0 %v3513
      %3615 = vmatprep.subr.mxu0 %v3516
      %3616 = vmatpush1.msra.mxu0 %v3515
      %3617 = vmatprep.subr.mxu0 %v3518
      %3618 = vmatpush1.msra.mxu0 %v3517
      %3619 = vmatprep.mubr.f32.mxu0 %v3218
      %3620 = vmatmul.mubr.f32.gmra.mrb[0].mxu0 %v3217
      %v3621 = vpop.f32.mrb[0].mxu0
      %v3622 = vadd.f32 0.0, %v3621
      %v3623 = vpop.f32.mrb[0].mxu0
      %v3624 = vadd.f32 0.0, %v3623
      %3625 = vmatprep.mubr.f32.mxu0 %v3221
      %3626 = vmatmul.mubr.f32.gmra.mrb[0].mxu0 %v3220
      %v3627 = vpop.f32.mrb[0].mxu0
      %v3628 = vadd.f32 0.0, %v3627
      %v3629 = vpop.f32.mrb[0].mxu0
      %v3630 = vadd.f32 0.0, %v3629
      %3631 = vmatprep.mubr.f32.mxu0 %v3224
      %3632 = vmatmul.mubr.f32.gmra.mrb[0].mxu0 %v3223
      %v3633 = vpop.f32.mrb[0].mxu0
      %v3634 = vadd.f32 0.0, %v3633
      %v3635 = vpop.f32.mrb[0].mxu0
      %v3636 = vadd.f32 0.0, %v3635
      %3637 = vmatprep.mubr.f32.mxu0 %v3227
      %3638 = vmatmul.mubr.f32.gmra.mrb[0].mxu0 %v3226
      %v3639 = vpop.f32.mrb[0].mxu0
      %v3640 = vadd.f32 0.0, %v3639
      %v3641 = vpop.f32.mrb[0].mxu0
      %v3642 = vadd.f32 0.0, %v3641
      %3643 = vdwg.mxu0
      %3644 = vmatprep.subr.mxu0 %v3520
      %3645 = vmatpush1.msra.mxu0 %v3519
      %3646 = vmatprep.subr.mxu0 %v3522
      %3647 = vmatpush1.msra.mxu0 %v3521
      %3648 = vmatprep.subr.mxu0 %v3524
      %3649 = vmatpush1.msra.mxu0 %v3523
      %3650 = vmatprep.subr.mxu0 %v3526
      %3651 = vmatpush1.msra.mxu0 %v3525
      %3652 = vmatprep.subr.mxu0 %v3528
      %3653 = vmatpush1.msra.mxu0 %v3527
      %3654 = vmatprep.subr.mxu0 %v3530
      %3655 = vmatpush1.msra.mxu0 %v3529
      %3656 = vmatprep.subr.mxu0 %v3532
      %3657 = vmatpush1.msra.mxu0 %v3531
      %3658 = vmatprep.subr.mxu0 %v3534
      %3659 = vmatpush1.msra.mxu0 %v3533
      %3660 = vmatprep.subr.mxu0 %v3536
      %3661 = vmatpush1.msra.mxu0 %v3535
      %3662 = vmatprep.subr.mxu0 %v3538
      %3663 = vmatpush1.msra.mxu0 %v3537
      %3664 = vmatprep.subr.mxu0 %v3540
      %3665 = vmatpush1.msra.mxu0 %v3539
      %3666 = vmatprep.subr.mxu0 %v3542
      %3667 = vmatpush1.msra.mxu0 %v3541
      %3668 = vmatprep.subr.mxu0 0.0
      %3669 = vmatpush1.msra.mxu0 0.0
      %3670 = vmatprep.subr.mxu0 0.0
      %3671 = vmatpush1.msra.mxu0 0.0
      %3672 = vmatprep.subr.mxu0 0.0
      %3673 = vmatpush1.msra.mxu0 0.0
      %3674 = vmatprep.subr.mxu0 0.0
      %3675 = vmatpush1.msra.mxu0 0.0
      %3676 = vmatprep.subr.mxu0 0.0
      %3677 = vmatpush1.msra.mxu0 0.0
      %3678 = vmatprep.subr.mxu0 0.0
      %3679 = vmatpush1.msra.mxu0 0.0
      %3680 = vmatprep.subr.mxu0 0.0
      %3681 = vmatpush1.msra.mxu0 0.0
      %3682 = vmatprep.subr.mxu0 0.0
      %3683 = vmatpush1.msra.mxu0 0.0
      %3684 = vmatprep.subr.mxu0 0.0
      %3685 = vmatpush1.msra.mxu0 0.0
      %3686 = vmatprep.subr.mxu0 0.0
      %3687 = vmatpush1.msra.mxu0 0.0
      %3688 = vmatprep.subr.mxu0 0.0
      %3689 = vmatpush1.msra.mxu0 0.0
      %3690 = vmatprep.subr.mxu0 0.0
      %3691 = vmatpush1.msra.mxu0 0.0
      %3692 = vmatprep.subr.mxu0 0.0
      %3693 = vmatpush1.msra.mxu0 0.0
      %3694 = vmatprep.subr.mxu0 0.0
      %3695 = vmatpush1.msra.mxu0 0.0
      %3696 = vmatprep.subr.mxu0 0.0
      %3697 = vmatpush1.msra.mxu0 0.0
      %3698 = vmatprep.subr.mxu0 0.0
      %3699 = vmatpush1.msra.mxu0 0.0
      %3700 = vmatprep.subr.mxu0 0.0
      %3701 = vmatpush1.msra.mxu0 0.0
      %3702 = vmatprep.subr.mxu0 0.0
      %3703 = vmatpush1.msra.mxu0 0.0
      %3704 = vmatprep.subr.mxu0 0.0
      %3705 = vmatpush1.msra.mxu0 0.0
      %3706 = vmatprep.subr.mxu0 0.0
      %3707 = vmatpush1.msra.mxu0 0.0
      %3708 = vmatprep.mubr.f32.mxu0 0.0
      %3709 = vmatmul.mubr.f32.gmra.mrb[0].mxu0 %v3544
      %v3710 = vpop.f32.mrb[0].mxu0
      %v3711 = vadd.f32 %v3622, %v3710
      %v3712 = vpop.f32.mrb[0].mxu0
      %v3713 = vadd.f32 %v3624, %v3712
      %3714 = vmatprep.mubr.f32.mxu0 0.0
      %3715 = vmatmul.mubr.f32.gmra.mrb[0].mxu0 %v3547
      %v3716 = vpop.f32.mrb[0].mxu0
      %v3717 = vadd.f32 %v3628, %v3716
      %v3718 = vpop.f32.mrb[0].mxu0
      %v3719 = vadd.f32 %v3630, %v3718
      %3720 = vmatprep.mubr.f32.mxu0 0.0
      %3721 = vmatmul.mubr.f32.gmra.mrb[0].mxu0 %v3550
      %v3722 = vpop.f32.mrb[0].mxu0
      %v3723 = vadd.f32 %v3634, %v3722
      %v3724 = vpop.f32.mrb[0].mxu0
      %v3725 = vadd.f32 %v3636, %v3724
      %3726 = vmatprep.mubr.f32.mxu0 0.0
      %3727 = vmatmul.mubr.f32.gmra.mrb[0].mxu0 %v3553
      %v3728 = vpop.f32.mrb[0].mxu0
      %v3729 = vadd.f32 %v3640, %v3728
      %v3730 = vpop.f32.mrb[0].mxu0
      %v3731 = vadd.f32 %v3642, %v3730
      %3732 = vdwg.mxu0
      %3733 = vst [vmem:[#allocation2] sm:$0xff] 0.0
      %3734 = vst [vmem:[#allocation2 + $0x8] sm:$0xff] 0.0
      %3735 = vst.msk [vmem:[#allocation2 + $0x10] sm:$0xff] %vm1557, 0.0
      %3736 = vst [vmem:[#allocation2 + $0x18] sm:$0xff] 0.0
      %3737 = vst [vmem:[#allocation2 + $0x20] sm:$0xff] 0.0
      %3738 = vst.msk [vmem:[#allocation2 + $0x28] sm:$0xff] %vm1557, 0.0
      %3739 = vst [vmem:[#allocation2 + $0x30] sm:$0xff] 0.0
      %3740 = vst [vmem:[#allocation2 + $0x38] sm:$0xff] 0.0
      %3741 = vst.msk [vmem:[#allocation2 + $0x40] sm:$0xff] %vm1557, 0.0
      %3742 = vst [vmem:[#allocation2 + $0x48] sm:$0xff] 0.0
      %3743 = vst [vmem:[#allocation2 + $0x50] sm:$0xff] 0.0
      %3744 = vst.msk [vmem:[#allocation2 + $0x58] sm:$0xff] %vm1557, 0.0
      %3745 = vst [vmem:[#allocation2 + $0x60] sm:$0xff] 0.0
      %3746 = vst [vmem:[#allocation2 + $0x68] sm:$0xff] 0.0
      %3747 = vst.msk [vmem:[#allocation2 + $0x70] sm:$0xff] %vm1557, 0.0
      %3748 = vst [vmem:[#allocation2 + $0x78] sm:$0xff] 0.0
      %3749 = vst [vmem:[#allocation2 + $0x80] sm:$0xff] 0.0
      %3750 = vst.msk [vmem:[#allocation2 + $0x88] sm:$0xff] %vm1557, 0.0
      %3751 = vst [vmem:[#allocation2 + $0x90] sm:$0xff] 0.0
      %3752 = vst [vmem:[#allocation2 + $0x98] sm:$0xff] 0.0
      %3753 = vst.msk [vmem:[#allocation2 + $0xa0] sm:$0xff] %vm1557, 0.0
      %3754 = vst [vmem:[#allocation2 + $0xa8] sm:$0xff] 0.0
      %3755 = vst [vmem:[#allocation2 + $0xb0] sm:$0xff] 0.0
      %3756 = vst.msk [vmem:[#allocation2 + $0xb8] sm:$0xff] %vm1557, 0.0
      %3757 = vst [vmem:[#allocation2 + $0xc0] sm:$0xff] 0.0
      %3758 = vst [vmem:[#allocation2 + $0xc8] sm:$0xff] 0.0
      %3759 = vst.msk [vmem:[#allocation2 + $0xd0] sm:$0xff] %vm1557, 0.0
      %3760 = vst [vmem:[#allocation2 + $0xd8] sm:$0xff] 0.0
      %3761 = vst [vmem:[#allocation2 + $0xe0] sm:$0xff] 0.0
      %3762 = vst.msk [vmem:[#allocation2 + $0xe8] sm:$0xff] %vm1557, 0.0
      %3763 = vst [vmem:[#allocation2 + $0xf0] sm:$0xff] 0.0
      %3764 = vst [vmem:[#allocation2 + $0xf8] sm:$0xff] 0.0
      %3765 = vst.msk [vmem:[#allocation2 + $0x100] sm:$0xff] %vm1557, 0.0
      %3766 = vst [vmem:[#allocation2 + $0x108] sm:$0xff] 0.0
      %3767 = vst [vmem:[#allocation2 + $0x110] sm:$0xff] 0.0
      %3768 = vst.msk [vmem:[#allocation2 + $0x118] sm:$0xff] %vm1557, 0.0
      %3769 = vst [vmem:[#allocation2 + $0x120] sm:$0xff] 0.0
      %3770 = vst [vmem:[#allocation2 + $0x128] sm:$0xff] 0.0
      %3771 = vst.msk [vmem:[#allocation2 + $0x130] sm:$0xff] %vm1557, 0.0
      %3772 = vst [vmem:[#allocation2 + $0x138] sm:$0xff] 0.0
      %3773 = vst [vmem:[#allocation2 + $0x140] sm:$0xff] 0.0
      %3774 = vst.msk [vmem:[#allocation2 + $0x148] sm:$0xff] %vm1557, 0.0
      %3775 = vst [vmem:[#allocation2 + $0x150] sm:$0xff] 0.0
      %3776 = vst [vmem:[#allocation2 + $0x158] sm:$0xff] 0.0
      %3777 = vst.msk [vmem:[#allocation2 + $0x160] sm:$0xff] %vm1557, 0.0
      %3778 = vst [vmem:[#allocation2 + $0x168] sm:$0xff] 0.0
      %3779 = vst [vmem:[#allocation2 + $0x170] sm:$0xff] 0.0
      %3780 = vst.msk [vmem:[#allocation2 + $0x178] sm:$0xff] %vm1557, 0.0
      %3781 = vst [vmem:[#allocation2 + $0x180] sm:$0xff] 0.0
      %3782 = vst [vmem:[#allocation2 + $0x188] sm:$0xff] 0.0
      %3783 = vst.msk [vmem:[#allocation2 + $0x190] sm:$0xff] %vm1557, 0.0
      %3784 = vst [vmem:[#allocation2 + $0x198] sm:$0xff] 0.0
      %3785 = vst [vmem:[#allocation2 + $0x1a0] sm:$0xff] 0.0
      %3786 = vst.msk [vmem:[#allocation2 + $0x1a8] sm:$0xff] %vm1557, 0.0
      %3787 = vst [vmem:[#allocation2 + $0x1b0] sm:$0xff] 0.0
      %3788 = vst [vmem:[#allocation2 + $0x1b8] sm:$0xff] 0.0
      %3789 = vst.msk [vmem:[#allocation2 + $0x1c0] sm:$0xff] %vm1557, 0.0
      %3790 = vst [vmem:[#allocation2 + $0x1c8] sm:$0xff] 0.0
      %3791 = vst [vmem:[#allocation2 + $0x1d0] sm:$0xff] 0.0
      %3792 = vst.msk [vmem:[#allocation2 + $0x1d8] sm:$0xff] %vm1557, 0.0
      %3801 = vrot.lane.b32.xlu0 %v3711, 1
      %v3802 = vpop.permute.xlu0 %3801
      %3803 = vrot.lane.b32.xlu0 %v3713, 1
      %v3804 = vpop.permute.xlu0 %3803
      %3805 = vrot.lane.b32.xlu0 %v3717, 1
      %v3806 = vpop.permute.xlu0 %3805
      %3807 = vrot.lane.b32.xlu0 %v3719, 1
      %v3808 = vpop.permute.xlu0 %3807
      %3809 = vrot.lane.b32.xlu0 %v3723, 1
      %v3810 = vpop.permute.xlu0 %3809
      %3811 = vrot.lane.b32.xlu0 %v3725, 1
      %v3812 = vpop.permute.xlu0 %3811
      %3813 = vrot.lane.b32.xlu0 %v3729, 1
      %v3814 = vpop.permute.xlu0 %3813
      %3815 = vrot.lane.b32.xlu0 %v3731, 1
      %v3816 = vpop.permute.xlu0 %3815
      %v3817 = vsel %vm1710, %v3802, %v3804
      %v3818 = vsel %vm1710, %v3806, %v3808
      %v3819 = vsel %vm1710, %v3810, %v3812
      %v3820 = vsel %vm1710, %v3814, %v3816
      %3829 = vst.msk [vmem:[#allocation2] sm:$0xff] %vm1731, %v3802
      %vm3830 = vcmask 392192
      %3831 = vst.msk [vmem:[#allocation2 + $0x8] sm:$0xff] %vm3830, %v3817
      %3832 = vst.msk [vmem:[#allocation2 + $0x18] sm:$0xff] %vm1731, %v3806
      %3833 = vst.msk [vmem:[#allocation2 + $0x20] sm:$0xff] %vm3830, %v3818
      %3834 = vst.msk [vmem:[#allocation2 + $0x30] sm:$0xff] %vm1731, %v3810
      %3835 = vst.msk [vmem:[#allocation2 + $0x38] sm:$0xff] %vm3830, %v3819
      %3836 = vst.msk [vmem:[#allocation2 + $0x48] sm:$0xff] %vm1731, %v3814
      %3837 = vst.msk [vmem:[#allocation2 + $0x50] sm:$0xff] %vm3830, %v3820
      %3838 = vst [vmem:[#allocation2 + $0x60] sm:$0xff] %v3711
      %3839 = vst.msk [vmem:[#allocation2 + $0x68] sm:$0xff] %vm3830, %v3713
      %3840 = vst [vmem:[#allocation2 + $0x78] sm:$0xff] %v3717
      %3841 = vst.msk [vmem:[#allocation2 + $0x80] sm:$0xff] %vm3830, %v3719
      %3842 = vst [vmem:[#allocation2 + $0x90] sm:$0xff] %v3723
      %3843 = vst.msk [vmem:[#allocation2 + $0x98] sm:$0xff] %vm3830, %v3725
      %3844 = vst [vmem:[#allocation2 + $0xa8] sm:$0xff] %v3729
      %3845 = vst.msk [vmem:[#allocation2 + $0xb0] sm:$0xff] %vm3830, %v3731
      %3846 = vrot.lane.b32.xlu0 %v3711, 127
      %v3847 = vpop.permute.xlu0 %3846
      %3848 = vrot.lane.b32.xlu0 %v3713, 127
      %v3849 = vpop.permute.xlu0 %3848
      %3850 = vrot.lane.b32.xlu0 %v3717, 127
      %v3851 = vpop.permute.xlu0 %3850
      %3852 = vrot.lane.b32.xlu0 %v3719, 127
      %v3853 = vpop.permute.xlu0 %3852
      %3854 = vrot.lane.b32.xlu0 %v3723, 127
      %v3855 = vpop.permute.xlu0 %3854
      %3856 = vrot.lane.b32.xlu0 %v3725, 127
      %v3857 = vpop.permute.xlu0 %3856
      %3858 = vrot.lane.b32.xlu0 %v3729, 127
      %v3859 = vpop.permute.xlu0 %3858
      %3860 = vrot.lane.b32.xlu0 %v3731, 127
      %v3861 = vpop.permute.xlu0 %3860
      %v3862 = vsel %vm1187, %v3847, %v3849
      %v3863 = vsel %vm1187, %v3851, %v3853
      %v3864 = vsel %vm1187, %v3855, %v3857
      %v3865 = vsel %vm1187, %v3859, %v3861
      %3874 = vst [vmem:[#allocation2 + $0xc0] sm:$0xff] %v3862
      %vm3875 = vcmask 384000
      %3876 = vst.msk [vmem:[#allocation2 + $0xc8] sm:$0xff] %vm3875, %v3849
      %3877 = vst [vmem:[#allocation2 + $0xd8] sm:$0xff] %v3863
      %3878 = vst.msk [vmem:[#allocation2 + $0xe0] sm:$0xff] %vm3875, %v3853
      %3879 = vst [vmem:[#allocation2 + $0xf0] sm:$0xff] %v3864
      %3880 = vst.msk [vmem:[#allocation2 + $0xf8] sm:$0xff] %vm3875, %v3857
      %3881 = vst [vmem:[#allocation2 + $0x108] sm:$0xff] %v3865
      %3882 = vst.msk [vmem:[#allocation2 + $0x110] sm:$0xff] %vm3875, %v3861
      %v3883 = vld [vmem:[%s19] sm:$0xff]
      %v3884 = vld [vmem:[%s19 + $0x8] sm:$0xff]
      %v3885 = vld [vmem:[%s19 + $0x10] sm:$0xff]
      %v3886 = vld [vmem:[%s19 + $0x18] sm:$0xff]
      %v3887 = vld [vmem:[#allocation2] sm:$0xff]
      %v3888 = vld [vmem:[#allocation2 + $0x8] sm:$0xff]
      %v3889 = vld [vmem:[#allocation2 + $0x18] sm:$0xff]
      %v3890 = vld [vmem:[#allocation2 + $0x20] sm:$0xff]
      %v3891 = vld [vmem:[#allocation2 + $0x30] sm:$0xff]
      %v3892 = vld [vmem:[#allocation2 + $0x38] sm:$0xff]
      %v3893 = vld [vmem:[#allocation2 + $0x48] sm:$0xff]
      %v3894 = vld [vmem:[#allocation2 + $0x50] sm:$0xff]
      %v3895 = vld [vmem:[#allocation2 + $0x60] sm:$0xff]
      %v3896 = vld [vmem:[#allocation2 + $0x68] sm:$0xff]
      %v3897 = vld [vmem:[#allocation2 + $0x78] sm:$0xff]
      %v3898 = vld [vmem:[#allocation2 + $0x80] sm:$0xff]
      %v3899 = vld [vmem:[#allocation2 + $0x90] sm:$0xff]
      %v3900 = vld [vmem:[#allocation2 + $0x98] sm:$0xff]
      %v3901 = vld [vmem:[#allocation2 + $0xa8] sm:$0xff]
      %v3902 = vld [vmem:[#allocation2 + $0xb0] sm:$0xff]
      %v3903 = vld [vmem:[#allocation2 + $0xc0] sm:$0xff]
      %v3904 = vld [vmem:[#allocation2 + $0xc8] sm:$0xff]
      %v3905 = vld [vmem:[#allocation2 + $0xd8] sm:$0xff]
      %v3906 = vld [vmem:[#allocation2 + $0xe0] sm:$0xff]
      %v3907 = vld [vmem:[#allocation2 + $0xf0] sm:$0xff]
      %v3908 = vld [vmem:[#allocation2 + $0xf8] sm:$0xff]
      %v3909 = vld [vmem:[#allocation2 + $0x108] sm:$0xff]
      %v3910 = vld [vmem:[#allocation2 + $0x110] sm:$0xff]
      %v3911 = vld [vmem:[%s21] sm:$0xff]
      %v3912 = vld [vmem:[%s21 + $0x8] sm:$0xff]
      %v3913 = vld [vmem:[%s21 + $0x10] sm:$0xff]
      %v3914 = vld [vmem:[%s21 + $0x18] sm:$0xff]
      %3916 = vset.pattern.permute.xlu0 0
      %3917 = vperm.xlu0 %3916, %v3911
      %v3918 = vpop.permute.xlu0 %3917
      %3921 = vset.pattern.permute.xlu0 0
      %3922 = vperm.xlu0 %3921, %v3912
      %v3923 = vpop.permute.xlu0 %3922
      %3926 = vset.pattern.permute.xlu0 0
      %3927 = vperm.xlu0 %3926, %v3913
      %v3928 = vpop.permute.xlu0 %3927
      %3931 = vset.pattern.permute.xlu0 0
      %3932 = vperm.xlu0 %3931, %v3914
      %v3933 = vpop.permute.xlu0 %3932
      %v3936 = vsel %vm1557, %v3883, 0
      %v3939 = vsel %vm1557, %v3884, 0
      %v3942 = vsel %vm1557, %v3885, 0
      %v3945 = vsel %vm1557, %v3886, 0
      %3947 = vmatprep.subr.mxu0 %v3888
      %3948 = vmatpush1.msra.mxu0 %v3887
      %3949 = vmatprep.subr.mxu0 %v3890
      %3950 = vmatpush1.msra.mxu0 %v3889
      %3951 = vmatprep.subr.mxu0 %v3892
      %3952 = vmatpush1.msra.mxu0 %v3891
      %3953 = vmatprep.subr.mxu0 %v3894
      %3954 = vmatpush1.msra.mxu0 %v3893
      %3955 = vmatprep.subr.mxu0 %v3896
      %3956 = vmatpush1.msra.mxu0 %v3895
      %3957 = vmatprep.subr.mxu0 %v3898
      %3958 = vmatpush1.msra.mxu0 %v3897
      %3959 = vmatprep.subr.mxu0 %v3900
      %3960 = vmatpush1.msra.mxu0 %v3899
      %3961 = vmatprep.subr.mxu0 %v3902
      %3962 = vmatpush1.msra.mxu0 %v3901
      %3963 = vmatprep.subr.mxu0 %v3904
      %3964 = vmatpush1.msra.mxu0 %v3903
      %3965 = vmatprep.subr.mxu0 %v3906
      %3966 = vmatpush1.msra.mxu0 %v3905
      %3967 = vmatprep.subr.mxu0 %v3908
      %3968 = vmatpush1.msra.mxu0 %v3907
      %3969 = vmatprep.subr.mxu0 %v3910
      %3970 = vmatpush1.msra.mxu0 %v3909
      %3971 = vmatprep.subr.mxu0 0.0
      %3972 = vmatpush1.msra.mxu0 0.0
      %3973 = vmatprep.subr.mxu0 0.0
      %3974 = vmatpush1.msra.mxu0 0.0
      %3975 = vmatprep.subr.mxu0 0.0
      %3976 = vmatpush1.msra.mxu0 0.0
      %3977 = vmatprep.subr.mxu0 0.0
      %3978 = vmatpush1.msra.mxu0 0.0
      %3979 = vmatprep.subr.mxu0 0.0
      %3980 = vmatpush1.msra.mxu0 0.0
      %3981 = vmatprep.subr.mxu0 0.0
      %3982 = vmatpush1.msra.mxu0 0.0
      %3983 = vmatprep.subr.mxu0 0.0
      %3984 = vmatpush1.msra.mxu0 0.0
      %3985 = vmatprep.subr.mxu0 0.0
      %3986 = vmatpush1.msra.mxu0 0.0
      %3987 = vmatprep.subr.mxu0 0.0
      %3988 = vmatpush1.msra.mxu0 0.0
      %3989 = vmatprep.subr.mxu0 0.0
      %3990 = vmatpush1.msra.mxu0 0.0
      %3991 = vmatprep.subr.mxu0 0.0
      %3992 = vmatpush1.msra.mxu0 0.0
      %3993 = vmatprep.subr.mxu0 0.0
      %3994 = vmatpush1.msra.mxu0 0.0
      %3995 = vmatprep.subr.mxu0 0.0
      %3996 = vmatpush1.msra.mxu0 0.0
      %3997 = vmatprep.subr.mxu0 0.0
      %3998 = vmatpush1.msra.mxu0 0.0
      %3999 = vmatprep.subr.mxu0 0.0
      %4000 = vmatpush1.msra.mxu0 0.0
      %4001 = vmatprep.subr.mxu0 0.0
      %4002 = vmatpush1.msra.mxu0 0.0
      %4003 = vmatprep.subr.mxu0 0.0
      %4004 = vmatpush1.msra.mxu0 0.0
      %4005 = vmatprep.subr.mxu0 0.0
      %4006 = vmatpush1.msra.mxu0 0.0
      %4007 = vmatprep.subr.mxu0 0.0
      %4008 = vmatpush1.msra.mxu0 0.0
      %4009 = vmatprep.subr.mxu0 0.0
      %4010 = vmatpush1.msra.mxu0 0.0
      %4011 = vmatprep.mubr.f32.mxu0 0.0
      %4012 = vmatmul.mubr.f32.gmra.mrb[0].mxu0 %v3936
      %v4013 = vpop.f32.mrb[0].mxu0
      %v4014 = vadd.f32 %v3918, %v4013
      %v4015 = vpop.f32.mrb[0].mxu0
      %v4016 = vadd.f32 %v3918, %v4015
      %4017 = vmatprep.mubr.f32.mxu0 0.0
      %4018 = vmatmul.mubr.f32.gmra.mrb[0].mxu0 %v3939
      %v4019 = vpop.f32.mrb[0].mxu0
      %v4020 = vadd.f32 %v3923, %v4019
      %v4021 = vpop.f32.mrb[0].mxu0
      %v4022 = vadd.f32 %v3923, %v4021
      %4023 = vmatprep.mubr.f32.mxu0 0.0
      %4024 = vmatmul.mubr.f32.gmra.mrb[0].mxu0 %v3942
      %v4025 = vpop.f32.mrb[0].mxu0
      %v4026 = vadd.f32 %v3928, %v4025
      %v4027 = vpop.f32.mrb[0].mxu0
      %v4028 = vadd.f32 %v3928, %v4027
      %4029 = vmatprep.mubr.f32.mxu0 0.0
      %4030 = vmatmul.mubr.f32.gmra.mrb[0].mxu0 %v3945
      %v4031 = vpop.f32.mrb[0].mxu0
      %v4032 = vadd.f32 %v3933, %v4031
      %v4033 = vpop.f32.mrb[0].mxu0
      %v4034 = vadd.f32 %v3933, %v4033
      %4035 = vdwg.mxu0
      %v4036 = vmax.f32 %v4014, 0.0
      %v4037 = vmax.f32 %v4016, 0.0
      %v4038 = vmax.f32 %v4020, 0.0
      %v4039 = vmax.f32 %v4022, 0.0
      %v4040 = vmax.f32 %v4026, 0.0
      %v4041 = vmax.f32 %v4028, 0.0
      %v4042 = vmax.f32 %v4032, 0.0
      %v4043 = vmax.f32 %v4034, 0.0
      %4044 = vst [vmem:[#allocation2] sm:$0xff] 0.0
      %4045 = vst [vmem:[#allocation2 + $0x8] sm:$0xff] 0.0
      %4046 = vst.msk [vmem:[#allocation2 + $0x10] sm:$0xff] %vm1557, 0.0
      %4047 = vst [vmem:[#allocation2 + $0x18] sm:$0xff] 0.0
      %4048 = vst [vmem:[#allocation2 + $0x20] sm:$0xff] 0.0
      %4049 = vst.msk [vmem:[#allocation2 + $0x28] sm:$0xff] %vm1557, 0.0
      %4050 = vst [vmem:[#allocation2 + $0x30] sm:$0xff] 0.0
      %4051 = vst [vmem:[#allocation2 + $0x38] sm:$0xff] 0.0
      %4052 = vst.msk [vmem:[#allocation2 + $0x40] sm:$0xff] %vm1557, 0.0
      %4053 = vst [vmem:[#allocation2 + $0x48] sm:$0xff] 0.0
      %4054 = vst [vmem:[#allocation2 + $0x50] sm:$0xff] 0.0
      %4055 = vst.msk [vmem:[#allocation2 + $0x58] sm:$0xff] %vm1557, 0.0
      %4056 = vst [vmem:[#allocation2 + $0x60] sm:$0xff] 0.0
      %4057 = vst [vmem:[#allocation2 + $0x68] sm:$0xff] 0.0
      %4058 = vst.msk [vmem:[#allocation2 + $0x70] sm:$0xff] %vm1557, 0.0
      %4059 = vst [vmem:[#allocation2 + $0x78] sm:$0xff] 0.0
      %4060 = vst [vmem:[#allocation2 + $0x80] sm:$0xff] 0.0
      %4061 = vst.msk [vmem:[#allocation2 + $0x88] sm:$0xff] %vm1557, 0.0
      %4062 = vst [vmem:[#allocation2 + $0x90] sm:$0xff] 0.0
      %4063 = vst [vmem:[#allocation2 + $0x98] sm:$0xff] 0.0
      %4064 = vst.msk [vmem:[#allocation2 + $0xa0] sm:$0xff] %vm1557, 0.0
      %4065 = vst [vmem:[#allocation2 + $0xa8] sm:$0xff] 0.0
      %4066 = vst [vmem:[#allocation2 + $0xb0] sm:$0xff] 0.0
      %4067 = vst.msk [vmem:[#allocation2 + $0xb8] sm:$0xff] %vm1557, 0.0
      %4068 = vst [vmem:[#allocation2 + $0xc0] sm:$0xff] 0.0
      %4069 = vst [vmem:[#allocation2 + $0xc8] sm:$0xff] 0.0
      %4070 = vst.msk [vmem:[#allocation2 + $0xd0] sm:$0xff] %vm1557, 0.0
      %4071 = vst [vmem:[#allocation2 + $0xd8] sm:$0xff] 0.0
      %4072 = vst [vmem:[#allocation2 + $0xe0] sm:$0xff] 0.0
      %4073 = vst.msk [vmem:[#allocation2 + $0xe8] sm:$0xff] %vm1557, 0.0
      %4074 = vst [vmem:[#allocation2 + $0xf0] sm:$0xff] 0.0
      %4075 = vst [vmem:[#allocation2 + $0xf8] sm:$0xff] 0.0
      %4076 = vst.msk [vmem:[#allocation2 + $0x100] sm:$0xff] %vm1557, 0.0
      %4077 = vst [vmem:[#allocation2 + $0x108] sm:$0xff] 0.0
      %4078 = vst [vmem:[#allocation2 + $0x110] sm:$0xff] 0.0
      %4079 = vst.msk [vmem:[#allocation2 + $0x118] sm:$0xff] %vm1557, 0.0
      %4080 = vst [vmem:[#allocation2 + $0x120] sm:$0xff] 0.0
      %4081 = vst [vmem:[#allocation2 + $0x128] sm:$0xff] 0.0
      %4082 = vst.msk [vmem:[#allocation2 + $0x130] sm:$0xff] %vm1557, 0.0
      %4083 = vst [vmem:[#allocation2 + $0x138] sm:$0xff] 0.0
      %4084 = vst [vmem:[#allocation2 + $0x140] sm:$0xff] 0.0
      %4085 = vst.msk [vmem:[#allocation2 + $0x148] sm:$0xff] %vm1557, 0.0
      %4086 = vst [vmem:[#allocation2 + $0x150] sm:$0xff] 0.0
      %4087 = vst [vmem:[#allocation2 + $0x158] sm:$0xff] 0.0
      %4088 = vst.msk [vmem:[#allocation2 + $0x160] sm:$0xff] %vm1557, 0.0
      %4089 = vst [vmem:[#allocation2 + $0x168] sm:$0xff] 0.0
      %4090 = vst [vmem:[#allocation2 + $0x170] sm:$0xff] 0.0
      %4091 = vst.msk [vmem:[#allocation2 + $0x178] sm:$0xff] %vm1557, 0.0
      %4092 = vst [vmem:[#allocation2 + $0x180] sm:$0xff] 0.0
      %4093 = vst [vmem:[#allocation2 + $0x188] sm:$0xff] 0.0
      %4094 = vst.msk [vmem:[#allocation2 + $0x190] sm:$0xff] %vm1557, 0.0
      %4095 = vst [vmem:[#allocation2 + $0x198] sm:$0xff] 0.0
      %4096 = vst [vmem:[#allocation2 + $0x1a0] sm:$0xff] 0.0
      %4097 = vst.msk [vmem:[#allocation2 + $0x1a8] sm:$0xff] %vm1557, 0.0
      %4098 = vst [vmem:[#allocation2 + $0x1b0] sm:$0xff] 0.0
      %4099 = vst [vmem:[#allocation2 + $0x1b8] sm:$0xff] 0.0
      %4100 = vst.msk [vmem:[#allocation2 + $0x1c0] sm:$0xff] %vm1557, 0.0
      %4101 = vst [vmem:[#allocation2 + $0x1c8] sm:$0xff] 0.0
      %4102 = vst [vmem:[#allocation2 + $0x1d0] sm:$0xff] 0.0
      %4103 = vst.msk [vmem:[#allocation2 + $0x1d8] sm:$0xff] %vm1557, 0.0
      %4112 = vrot.lane.b32.xlu0 %v4036, 1
      %v4113 = vpop.permute.xlu0 %4112
      %4114 = vrot.lane.b32.xlu0 %v4037, 1
      %v4115 = vpop.permute.xlu0 %4114
      %4116 = vrot.lane.b32.xlu0 %v4038, 1
      %v4117 = vpop.permute.xlu0 %4116
      %4118 = vrot.lane.b32.xlu0 %v4039, 1
      %v4119 = vpop.permute.xlu0 %4118
      %4120 = vrot.lane.b32.xlu0 %v4040, 1
      %v4121 = vpop.permute.xlu0 %4120
      %4122 = vrot.lane.b32.xlu0 %v4041, 1
      %v4123 = vpop.permute.xlu0 %4122
      %4124 = vrot.lane.b32.xlu0 %v4042, 1
      %v4125 = vpop.permute.xlu0 %4124
      %4126 = vrot.lane.b32.xlu0 %v4043, 1
      %v4127 = vpop.permute.xlu0 %4126
      %v4128 = vsel %vm1710, %v4113, %v4115
      %v4129 = vsel %vm1710, %v4117, %v4119
      %v4130 = vsel %vm1710, %v4121, %v4123
      %v4131 = vsel %vm1710, %v4125, %v4127
      %4140 = vst.msk [vmem:[#allocation2] sm:$0xff] %vm1731, %v4113
      %4141 = vst.msk [vmem:[#allocation2 + $0x8] sm:$0xff] %vm3830, %v4128
      %4142 = vst.msk [vmem:[#allocation2 + $0x18] sm:$0xff] %vm1731, %v4117
      %4143 = vst.msk [vmem:[#allocation2 + $0x20] sm:$0xff] %vm3830, %v4129
      %4144 = vst.msk [vmem:[#allocation2 + $0x30] sm:$0xff] %vm1731, %v4121
      %4145 = vst.msk [vmem:[#allocation2 + $0x38] sm:$0xff] %vm3830, %v4130
      %4146 = vst.msk [vmem:[#allocation2 + $0x48] sm:$0xff] %vm1731, %v4125
      %4147 = vst.msk [vmem:[#allocation2 + $0x50] sm:$0xff] %vm3830, %v4131
      %4148 = vst [vmem:[#allocation2 + $0x60] sm:$0xff] %v4036
      %4149 = vst.msk [vmem:[#allocation2 + $0x68] sm:$0xff] %vm3830, %v4037
      %4150 = vst [vmem:[#allocation2 + $0x78] sm:$0xff] %v4038
      %4151 = vst.msk [vmem:[#allocation2 + $0x80] sm:$0xff] %vm3830, %v4039
      %4152 = vst [vmem:[#allocation2 + $0x90] sm:$0xff] %v4040
      %4153 = vst.msk [vmem:[#allocation2 + $0x98] sm:$0xff] %vm3830, %v4041
      %4154 = vst [vmem:[#allocation2 + $0xa8] sm:$0xff] %v4042
      %4155 = vst.msk [vmem:[#allocation2 + $0xb0] sm:$0xff] %vm3830, %v4043
      %4156 = vrot.lane.b32.xlu0 %v4036, 127
      %v4157 = vpop.permute.xlu0 %4156
      %4158 = vrot.lane.b32.xlu0 %v4037, 127
      %v4159 = vpop.permute.xlu0 %4158
      %4160 = vrot.lane.b32.xlu0 %v4038, 127
      %v4161 = vpop.permute.xlu0 %4160
      %4162 = vrot.lane.b32.xlu0 %v4039, 127
      %v4163 = vpop.permute.xlu0 %4162
      %4164 = vrot.lane.b32.xlu0 %v4040, 127
      %v4165 = vpop.permute.xlu0 %4164
      %4166 = vrot.lane.b32.xlu0 %v4041, 127
      %v4167 = vpop.permute.xlu0 %4166
      %4168 = vrot.lane.b32.xlu0 %v4042, 127
      %v4169 = vpop.permute.xlu0 %4168
      %4170 = vrot.lane.b32.xlu0 %v4043, 127
      %v4171 = vpop.permute.xlu0 %4170
      %v4172 = vsel %vm1187, %v4157, %v4159
      %v4173 = vsel %vm1187, %v4161, %v4163
      %v4174 = vsel %vm1187, %v4165, %v4167
      %v4175 = vsel %vm1187, %v4169, %v4171
      %4184 = vst [vmem:[#allocation2 + $0xc0] sm:$0xff] %v4172
      %4185 = vst.msk [vmem:[#allocation2 + $0xc8] sm:$0xff] %vm3875, %v4159
      %4186 = vst [vmem:[#allocation2 + $0xd8] sm:$0xff] %v4173
      %4187 = vst.msk [vmem:[#allocation2 + $0xe0] sm:$0xff] %vm3875, %v4163
      %4188 = vst [vmem:[#allocation2 + $0xf0] sm:$0xff] %v4174
      %4189 = vst.msk [vmem:[#allocation2 + $0xf8] sm:$0xff] %vm3875, %v4167
      %4190 = vst [vmem:[#allocation2 + $0x108] sm:$0xff] %v4175
      %4191 = vst.msk [vmem:[#allocation2 + $0x110] sm:$0xff] %vm3875, %v4171
      %v4192 = vld [vmem:[%s23] sm:$0xff]
      %v4193 = vld [vmem:[%s23 + $0x8] sm:$0xff]
      %v4194 = vld [vmem:[%s23 + $0x10] sm:$0xff]
      %v4195 = vld [vmem:[%s23 + $0x18] sm:$0xff]
      %v4196 = vld [vmem:[#allocation2] sm:$0xff]
      %v4197 = vld [vmem:[#allocation2 + $0x8] sm:$0xff]
      %v4198 = vld [vmem:[#allocation2 + $0x18] sm:$0xff]
      %v4199 = vld [vmem:[#allocation2 + $0x20] sm:$0xff]
      %v4200 = vld [vmem:[#allocation2 + $0x30] sm:$0xff]
      %v4201 = vld [vmem:[#allocation2 + $0x38] sm:$0xff]
      %v4202 = vld [vmem:[#allocation2 + $0x48] sm:$0xff]
      %v4203 = vld [vmem:[#allocation2 + $0x50] sm:$0xff]
      %v4204 = vld [vmem:[#allocation2 + $0x60] sm:$0xff]
      %v4205 = vld [vmem:[#allocation2 + $0x68] sm:$0xff]
      %v4206 = vld [vmem:[#allocation2 + $0x78] sm:$0xff]
      %v4207 = vld [vmem:[#allocation2 + $0x80] sm:$0xff]
      %v4208 = vld [vmem:[#allocation2 + $0x90] sm:$0xff]
      %v4209 = vld [vmem:[#allocation2 + $0x98] sm:$0xff]
      %v4210 = vld [vmem:[#allocation2 + $0xa8] sm:$0xff]
      %v4211 = vld [vmem:[#allocation2 + $0xb0] sm:$0xff]
      %v4212 = vld [vmem:[#allocation2 + $0xc0] sm:$0xff]
      %v4213 = vld [vmem:[#allocation2 + $0xc8] sm:$0xff]
      %v4214 = vld [vmem:[#allocation2 + $0xd8] sm:$0xff]
      %v4215 = vld [vmem:[#allocation2 + $0xe0] sm:$0xff]
      %v4216 = vld [vmem:[#allocation2 + $0xf0] sm:$0xff]
      %v4217 = vld [vmem:[#allocation2 + $0xf8] sm:$0xff]
      %v4218 = vld [vmem:[#allocation2 + $0x108] sm:$0xff]
      %v4219 = vld [vmem:[#allocation2 + $0x110] sm:$0xff]
      %v4220 = vld [vmem:[%s25] sm:$0xff]
      %v4221 = vld [vmem:[%s25 + $0x8] sm:$0xff]
      %v4222 = vld [vmem:[%s25 + $0x10] sm:$0xff]
      %v4223 = vld [vmem:[%s25 + $0x18] sm:$0xff]
      %4225 = vset.pattern.permute.xlu0 0
      %4226 = vperm.xlu0 %4225, %v4220
      %v4227 = vpop.permute.xlu0 %4226
      %4230 = vset.pattern.permute.xlu0 0
      %4231 = vperm.xlu0 %4230, %v4221
      %v4232 = vpop.permute.xlu0 %4231
      %4235 = vset.pattern.permute.xlu0 0
      %4236 = vperm.xlu0 %4235, %v4222
      %v4237 = vpop.permute.xlu0 %4236
      %4240 = vset.pattern.permute.xlu0 0
      %4241 = vperm.xlu0 %4240, %v4223
      %v4242 = vpop.permute.xlu0 %4241
      %v4245 = vsel %vm1557, %v4192, 0
      %v4248 = vsel %vm1557, %v4193, 0
      %v4251 = vsel %vm1557, %v4194, 0
      %v4254 = vsel %vm1557, %v4195, 0
      %4256 = vmatprep.subr.mxu0 %v4197
      %4257 = vmatpush1.msra.mxu0 %v4196
      %4258 = vmatprep.subr.mxu0 %v4199
      %4259 = vmatpush1.msra.mxu0 %v4198
      %4260 = vmatprep.subr.mxu0 %v4201
      %4261 = vmatpush1.msra.mxu0 %v4200
      %4262 = vmatprep.subr.mxu0 %v4203
      %4263 = vmatpush1.msra.mxu0 %v4202
      %4264 = vmatprep.subr.mxu0 %v4205
      %4265 = vmatpush1.msra.mxu0 %v4204
      %4266 = vmatprep.subr.mxu0 %v4207
      %4267 = vmatpush1.msra.mxu0 %v4206
      %4268 = vmatprep.subr.mxu0 %v4209
      %4269 = vmatpush1.msra.mxu0 %v4208
      %4270 = vmatprep.subr.mxu0 %v4211
      %4271 = vmatpush1.msra.mxu0 %v4210
      %4272 = vmatprep.subr.mxu0 %v4213
      %4273 = vmatpush1.msra.mxu0 %v4212
      %4274 = vmatprep.subr.mxu0 %v4215
      %4275 = vmatpush1.msra.mxu0 %v4214
      %4276 = vmatprep.subr.mxu0 %v4217
      %4277 = vmatpush1.msra.mxu0 %v4216
      %4278 = vmatprep.subr.mxu0 %v4219
      %4279 = vmatpush1.msra.mxu0 %v4218
      %4280 = vmatprep.subr.mxu0 0.0
      %4281 = vmatpush1.msra.mxu0 0.0
      %4282 = vmatprep.subr.mxu0 0.0
      %4283 = vmatpush1.msra.mxu0 0.0
      %4284 = vmatprep.subr.mxu0 0.0
      %4285 = vmatpush1.msra.mxu0 0.0
      %4286 = vmatprep.subr.mxu0 0.0
      %4287 = vmatpush1.msra.mxu0 0.0
      %4288 = vmatprep.subr.mxu0 0.0
      %4289 = vmatpush1.msra.mxu0 0.0
      %4290 = vmatprep.subr.mxu0 0.0
      %4291 = vmatpush1.msra.mxu0 0.0
      %4292 = vmatprep.subr.mxu0 0.0
      %4293 = vmatpush1.msra.mxu0 0.0
      %4294 = vmatprep.subr.mxu0 0.0
      %4295 = vmatpush1.msra.mxu0 0.0
      %4296 = vmatprep.subr.mxu0 0.0
      %4297 = vmatpush1.msra.mxu0 0.0
      %4298 = vmatprep.subr.mxu0 0.0
      %4299 = vmatpush1.msra.mxu0 0.0
      %4300 = vmatprep.subr.mxu0 0.0
      %4301 = vmatpush1.msra.mxu0 0.0
      %4302 = vmatprep.subr.mxu0 0.0
      %4303 = vmatpush1.msra.mxu0 0.0
      %4304 = vmatprep.subr.mxu0 0.0
      %4305 = vmatpush1.msra.mxu0 0.0
      %4306 = vmatprep.subr.mxu0 0.0
      %4307 = vmatpush1.msra.mxu0 0.0
      %4308 = vmatprep.subr.mxu0 0.0
      %4309 = vmatpush1.msra.mxu0 0.0
      %4310 = vmatprep.subr.mxu0 0.0
      %4311 = vmatpush1.msra.mxu0 0.0
      %4312 = vmatprep.subr.mxu0 0.0
      %4313 = vmatpush1.msra.mxu0 0.0
      %4314 = vmatprep.subr.mxu0 0.0
      %4315 = vmatpush1.msra.mxu0 0.0
      %4316 = vmatprep.subr.mxu0 0.0
      %4317 = vmatpush1.msra.mxu0 0.0
      %4318 = vmatprep.subr.mxu0 0.0
      %4319 = vmatpush1.msra.mxu0 0.0
      %4320 = vmatprep.mubr.f32.mxu0 0.0
      %4321 = vmatmul.mubr.f32.gmra.mrb[0].mxu0 %v4245
      %v4322 = vpop.f32.mrb[0].mxu0
      %v4323 = vadd.f32 %v4227, %v4322
      %v4324 = vpop.f32.mrb[0].mxu0
      %v4325 = vadd.f32 %v4227, %v4324
      %4326 = vmatprep.mubr.f32.mxu0 0.0
      %4327 = vmatmul.mubr.f32.gmra.mrb[0].mxu0 %v4248
      %v4328 = vpop.f32.mrb[0].mxu0
      %v4329 = vadd.f32 %v4232, %v4328
      %v4330 = vpop.f32.mrb[0].mxu0
      %v4331 = vadd.f32 %v4232, %v4330
      %4332 = vmatprep.mubr.f32.mxu0 0.0
      %4333 = vmatmul.mubr.f32.gmra.mrb[0].mxu0 %v4251
      %v4334 = vpop.f32.mrb[0].mxu0
      %v4335 = vadd.f32 %v4237, %v4334
      %v4336 = vpop.f32.mrb[0].mxu0
      %v4337 = vadd.f32 %v4237, %v4336
      %4338 = vmatprep.mubr.f32.mxu0 0.0
      %4339 = vmatmul.mubr.f32.gmra.mrb[0].mxu0 %v4254
      %v4340 = vpop.f32.mrb[0].mxu0
      %v4341 = vadd.f32 %v4242, %v4340
      %v4342 = vpop.f32.mrb[0].mxu0
      %v4343 = vadd.f32 %v4242, %v4342
      %4344 = vdwg.mxu0
      %v4345 = vadd.f32 %v4323, %v3711
      %v4346 = vadd.f32 %v4325, %v3713
      %v4347 = vadd.f32 %v4329, %v3717
      %v4348 = vadd.f32 %v4331, %v3719
      %v4349 = vadd.f32 %v4335, %v3723
      %v4350 = vadd.f32 %v4337, %v3725
      %v4351 = vadd.f32 %v4341, %v3729
      %v4352 = vadd.f32 %v4343, %v3731
      %v4353 = vmax.f32 %v4345, 0.0
      %v4354 = vmax.f32 %v4346, 0.0
      %v4355 = vmax.f32 %v4347, 0.0
      %v4356 = vmax.f32 %v4348, 0.0
      %v4357 = vmax.f32 %v4349, 0.0
      %v4358 = vmax.f32 %v4350, 0.0
      %v4359 = vmax.f32 %v4351, 0.0
      %v4360 = vmax.f32 %v4352, 0.0
      %4361 = vst [vmem:[#allocation2] sm:$0xff] 0.0
      %4362 = vst [vmem:[#allocation2 + $0x8] sm:$0xff] 0.0
      %4363 = vst.msk [vmem:[#allocation2 + $0x10] sm:$0xff] %vm1557, 0.0
      %4364 = vst [vmem:[#allocation2 + $0x18] sm:$0xff] 0.0
      %4365 = vst [vmem:[#allocation2 + $0x20] sm:$0xff] 0.0
      %4366 = vst.msk [vmem:[#allocation2 + $0x28] sm:$0xff] %vm1557, 0.0
      %4367 = vst [vmem:[#allocation2 + $0x30] sm:$0xff] 0.0
      %4368 = vst [vmem:[#allocation2 + $0x38] sm:$0xff] 0.0
      %4369 = vst.msk [vmem:[#allocation2 + $0x40] sm:$0xff] %vm1557, 0.0
      %4370 = vst [vmem:[#allocation2 + $0x48] sm:$0xff] 0.0
      %4371 = vst [vmem:[#allocation2 + $0x50] sm:$0xff] 0.0
      %4372 = vst.msk [vmem:[#allocation2 + $0x58] sm:$0xff] %vm1557, 0.0
      %4373 = vst [vmem:[#allocation2 + $0x60] sm:$0xff] 0.0
      %4374 = vst [vmem:[#allocation2 + $0x68] sm:$0xff] 0.0
      %4375 = vst.msk [vmem:[#allocation2 + $0x70] sm:$0xff] %vm1557, 0.0
      %4376 = vst [vmem:[#allocation2 + $0x78] sm:$0xff] 0.0
      %4377 = vst [vmem:[#allocation2 + $0x80] sm:$0xff] 0.0
      %4378 = vst.msk [vmem:[#allocation2 + $0x88] sm:$0xff] %vm1557, 0.0
      %4379 = vst [vmem:[#allocation2 + $0x90] sm:$0xff] 0.0
      %4380 = vst [vmem:[#allocation2 + $0x98] sm:$0xff] 0.0
      %4381 = vst.msk [vmem:[#allocation2 + $0xa0] sm:$0xff] %vm1557, 0.0
      %4382 = vst [vmem:[#allocation2 + $0xa8] sm:$0xff] 0.0
      %4383 = vst [vmem:[#allocation2 + $0xb0] sm:$0xff] 0.0
      %4384 = vst.msk [vmem:[#allocation2 + $0xb8] sm:$0xff] %vm1557, 0.0
      %4385 = vst [vmem:[#allocation2 + $0xc0] sm:$0xff] 0.0
      %4386 = vst [vmem:[#allocation2 + $0xc8] sm:$0xff] 0.0
      %4387 = vst.msk [vmem:[#allocation2 + $0xd0] sm:$0xff] %vm1557, 0.0
      %4388 = vst [vmem:[#allocation2 + $0xd8] sm:$0xff] 0.0
      %4389 = vst [vmem:[#allocation2 + $0xe0] sm:$0xff] 0.0
      %4390 = vst.msk [vmem:[#allocation2 + $0xe8] sm:$0xff] %vm1557, 0.0
      %4391 = vst [vmem:[#allocation2 + $0xf0] sm:$0xff] 0.0
      %4392 = vst [vmem:[#allocation2 + $0xf8] sm:$0xff] 0.0
      %4393 = vst.msk [vmem:[#allocation2 + $0x100] sm:$0xff] %vm1557, 0.0
      %4394 = vst [vmem:[#allocation2 + $0x108] sm:$0xff] 0.0
      %4395 = vst [vmem:[#allocation2 + $0x110] sm:$0xff] 0.0
      %4396 = vst.msk [vmem:[#allocation2 + $0x118] sm:$0xff] %vm1557, 0.0
      %4397 = vst [vmem:[#allocation2 + $0x120] sm:$0xff] 0.0
      %4398 = vst [vmem:[#allocation2 + $0x128] sm:$0xff] 0.0
      %4399 = vst.msk [vmem:[#allocation2 + $0x130] sm:$0xff] %vm1557, 0.0
      %4400 = vst [vmem:[#allocation2 + $0x138] sm:$0xff] 0.0
      %4401 = vst [vmem:[#allocation2 + $0x140] sm:$0xff] 0.0
      %4402 = vst.msk [vmem:[#allocation2 + $0x148] sm:$0xff] %vm1557, 0.0
      %4403 = vst [vmem:[#allocation2 + $0x150] sm:$0xff] 0.0
      %4404 = vst [vmem:[#allocation2 + $0x158] sm:$0xff] 0.0
      %4405 = vst.msk [vmem:[#allocation2 + $0x160] sm:$0xff] %vm1557, 0.0
      %4406 = vst [vmem:[#allocation2 + $0x168] sm:$0xff] 0.0
      %4407 = vst [vmem:[#allocation2 + $0x170] sm:$0xff] 0.0
      %4408 = vst.msk [vmem:[#allocation2 + $0x178] sm:$0xff] %vm1557, 0.0
      %4409 = vst [vmem:[#allocation2 + $0x180] sm:$0xff] 0.0
      %4410 = vst [vmem:[#allocation2 + $0x188] sm:$0xff] 0.0
      %4411 = vst.msk [vmem:[#allocation2 + $0x190] sm:$0xff] %vm1557, 0.0
      %4412 = vst [vmem:[#allocation2 + $0x198] sm:$0xff] 0.0
      %4413 = vst [vmem:[#allocation2 + $0x1a0] sm:$0xff] 0.0
      %4414 = vst.msk [vmem:[#allocation2 + $0x1a8] sm:$0xff] %vm1557, 0.0
      %4415 = vst [vmem:[#allocation2 + $0x1b0] sm:$0xff] 0.0
      %4416 = vst [vmem:[#allocation2 + $0x1b8] sm:$0xff] 0.0
      %4417 = vst.msk [vmem:[#allocation2 + $0x1c0] sm:$0xff] %vm1557, 0.0
      %4418 = vst [vmem:[#allocation2 + $0x1c8] sm:$0xff] 0.0
      %4419 = vst [vmem:[#allocation2 + $0x1d0] sm:$0xff] 0.0
      %4420 = vst.msk [vmem:[#allocation2 + $0x1d8] sm:$0xff] %vm1557, 0.0
      %4429 = vrot.lane.b32.xlu0 %v4353, 1
      %v4430 = vpop.permute.xlu0 %4429
      %4431 = vrot.lane.b32.xlu0 %v4354, 1
      %v4432 = vpop.permute.xlu0 %4431
      %4433 = vrot.lane.b32.xlu0 %v4355, 1
      %v4434 = vpop.permute.xlu0 %4433
      %4435 = vrot.lane.b32.xlu0 %v4356, 1
      %v4436 = vpop.permute.xlu0 %4435
      %4437 = vrot.lane.b32.xlu0 %v4357, 1
      %v4438 = vpop.permute.xlu0 %4437
      %4439 = vrot.lane.b32.xlu0 %v4358, 1
      %v4440 = vpop.permute.xlu0 %4439
      %4441 = vrot.lane.b32.xlu0 %v4359, 1
      %v4442 = vpop.permute.xlu0 %4441
      %4443 = vrot.lane.b32.xlu0 %v4360, 1
      %v4444 = vpop.permute.xlu0 %4443
      %v4445 = vsel %vm1710, %v4430, %v4432
      %v4446 = vsel %vm1710, %v4434, %v4436
      %v4447 = vsel %vm1710, %v4438, %v4440
      %v4448 = vsel %vm1710, %v4442, %v4444
      %4457 = vst.msk [vmem:[#allocation2] sm:$0xff] %vm1731, %v4430
      %4458 = vst.msk [vmem:[#allocation2 + $0x8] sm:$0xff] %vm3830, %v4445
      %4459 = vst.msk [vmem:[#allocation2 + $0x18] sm:$0xff] %vm1731, %v4434
      %4460 = vst.msk [vmem:[#allocation2 + $0x20] sm:$0xff] %vm3830, %v4446
      %4461 = vst.msk [vmem:[#allocation2 + $0x30] sm:$0xff] %vm1731, %v4438
      %4462 = vst.msk [vmem:[#allocation2 + $0x38] sm:$0xff] %vm3830, %v4447
      %4463 = vst.msk [vmem:[#allocation2 + $0x48] sm:$0xff] %vm1731, %v4442
      %4464 = vst.msk [vmem:[#allocation2 + $0x50] sm:$0xff] %vm3830, %v4448
      %4465 = vst [vmem:[#allocation2 + $0x60] sm:$0xff] %v4353
      %4466 = vst.msk [vmem:[#allocation2 + $0x68] sm:$0xff] %vm3830, %v4354
      %4467 = vst [vmem:[#allocation2 + $0x78] sm:$0xff] %v4355
      %4468 = vst.msk [vmem:[#allocation2 + $0x80] sm:$0xff] %vm3830, %v4356
      %4469 = vst [vmem:[#allocation2 + $0x90] sm:$0xff] %v4357
      %4470 = vst.msk [vmem:[#allocation2 + $0x98] sm:$0xff] %vm3830, %v4358
      %4471 = vst [vmem:[#allocation2 + $0xa8] sm:$0xff] %v4359
      %4472 = vst.msk [vmem:[#allocation2 + $0xb0] sm:$0xff] %vm3830, %v4360
      %4473 = vrot.lane.b32.xlu0 %v4353, 127
      %v4474 = vpop.permute.xlu0 %4473
      %4475 = vrot.lane.b32.xlu0 %v4354, 127
      %v4476 = vpop.permute.xlu0 %4475
      %4477 = vrot.lane.b32.xlu0 %v4355, 127
      %v4478 = vpop.permute.xlu0 %4477
      %4479 = vrot.lane.b32.xlu0 %v4356, 127
      %v4480 = vpop.permute.xlu0 %4479
      %4481 = vrot.lane.b32.xlu0 %v4357, 127
      %v4482 = vpop.permute.xlu0 %4481
      %4483 = vrot.lane.b32.xlu0 %v4358, 127
      %v4484 = vpop.permute.xlu0 %4483
      %4485 = vrot.lane.b32.xlu0 %v4359, 127
      %v4486 = vpop.permute.xlu0 %4485
      %4487 = vrot.lane.b32.xlu0 %v4360, 127
      %v4488 = vpop.permute.xlu0 %4487
      %v4489 = vsel %vm1187, %v4474, %v4476
      %v4490 = vsel %vm1187, %v4478, %v4480
      %v4491 = vsel %vm1187, %v4482, %v4484
      %v4492 = vsel %vm1187, %v4486, %v4488
      %4501 = vst [vmem:[#allocation2 + $0xc0] sm:$0xff] %v4489
      %4502 = vst.msk [vmem:[#allocation2 + $0xc8] sm:$0xff] %vm3875, %v4476
      %4503 = vst [vmem:[#allocation2 + $0xd8] sm:$0xff] %v4490
      %4504 = vst.msk [vmem:[#allocation2 + $0xe0] sm:$0xff] %vm3875, %v4480
      %4505 = vst [vmem:[#allocation2 + $0xf0] sm:$0xff] %v4491
      %4506 = vst.msk [vmem:[#allocation2 + $0xf8] sm:$0xff] %vm3875, %v4484
      %4507 = vst [vmem:[#allocation2 + $0x108] sm:$0xff] %v4492
      %4508 = vst.msk [vmem:[#allocation2 + $0x110] sm:$0xff] %vm3875, %v4488
      %v4509 = vld [vmem:[%s27] sm:$0xff]
      %v4510 = vld [vmem:[%s27 + $0x8] sm:$0xff]
      %v4511 = vld [vmem:[%s27 + $0x10] sm:$0xff]
      %v4512 = vld [vmem:[%s27 + $0x18] sm:$0xff]
      %v4513 = vld [vmem:[#allocation2] sm:$0xff]
      %v4514 = vld [vmem:[#allocation2 + $0x8] sm:$0xff]
      %v4515 = vld [vmem:[#allocation2 + $0x18] sm:$0xff]
      %v4516 = vld [vmem:[#allocation2 + $0x20] sm:$0xff]
      %v4517 = vld [vmem:[#allocation2 + $0x30] sm:$0xff]
      %v4518 = vld [vmem:[#allocation2 + $0x38] sm:$0xff]
      %v4519 = vld [vmem:[#allocation2 + $0x48] sm:$0xff]
      %v4520 = vld [vmem:[#allocation2 + $0x50] sm:$0xff]
      %v4521 = vld [vmem:[#allocation2 + $0x60] sm:$0xff]
      %v4522 = vld [vmem:[#allocation2 + $0x68] sm:$0xff]
      %v4523 = vld [vmem:[#allocation2 + $0x78] sm:$0xff]
      %v4524 = vld [vmem:[#allocation2 + $0x80] sm:$0xff]
      %v4525 = vld [vmem:[#allocation2 + $0x90] sm:$0xff]
      %v4526 = vld [vmem:[#allocation2 + $0x98] sm:$0xff]
      %v4527 = vld [vmem:[#allocation2 + $0xa8] sm:$0xff]
      %v4528 = vld [vmem:[#allocation2 + $0xb0] sm:$0xff]
      %v4529 = vld [vmem:[#allocation2 + $0xc0] sm:$0xff]
      %v4530 = vld [vmem:[#allocation2 + $0xc8] sm:$0xff]
      %v4531 = vld [vmem:[#allocation2 + $0xd8] sm:$0xff]
      %v4532 = vld [vmem:[#allocation2 + $0xe0] sm:$0xff]
      %v4533 = vld [vmem:[#allocation2 + $0xf0] sm:$0xff]
      %v4534 = vld [vmem:[#allocation2 + $0xf8] sm:$0xff]
      %v4535 = vld [vmem:[#allocation2 + $0x108] sm:$0xff]
      %v4536 = vld [vmem:[#allocation2 + $0x110] sm:$0xff]
      %v4537 = vld [vmem:[%s29] sm:$0xff]
      %v4538 = vld [vmem:[%s29 + $0x8] sm:$0xff]
      %v4539 = vld [vmem:[%s29 + $0x10] sm:$0xff]
      %v4540 = vld [vmem:[%s29 + $0x18] sm:$0xff]
      %4542 = vset.pattern.permute.xlu0 0
      %4543 = vperm.xlu0 %4542, %v4537
      %v4544 = vpop.permute.xlu0 %4543
      %4547 = vset.pattern.permute.xlu0 0
      %4548 = vperm.xlu0 %4547, %v4538
      %v4549 = vpop.permute.xlu0 %4548
      %4552 = vset.pattern.permute.xlu0 0
      %4553 = vperm.xlu0 %4552, %v4539
      %v4554 = vpop.permute.xlu0 %4553
      %4557 = vset.pattern.permute.xlu0 0
      %4558 = vperm.xlu0 %4557, %v4540
      %v4559 = vpop.permute.xlu0 %4558
      %v4562 = vsel %vm1557, %v4509, 0
      %v4565 = vsel %vm1557, %v4510, 0
      %v4568 = vsel %vm1557, %v4511, 0
      %v4571 = vsel %vm1557, %v4512, 0
      %4573 = vmatprep.subr.mxu0 %v4514
      %4574 = vmatpush1.msra.mxu0 %v4513
      %4575 = vmatprep.subr.mxu0 %v4516
      %4576 = vmatpush1.msra.mxu0 %v4515
      %4577 = vmatprep.subr.mxu0 %v4518
      %4578 = vmatpush1.msra.mxu0 %v4517
      %4579 = vmatprep.subr.mxu0 %v4520
      %4580 = vmatpush1.msra.mxu0 %v4519
      %4581 = vmatprep.subr.mxu0 %v4522
      %4582 = vmatpush1.msra.mxu0 %v4521
      %4583 = vmatprep.subr.mxu0 %v4524
      %4584 = vmatpush1.msra.mxu0 %v4523
      %4585 = vmatprep.subr.mxu0 %v4526
      %4586 = vmatpush1.msra.mxu0 %v4525
      %4587 = vmatprep.subr.mxu0 %v4528
      %4588 = vmatpush1.msra.mxu0 %v4527
      %4589 = vmatprep.subr.mxu0 %v4530
      %4590 = vmatpush1.msra.mxu0 %v4529
      %4591 = vmatprep.subr.mxu0 %v4532
      %4592 = vmatpush1.msra.mxu0 %v4531
      %4593 = vmatprep.subr.mxu0 %v4534
      %4594 = vmatpush1.msra.mxu0 %v4533
      %4595 = vmatprep.subr.mxu0 %v4536
      %4596 = vmatpush1.msra.mxu0 %v4535
      %4597 = vmatprep.subr.mxu0 0.0
      %4598 = vmatpush1.msra.mxu0 0.0
      %4599 = vmatprep.subr.mxu0 0.0
      %4600 = vmatpush1.msra.mxu0 0.0
      %4601 = vmatprep.subr.mxu0 0.0
      %4602 = vmatpush1.msra.mxu0 0.0
      %4603 = vmatprep.subr.mxu0 0.0
      %4604 = vmatpush1.msra.mxu0 0.0
      %4605 = vmatprep.subr.mxu0 0.0
      %4606 = vmatpush1.msra.mxu0 0.0
      %4607 = vmatprep.subr.mxu0 0.0
      %4608 = vmatpush1.msra.mxu0 0.0
      %4609 = vmatprep.subr.mxu0 0.0
      %4610 = vmatpush1.msra.mxu0 0.0
      %4611 = vmatprep.subr.mxu0 0.0
      %4612 = vmatpush1.msra.mxu0 0.0
      %4613 = vmatprep.subr.mxu0 0.0
      %4614 = vmatpush1.msra.mxu0 0.0
      %4615 = vmatprep.subr.mxu0 0.0
      %4616 = vmatpush1.msra.mxu0 0.0
      %4617 = vmatprep.subr.mxu0 0.0
      %4618 = vmatpush1.msra.mxu0 0.0
      %4619 = vmatprep.subr.mxu0 0.0
      %4620 = vmatpush1.msra.mxu0 0.0
      %4621 = vmatprep.subr.mxu0 0.0
      %4622 = vmatpush1.msra.mxu0 0.0
      %4623 = vmatprep.subr.mxu0 0.0
      %4624 = vmatpush1.msra.mxu0 0.0
      %4625 = vmatprep.subr.mxu0 0.0
      %4626 = vmatpush1.msra.mxu0 0.0
      %4627 = vmatprep.subr.mxu0 0.0
      %4628 = vmatpush1.msra.mxu0 0.0
      %4629 = vmatprep.subr.mxu0 0.0
      %4630 = vmatpush1.msra.mxu0 0.0
      %4631 = vmatprep.subr.mxu0 0.0
      %4632 = vmatpush1.msra.mxu0 0.0
      %4633 = vmatprep.subr.mxu0 0.0
      %4634 = vmatpush1.msra.mxu0 0.0
      %4635 = vmatprep.subr.mxu0 0.0
      %4636 = vmatpush1.msra.mxu0 0.0
      %4637 = vmatprep.mubr.f32.mxu0 0.0
      %4638 = vmatmul.mubr.f32.gmra.mrb[0].mxu0 %v4562
      %v4639 = vpop.f32.mrb[0].mxu0
      %v4640 = vadd.f32 %v4544, %v4639
      %v4641 = vpop.f32.mrb[0].mxu0
      %v4642 = vadd.f32 %v4544, %v4641
      %4643 = vmatprep.mubr.f32.mxu0 0.0
      %4644 = vmatmul.mubr.f32.gmra.mrb[0].mxu0 %v4565
      %v4645 = vpop.f32.mrb[0].mxu0
      %v4646 = vadd.f32 %v4549, %v4645
      %v4647 = vpop.f32.mrb[0].mxu0
      %v4648 = vadd.f32 %v4549, %v4647
      %4649 = vmatprep.mubr.f32.mxu0 0.0
      %4650 = vmatmul.mubr.f32.gmra.mrb[0].mxu0 %v4568
      %v4651 = vpop.f32.mrb[0].mxu0
      %v4652 = vadd.f32 %v4554, %v4651
      %v4653 = vpop.f32.mrb[0].mxu0
      %v4654 = vadd.f32 %v4554, %v4653
      %4655 = vmatprep.mubr.f32.mxu0 0.0
      %4656 = vmatmul.mubr.f32.gmra.mrb[0].mxu0 %v4571
      %v4657 = vpop.f32.mrb[0].mxu0
      %v4658 = vadd.f32 %v4559, %v4657
      %v4659 = vpop.f32.mrb[0].mxu0
      %v4660 = vadd.f32 %v4559, %v4659
      %4661 = vdwg.mxu0
      %v4662 = vmax.f32 %v4640, 0.0
      %v4663 = vmax.f32 %v4642, 0.0
      %v4664 = vmax.f32 %v4646, 0.0
      %v4665 = vmax.f32 %v4648, 0.0
      %v4666 = vmax.f32 %v4652, 0.0
      %v4667 = vmax.f32 %v4654, 0.0
      %v4668 = vmax.f32 %v4658, 0.0
      %v4669 = vmax.f32 %v4660, 0.0
      %v4671 = vsel %vm3830, %v4663, 0
      %v4674 = vsel %vm3830, %v4665, 0
      %v4677 = vsel %vm3830, %v4667, 0
      %v4680 = vsel %vm3830, %v4669, 0
      %4682 = vmatprep.subr.mxu0 0.0
      %4683 = vmatpush1.msra.mxu0 %v3455
      %4684 = vmatprep.subr.mxu0 0.0
      %4685 = vmatpush1.msra.mxu0 %v3457
      %4686 = vmatprep.subr.mxu0 0.0
      %4687 = vmatpush1.msra.mxu0 %v3459
      %4688 = vmatprep.subr.mxu0 0.0
      %4689 = vmatpush1.msra.mxu0 %v3461
      %4690 = vmatprep.subr.mxu0 0.0
      %4691 = vmatpush1.msra.mxu0 %v3463
      %4692 = vmatprep.subr.mxu0 0.0
      %4693 = vmatpush1.msra.mxu0 %v3465
      %4694 = vmatprep.subr.mxu0 0.0
      %4695 = vmatpush1.msra.mxu0 %v3467
      %4696 = vmatprep.subr.mxu0 0.0
      %4697 = vmatpush1.msra.mxu0 %v3469
      %4698 = vmatprep.subr.mxu0 0.0
      %4699 = vmatpush1.msra.mxu0 %v3471
      %4700 = vmatprep.subr.mxu0 0.0
      %4701 = vmatpush1.msra.mxu0 %v3473
      %4702 = vmatprep.subr.mxu0 0.0
      %4703 = vmatpush1.msra.mxu0 %v3475
      %4704 = vmatprep.subr.mxu0 0.0
      %4705 = vmatpush1.msra.mxu0 %v3477
      %4706 = vmatprep.subr.mxu0 0.0
      %4707 = vmatpush1.msra.mxu0 %v3479
      %4708 = vmatprep.subr.mxu0 0.0
      %4709 = vmatpush1.msra.mxu0 %v3481
      %4710 = vmatprep.subr.mxu0 0.0
      %4711 = vmatpush1.msra.mxu0 %v3483
      %4712 = vmatprep.subr.mxu0 0.0
      %4713 = vmatpush1.msra.mxu0 %v3485
      %4714 = vmatprep.subr.mxu0 0.0
      %4715 = vmatpush1.msra.mxu0 %v3487
      %4716 = vmatprep.subr.mxu0 0.0
      %4717 = vmatpush1.msra.mxu0 %v3489
      %4718 = vmatprep.subr.mxu0 0.0
      %4719 = vmatpush1.msra.mxu0 %v3491
      %4720 = vmatprep.subr.mxu0 0.0
      %4721 = vmatpush1.msra.mxu0 %v3493
      %4722 = vmatprep.subr.mxu0 0.0
      %4723 = vmatpush1.msra.mxu0 %v3495
      %4724 = vmatprep.subr.mxu0 0.0
      %4725 = vmatpush1.msra.mxu0 %v3497
      %4726 = vmatprep.subr.mxu0 0.0
      %4727 = vmatpush1.msra.mxu0 0.0
      %4728 = vmatprep.subr.mxu0 0.0
      %4729 = vmatpush1.msra.mxu0 0.0
      %4730 = vmatprep.subr.mxu0 0.0
      %4731 = vmatpush1.msra.mxu0 0.0
      %4732 = vmatprep.subr.mxu0 0.0
      %4733 = vmatpush1.msra.mxu0 0.0
      %4734 = vmatprep.subr.mxu0 0.0
      %4735 = vmatpush1.msra.mxu0 0.0
      %4736 = vmatprep.subr.mxu0 0.0
      %4737 = vmatpush1.msra.mxu0 0.0
      %4738 = vmatprep.subr.mxu0 0.0
      %4739 = vmatpush1.msra.mxu0 0.0
      %4740 = vmatprep.subr.mxu0 0.0
      %4741 = vmatpush1.msra.mxu0 0.0
      %4742 = vmatprep.subr.mxu0 0.0
      %4743 = vmatpush1.msra.mxu0 0.0
      %4744 = vmatprep.subr.mxu0 0.0
      %4745 = vmatpush1.msra.mxu0 0.0
      %4746 = vmatprep.mubr.f32.mxu0 %v4671
      %4747 = vmatmul.mubr.f32.gmra.mrb[0].mxu0 %v4662
      %v4748 = vpop.f32.mrb[0].mxu0
      %v4749 = vadd.f32 0.0, %v4748
      %v4750 = vpop.f32.mrb[0].mxu0
      %4751 = vmatprep.mubr.f32.mxu0 %v4674
      %4752 = vmatmul.mubr.f32.gmra.mrb[0].mxu0 %v4664
      %v4753 = vpop.f32.mrb[0].mxu0
      %v4754 = vadd.f32 0.0, %v4753
      %v4755 = vpop.f32.mrb[0].mxu0
      %4756 = vmatprep.mubr.f32.mxu0 %v4677
      %4757 = vmatmul.mubr.f32.gmra.mrb[0].mxu0 %v4666
      %v4758 = vpop.f32.mrb[0].mxu0
      %v4759 = vadd.f32 0.0, %v4758
      %v4760 = vpop.f32.mrb[0].mxu0
      %4761 = vmatprep.mubr.f32.mxu0 %v4680
      %4762 = vmatmul.mubr.f32.gmra.mrb[0].mxu0 %v4668
      %v4763 = vpop.f32.mrb[0].mxu0
      %v4764 = vadd.f32 0.0, %v4763
      %v4765 = vpop.f32.mrb[0].mxu0
      %4766 = vdwg.mxu0
      %4767 = vst [vmem:[#allocation2] sm:$0xff] 0.0
      %4768 = vst [vmem:[#allocation2 + $0x8] sm:$0xff] 0.0
      %4769 = vst.msk [vmem:[#allocation2 + $0x10] sm:$0xff] %vm1557, 0.0
      %4770 = vst [vmem:[#allocation2 + $0x18] sm:$0xff] 0.0
      %4771 = vst [vmem:[#allocation2 + $0x20] sm:$0xff] 0.0
      %4772 = vst.msk [vmem:[#allocation2 + $0x28] sm:$0xff] %vm1557, 0.0
      %4773 = vst [vmem:[#allocation2 + $0x30] sm:$0xff] 0.0
      %4774 = vst [vmem:[#allocation2 + $0x38] sm:$0xff] 0.0
      %4775 = vst.msk [vmem:[#allocation2 + $0x40] sm:$0xff] %vm1557, 0.0
      %4776 = vst [vmem:[#allocation2 + $0x48] sm:$0xff] 0.0
      %4777 = vst [vmem:[#allocation2 + $0x50] sm:$0xff] 0.0
      %4778 = vst.msk [vmem:[#allocation2 + $0x58] sm:$0xff] %vm1557, 0.0
      %4779 = vst [vmem:[#allocation2 + $0x60] sm:$0xff] 0.0
      %4780 = vst [vmem:[#allocation2 + $0x68] sm:$0xff] 0.0
      %4781 = vst.msk [vmem:[#allocation2 + $0x70] sm:$0xff] %vm1557, 0.0
      %4782 = vst [vmem:[#allocation2 + $0x78] sm:$0xff] 0.0
      %4783 = vst [vmem:[#allocation2 + $0x80] sm:$0xff] 0.0
      %4784 = vst.msk [vmem:[#allocation2 + $0x88] sm:$0xff] %vm1557, 0.0
      %4785 = vst [vmem:[#allocation2 + $0x90] sm:$0xff] 0.0
      %4786 = vst [vmem:[#allocation2 + $0x98] sm:$0xff] 0.0
      %4787 = vst.msk [vmem:[#allocation2 + $0xa0] sm:$0xff] %vm1557, 0.0
      %4788 = vst [vmem:[#allocation2 + $0xa8] sm:$0xff] 0.0
      %4789 = vst [vmem:[#allocation2 + $0xb0] sm:$0xff] 0.0
      %4790 = vst.msk [vmem:[#allocation2 + $0xb8] sm:$0xff] %vm1557, 0.0
      %4791 = vst [vmem:[#allocation2 + $0xc0] sm:$0xff] 0.0
      %4792 = vst [vmem:[#allocation2 + $0xc8] sm:$0xff] 0.0
      %4793 = vst.msk [vmem:[#allocation2 + $0xd0] sm:$0xff] %vm1557, 0.0
      %4794 = vst [vmem:[#allocation2 + $0xd8] sm:$0xff] 0.0
      %4795 = vst [vmem:[#allocation2 + $0xe0] sm:$0xff] 0.0
      %4796 = vst.msk [vmem:[#allocation2 + $0xe8] sm:$0xff] %vm1557, 0.0
      %4797 = vst [vmem:[#allocation2 + $0xf0] sm:$0xff] 0.0
      %4798 = vst [vmem:[#allocation2 + $0xf8] sm:$0xff] 0.0
      %4799 = vst.msk [vmem:[#allocation2 + $0x100] sm:$0xff] %vm1557, 0.0
      %4800 = vst [vmem:[#allocation2 + $0x108] sm:$0xff] 0.0
      %4801 = vst [vmem:[#allocation2 + $0x110] sm:$0xff] 0.0
      %4802 = vst.msk [vmem:[#allocation2 + $0x118] sm:$0xff] %vm1557, 0.0
      %4803 = vst [vmem:[#allocation2 + $0x120] sm:$0xff] 0.0
      %4804 = vst [vmem:[#allocation2 + $0x128] sm:$0xff] 0.0
      %4805 = vst.msk [vmem:[#allocation2 + $0x130] sm:$0xff] %vm1557, 0.0
      %4806 = vst [vmem:[#allocation2 + $0x138] sm:$0xff] 0.0
      %4807 = vst [vmem:[#allocation2 + $0x140] sm:$0xff] 0.0
      %4808 = vst.msk [vmem:[#allocation2 + $0x148] sm:$0xff] %vm1557, 0.0
      %4809 = vst [vmem:[#allocation2 + $0x150] sm:$0xff] 0.0
      %4810 = vst [vmem:[#allocation2 + $0x158] sm:$0xff] 0.0
      %4811 = vst.msk [vmem:[#allocation2 + $0x160] sm:$0xff] %vm1557, 0.0
      %4812 = vst [vmem:[#allocation2 + $0x168] sm:$0xff] 0.0
      %4813 = vst [vmem:[#allocation2 + $0x170] sm:$0xff] 0.0
      %4814 = vst.msk [vmem:[#allocation2 + $0x178] sm:$0xff] %vm1557, 0.0
      %4815 = vst [vmem:[#allocation2 + $0x180] sm:$0xff] 0.0
      %4816 = vst [vmem:[#allocation2 + $0x188] sm:$0xff] 0.0
      %4817 = vst.msk [vmem:[#allocation2 + $0x190] sm:$0xff] %vm1557, 0.0
      %4818 = vst [vmem:[#allocation2 + $0x198] sm:$0xff] 0.0
      %4819 = vst [vmem:[#allocation2 + $0x1a0] sm:$0xff] 0.0
      %4820 = vst.msk [vmem:[#allocation2 + $0x1a8] sm:$0xff] %vm1557, 0.0
      %4821 = vst [vmem:[#allocation2 + $0x1b0] sm:$0xff] 0.0
      %4822 = vst [vmem:[#allocation2 + $0x1b8] sm:$0xff] 0.0
      %4823 = vst.msk [vmem:[#allocation2 + $0x1c0] sm:$0xff] %vm1557, 0.0
      %4824 = vst [vmem:[#allocation2 + $0x1c8] sm:$0xff] 0.0
      %4825 = vst [vmem:[#allocation2 + $0x1d0] sm:$0xff] 0.0
      %4826 = vst.msk [vmem:[#allocation2 + $0x1d8] sm:$0xff] %vm1557, 0.0
      %4831 = vrot.lane.b32.xlu0 %v4749, 1
      %v4832 = vpop.permute.xlu0 %4831
      %4833 = vrot.lane.b32.xlu0 %v4754, 1
      %v4834 = vpop.permute.xlu0 %4833
      %4835 = vrot.lane.b32.xlu0 %v4759, 1
      %v4836 = vpop.permute.xlu0 %4835
      %4837 = vrot.lane.b32.xlu0 %v4764, 1
      %v4838 = vpop.permute.xlu0 %4837
      %vm4843 = vcmask 719880
      %4844 = vst.msk [vmem:[#allocation2] sm:$0xff] %vm4843, %v4832
      %4845 = vst.msk [vmem:[#allocation2 + $0x18] sm:$0xff] %vm4843, %v4834
      %4846 = vst.msk [vmem:[#allocation2 + $0x30] sm:$0xff] %vm4843, %v4836
      %4847 = vst.msk [vmem:[#allocation2 + $0x48] sm:$0xff] %vm4843, %v4838
      %vm4848 = vcmask 719872
      %4849 = vst.msk [vmem:[#allocation2 + $0x60] sm:$0xff] %vm4848, %v4749
      %4850 = vst.msk [vmem:[#allocation2 + $0x78] sm:$0xff] %vm4848, %v4754
      %4851 = vst.msk [vmem:[#allocation2 + $0x90] sm:$0xff] %vm4848, %v4759
      %4852 = vst.msk [vmem:[#allocation2 + $0xa8] sm:$0xff] %vm4848, %v4764
      %4853 = vrot.lane.b32.xlu0 %v4749, 127
      %v4854 = vpop.permute.xlu0 %4853
      %4855 = vrot.lane.b32.xlu0 %v4754, 127
      %v4856 = vpop.permute.xlu0 %4855
      %4857 = vrot.lane.b32.xlu0 %v4759, 127
      %v4858 = vpop.permute.xlu0 %4857
      %4859 = vrot.lane.b32.xlu0 %v4764, 127
      %v4860 = vpop.permute.xlu0 %4859
      %vm4865 = vcmask 711680
      %4866 = vst.msk [vmem:[#allocation2 + $0xc0] sm:$0xff] %vm4865, %v4854
      %4867 = vst.msk [vmem:[#allocation2 + $0xd8] sm:$0xff] %vm4865, %v4856
      %4868 = vst.msk [vmem:[#allocation2 + $0xf0] sm:$0xff] %vm4865, %v4858
      %4869 = vst.msk [vmem:[#allocation2 + $0x108] sm:$0xff] %vm4865, %v4860
      %v4870 = vld [vmem:[%s31] sm:$0xff]
      %v4871 = vld [vmem:[%s31 + $0x8] sm:$0xff]
      %v4872 = vld [vmem:[%s31 + $0x10] sm:$0xff]
      %v4873 = vld [vmem:[%s31 + $0x18] sm:$0xff]
      %v4874 = vld [vmem:[#allocation2] sm:$0xff]
      %v4875 = vld [vmem:[#allocation2 + $0x18] sm:$0xff]
      %v4876 = vld [vmem:[#allocation2 + $0x30] sm:$0xff]
      %v4877 = vld [vmem:[#allocation2 + $0x48] sm:$0xff]
      %v4878 = vld [vmem:[#allocation2 + $0x60] sm:$0xff]
      %v4879 = vld [vmem:[#allocation2 + $0x78] sm:$0xff]
      %v4880 = vld [vmem:[#allocation2 + $0x90] sm:$0xff]
      %v4881 = vld [vmem:[#allocation2 + $0xa8] sm:$0xff]
      %v4882 = vld [vmem:[#allocation2 + $0xc0] sm:$0xff]
      %v4883 = vld [vmem:[#allocation2 + $0xd8] sm:$0xff]
      %v4884 = vld [vmem:[#allocation2 + $0xf0] sm:$0xff]
      %v4885 = vld [vmem:[#allocation2 + $0x108] sm:$0xff]
      %v4886 = vld [vmem:[%s33] sm:$0xff]
      %v4887 = vld [vmem:[%s33 + $0x8] sm:$0xff]
      %v4888 = vld [vmem:[%s33 + $0x10] sm:$0xff]
      %v4889 = vld [vmem:[%s33 + $0x18] sm:$0xff]
      %4891 = vset.pattern.permute.xlu0 0
      %4892 = vperm.xlu0 %4891, %v4886
      %v4893 = vpop.permute.xlu0 %4892
      %4896 = vset.pattern.permute.xlu0 0
      %4897 = vperm.xlu0 %4896, %v4887
      %v4898 = vpop.permute.xlu0 %4897
      %4901 = vset.pattern.permute.xlu0 0
      %4902 = vperm.xlu0 %4901, %v4888
      %v4903 = vpop.permute.xlu0 %4902
      %4906 = vset.pattern.permute.xlu0 0
      %4907 = vperm.xlu0 %4906, %v4889
      %v4908 = vpop.permute.xlu0 %4907
      %v4911 = vsel %vm1557, %v4870, 0
      %v4914 = vsel %vm1557, %v4871, 0
      %v4917 = vsel %vm1557, %v4872, 0
      %v4920 = vsel %vm1557, %v4873, 0
      %4922 = vmatprep.subr.mxu0 0.0
      %4923 = vmatpush1.msra.mxu0 %v4874
      %4924 = vmatprep.subr.mxu0 0.0
      %4925 = vmatpush1.msra.mxu0 %v4875
      %4926 = vmatprep.subr.mxu0 0.0
      %4927 = vmatpush1.msra.mxu0 %v4876
      %4928 = vmatprep.subr.mxu0 0.0
      %4929 = vmatpush1.msra.mxu0 %v4877
      %4930 = vmatprep.subr.mxu0 0.0
      %4931 = vmatpush1.msra.mxu0 %v4878
      %4932 = vmatprep.subr.mxu0 0.0
      %4933 = vmatpush1.msra.mxu0 %v4879
      %4934 = vmatprep.subr.mxu0 0.0
      %4935 = vmatpush1.msra.mxu0 %v4880
      %4936 = vmatprep.subr.mxu0 0.0
      %4937 = vmatpush1.msra.mxu0 %v4881
      %4938 = vmatprep.subr.mxu0 0.0
      %4939 = vmatpush1.msra.mxu0 %v4882
      %4940 = vmatprep.subr.mxu0 0.0
      %4941 = vmatpush1.msra.mxu0 %v4883
      %4942 = vmatprep.subr.mxu0 0.0
      %4943 = vmatpush1.msra.mxu0 %v4884
      %4944 = vmatprep.subr.mxu0 0.0
      %4945 = vmatpush1.msra.mxu0 %v4885
      %4946 = vmatprep.subr.mxu0 0.0
      %4947 = vmatpush1.msra.mxu0 0.0
      %4948 = vmatprep.subr.mxu0 0.0
      %4949 = vmatpush1.msra.mxu0 0.0
      %4950 = vmatprep.subr.mxu0 0.0
      %4951 = vmatpush1.msra.mxu0 0.0
      %4952 = vmatprep.subr.mxu0 0.0
      %4953 = vmatpush1.msra.mxu0 0.0
      %4954 = vmatprep.subr.mxu0 0.0
      %4955 = vmatpush1.msra.mxu0 0.0
      %4956 = vmatprep.subr.mxu0 0.0
      %4957 = vmatpush1.msra.mxu0 0.0
      %4958 = vmatprep.subr.mxu0 0.0
      %4959 = vmatpush1.msra.mxu0 0.0
      %4960 = vmatprep.subr.mxu0 0.0
      %4961 = vmatpush1.msra.mxu0 0.0
      %4962 = vmatprep.subr.mxu0 0.0
      %4963 = vmatpush1.msra.mxu0 0.0
      %4964 = vmatprep.subr.mxu0 0.0
      %4965 = vmatpush1.msra.mxu0 0.0
      %4966 = vmatprep.subr.mxu0 0.0
      %4967 = vmatpush1.msra.mxu0 0.0
      %4968 = vmatprep.subr.mxu0 0.0
      %4969 = vmatpush1.msra.mxu0 0.0
      %4970 = vmatprep.subr.mxu0 0.0
      %4971 = vmatpush1.msra.mxu0 0.0
      %4972 = vmatprep.subr.mxu0 0.0
      %4973 = vmatpush1.msra.mxu0 0.0
      %4974 = vmatprep.subr.mxu0 0.0
      %4975 = vmatpush1.msra.mxu0 0.0
      %4976 = vmatprep.subr.mxu0 0.0
      %4977 = vmatpush1.msra.mxu0 0.0
      %4978 = vmatprep.subr.mxu0 0.0
      %4979 = vmatpush1.msra.mxu0 0.0
      %4980 = vmatprep.subr.mxu0 0.0
      %4981 = vmatpush1.msra.mxu0 0.0
      %4982 = vmatprep.subr.mxu0 0.0
      %4983 = vmatpush1.msra.mxu0 0.0
      %4984 = vmatprep.subr.mxu0 0.0
      %4985 = vmatpush1.msra.mxu0 0.0
      %4986 = vmatprep.mubr.f32.mxu0 0.0
      %4987 = vmatmul.mubr.f32.gmra.mrb[0].mxu0 %v4911
      %v4988 = vpop.f32.mrb[0].mxu0
      %v4989 = vadd.f32 %v4893, %v4988
      %v4990 = vpop.f32.mrb[0].mxu0
      %4991 = vmatprep.mubr.f32.mxu0 0.0
      %4992 = vmatmul.mubr.f32.gmra.mrb[0].mxu0 %v4914
      %v4993 = vpop.f32.mrb[0].mxu0
      %v4994 = vadd.f32 %v4898, %v4993
      %v4995 = vpop.f32.mrb[0].mxu0
      %4996 = vmatprep.mubr.f32.mxu0 0.0
      %4997 = vmatmul.mubr.f32.gmra.mrb[0].mxu0 %v4917
      %v4998 = vpop.f32.mrb[0].mxu0
      %v4999 = vadd.f32 %v4903, %v4998
      %v5000 = vpop.f32.mrb[0].mxu0
      %5001 = vmatprep.mubr.f32.mxu0 0.0
      %5002 = vmatmul.mubr.f32.gmra.mrb[0].mxu0 %v4920
      %v5003 = vpop.f32.mrb[0].mxu0
      %v5004 = vadd.f32 %v4908, %v5003
      %v5005 = vpop.f32.mrb[0].mxu0
      %5006 = vdwg.mxu0
      %v5007 = vmax.f32 %v4989, 0.0
      %v5008 = vmax.f32 %v4994, 0.0
      %v5009 = vmax.f32 %v4999, 0.0
      %v5010 = vmax.f32 %v5004, 0.0
      %5011 = vst [vmem:[#allocation2] sm:$0xff] 0.0
      %5012 = vst [vmem:[#allocation2 + $0x8] sm:$0xff] 0.0
      %5013 = vst.msk [vmem:[#allocation2 + $0x10] sm:$0xff] %vm1557, 0.0
      %5014 = vst [vmem:[#allocation2 + $0x18] sm:$0xff] 0.0
      %5015 = vst [vmem:[#allocation2 + $0x20] sm:$0xff] 0.0
      %5016 = vst.msk [vmem:[#allocation2 + $0x28] sm:$0xff] %vm1557, 0.0
      %5017 = vst [vmem:[#allocation2 + $0x30] sm:$0xff] 0.0
      %5018 = vst [vmem:[#allocation2 + $0x38] sm:$0xff] 0.0
      %5019 = vst.msk [vmem:[#allocation2 + $0x40] sm:$0xff] %vm1557, 0.0
      %5020 = vst [vmem:[#allocation2 + $0x48] sm:$0xff] 0.0
      %5021 = vst [vmem:[#allocation2 + $0x50] sm:$0xff] 0.0
      %5022 = vst.msk [vmem:[#allocation2 + $0x58] sm:$0xff] %vm1557, 0.0
      %5023 = vst [vmem:[#allocation2 + $0x60] sm:$0xff] 0.0
      %5024 = vst [vmem:[#allocation2 + $0x68] sm:$0xff] 0.0
      %5025 = vst.msk [vmem:[#allocation2 + $0x70] sm:$0xff] %vm1557, 0.0
      %5026 = vst [vmem:[#allocation2 + $0x78] sm:$0xff] 0.0
      %5027 = vst [vmem:[#allocation2 + $0x80] sm:$0xff] 0.0
      %5028 = vst.msk [vmem:[#allocation2 + $0x88] sm:$0xff] %vm1557, 0.0
      %5029 = vst [vmem:[#allocation2 + $0x90] sm:$0xff] 0.0
      %5030 = vst [vmem:[#allocation2 + $0x98] sm:$0xff] 0.0
      %5031 = vst.msk [vmem:[#allocation2 + $0xa0] sm:$0xff] %vm1557, 0.0
      %5032 = vst [vmem:[#allocation2 + $0xa8] sm:$0xff] 0.0
      %5033 = vst [vmem:[#allocation2 + $0xb0] sm:$0xff] 0.0
      %5034 = vst.msk [vmem:[#allocation2 + $0xb8] sm:$0xff] %vm1557, 0.0
      %5035 = vst [vmem:[#allocation2 + $0xc0] sm:$0xff] 0.0
      %5036 = vst [vmem:[#allocation2 + $0xc8] sm:$0xff] 0.0
      %5037 = vst.msk [vmem:[#allocation2 + $0xd0] sm:$0xff] %vm1557, 0.0
      %5038 = vst [vmem:[#allocation2 + $0xd8] sm:$0xff] 0.0
      %5039 = vst [vmem:[#allocation2 + $0xe0] sm:$0xff] 0.0
      %5040 = vst.msk [vmem:[#allocation2 + $0xe8] sm:$0xff] %vm1557, 0.0
      %5041 = vst [vmem:[#allocation2 + $0xf0] sm:$0xff] 0.0
      %5042 = vst [vmem:[#allocation2 + $0xf8] sm:$0xff] 0.0
      %5043 = vst.msk [vmem:[#allocation2 + $0x100] sm:$0xff] %vm1557, 0.0
      %5044 = vst [vmem:[#allocation2 + $0x108] sm:$0xff] 0.0
      %5045 = vst [vmem:[#allocation2 + $0x110] sm:$0xff] 0.0
      %5046 = vst.msk [vmem:[#allocation2 + $0x118] sm:$0xff] %vm1557, 0.0
      %5047 = vst [vmem:[#allocation2 + $0x120] sm:$0xff] 0.0
      %5048 = vst [vmem:[#allocation2 + $0x128] sm:$0xff] 0.0
      %5049 = vst.msk [vmem:[#allocation2 + $0x130] sm:$0xff] %vm1557, 0.0
      %5050 = vst [vmem:[#allocation2 + $0x138] sm:$0xff] 0.0
      %5051 = vst [vmem:[#allocation2 + $0x140] sm:$0xff] 0.0
      %5052 = vst.msk [vmem:[#allocation2 + $0x148] sm:$0xff] %vm1557, 0.0
      %5053 = vst [vmem:[#allocation2 + $0x150] sm:$0xff] 0.0
      %5054 = vst [vmem:[#allocation2 + $0x158] sm:$0xff] 0.0
      %5055 = vst.msk [vmem:[#allocation2 + $0x160] sm:$0xff] %vm1557, 0.0
      %5056 = vst [vmem:[#allocation2 + $0x168] sm:$0xff] 0.0
      %5057 = vst [vmem:[#allocation2 + $0x170] sm:$0xff] 0.0
      %5058 = vst.msk [vmem:[#allocation2 + $0x178] sm:$0xff] %vm1557, 0.0
      %5059 = vst [vmem:[#allocation2 + $0x180] sm:$0xff] 0.0
      %5060 = vst [vmem:[#allocation2 + $0x188] sm:$0xff] 0.0
      %5061 = vst.msk [vmem:[#allocation2 + $0x190] sm:$0xff] %vm1557, 0.0
      %5062 = vst [vmem:[#allocation2 + $0x198] sm:$0xff] 0.0
      %5063 = vst [vmem:[#allocation2 + $0x1a0] sm:$0xff] 0.0
      %5064 = vst.msk [vmem:[#allocation2 + $0x1a8] sm:$0xff] %vm1557, 0.0
      %5065 = vst [vmem:[#allocation2 + $0x1b0] sm:$0xff] 0.0
      %5066 = vst [vmem:[#allocation2 + $0x1b8] sm:$0xff] 0.0
      %5067 = vst.msk [vmem:[#allocation2 + $0x1c0] sm:$0xff] %vm1557, 0.0
      %5068 = vst [vmem:[#allocation2 + $0x1c8] sm:$0xff] 0.0
      %5069 = vst [vmem:[#allocation2 + $0x1d0] sm:$0xff] 0.0
      %5070 = vst.msk [vmem:[#allocation2 + $0x1d8] sm:$0xff] %vm1557, 0.0
      %5075 = vrot.lane.b32.xlu0 %v5007, 1
      %v5076 = vpop.permute.xlu0 %5075
      %5077 = vrot.lane.b32.xlu0 %v5008, 1
      %v5078 = vpop.permute.xlu0 %5077
      %5079 = vrot.lane.b32.xlu0 %v5009, 1
      %v5080 = vpop.permute.xlu0 %5079
      %5081 = vrot.lane.b32.xlu0 %v5010, 1
      %v5082 = vpop.permute.xlu0 %5081
      %5087 = vst.msk [vmem:[#allocation2] sm:$0xff] %vm4843, %v5076
      %5088 = vst.msk [vmem:[#allocation2 + $0x18] sm:$0xff] %vm4843, %v5078
      %5089 = vst.msk [vmem:[#allocation2 + $0x30] sm:$0xff] %vm4843, %v5080
      %5090 = vst.msk [vmem:[#allocation2 + $0x48] sm:$0xff] %vm4843, %v5082
      %5091 = vst.msk [vmem:[#allocation2 + $0x60] sm:$0xff] %vm4848, %v5007
      %5092 = vst.msk [vmem:[#allocation2 + $0x78] sm:$0xff] %vm4848, %v5008
      %5093 = vst.msk [vmem:[#allocation2 + $0x90] sm:$0xff] %vm4848, %v5009
      %5094 = vst.msk [vmem:[#allocation2 + $0xa8] sm:$0xff] %vm4848, %v5010
      %5095 = vrot.lane.b32.xlu0 %v5007, 127
      %v5096 = vpop.permute.xlu0 %5095
      %5097 = vrot.lane.b32.xlu0 %v5008, 127
      %v5098 = vpop.permute.xlu0 %5097
      %5099 = vrot.lane.b32.xlu0 %v5009, 127
      %v5100 = vpop.permute.xlu0 %5099
      %5101 = vrot.lane.b32.xlu0 %v5010, 127
      %v5102 = vpop.permute.xlu0 %5101
      %5107 = vst.msk [vmem:[#allocation2 + $0xc0] sm:$0xff] %vm4865, %v5096
      %5108 = vst.msk [vmem:[#allocation2 + $0xd8] sm:$0xff] %vm4865, %v5098
      %5109 = vst.msk [vmem:[#allocation2 + $0xf0] sm:$0xff] %vm4865, %v5100
      %5110 = vst.msk [vmem:[#allocation2 + $0x108] sm:$0xff] %vm4865, %v5102
      %v5111 = vld [vmem:[%s35] sm:$0xff]
      %v5112 = vld [vmem:[%s35 + $0x8] sm:$0xff]
      %v5113 = vld [vmem:[%s35 + $0x10] sm:$0xff]
      %v5114 = vld [vmem:[%s35 + $0x18] sm:$0xff]
      %v5115 = vld [vmem:[#allocation2] sm:$0xff]
      %v5116 = vld [vmem:[#allocation2 + $0x18] sm:$0xff]
      %v5117 = vld [vmem:[#allocation2 + $0x30] sm:$0xff]
      %v5118 = vld [vmem:[#allocation2 + $0x48] sm:$0xff]
      %v5119 = vld [vmem:[#allocation2 + $0x60] sm:$0xff]
      %v5120 = vld [vmem:[#allocation2 + $0x78] sm:$0xff]
      %v5121 = vld [vmem:[#allocation2 + $0x90] sm:$0xff]
      %v5122 = vld [vmem:[#allocation2 + $0xa8] sm:$0xff]
      %v5123 = vld [vmem:[#allocation2 + $0xc0] sm:$0xff]
      %v5124 = vld [vmem:[#allocation2 + $0xd8] sm:$0xff]
      %v5125 = vld [vmem:[#allocation2 + $0xf0] sm:$0xff]
      %v5126 = vld [vmem:[#allocation2 + $0x108] sm:$0xff]
      %v5127 = vld [vmem:[%s37] sm:$0xff]
      %v5128 = vld [vmem:[%s37 + $0x8] sm:$0xff]
      %v5129 = vld [vmem:[%s37 + $0x10] sm:$0xff]
      %v5130 = vld [vmem:[%s37 + $0x18] sm:$0xff]
      %5132 = vset.pattern.permute.xlu0 0
      %5133 = vperm.xlu0 %5132, %v5127
      %v5134 = vpop.permute.xlu0 %5133
      %5137 = vset.pattern.permute.xlu0 0
      %5138 = vperm.xlu0 %5137, %v5128
      %v5139 = vpop.permute.xlu0 %5138
      %5142 = vset.pattern.permute.xlu0 0
      %5143 = vperm.xlu0 %5142, %v5129
      %v5144 = vpop.permute.xlu0 %5143
      %5147 = vset.pattern.permute.xlu0 0
      %5148 = vperm.xlu0 %5147, %v5130
      %v5149 = vpop.permute.xlu0 %5148
      %v5152 = vsel %vm1557, %v5111, 0
      %v5155 = vsel %vm1557, %v5112, 0
      %v5158 = vsel %vm1557, %v5113, 0
      %v5161 = vsel %vm1557, %v5114, 0
      %5163 = vmatprep.subr.mxu0 0.0
      %5164 = vmatpush1.msra.mxu0 %v5115
      %5165 = vmatprep.subr.mxu0 0.0
      %5166 = vmatpush1.msra.mxu0 %v5116
      %5167 = vmatprep.subr.mxu0 0.0
      %5168 = vmatpush1.msra.mxu0 %v5117
      %5169 = vmatprep.subr.mxu0 0.0
      %5170 = vmatpush1.msra.mxu0 %v5118
      %5171 = vmatprep.subr.mxu0 0.0
      %5172 = vmatpush1.msra.mxu0 %v5119
      %5173 = vmatprep.subr.mxu0 0.0
      %5174 = vmatpush1.msra.mxu0 %v5120
      %5175 = vmatprep.subr.mxu0 0.0
      %5176 = vmatpush1.msra.mxu0 %v5121
      %5177 = vmatprep.subr.mxu0 0.0
      %5178 = vmatpush1.msra.mxu0 %v5122
      %5179 = vmatprep.subr.mxu0 0.0
      %5180 = vmatpush1.msra.mxu0 %v5123
      %5181 = vmatprep.subr.mxu0 0.0
      %5182 = vmatpush1.msra.mxu0 %v5124
      %5183 = vmatprep.subr.mxu0 0.0
      %5184 = vmatpush1.msra.mxu0 %v5125
      %5185 = vmatprep.subr.mxu0 0.0
      %5186 = vmatpush1.msra.mxu0 %v5126
      %5187 = vmatprep.subr.mxu0 0.0
      %5188 = vmatpush1.msra.mxu0 0.0
      %5189 = vmatprep.subr.mxu0 0.0
      %5190 = vmatpush1.msra.mxu0 0.0
      %5191 = vmatprep.subr.mxu0 0.0
      %5192 = vmatpush1.msra.mxu0 0.0
      %5193 = vmatprep.subr.mxu0 0.0
      %5194 = vmatpush1.msra.mxu0 0.0
      %5195 = vmatprep.subr.mxu0 0.0
      %5196 = vmatpush1.msra.mxu0 0.0
      %5197 = vmatprep.subr.mxu0 0.0
      %5198 = vmatpush1.msra.mxu0 0.0
      %5199 = vmatprep.subr.mxu0 0.0
      %5200 = vmatpush1.msra.mxu0 0.0
      %5201 = vmatprep.subr.mxu0 0.0
      %5202 = vmatpush1.msra.mxu0 0.0
      %5203 = vmatprep.subr.mxu0 0.0
      %5204 = vmatpush1.msra.mxu0 0.0
      %5205 = vmatprep.subr.mxu0 0.0
      %5206 = vmatpush1.msra.mxu0 0.0
      %5207 = vmatprep.subr.mxu0 0.0
      %5208 = vmatpush1.msra.mxu0 0.0
      %5209 = vmatprep.subr.mxu0 0.0
      %5210 = vmatpush1.msra.mxu0 0.0
      %5211 = vmatprep.subr.mxu0 0.0
      %5212 = vmatpush1.msra.mxu0 0.0
      %5213 = vmatprep.subr.mxu0 0.0
      %5214 = vmatpush1.msra.mxu0 0.0
      %5215 = vmatprep.subr.mxu0 0.0
      %5216 = vmatpush1.msra.mxu0 0.0
      %5217 = vmatprep.subr.mxu0 0.0
      %5218 = vmatpush1.msra.mxu0 0.0
      %5219 = vmatprep.subr.mxu0 0.0
      %5220 = vmatpush1.msra.mxu0 0.0
      %5221 = vmatprep.subr.mxu0 0.0
      %5222 = vmatpush1.msra.mxu0 0.0
      %5223 = vmatprep.subr.mxu0 0.0
      %5224 = vmatpush1.msra.mxu0 0.0
      %5225 = vmatprep.subr.mxu0 0.0
      %5226 = vmatpush1.msra.mxu0 0.0
      %5227 = vmatprep.mubr.f32.mxu0 0.0
      %5228 = vmatmul.mubr.f32.gmra.mrb[0].mxu0 %v5152
      %v5229 = vpop.f32.mrb[0].mxu0
      %v5230 = vadd.f32 %v5134, %v5229
      %v5231 = vpop.f32.mrb[0].mxu0
      %5232 = vmatprep.mubr.f32.mxu0 0.0
      %5233 = vmatmul.mubr.f32.gmra.mrb[0].mxu0 %v5155
      %v5234 = vpop.f32.mrb[0].mxu0
      %v5235 = vadd.f32 %v5139, %v5234
      %v5236 = vpop.f32.mrb[0].mxu0
      %5237 = vmatprep.mubr.f32.mxu0 0.0
      %5238 = vmatmul.mubr.f32.gmra.mrb[0].mxu0 %v5158
      %v5239 = vpop.f32.mrb[0].mxu0
      %v5240 = vadd.f32 %v5144, %v5239
      %v5241 = vpop.f32.mrb[0].mxu0
      %5242 = vmatprep.mubr.f32.mxu0 0.0
      %5243 = vmatmul.mubr.f32.gmra.mrb[0].mxu0 %v5161
      %v5244 = vpop.f32.mrb[0].mxu0
      %v5245 = vadd.f32 %v5149, %v5244
      %v5246 = vpop.f32.mrb[0].mxu0
      %5247 = vdwg.mxu0
      %v5248 = vadd.f32 %v5230, %v4749
      %v5249 = vadd.f32 %v5235, %v4754
      %v5250 = vadd.f32 %v5240, %v4759
      %v5251 = vadd.f32 %v5245, %v4764
      %v5252 = vmax.f32 %v5248, 0.0
      %v5253 = vmax.f32 %v5249, 0.0
      %v5254 = vmax.f32 %v5250, 0.0
      %v5255 = vmax.f32 %v5251, 0.0
      %5256 = vst [vmem:[#allocation2] sm:$0xff] 0.0
      %5257 = vst [vmem:[#allocation2 + $0x8] sm:$0xff] 0.0
      %5258 = vst.msk [vmem:[#allocation2 + $0x10] sm:$0xff] %vm1557, 0.0
      %5259 = vst [vmem:[#allocation2 + $0x18] sm:$0xff] 0.0
      %5260 = vst [vmem:[#allocation2 + $0x20] sm:$0xff] 0.0
      %5261 = vst.msk [vmem:[#allocation2 + $0x28] sm:$0xff] %vm1557, 0.0
      %5262 = vst [vmem:[#allocation2 + $0x30] sm:$0xff] 0.0
      %5263 = vst [vmem:[#allocation2 + $0x38] sm:$0xff] 0.0
      %5264 = vst.msk [vmem:[#allocation2 + $0x40] sm:$0xff] %vm1557, 0.0
      %5265 = vst [vmem:[#allocation2 + $0x48] sm:$0xff] 0.0
      %5266 = vst [vmem:[#allocation2 + $0x50] sm:$0xff] 0.0
      %5267 = vst.msk [vmem:[#allocation2 + $0x58] sm:$0xff] %vm1557, 0.0
      %5268 = vst [vmem:[#allocation2 + $0x60] sm:$0xff] 0.0
      %5269 = vst [vmem:[#allocation2 + $0x68] sm:$0xff] 0.0
      %5270 = vst.msk [vmem:[#allocation2 + $0x70] sm:$0xff] %vm1557, 0.0
      %5271 = vst [vmem:[#allocation2 + $0x78] sm:$0xff] 0.0
      %5272 = vst [vmem:[#allocation2 + $0x80] sm:$0xff] 0.0
      %5273 = vst.msk [vmem:[#allocation2 + $0x88] sm:$0xff] %vm1557, 0.0
      %5274 = vst [vmem:[#allocation2 + $0x90] sm:$0xff] 0.0
      %5275 = vst [vmem:[#allocation2 + $0x98] sm:$0xff] 0.0
      %5276 = vst.msk [vmem:[#allocation2 + $0xa0] sm:$0xff] %vm1557, 0.0
      %5277 = vst [vmem:[#allocation2 + $0xa8] sm:$0xff] 0.0
      %5278 = vst [vmem:[#allocation2 + $0xb0] sm:$0xff] 0.0
      %5279 = vst.msk [vmem:[#allocation2 + $0xb8] sm:$0xff] %vm1557, 0.0
      %5280 = vst [vmem:[#allocation2 + $0xc0] sm:$0xff] 0.0
      %5281 = vst [vmem:[#allocation2 + $0xc8] sm:$0xff] 0.0
      %5282 = vst.msk [vmem:[#allocation2 + $0xd0] sm:$0xff] %vm1557, 0.0
      %5283 = vst [vmem:[#allocation2 + $0xd8] sm:$0xff] 0.0
      %5284 = vst [vmem:[#allocation2 + $0xe0] sm:$0xff] 0.0
      %5285 = vst.msk [vmem:[#allocation2 + $0xe8] sm:$0xff] %vm1557, 0.0
      %5286 = vst [vmem:[#allocation2 + $0xf0] sm:$0xff] 0.0
      %5287 = vst [vmem:[#allocation2 + $0xf8] sm:$0xff] 0.0
      %5288 = vst.msk [vmem:[#allocation2 + $0x100] sm:$0xff] %vm1557, 0.0
      %5289 = vst [vmem:[#allocation2 + $0x108] sm:$0xff] 0.0
      %5290 = vst [vmem:[#allocation2 + $0x110] sm:$0xff] 0.0
      %5291 = vst.msk [vmem:[#allocation2 + $0x118] sm:$0xff] %vm1557, 0.0
      %5292 = vst [vmem:[#allocation2 + $0x120] sm:$0xff] 0.0
      %5293 = vst [vmem:[#allocation2 + $0x128] sm:$0xff] 0.0
      %5294 = vst.msk [vmem:[#allocation2 + $0x130] sm:$0xff] %vm1557, 0.0
      %5295 = vst [vmem:[#allocation2 + $0x138] sm:$0xff] 0.0
      %5296 = vst [vmem:[#allocation2 + $0x140] sm:$0xff] 0.0
      %5297 = vst.msk [vmem:[#allocation2 + $0x148] sm:$0xff] %vm1557, 0.0
      %5298 = vst [vmem:[#allocation2 + $0x150] sm:$0xff] 0.0
      %5299 = vst [vmem:[#allocation2 + $0x158] sm:$0xff] 0.0
      %5300 = vst.msk [vmem:[#allocation2 + $0x160] sm:$0xff] %vm1557, 0.0
      %5301 = vst [vmem:[#allocation2 + $0x168] sm:$0xff] 0.0
      %5302 = vst [vmem:[#allocation2 + $0x170] sm:$0xff] 0.0
      %5303 = vst.msk [vmem:[#allocation2 + $0x178] sm:$0xff] %vm1557, 0.0
      %5304 = vst [vmem:[#allocation2 + $0x180] sm:$0xff] 0.0
      %5305 = vst [vmem:[#allocation2 + $0x188] sm:$0xff] 0.0
      %5306 = vst.msk [vmem:[#allocation2 + $0x190] sm:$0xff] %vm1557, 0.0
      %5307 = vst [vmem:[#allocation2 + $0x198] sm:$0xff] 0.0
      %5308 = vst [vmem:[#allocation2 + $0x1a0] sm:$0xff] 0.0
      %5309 = vst.msk [vmem:[#allocation2 + $0x1a8] sm:$0xff] %vm1557, 0.0
      %5310 = vst [vmem:[#allocation2 + $0x1b0] sm:$0xff] 0.0
      %5311 = vst [vmem:[#allocation2 + $0x1b8] sm:$0xff] 0.0
      %5312 = vst.msk [vmem:[#allocation2 + $0x1c0] sm:$0xff] %vm1557, 0.0
      %5313 = vst [vmem:[#allocation2 + $0x1c8] sm:$0xff] 0.0
      %5314 = vst [vmem:[#allocation2 + $0x1d0] sm:$0xff] 0.0
      %5315 = vst.msk [vmem:[#allocation2 + $0x1d8] sm:$0xff] %vm1557, 0.0
      %5320 = vrot.lane.b32.xlu0 %v5252, 1
      %v5321 = vpop.permute.xlu0 %5320
      %5322 = vrot.lane.b32.xlu0 %v5253, 1
      %v5323 = vpop.permute.xlu0 %5322
      %5324 = vrot.lane.b32.xlu0 %v5254, 1
      %v5325 = vpop.permute.xlu0 %5324
      %5326 = vrot.lane.b32.xlu0 %v5255, 1
      %v5327 = vpop.permute.xlu0 %5326
      %5332 = vst.msk [vmem:[#allocation2] sm:$0xff] %vm4843, %v5321
      %5333 = vst.msk [vmem:[#allocation2 + $0x18] sm:$0xff] %vm4843, %v5323
      %5334 = vst.msk [vmem:[#allocation2 + $0x30] sm:$0xff] %vm4843, %v5325
      %5335 = vst.msk [vmem:[#allocation2 + $0x48] sm:$0xff] %vm4843, %v5327
      %5336 = vst.msk [vmem:[#allocation2 + $0x60] sm:$0xff] %vm4848, %v5252
      %5337 = vst.msk [vmem:[#allocation2 + $0x78] sm:$0xff] %vm4848, %v5253
      %5338 = vst.msk [vmem:[#allocation2 + $0x90] sm:$0xff] %vm4848, %v5254
      %5339 = vst.msk [vmem:[#allocation2 + $0xa8] sm:$0xff] %vm4848, %v5255
      %5340 = vrot.lane.b32.xlu0 %v5252, 127
      %v5341 = vpop.permute.xlu0 %5340
      %5342 = vrot.lane.b32.xlu0 %v5253, 127
      %v5343 = vpop.permute.xlu0 %5342
      %5344 = vrot.lane.b32.xlu0 %v5254, 127
      %v5345 = vpop.permute.xlu0 %5344
      %5346 = vrot.lane.b32.xlu0 %v5255, 127
      %v5347 = vpop.permute.xlu0 %5346
      %5352 = vst.msk [vmem:[#allocation2 + $0xc0] sm:$0xff] %vm4865, %v5341
      %5353 = vst.msk [vmem:[#allocation2 + $0xd8] sm:$0xff] %vm4865, %v5343
      %5354 = vst.msk [vmem:[#allocation2 + $0xf0] sm:$0xff] %vm4865, %v5345
      %5355 = vst.msk [vmem:[#allocation2 + $0x108] sm:$0xff] %vm4865, %v5347
      %v5356 = vld [vmem:[%s39] sm:$0xff]
      %v5357 = vld [vmem:[%s39 + $0x8] sm:$0xff]
      %v5358 = vld [vmem:[%s39 + $0x10] sm:$0xff]
      %v5359 = vld [vmem:[%s39 + $0x18] sm:$0xff]
      %v5360 = vld [vmem:[#allocation2] sm:$0xff]
      %v5361 = vld [vmem:[#allocation2 + $0x18] sm:$0xff]
      %v5362 = vld [vmem:[#allocation2 + $0x30] sm:$0xff]
      %v5363 = vld [vmem:[#allocation2 + $0x48] sm:$0xff]
      %v5364 = vld [vmem:[#allocation2 + $0x60] sm:$0xff]
      %v5365 = vld [vmem:[#allocation2 + $0x78] sm:$0xff]
      %v5366 = vld [vmem:[#allocation2 + $0x90] sm:$0xff]
      %v5367 = vld [vmem:[#allocation2 + $0xa8] sm:$0xff]
      %v5368 = vld [vmem:[#allocation2 + $0xc0] sm:$0xff]
      %v5369 = vld [vmem:[#allocation2 + $0xd8] sm:$0xff]
      %v5370 = vld [vmem:[#allocation2 + $0xf0] sm:$0xff]
      %v5371 = vld [vmem:[#allocation2 + $0x108] sm:$0xff]
      %v5372 = vld [vmem:[%s41] sm:$0xff]
      %v5373 = vld [vmem:[%s41 + $0x8] sm:$0xff]
      %v5374 = vld [vmem:[%s41 + $0x10] sm:$0xff]
      %v5375 = vld [vmem:[%s41 + $0x18] sm:$0xff]
      %5377 = vset.pattern.permute.xlu0 0
      %5378 = vperm.xlu0 %5377, %v5372
      %v5379 = vpop.permute.xlu0 %5378
      %5382 = vset.pattern.permute.xlu0 0
      %5383 = vperm.xlu0 %5382, %v5373
      %v5384 = vpop.permute.xlu0 %5383
      %5387 = vset.pattern.permute.xlu0 0
      %5388 = vperm.xlu0 %5387, %v5374
      %v5389 = vpop.permute.xlu0 %5388
      %5392 = vset.pattern.permute.xlu0 0
      %5393 = vperm.xlu0 %5392, %v5375
      %v5394 = vpop.permute.xlu0 %5393
      %v5397 = vsel %vm1557, %v5356, 0
      %v5400 = vsel %vm1557, %v5357, 0
      %v5403 = vsel %vm1557, %v5358, 0
      %v5406 = vsel %vm1557, %v5359, 0
      %5408 = vmatprep.subr.mxu0 0.0
      %5409 = vmatpush1.msra.mxu0 %v5360
      %5410 = vmatprep.subr.mxu0 0.0
      %5411 = vmatpush1.msra.mxu0 %v5361
      %5412 = vmatprep.subr.mxu0 0.0
      %5413 = vmatpush1.msra.mxu0 %v5362
      %5414 = vmatprep.subr.mxu0 0.0
      %5415 = vmatpush1.msra.mxu0 %v5363
      %5416 = vmatprep.subr.mxu0 0.0
      %5417 = vmatpush1.msra.mxu0 %v5364
      %5418 = vmatprep.subr.mxu0 0.0
      %5419 = vmatpush1.msra.mxu0 %v5365
      %5420 = vmatprep.subr.mxu0 0.0
      %5421 = vmatpush1.msra.mxu0 %v5366
      %5422 = vmatprep.subr.mxu0 0.0
      %5423 = vmatpush1.msra.mxu0 %v5367
      %5424 = vmatprep.subr.mxu0 0.0
      %5425 = vmatpush1.msra.mxu0 %v5368
      %5426 = vmatprep.subr.mxu0 0.0
      %5427 = vmatpush1.msra.mxu0 %v5369
      %5428 = vmatprep.subr.mxu0 0.0
      %5429 = vmatpush1.msra.mxu0 %v5370
      %5430 = vmatprep.subr.mxu0 0.0
      %5431 = vmatpush1.msra.mxu0 %v5371
      %5432 = vmatprep.subr.mxu0 0.0
      %5433 = vmatpush1.msra.mxu0 0.0
      %5434 = vmatprep.subr.mxu0 0.0
      %5435 = vmatpush1.msra.mxu0 0.0
      %5436 = vmatprep.subr.mxu0 0.0
      %5437 = vmatpush1.msra.mxu0 0.0
      %5438 = vmatprep.subr.mxu0 0.0
      %5439 = vmatpush1.msra.mxu0 0.0
      %5440 = vmatprep.subr.mxu0 0.0
      %5441 = vmatpush1.msra.mxu0 0.0
      %5442 = vmatprep.subr.mxu0 0.0
      %5443 = vmatpush1.msra.mxu0 0.0
      %5444 = vmatprep.subr.mxu0 0.0
      %5445 = vmatpush1.msra.mxu0 0.0
      %5446 = vmatprep.subr.mxu0 0.0
      %5447 = vmatpush1.msra.mxu0 0.0
      %5448 = vmatprep.subr.mxu0 0.0
      %5449 = vmatpush1.msra.mxu0 0.0
      %5450 = vmatprep.subr.mxu0 0.0
      %5451 = vmatpush1.msra.mxu0 0.0
      %5452 = vmatprep.subr.mxu0 0.0
      %5453 = vmatpush1.msra.mxu0 0.0
      %5454 = vmatprep.subr.mxu0 0.0
      %5455 = vmatpush1.msra.mxu0 0.0
      %5456 = vmatprep.subr.mxu0 0.0
      %5457 = vmatpush1.msra.mxu0 0.0
      %5458 = vmatprep.subr.mxu0 0.0
      %5459 = vmatpush1.msra.mxu0 0.0
      %5460 = vmatprep.subr.mxu0 0.0
      %5461 = vmatpush1.msra.mxu0 0.0
      %5462 = vmatprep.subr.mxu0 0.0
      %5463 = vmatpush1.msra.mxu0 0.0
      %5464 = vmatprep.subr.mxu0 0.0
      %5465 = vmatpush1.msra.mxu0 0.0
      %5466 = vmatprep.subr.mxu0 0.0
      %5467 = vmatpush1.msra.mxu0 0.0
      %5468 = vmatprep.subr.mxu0 0.0
      %5469 = vmatpush1.msra.mxu0 0.0
      %5470 = vmatprep.subr.mxu0 0.0
      %5471 = vmatpush1.msra.mxu0 0.0
      %5472 = vmatprep.mubr.f32.mxu0 0.0
      %5473 = vmatmul.mubr.f32.gmra.mrb[0].mxu0 %v5397
      %v5474 = vpop.f32.mrb[0].mxu0
      %v5475 = vadd.f32 %v5379, %v5474
      %v5476 = vpop.f32.mrb[0].mxu0
      %5477 = vmatprep.mubr.f32.mxu0 0.0
      %5478 = vmatmul.mubr.f32.gmra.mrb[0].mxu0 %v5400
      %v5479 = vpop.f32.mrb[0].mxu0
      %v5480 = vadd.f32 %v5384, %v5479
      %v5481 = vpop.f32.mrb[0].mxu0
      %5482 = vmatprep.mubr.f32.mxu0 0.0
      %5483 = vmatmul.mubr.f32.gmra.mrb[0].mxu0 %v5403
      %v5484 = vpop.f32.mrb[0].mxu0
      %v5485 = vadd.f32 %v5389, %v5484
      %v5486 = vpop.f32.mrb[0].mxu0
      %5487 = vmatprep.mubr.f32.mxu0 0.0
      %5488 = vmatmul.mubr.f32.gmra.mrb[0].mxu0 %v5406
      %v5489 = vpop.f32.mrb[0].mxu0
      %v5490 = vadd.f32 %v5394, %v5489
      %v5491 = vpop.f32.mrb[0].mxu0
      %5492 = vdwg.mxu0
      %v5493 = vmax.f32 %v5475, 0.0
      %v5494 = vmax.f32 %v5480, 0.0
      %v5495 = vmax.f32 %v5485, 0.0
      %v5496 = vmax.f32 %v5490, 0.0
      %v5498 = vsel %vm4848, %v5493, 0
      %v5501 = vsel %vm4848, %v5494, 0
      %v5504 = vsel %vm4848, %v5495, 0
      %v5507 = vsel %vm4848, %v5496, 0
      %5509 = vmatprep.subr.mxu0 0.0
      %5510 = vmatpush1.msra.mxu0 %v3455
      %5511 = vmatprep.subr.mxu0 0.0
      %5512 = vmatpush1.msra.mxu0 %v3457
      %5513 = vmatprep.subr.mxu0 0.0
      %5514 = vmatpush1.msra.mxu0 %v3459
      %5515 = vmatprep.subr.mxu0 0.0
      %5516 = vmatpush1.msra.mxu0 %v3461
      %5517 = vmatprep.subr.mxu0 0.0
      %5518 = vmatpush1.msra.mxu0 %v3463
      %5519 = vmatprep.subr.mxu0 0.0
      %5520 = vmatpush1.msra.mxu0 %v3465
      %5521 = vmatprep.subr.mxu0 0.0
      %5522 = vmatpush1.msra.mxu0 %v3467
      %5523 = vmatprep.subr.mxu0 0.0
      %5524 = vmatpush1.msra.mxu0 %v3469
      %5525 = vmatprep.subr.mxu0 0.0
      %5526 = vmatpush1.msra.mxu0 %v3471
      %5527 = vmatprep.subr.mxu0 0.0
      %5528 = vmatpush1.msra.mxu0 %v3473
      %5529 = vmatprep.subr.mxu0 0.0
      %5530 = vmatpush1.msra.mxu0 %v3475
      %5531 = vmatprep.subr.mxu0 0.0
      %5532 = vmatpush1.msra.mxu0 0.0
      %5533 = vmatprep.subr.mxu0 0.0
      %5534 = vmatpush1.msra.mxu0 0.0
      %5535 = vmatprep.subr.mxu0 0.0
      %5536 = vmatpush1.msra.mxu0 0.0
      %5537 = vmatprep.subr.mxu0 0.0
      %5538 = vmatpush1.msra.mxu0 0.0
      %5539 = vmatprep.subr.mxu0 0.0
      %5540 = vmatpush1.msra.mxu0 0.0
      %5541 = vmatprep.subr.mxu0 0.0
      %5542 = vmatpush1.msra.mxu0 0.0
      %5543 = vmatprep.subr.mxu0 0.0
      %5544 = vmatpush1.msra.mxu0 0.0
      %5545 = vmatprep.subr.mxu0 0.0
      %5546 = vmatpush1.msra.mxu0 0.0
      %5547 = vmatprep.subr.mxu0 0.0
      %5548 = vmatpush1.msra.mxu0 0.0
      %5549 = vmatprep.subr.mxu0 0.0
      %5550 = vmatpush1.msra.mxu0 0.0
      %5551 = vmatprep.subr.mxu0 0.0
      %5552 = vmatpush1.msra.mxu0 0.0
      %5553 = vmatprep.subr.mxu0 0.0
      %5554 = vmatpush1.msra.mxu0 0.0
      %5555 = vmatprep.subr.mxu0 0.0
      %5556 = vmatpush1.msra.mxu0 0.0
      %5557 = vmatprep.subr.mxu0 0.0
      %5558 = vmatpush1.msra.mxu0 0.0
      %5559 = vmatprep.subr.mxu0 0.0
      %5560 = vmatpush1.msra.mxu0 0.0
      %5561 = vmatprep.subr.mxu0 0.0
      %5562 = vmatpush1.msra.mxu0 0.0
      %5563 = vmatprep.subr.mxu0 0.0
      %5564 = vmatpush1.msra.mxu0 0.0
      %5565 = vmatprep.subr.mxu0 0.0
      %5566 = vmatpush1.msra.mxu0 0.0
      %5567 = vmatprep.subr.mxu0 0.0
      %5568 = vmatpush1.msra.mxu0 0.0
      %5569 = vmatprep.subr.mxu0 0.0
      %5570 = vmatpush1.msra.mxu0 0.0
      %5571 = vmatprep.subr.mxu0 0.0
      %5572 = vmatpush1.msra.mxu0 0.0
      %5573 = vmatprep.mubr.f32.mxu0 0.0
      %5574 = vmatmul.mubr.f32.gmra.mrb[0].mxu0 %v5498
      %v5575 = vpop.f32.mrb[0].mxu0
      %v5576 = vadd.f32 0.0, %v5575
      %v5577 = vpop.f32.mrb[0].mxu0
      %5578 = vmatprep.mubr.f32.mxu0 0.0
      %5579 = vmatmul.mubr.f32.gmra.mrb[0].mxu0 %v5501
      %v5580 = vpop.f32.mrb[0].mxu0
      %v5581 = vadd.f32 0.0, %v5580
      %v5582 = vpop.f32.mrb[0].mxu0
      %5583 = vmatprep.mubr.f32.mxu0 0.0
      %5584 = vmatmul.mubr.f32.gmra.mrb[0].mxu0 %v5504
      %v5585 = vpop.f32.mrb[0].mxu0
      %v5586 = vadd.f32 0.0, %v5585
      %v5587 = vpop.f32.mrb[0].mxu0
      %5588 = vmatprep.mubr.f32.mxu0 0.0
      %5589 = vmatmul.mubr.f32.gmra.mrb[0].mxu0 %v5507
      %v5590 = vpop.f32.mrb[0].mxu0
      %v5591 = vadd.f32 0.0, %v5590
      %v5592 = vpop.f32.mrb[0].mxu0
      %5593 = vdwg.mxu0
      %5594 = vst [vmem:[#allocation2] sm:$0xff] 0.0
      %5595 = vst [vmem:[#allocation2 + $0x8] sm:$0xff] 0.0
      %5596 = vst.msk [vmem:[#allocation2 + $0x10] sm:$0xff] %vm1557, 0.0
      %5597 = vst [vmem:[#allocation2 + $0x18] sm:$0xff] 0.0
      %5598 = vst [vmem:[#allocation2 + $0x20] sm:$0xff] 0.0
      %5599 = vst.msk [vmem:[#allocation2 + $0x28] sm:$0xff] %vm1557, 0.0
      %5600 = vst [vmem:[#allocation2 + $0x30] sm:$0xff] 0.0
      %5601 = vst [vmem:[#allocation2 + $0x38] sm:$0xff] 0.0
      %5602 = vst.msk [vmem:[#allocation2 + $0x40] sm:$0xff] %vm1557, 0.0
      %5603 = vst [vmem:[#allocation2 + $0x48] sm:$0xff] 0.0
      %5604 = vst [vmem:[#allocation2 + $0x50] sm:$0xff] 0.0
      %5605 = vst.msk [vmem:[#allocation2 + $0x58] sm:$0xff] %vm1557, 0.0
      %5606 = vst [vmem:[#allocation2 + $0x60] sm:$0xff] 0.0
      %5607 = vst [vmem:[#allocation2 + $0x68] sm:$0xff] 0.0
      %5608 = vst.msk [vmem:[#allocation2 + $0x70] sm:$0xff] %vm1557, 0.0
      %5609 = vst [vmem:[#allocation2 + $0x78] sm:$0xff] 0.0
      %5610 = vst [vmem:[#allocation2 + $0x80] sm:$0xff] 0.0
      %5611 = vst.msk [vmem:[#allocation2 + $0x88] sm:$0xff] %vm1557, 0.0
      %5612 = vst [vmem:[#allocation2 + $0x90] sm:$0xff] 0.0
      %5613 = vst [vmem:[#allocation2 + $0x98] sm:$0xff] 0.0
      %5614 = vst.msk [vmem:[#allocation2 + $0xa0] sm:$0xff] %vm1557, 0.0
      %5615 = vst [vmem:[#allocation2 + $0xa8] sm:$0xff] 0.0
      %5616 = vst [vmem:[#allocation2 + $0xb0] sm:$0xff] 0.0
      %5617 = vst.msk [vmem:[#allocation2 + $0xb8] sm:$0xff] %vm1557, 0.0
      %5618 = vst [vmem:[#allocation2 + $0xc0] sm:$0xff] 0.0
      %5619 = vst [vmem:[#allocation2 + $0xc8] sm:$0xff] 0.0
      %5620 = vst.msk [vmem:[#allocation2 + $0xd0] sm:$0xff] %vm1557, 0.0
      %5621 = vst [vmem:[#allocation2 + $0xd8] sm:$0xff] 0.0
      %5622 = vst [vmem:[#allocation2 + $0xe0] sm:$0xff] 0.0
      %5623 = vst.msk [vmem:[#allocation2 + $0xe8] sm:$0xff] %vm1557, 0.0
      %5624 = vst [vmem:[#allocation2 + $0xf0] sm:$0xff] 0.0
      %5625 = vst [vmem:[#allocation2 + $0xf8] sm:$0xff] 0.0
      %5626 = vst.msk [vmem:[#allocation2 + $0x100] sm:$0xff] %vm1557, 0.0
      %5627 = vst [vmem:[#allocation2 + $0x108] sm:$0xff] 0.0
      %5628 = vst [vmem:[#allocation2 + $0x110] sm:$0xff] 0.0
      %5629 = vst.msk [vmem:[#allocation2 + $0x118] sm:$0xff] %vm1557, 0.0
      %5630 = vst [vmem:[#allocation2 + $0x120] sm:$0xff] 0.0
      %5631 = vst [vmem:[#allocation2 + $0x128] sm:$0xff] 0.0
      %5632 = vst.msk [vmem:[#allocation2 + $0x130] sm:$0xff] %vm1557, 0.0
      %5633 = vst [vmem:[#allocation2 + $0x138] sm:$0xff] 0.0
      %5634 = vst [vmem:[#allocation2 + $0x140] sm:$0xff] 0.0
      %5635 = vst.msk [vmem:[#allocation2 + $0x148] sm:$0xff] %vm1557, 0.0
      %5636 = vst [vmem:[#allocation2 + $0x150] sm:$0xff] 0.0
      %5637 = vst [vmem:[#allocation2 + $0x158] sm:$0xff] 0.0
      %5638 = vst.msk [vmem:[#allocation2 + $0x160] sm:$0xff] %vm1557, 0.0
      %5639 = vst [vmem:[#allocation2 + $0x168] sm:$0xff] 0.0
      %5640 = vst [vmem:[#allocation2 + $0x170] sm:$0xff] 0.0
      %5641 = vst.msk [vmem:[#allocation2 + $0x178] sm:$0xff] %vm1557, 0.0
      %5642 = vst [vmem:[#allocation2 + $0x180] sm:$0xff] 0.0
      %5643 = vst [vmem:[#allocation2 + $0x188] sm:$0xff] 0.0
      %5644 = vst.msk [vmem:[#allocation2 + $0x190] sm:$0xff] %vm1557, 0.0
      %5645 = vst [vmem:[#allocation2 + $0x198] sm:$0xff] 0.0
      %5646 = vst [vmem:[#allocation2 + $0x1a0] sm:$0xff] 0.0
      %5647 = vst.msk [vmem:[#allocation2 + $0x1a8] sm:$0xff] %vm1557, 0.0
      %5648 = vst [vmem:[#allocation2 + $0x1b0] sm:$0xff] 0.0
      %5649 = vst [vmem:[#allocation2 + $0x1b8] sm:$0xff] 0.0
      %5650 = vst.msk [vmem:[#allocation2 + $0x1c0] sm:$0xff] %vm1557, 0.0
      %5651 = vst [vmem:[#allocation2 + $0x1c8] sm:$0xff] 0.0
      %5652 = vst [vmem:[#allocation2 + $0x1d0] sm:$0xff] 0.0
      %5653 = vst.msk [vmem:[#allocation2 + $0x1d8] sm:$0xff] %vm1557, 0.0
      %5658 = vrot.lane.b32.xlu0 %v5576, 1
      %v5659 = vpop.permute.xlu0 %5658
      %5660 = vrot.lane.b32.xlu0 %v5581, 1
      %v5661 = vpop.permute.xlu0 %5660
      %5662 = vrot.lane.b32.xlu0 %v5586, 1
      %v5663 = vpop.permute.xlu0 %5662
      %5664 = vrot.lane.b32.xlu0 %v5591, 1
      %v5665 = vpop.permute.xlu0 %5664
      %vm5670 = vcmask 359432
      %5671 = vst.msk [vmem:[#allocation2] sm:$0xff] %vm5670, %v5659
      %5672 = vst.msk [vmem:[#allocation2 + $0x18] sm:$0xff] %vm5670, %v5661
      %5673 = vst.msk [vmem:[#allocation2 + $0x30] sm:$0xff] %vm5670, %v5663
      %5674 = vst.msk [vmem:[#allocation2 + $0x48] sm:$0xff] %vm5670, %v5665
      %vm5675 = vcmask 359424
      %5676 = vst.msk [vmem:[#allocation2 + $0x60] sm:$0xff] %vm5675, %v5576
      %5677 = vst.msk [vmem:[#allocation2 + $0x78] sm:$0xff] %vm5675, %v5581
      %5678 = vst.msk [vmem:[#allocation2 + $0x90] sm:$0xff] %vm5675, %v5586
      %5679 = vst.msk [vmem:[#allocation2 + $0xa8] sm:$0xff] %vm5675, %v5591
      %5680 = vrot.lane.b32.xlu0 %v5576, 127
      %v5681 = vpop.permute.xlu0 %5680
      %5682 = vrot.lane.b32.xlu0 %v5581, 127
      %v5683 = vpop.permute.xlu0 %5682
      %5684 = vrot.lane.b32.xlu0 %v5586, 127
      %v5685 = vpop.permute.xlu0 %5684
      %5686 = vrot.lane.b32.xlu0 %v5591, 127
      %v5687 = vpop.permute.xlu0 %5686
      %vm5692 = vcmask 351232
      %5693 = vst.msk [vmem:[#allocation2 + $0xc0] sm:$0xff] %vm5692, %v5681
      %5694 = vst.msk [vmem:[#allocation2 + $0xd8] sm:$0xff] %vm5692, %v5683
      %5695 = vst.msk [vmem:[#allocation2 + $0xf0] sm:$0xff] %vm5692, %v5685
      %5696 = vst.msk [vmem:[#allocation2 + $0x108] sm:$0xff] %vm5692, %v5687
      %v5697 = vld [vmem:[%s43] sm:$0xff]
      %v5698 = vld [vmem:[%s43 + $0x8] sm:$0xff]
      %v5699 = vld [vmem:[%s43 + $0x10] sm:$0xff]
      %v5700 = vld [vmem:[%s43 + $0x18] sm:$0xff]
      %v5701 = vld [vmem:[#allocation2] sm:$0xff]
      %v5702 = vld [vmem:[#allocation2 + $0x18] sm:$0xff]
      %v5703 = vld [vmem:[#allocation2 + $0x30] sm:$0xff]
      %v5704 = vld [vmem:[#allocation2 + $0x48] sm:$0xff]
      %v5705 = vld [vmem:[#allocation2 + $0x60] sm:$0xff]
      %v5706 = vld [vmem:[#allocation2 + $0x78] sm:$0xff]
      %v5707 = vld [vmem:[#allocation2 + $0x90] sm:$0xff]
      %v5708 = vld [vmem:[#allocation2 + $0xa8] sm:$0xff]
      %v5709 = vld [vmem:[#allocation2 + $0xc0] sm:$0xff]
      %v5710 = vld [vmem:[#allocation2 + $0xd8] sm:$0xff]
      %v5711 = vld [vmem:[#allocation2 + $0xf0] sm:$0xff]
      %v5712 = vld [vmem:[#allocation2 + $0x108] sm:$0xff]
      %v5713 = vld [vmem:[%s45] sm:$0xff]
      %v5714 = vld [vmem:[%s45 + $0x8] sm:$0xff]
      %v5715 = vld [vmem:[%s45 + $0x10] sm:$0xff]
      %v5716 = vld [vmem:[%s45 + $0x18] sm:$0xff]
      %5718 = vset.pattern.permute.xlu0 0
      %5719 = vperm.xlu0 %5718, %v5713
      %v5720 = vpop.permute.xlu0 %5719
      %5723 = vset.pattern.permute.xlu0 0
      %5724 = vperm.xlu0 %5723, %v5714
      %v5725 = vpop.permute.xlu0 %5724
      %5728 = vset.pattern.permute.xlu0 0
      %5729 = vperm.xlu0 %5728, %v5715
      %v5730 = vpop.permute.xlu0 %5729
      %5733 = vset.pattern.permute.xlu0 0
      %5734 = vperm.xlu0 %5733, %v5716
      %v5735 = vpop.permute.xlu0 %5734
      %v5738 = vsel %vm1557, %v5697, 0
      %v5741 = vsel %vm1557, %v5698, 0
      %v5744 = vsel %vm1557, %v5699, 0
      %v5747 = vsel %vm1557, %v5700, 0
      %5749 = vmatprep.subr.mxu0 0.0
      %5750 = vmatpush1.msra.mxu0 %v5701
      %5751 = vmatprep.subr.mxu0 0.0
      %5752 = vmatpush1.msra.mxu0 %v5702
      %5753 = vmatprep.subr.mxu0 0.0
      %5754 = vmatpush1.msra.mxu0 %v5703
      %5755 = vmatprep.subr.mxu0 0.0
      %5756 = vmatpush1.msra.mxu0 %v5704
      %5757 = vmatprep.subr.mxu0 0.0
      %5758 = vmatpush1.msra.mxu0 %v5705
      %5759 = vmatprep.subr.mxu0 0.0
      %5760 = vmatpush1.msra.mxu0 %v5706
      %5761 = vmatprep.subr.mxu0 0.0
      %5762 = vmatpush1.msra.mxu0 %v5707
      %5763 = vmatprep.subr.mxu0 0.0
      %5764 = vmatpush1.msra.mxu0 %v5708
      %5765 = vmatprep.subr.mxu0 0.0
      %5766 = vmatpush1.msra.mxu0 %v5709
      %5767 = vmatprep.subr.mxu0 0.0
      %5768 = vmatpush1.msra.mxu0 %v5710
      %5769 = vmatprep.subr.mxu0 0.0
      %5770 = vmatpush1.msra.mxu0 %v5711
      %5771 = vmatprep.subr.mxu0 0.0
      %5772 = vmatpush1.msra.mxu0 %v5712
      %5773 = vmatprep.subr.mxu0 0.0
      %5774 = vmatpush1.msra.mxu0 0.0
      %5775 = vmatprep.subr.mxu0 0.0
      %5776 = vmatpush1.msra.mxu0 0.0
      %5777 = vmatprep.subr.mxu0 0.0
      %5778 = vmatpush1.msra.mxu0 0.0
      %5779 = vmatprep.subr.mxu0 0.0
      %5780 = vmatpush1.msra.mxu0 0.0
      %5781 = vmatprep.subr.mxu0 0.0
      %5782 = vmatpush1.msra.mxu0 0.0
      %5783 = vmatprep.subr.mxu0 0.0
      %5784 = vmatpush1.msra.mxu0 0.0
      %5785 = vmatprep.subr.mxu0 0.0
      %5786 = vmatpush1.msra.mxu0 0.0
      %5787 = vmatprep.subr.mxu0 0.0
      %5788 = vmatpush1.msra.mxu0 0.0
      %5789 = vmatprep.subr.mxu0 0.0
      %5790 = vmatpush1.msra.mxu0 0.0
      %5791 = vmatprep.subr.mxu0 0.0
      %5792 = vmatpush1.msra.mxu0 0.0
      %5793 = vmatprep.subr.mxu0 0.0
      %5794 = vmatpush1.msra.mxu0 0.0
      %5795 = vmatprep.subr.mxu0 0.0
      %5796 = vmatpush1.msra.mxu0 0.0
      %5797 = vmatprep.subr.mxu0 0.0
      %5798 = vmatpush1.msra.mxu0 0.0
      %5799 = vmatprep.subr.mxu0 0.0
      %5800 = vmatpush1.msra.mxu0 0.0
      %5801 = vmatprep.subr.mxu0 0.0
      %5802 = vmatpush1.msra.mxu0 0.0
      %5803 = vmatprep.subr.mxu0 0.0
      %5804 = vmatpush1.msra.mxu0 0.0
      %5805 = vmatprep.subr.mxu0 0.0
      %5806 = vmatpush1.msra.mxu0 0.0
      %5807 = vmatprep.subr.mxu0 0.0
      %5808 = vmatpush1.msra.mxu0 0.0
      %5809 = vmatprep.subr.mxu0 0.0
      %5810 = vmatpush1.msra.mxu0 0.0
      %5811 = vmatprep.subr.mxu0 0.0
      %5812 = vmatpush1.msra.mxu0 0.0
      %5813 = vmatprep.mubr.f32.mxu0 0.0
      %5814 = vmatmul.mubr.f32.gmra.mrb[0].mxu0 %v5738
      %v5815 = vpop.f32.mrb[0].mxu0
      %v5816 = vadd.f32 %v5720, %v5815
      %v5817 = vpop.f32.mrb[0].mxu0
      %5818 = vmatprep.mubr.f32.mxu0 0.0
      %5819 = vmatmul.mubr.f32.gmra.mrb[0].mxu0 %v5741
      %v5820 = vpop.f32.mrb[0].mxu0
      %v5821 = vadd.f32 %v5725, %v5820
      %v5822 = vpop.f32.mrb[0].mxu0
      %5823 = vmatprep.mubr.f32.mxu0 0.0
      %5824 = vmatmul.mubr.f32.gmra.mrb[0].mxu0 %v5744
      %v5825 = vpop.f32.mrb[0].mxu0
      %v5826 = vadd.f32 %v5730, %v5825
      %v5827 = vpop.f32.mrb[0].mxu0
      %5828 = vmatprep.mubr.f32.mxu0 0.0
      %5829 = vmatmul.mubr.f32.gmra.mrb[0].mxu0 %v5747
      %v5830 = vpop.f32.mrb[0].mxu0
      %v5831 = vadd.f32 %v5735, %v5830
      %v5832 = vpop.f32.mrb[0].mxu0
      %5833 = vdwg.mxu0
      %v5834 = vmax.f32 %v5816, 0.0
      %v5835 = vmax.f32 %v5821, 0.0
      %v5836 = vmax.f32 %v5826, 0.0
      %v5837 = vmax.f32 %v5831, 0.0
      %5838 = vst [vmem:[#allocation2] sm:$0xff] 0.0
      %5839 = vst [vmem:[#allocation2 + $0x8] sm:$0xff] 0.0
      %5840 = vst.msk [vmem:[#allocation2 + $0x10] sm:$0xff] %vm1557, 0.0
      %5841 = vst [vmem:[#allocation2 + $0x18] sm:$0xff] 0.0
      %5842 = vst [vmem:[#allocation2 + $0x20] sm:$0xff] 0.0
      %5843 = vst.msk [vmem:[#allocation2 + $0x28] sm:$0xff] %vm1557, 0.0
      %5844 = vst [vmem:[#allocation2 + $0x30] sm:$0xff] 0.0
      %5845 = vst [vmem:[#allocation2 + $0x38] sm:$0xff] 0.0
      %5846 = vst.msk [vmem:[#allocation2 + $0x40] sm:$0xff] %vm1557, 0.0
      %5847 = vst [vmem:[#allocation2 + $0x48] sm:$0xff] 0.0
      %5848 = vst [vmem:[#allocation2 + $0x50] sm:$0xff] 0.0
      %5849 = vst.msk [vmem:[#allocation2 + $0x58] sm:$0xff] %vm1557, 0.0
      %5850 = vst [vmem:[#allocation2 + $0x60] sm:$0xff] 0.0
      %5851 = vst [vmem:[#allocation2 + $0x68] sm:$0xff] 0.0
      %5852 = vst.msk [vmem:[#allocation2 + $0x70] sm:$0xff] %vm1557, 0.0
      %5853 = vst [vmem:[#allocation2 + $0x78] sm:$0xff] 0.0
      %5854 = vst [vmem:[#allocation2 + $0x80] sm:$0xff] 0.0
      %5855 = vst.msk [vmem:[#allocation2 + $0x88] sm:$0xff] %vm1557, 0.0
      %5856 = vst [vmem:[#allocation2 + $0x90] sm:$0xff] 0.0
      %5857 = vst [vmem:[#allocation2 + $0x98] sm:$0xff] 0.0
      %5858 = vst.msk [vmem:[#allocation2 + $0xa0] sm:$0xff] %vm1557, 0.0
      %5859 = vst [vmem:[#allocation2 + $0xa8] sm:$0xff] 0.0
      %5860 = vst [vmem:[#allocation2 + $0xb0] sm:$0xff] 0.0
      %5861 = vst.msk [vmem:[#allocation2 + $0xb8] sm:$0xff] %vm1557, 0.0
      %5862 = vst [vmem:[#allocation2 + $0xc0] sm:$0xff] 0.0
      %5863 = vst [vmem:[#allocation2 + $0xc8] sm:$0xff] 0.0
      %5864 = vst.msk [vmem:[#allocation2 + $0xd0] sm:$0xff] %vm1557, 0.0
      %5865 = vst [vmem:[#allocation2 + $0xd8] sm:$0xff] 0.0
      %5866 = vst [vmem:[#allocation2 + $0xe0] sm:$0xff] 0.0
      %5867 = vst.msk [vmem:[#allocation2 + $0xe8] sm:$0xff] %vm1557, 0.0
      %5868 = vst [vmem:[#allocation2 + $0xf0] sm:$0xff] 0.0
      %5869 = vst [vmem:[#allocation2 + $0xf8] sm:$0xff] 0.0
      %5870 = vst.msk [vmem:[#allocation2 + $0x100] sm:$0xff] %vm1557, 0.0
      %5871 = vst [vmem:[#allocation2 + $0x108] sm:$0xff] 0.0
      %5872 = vst [vmem:[#allocation2 + $0x110] sm:$0xff] 0.0
      %5873 = vst.msk [vmem:[#allocation2 + $0x118] sm:$0xff] %vm1557, 0.0
      %5874 = vst [vmem:[#allocation2 + $0x120] sm:$0xff] 0.0
      %5875 = vst [vmem:[#allocation2 + $0x128] sm:$0xff] 0.0
      %5876 = vst.msk [vmem:[#allocation2 + $0x130] sm:$0xff] %vm1557, 0.0
      %5877 = vst [vmem:[#allocation2 + $0x138] sm:$0xff] 0.0
      %5878 = vst [vmem:[#allocation2 + $0x140] sm:$0xff] 0.0
      %5879 = vst.msk [vmem:[#allocation2 + $0x148] sm:$0xff] %vm1557, 0.0
      %5880 = vst [vmem:[#allocation2 + $0x150] sm:$0xff] 0.0
      %5881 = vst [vmem:[#allocation2 + $0x158] sm:$0xff] 0.0
      %5882 = vst.msk [vmem:[#allocation2 + $0x160] sm:$0xff] %vm1557, 0.0
      %5883 = vst [vmem:[#allocation2 + $0x168] sm:$0xff] 0.0
      %5884 = vst [vmem:[#allocation2 + $0x170] sm:$0xff] 0.0
      %5885 = vst.msk [vmem:[#allocation2 + $0x178] sm:$0xff] %vm1557, 0.0
      %5886 = vst [vmem:[#allocation2 + $0x180] sm:$0xff] 0.0
      %5887 = vst [vmem:[#allocation2 + $0x188] sm:$0xff] 0.0
      %5888 = vst.msk [vmem:[#allocation2 + $0x190] sm:$0xff] %vm1557, 0.0
      %5889 = vst [vmem:[#allocation2 + $0x198] sm:$0xff] 0.0
      %5890 = vst [vmem:[#allocation2 + $0x1a0] sm:$0xff] 0.0
      %5891 = vst.msk [vmem:[#allocation2 + $0x1a8] sm:$0xff] %vm1557, 0.0
      %5892 = vst [vmem:[#allocation2 + $0x1b0] sm:$0xff] 0.0
      %5893 = vst [vmem:[#allocation2 + $0x1b8] sm:$0xff] 0.0
      %5894 = vst.msk [vmem:[#allocation2 + $0x1c0] sm:$0xff] %vm1557, 0.0
      %5895 = vst [vmem:[#allocation2 + $0x1c8] sm:$0xff] 0.0
      %5896 = vst [vmem:[#allocation2 + $0x1d0] sm:$0xff] 0.0
      %5897 = vst.msk [vmem:[#allocation2 + $0x1d8] sm:$0xff] %vm1557, 0.0
      %5902 = vrot.lane.b32.xlu0 %v5834, 1
      %v5903 = vpop.permute.xlu0 %5902
      %5904 = vrot.lane.b32.xlu0 %v5835, 1
      %v5905 = vpop.permute.xlu0 %5904
      %5906 = vrot.lane.b32.xlu0 %v5836, 1
      %v5907 = vpop.permute.xlu0 %5906
      %5908 = vrot.lane.b32.xlu0 %v5837, 1
      %v5909 = vpop.permute.xlu0 %5908
      %5914 = vst.msk [vmem:[#allocation2] sm:$0xff] %vm5670, %v5903
      %5915 = vst.msk [vmem:[#allocation2 + $0x18] sm:$0xff] %vm5670, %v5905
      %5916 = vst.msk [vmem:[#allocation2 + $0x30] sm:$0xff] %vm5670, %v5907
      %5917 = vst.msk [vmem:[#allocation2 + $0x48] sm:$0xff] %vm5670, %v5909
      %5918 = vst.msk [vmem:[#allocation2 + $0x60] sm:$0xff] %vm5675, %v5834
      %5919 = vst.msk [vmem:[#allocation2 + $0x78] sm:$0xff] %vm5675, %v5835
      %5920 = vst.msk [vmem:[#allocation2 + $0x90] sm:$0xff] %vm5675, %v5836
      %5921 = vst.msk [vmem:[#allocation2 + $0xa8] sm:$0xff] %vm5675, %v5837
      %5922 = vrot.lane.b32.xlu0 %v5834, 127
      %v5923 = vpop.permute.xlu0 %5922
      %5924 = vrot.lane.b32.xlu0 %v5835, 127
      %v5925 = vpop.permute.xlu0 %5924
      %5926 = vrot.lane.b32.xlu0 %v5836, 127
      %v5927 = vpop.permute.xlu0 %5926
      %5928 = vrot.lane.b32.xlu0 %v5837, 127
      %v5929 = vpop.permute.xlu0 %5928
      %5934 = vst.msk [vmem:[#allocation2 + $0xc0] sm:$0xff] %vm5692, %v5923
      %5935 = vst.msk [vmem:[#allocation2 + $0xd8] sm:$0xff] %vm5692, %v5925
      %5936 = vst.msk [vmem:[#allocation2 + $0xf0] sm:$0xff] %vm5692, %v5927
      %5937 = vst.msk [vmem:[#allocation2 + $0x108] sm:$0xff] %vm5692, %v5929
      %v5938 = vld [vmem:[%s47] sm:$0xff]
      %v5939 = vld [vmem:[%s47 + $0x8] sm:$0xff]
      %v5940 = vld [vmem:[%s47 + $0x10] sm:$0xff]
      %v5941 = vld [vmem:[%s47 + $0x18] sm:$0xff]
      %v5942 = vld [vmem:[#allocation2] sm:$0xff]
      %v5943 = vld [vmem:[#allocation2 + $0x18] sm:$0xff]
      %v5944 = vld [vmem:[#allocation2 + $0x30] sm:$0xff]
      %v5945 = vld [vmem:[#allocation2 + $0x48] sm:$0xff]
      %v5946 = vld [vmem:[#allocation2 + $0x60] sm:$0xff]
      %v5947 = vld [vmem:[#allocation2 + $0x78] sm:$0xff]
      %v5948 = vld [vmem:[#allocation2 + $0x90] sm:$0xff]
      %v5949 = vld [vmem:[#allocation2 + $0xa8] sm:$0xff]
      %v5950 = vld [vmem:[#allocation2 + $0xc0] sm:$0xff]
      %v5951 = vld [vmem:[#allocation2 + $0xd8] sm:$0xff]
      %v5952 = vld [vmem:[#allocation2 + $0xf0] sm:$0xff]
      %v5953 = vld [vmem:[#allocation2 + $0x108] sm:$0xff]
      %v5954 = vld [vmem:[%s49] sm:$0xff]
      %v5955 = vld [vmem:[%s49 + $0x8] sm:$0xff]
      %v5956 = vld [vmem:[%s49 + $0x10] sm:$0xff]
      %v5957 = vld [vmem:[%s49 + $0x18] sm:$0xff]
      %5959 = vset.pattern.permute.xlu0 0
      %5960 = vperm.xlu0 %5959, %v5954
      %v5961 = vpop.permute.xlu0 %5960
      %5964 = vset.pattern.permute.xlu0 0
      %5965 = vperm.xlu0 %5964, %v5955
      %v5966 = vpop.permute.xlu0 %5965
      %5969 = vset.pattern.permute.xlu0 0
      %5970 = vperm.xlu0 %5969, %v5956
      %v5971 = vpop.permute.xlu0 %5970
      %5974 = vset.pattern.permute.xlu0 0
      %5975 = vperm.xlu0 %5974, %v5957
      %v5976 = vpop.permute.xlu0 %5975
      %v5979 = vsel %vm1557, %v5938, 0
      %v5982 = vsel %vm1557, %v5939, 0
      %v5985 = vsel %vm1557, %v5940, 0
      %v5988 = vsel %vm1557, %v5941, 0
      %5990 = vmatprep.subr.mxu0 0.0
      %5991 = vmatpush1.msra.mxu0 %v5942
      %5992 = vmatprep.subr.mxu0 0.0
      %5993 = vmatpush1.msra.mxu0 %v5943
      %5994 = vmatprep.subr.mxu0 0.0
      %5995 = vmatpush1.msra.mxu0 %v5944
      %5996 = vmatprep.subr.mxu0 0.0
      %5997 = vmatpush1.msra.mxu0 %v5945
      %5998 = vmatprep.subr.mxu0 0.0
      %5999 = vmatpush1.msra.mxu0 %v5946
      %6000 = vmatprep.subr.mxu0 0.0
      %6001 = vmatpush1.msra.mxu0 %v5947
      %6002 = vmatprep.subr.mxu0 0.0
      %6003 = vmatpush1.msra.mxu0 %v5948
      %6004 = vmatprep.subr.mxu0 0.0
      %6005 = vmatpush1.msra.mxu0 %v5949
      %6006 = vmatprep.subr.mxu0 0.0
      %6007 = vmatpush1.msra.mxu0 %v5950
      %6008 = vmatprep.subr.mxu0 0.0
      %6009 = vmatpush1.msra.mxu0 %v5951
      %6010 = vmatprep.subr.mxu0 0.0
      %6011 = vmatpush1.msra.mxu0 %v5952
      %6012 = vmatprep.subr.mxu0 0.0
      %6013 = vmatpush1.msra.mxu0 %v5953
      %6014 = vmatprep.subr.mxu0 0.0
      %6015 = vmatpush1.msra.mxu0 0.0
      %6016 = vmatprep.subr.mxu0 0.0
      %6017 = vmatpush1.msra.mxu0 0.0
      %6018 = vmatprep.subr.mxu0 0.0
      %6019 = vmatpush1.msra.mxu0 0.0
      %6020 = vmatprep.subr.mxu0 0.0
      %6021 = vmatpush1.msra.mxu0 0.0
      %6022 = vmatprep.subr.mxu0 0.0
      %6023 = vmatpush1.msra.mxu0 0.0
      %6024 = vmatprep.subr.mxu0 0.0
      %6025 = vmatpush1.msra.mxu0 0.0
      %6026 = vmatprep.subr.mxu0 0.0
      %6027 = vmatpush1.msra.mxu0 0.0
      %6028 = vmatprep.subr.mxu0 0.0
      %6029 = vmatpush1.msra.mxu0 0.0
      %6030 = vmatprep.subr.mxu0 0.0
      %6031 = vmatpush1.msra.mxu0 0.0
      %6032 = vmatprep.subr.mxu0 0.0
      %6033 = vmatpush1.msra.mxu0 0.0
      %6034 = vmatprep.subr.mxu0 0.0
      %6035 = vmatpush1.msra.mxu0 0.0
      %6036 = vmatprep.subr.mxu0 0.0
      %6037 = vmatpush1.msra.mxu0 0.0
      %6038 = vmatprep.subr.mxu0 0.0
      %6039 = vmatpush1.msra.mxu0 0.0
      %6040 = vmatprep.subr.mxu0 0.0
      %6041 = vmatpush1.msra.mxu0 0.0
      %6042 = vmatprep.subr.mxu0 0.0
      %6043 = vmatpush1.msra.mxu0 0.0
      %6044 = vmatprep.subr.mxu0 0.0
      %6045 = vmatpush1.msra.mxu0 0.0
      %6046 = vmatprep.subr.mxu0 0.0
      %6047 = vmatpush1.msra.mxu0 0.0
      %6048 = vmatprep.subr.mxu0 0.0
      %6049 = vmatpush1.msra.mxu0 0.0
      %6050 = vmatprep.subr.mxu0 0.0
      %6051 = vmatpush1.msra.mxu0 0.0
      %6052 = vmatprep.subr.mxu0 0.0
      %6053 = vmatpush1.msra.mxu0 0.0
      %6054 = vmatprep.mubr.f32.mxu0 0.0
      %6055 = vmatmul.mubr.f32.gmra.mrb[0].mxu0 %v5979
      %v6056 = vpop.f32.mrb[0].mxu0
      %v6057 = vadd.f32 %v5961, %v6056
      %v6058 = vpop.f32.mrb[0].mxu0
      %6059 = vmatprep.mubr.f32.mxu0 0.0
      %6060 = vmatmul.mubr.f32.gmra.mrb[0].mxu0 %v5982
      %v6061 = vpop.f32.mrb[0].mxu0
      %v6062 = vadd.f32 %v5966, %v6061
      %v6063 = vpop.f32.mrb[0].mxu0
      %6064 = vmatprep.mubr.f32.mxu0 0.0
      %6065 = vmatmul.mubr.f32.gmra.mrb[0].mxu0 %v5985
      %v6066 = vpop.f32.mrb[0].mxu0
      %v6067 = vadd.f32 %v5971, %v6066
      %v6068 = vpop.f32.mrb[0].mxu0
      %6069 = vmatprep.mubr.f32.mxu0 0.0
      %6070 = vmatmul.mubr.f32.gmra.mrb[0].mxu0 %v5988
      %v6071 = vpop.f32.mrb[0].mxu0
      %v6072 = vadd.f32 %v5976, %v6071
      %v6073 = vpop.f32.mrb[0].mxu0
      %6074 = vdwg.mxu0
      %v6075 = vadd.f32 %v6057, %v5576
      %v6076 = vadd.f32 %v6062, %v5581
      %v6077 = vadd.f32 %v6067, %v5586
      %v6078 = vadd.f32 %v6072, %v5591
      %v6079 = vmax.f32 %v6075, 0.0
      %v6080 = vmax.f32 %v6076, 0.0
      %v6081 = vmax.f32 %v6077, 0.0
      %v6082 = vmax.f32 %v6078, 0.0
      %6083 = vst [vmem:[#allocation2] sm:$0xff] 0.0
      %6084 = vst [vmem:[#allocation2 + $0x8] sm:$0xff] 0.0
      %6085 = vst.msk [vmem:[#allocation2 + $0x10] sm:$0xff] %vm1557, 0.0
      %6086 = vst [vmem:[#allocation2 + $0x18] sm:$0xff] 0.0
      %6087 = vst [vmem:[#allocation2 + $0x20] sm:$0xff] 0.0
      %6088 = vst.msk [vmem:[#allocation2 + $0x28] sm:$0xff] %vm1557, 0.0
      %6089 = vst [vmem:[#allocation2 + $0x30] sm:$0xff] 0.0
      %6090 = vst [vmem:[#allocation2 + $0x38] sm:$0xff] 0.0
      %6091 = vst.msk [vmem:[#allocation2 + $0x40] sm:$0xff] %vm1557, 0.0
      %6092 = vst [vmem:[#allocation2 + $0x48] sm:$0xff] 0.0
      %6093 = vst [vmem:[#allocation2 + $0x50] sm:$0xff] 0.0
      %6094 = vst.msk [vmem:[#allocation2 + $0x58] sm:$0xff] %vm1557, 0.0
      %6095 = vst [vmem:[#allocation2 + $0x60] sm:$0xff] 0.0
      %6096 = vst [vmem:[#allocation2 + $0x68] sm:$0xff] 0.0
      %6097 = vst.msk [vmem:[#allocation2 + $0x70] sm:$0xff] %vm1557, 0.0
      %6098 = vst [vmem:[#allocation2 + $0x78] sm:$0xff] 0.0
      %6099 = vst [vmem:[#allocation2 + $0x80] sm:$0xff] 0.0
      %6100 = vst.msk [vmem:[#allocation2 + $0x88] sm:$0xff] %vm1557, 0.0
      %6101 = vst [vmem:[#allocation2 + $0x90] sm:$0xff] 0.0
      %6102 = vst [vmem:[#allocation2 + $0x98] sm:$0xff] 0.0
      %6103 = vst.msk [vmem:[#allocation2 + $0xa0] sm:$0xff] %vm1557, 0.0
      %6104 = vst [vmem:[#allocation2 + $0xa8] sm:$0xff] 0.0
      %6105 = vst [vmem:[#allocation2 + $0xb0] sm:$0xff] 0.0
      %6106 = vst.msk [vmem:[#allocation2 + $0xb8] sm:$0xff] %vm1557, 0.0
      %6107 = vst [vmem:[#allocation2 + $0xc0] sm:$0xff] 0.0
      %6108 = vst [vmem:[#allocation2 + $0xc8] sm:$0xff] 0.0
      %6109 = vst.msk [vmem:[#allocation2 + $0xd0] sm:$0xff] %vm1557, 0.0
      %6110 = vst [vmem:[#allocation2 + $0xd8] sm:$0xff] 0.0
      %6111 = vst [vmem:[#allocation2 + $0xe0] sm:$0xff] 0.0
      %6112 = vst.msk [vmem:[#allocation2 + $0xe8] sm:$0xff] %vm1557, 0.0
      %6113 = vst [vmem:[#allocation2 + $0xf0] sm:$0xff] 0.0
      %6114 = vst [vmem:[#allocation2 + $0xf8] sm:$0xff] 0.0
      %6115 = vst.msk [vmem:[#allocation2 + $0x100] sm:$0xff] %vm1557, 0.0
      %6116 = vst [vmem:[#allocation2 + $0x108] sm:$0xff] 0.0
      %6117 = vst [vmem:[#allocation2 + $0x110] sm:$0xff] 0.0
      %6118 = vst.msk [vmem:[#allocation2 + $0x118] sm:$0xff] %vm1557, 0.0
      %6119 = vst [vmem:[#allocation2 + $0x120] sm:$0xff] 0.0
      %6120 = vst [vmem:[#allocation2 + $0x128] sm:$0xff] 0.0
      %6121 = vst.msk [vmem:[#allocation2 + $0x130] sm:$0xff] %vm1557, 0.0
      %6122 = vst [vmem:[#allocation2 + $0x138] sm:$0xff] 0.0
      %6123 = vst [vmem:[#allocation2 + $0x140] sm:$0xff] 0.0
      %6124 = vst.msk [vmem:[#allocation2 + $0x148] sm:$0xff] %vm1557, 0.0
      %6125 = vst [vmem:[#allocation2 + $0x150] sm:$0xff] 0.0
      %6126 = vst [vmem:[#allocation2 + $0x158] sm:$0xff] 0.0
      %6127 = vst.msk [vmem:[#allocation2 + $0x160] sm:$0xff] %vm1557, 0.0
      %6128 = vst [vmem:[#allocation2 + $0x168] sm:$0xff] 0.0
      %6129 = vst [vmem:[#allocation2 + $0x170] sm:$0xff] 0.0
      %6130 = vst.msk [vmem:[#allocation2 + $0x178] sm:$0xff] %vm1557, 0.0
      %6131 = vst [vmem:[#allocation2 + $0x180] sm:$0xff] 0.0
      %6132 = vst [vmem:[#allocation2 + $0x188] sm:$0xff] 0.0
      %6133 = vst.msk [vmem:[#allocation2 + $0x190] sm:$0xff] %vm1557, 0.0
      %6134 = vst [vmem:[#allocation2 + $0x198] sm:$0xff] 0.0
      %6135 = vst [vmem:[#allocation2 + $0x1a0] sm:$0xff] 0.0
      %6136 = vst.msk [vmem:[#allocation2 + $0x1a8] sm:$0xff] %vm1557, 0.0
      %6137 = vst [vmem:[#allocation2 + $0x1b0] sm:$0xff] 0.0
      %6138 = vst [vmem:[#allocation2 + $0x1b8] sm:$0xff] 0.0
      %6139 = vst.msk [vmem:[#allocation2 + $0x1c0] sm:$0xff] %vm1557, 0.0
      %6140 = vst [vmem:[#allocation2 + $0x1c8] sm:$0xff] 0.0
      %6141 = vst [vmem:[#allocation2 + $0x1d0] sm:$0xff] 0.0
      %6142 = vst.msk [vmem:[#allocation2 + $0x1d8] sm:$0xff] %vm1557, 0.0
      %6147 = vrot.lane.b32.xlu0 %v6079, 1
      %v6148 = vpop.permute.xlu0 %6147
      %6149 = vrot.lane.b32.xlu0 %v6080, 1
      %v6150 = vpop.permute.xlu0 %6149
      %6151 = vrot.lane.b32.xlu0 %v6081, 1
      %v6152 = vpop.permute.xlu0 %6151
      %6153 = vrot.lane.b32.xlu0 %v6082, 1
      %v6154 = vpop.permute.xlu0 %6153
      %6159 = vst.msk [vmem:[#allocation2] sm:$0xff] %vm5670, %v6148
      %6160 = vst.msk [vmem:[#allocation2 + $0x18] sm:$0xff] %vm5670, %v6150
      %6161 = vst.msk [vmem:[#allocation2 + $0x30] sm:$0xff] %vm5670, %v6152
      %6162 = vst.msk [vmem:[#allocation2 + $0x48] sm:$0xff] %vm5670, %v6154
      %6163 = vst.msk [vmem:[#allocation2 + $0x60] sm:$0xff] %vm5675, %v6079
      %6164 = vst.msk [vmem:[#allocation2 + $0x78] sm:$0xff] %vm5675, %v6080
      %6165 = vst.msk [vmem:[#allocation2 + $0x90] sm:$0xff] %vm5675, %v6081
      %6166 = vst.msk [vmem:[#allocation2 + $0xa8] sm:$0xff] %vm5675, %v6082
      %6167 = vrot.lane.b32.xlu0 %v6079, 127
      %v6168 = vpop.permute.xlu0 %6167
      %6169 = vrot.lane.b32.xlu0 %v6080, 127
      %v6170 = vpop.permute.xlu0 %6169
      %6171 = vrot.lane.b32.xlu0 %v6081, 127
      %v6172 = vpop.permute.xlu0 %6171
      %6173 = vrot.lane.b32.xlu0 %v6082, 127
      %v6174 = vpop.permute.xlu0 %6173
      %6179 = vst.msk [vmem:[#allocation2 + $0xc0] sm:$0xff] %vm5692, %v6168
      %6180 = vst.msk [vmem:[#allocation2 + $0xd8] sm:$0xff] %vm5692, %v6170
      %6181 = vst.msk [vmem:[#allocation2 + $0xf0] sm:$0xff] %vm5692, %v6172
      %6182 = vst.msk [vmem:[#allocation2 + $0x108] sm:$0xff] %vm5692, %v6174
      %v6183 = vld [vmem:[%s51] sm:$0xff]
      %v6184 = vld [vmem:[%s51 + $0x8] sm:$0xff]
      %v6185 = vld [vmem:[%s51 + $0x10] sm:$0xff]
      %v6186 = vld [vmem:[%s51 + $0x18] sm:$0xff]
      %v6187 = vld [vmem:[#allocation2] sm:$0xff]
      %v6188 = vld [vmem:[#allocation2 + $0x18] sm:$0xff]
      %v6189 = vld [vmem:[#allocation2 + $0x30] sm:$0xff]
      %v6190 = vld [vmem:[#allocation2 + $0x48] sm:$0xff]
      %v6191 = vld [vmem:[#allocation2 + $0x60] sm:$0xff]
      %v6192 = vld [vmem:[#allocation2 + $0x78] sm:$0xff]
      %v6193 = vld [vmem:[#allocation2 + $0x90] sm:$0xff]
      %v6194 = vld [vmem:[#allocation2 + $0xa8] sm:$0xff]
      %v6195 = vld [vmem:[#allocation2 + $0xc0] sm:$0xff]
      %v6196 = vld [vmem:[#allocation2 + $0xd8] sm:$0xff]
      %v6197 = vld [vmem:[#allocation2 + $0xf0] sm:$0xff]
      %v6198 = vld [vmem:[#allocation2 + $0x108] sm:$0xff]
      %v6199 = vld [vmem:[%s53] sm:$0xff]
      %v6200 = vld [vmem:[%s53 + $0x8] sm:$0xff]
      %v6201 = vld [vmem:[%s53 + $0x10] sm:$0xff]
      %v6202 = vld [vmem:[%s53 + $0x18] sm:$0xff]
      %6204 = vset.pattern.permute.xlu0 0
      %6205 = vperm.xlu0 %6204, %v6199
      %v6206 = vpop.permute.xlu0 %6205
      %6209 = vset.pattern.permute.xlu0 0
      %6210 = vperm.xlu0 %6209, %v6200
      %v6211 = vpop.permute.xlu0 %6210
      %6214 = vset.pattern.permute.xlu0 0
      %6215 = vperm.xlu0 %6214, %v6201
      %v6216 = vpop.permute.xlu0 %6215
      %6219 = vset.pattern.permute.xlu0 0
      %6220 = vperm.xlu0 %6219, %v6202
      %v6221 = vpop.permute.xlu0 %6220
      %v6224 = vsel %vm1557, %v6183, 0
      %v6227 = vsel %vm1557, %v6184, 0
      %v6230 = vsel %vm1557, %v6185, 0
      %v6233 = vsel %vm1557, %v6186, 0
      %6235 = vmatprep.subr.mxu0 0.0
      %6236 = vmatpush1.msra.mxu0 %v6187
      %6237 = vmatprep.subr.mxu0 0.0
      %6238 = vmatpush1.msra.mxu0 %v6188
      %6239 = vmatprep.subr.mxu0 0.0
      %6240 = vmatpush1.msra.mxu0 %v6189
      %6241 = vmatprep.subr.mxu0 0.0
      %6242 = vmatpush1.msra.mxu0 %v6190
      %6243 = vmatprep.subr.mxu0 0.0
      %6244 = vmatpush1.msra.mxu0 %v6191
      %6245 = vmatprep.subr.mxu0 0.0
      %6246 = vmatpush1.msra.mxu0 %v6192
      %6247 = vmatprep.subr.mxu0 0.0
      %6248 = vmatpush1.msra.mxu0 %v6193
      %6249 = vmatprep.subr.mxu0 0.0
      %6250 = vmatpush1.msra.mxu0 %v6194
      %6251 = vmatprep.subr.mxu0 0.0
      %6252 = vmatpush1.msra.mxu0 %v6195
      %6253 = vmatprep.subr.mxu0 0.0
      %6254 = vmatpush1.msra.mxu0 %v6196
      %6255 = vmatprep.subr.mxu0 0.0
      %6256 = vmatpush1.msra.mxu0 %v6197
      %6257 = vmatprep.subr.mxu0 0.0
      %6258 = vmatpush1.msra.mxu0 %v6198
      %6259 = vmatprep.subr.mxu0 0.0
      %6260 = vmatpush1.msra.mxu0 0.0
      %6261 = vmatprep.subr.mxu0 0.0
      %6262 = vmatpush1.msra.mxu0 0.0
      %6263 = vmatprep.subr.mxu0 0.0
      %6264 = vmatpush1.msra.mxu0 0.0
      %6265 = vmatprep.subr.mxu0 0.0
      %6266 = vmatpush1.msra.mxu0 0.0
      %6267 = vmatprep.subr.mxu0 0.0
      %6268 = vmatpush1.msra.mxu0 0.0
      %6269 = vmatprep.subr.mxu0 0.0
      %6270 = vmatpush1.msra.mxu0 0.0
      %6271 = vmatprep.subr.mxu0 0.0
      %6272 = vmatpush1.msra.mxu0 0.0
      %6273 = vmatprep.subr.mxu0 0.0
      %6274 = vmatpush1.msra.mxu0 0.0
      %6275 = vmatprep.subr.mxu0 0.0
      %6276 = vmatpush1.msra.mxu0 0.0
      %6277 = vmatprep.subr.mxu0 0.0
      %6278 = vmatpush1.msra.mxu0 0.0
      %6279 = vmatprep.subr.mxu0 0.0
      %6280 = vmatpush1.msra.mxu0 0.0
      %6281 = vmatprep.subr.mxu0 0.0
      %6282 = vmatpush1.msra.mxu0 0.0
      %6283 = vmatprep.subr.mxu0 0.0
      %6284 = vmatpush1.msra.mxu0 0.0
      %6285 = vmatprep.subr.mxu0 0.0
      %6286 = vmatpush1.msra.mxu0 0.0
      %6287 = vmatprep.subr.mxu0 0.0
      %6288 = vmatpush1.msra.mxu0 0.0
      %6289 = vmatprep.subr.mxu0 0.0
      %6290 = vmatpush1.msra.mxu0 0.0
      %6291 = vmatprep.subr.mxu0 0.0
      %6292 = vmatpush1.msra.mxu0 0.0
      %6293 = vmatprep.subr.mxu0 0.0
      %6294 = vmatpush1.msra.mxu0 0.0
      %6295 = vmatprep.subr.mxu0 0.0
      %6296 = vmatpush1.msra.mxu0 0.0
      %6297 = vmatprep.subr.mxu0 0.0
      %6298 = vmatpush1.msra.mxu0 0.0
      %6299 = vmatprep.mubr.f32.mxu0 0.0
      %6300 = vmatmul.mubr.f32.gmra.mrb[0].mxu0 %v6224
      %v6301 = vpop.f32.mrb[0].mxu0
      %v6302 = vadd.f32 %v6206, %v6301
      %v6303 = vpop.f32.mrb[0].mxu0
      %6304 = vmatprep.mubr.f32.mxu0 0.0
      %6305 = vmatmul.mubr.f32.gmra.mrb[0].mxu0 %v6227
      %v6306 = vpop.f32.mrb[0].mxu0
      %v6307 = vadd.f32 %v6211, %v6306
      %v6308 = vpop.f32.mrb[0].mxu0
      %6309 = vmatprep.mubr.f32.mxu0 0.0
      %6310 = vmatmul.mubr.f32.gmra.mrb[0].mxu0 %v6230
      %v6311 = vpop.f32.mrb[0].mxu0
      %v6312 = vadd.f32 %v6216, %v6311
      %v6313 = vpop.f32.mrb[0].mxu0
      %6314 = vmatprep.mubr.f32.mxu0 0.0
      %6315 = vmatmul.mubr.f32.gmra.mrb[0].mxu0 %v6233
      %v6316 = vpop.f32.mrb[0].mxu0
      %v6317 = vadd.f32 %v6221, %v6316
      %v6318 = vpop.f32.mrb[0].mxu0
      %6319 = vdwg.mxu0
      %v6320 = vmax.f32 %v6302, 0.0
      %v6321 = vmax.f32 %v6307, 0.0
      %v6322 = vmax.f32 %v6312, 0.0
      %v6323 = vmax.f32 %v6317, 0.0
      %v6325 = vsel %vm5675, %v6320, 0
      %v6328 = vsel %vm5675, %v6321, 0
      %v6331 = vsel %vm5675, %v6322, 0
      %v6334 = vsel %vm5675, %v6323, 0
      %vm6336 = vcmask 1043456
      %v6338 = vsel %vm6336, %v3465, 0
      %6340 = vmatprep.subr.mxu0 0.0
      %6341 = vmatpush1.msra.mxu0 %v3455
      %6342 = vmatprep.subr.mxu0 0.0
      %6343 = vmatpush1.msra.mxu0 %v3457
      %6344 = vmatprep.subr.mxu0 0.0
      %6345 = vmatpush1.msra.mxu0 %v3459
      %6346 = vmatprep.subr.mxu0 0.0
      %6347 = vmatpush1.msra.mxu0 %v3461
      %6348 = vmatprep.subr.mxu0 0.0
      %6349 = vmatpush1.msra.mxu0 %v3463
      %6350 = vmatprep.subr.mxu0 0.0
      %6351 = vmatpush1.msra.mxu0 %v6338
      %6352 = vmatprep.subr.mxu0 0.0
      %6353 = vmatpush1.msra.mxu0 0.0
      %6354 = vmatprep.subr.mxu0 0.0
      %6355 = vmatpush1.msra.mxu0 0.0
      %6356 = vmatprep.subr.mxu0 0.0
      %6357 = vmatpush1.msra.mxu0 0.0
      %6358 = vmatprep.subr.mxu0 0.0
      %6359 = vmatpush1.msra.mxu0 0.0
      %6360 = vmatprep.subr.mxu0 0.0
      %6361 = vmatpush1.msra.mxu0 0.0
      %6362 = vmatprep.subr.mxu0 0.0
      %6363 = vmatpush1.msra.mxu0 0.0
      %6364 = vmatprep.subr.mxu0 0.0
      %6365 = vmatpush1.msra.mxu0 0.0
      %6366 = vmatprep.subr.mxu0 0.0
      %6367 = vmatpush1.msra.mxu0 0.0
      %6368 = vmatprep.subr.mxu0 0.0
      %6369 = vmatpush1.msra.mxu0 0.0
      %6370 = vmatprep.subr.mxu0 0.0
      %6371 = vmatpush1.msra.mxu0 0.0
      %6372 = vmatprep.subr.mxu0 0.0
      %6373 = vmatpush1.msra.mxu0 0.0
      %6374 = vmatprep.subr.mxu0 0.0
      %6375 = vmatpush1.msra.mxu0 0.0
      %6376 = vmatprep.subr.mxu0 0.0
      %6377 = vmatpush1.msra.mxu0 0.0
      %6378 = vmatprep.subr.mxu0 0.0
      %6379 = vmatpush1.msra.mxu0 0.0
      %6380 = vmatprep.subr.mxu0 0.0
      %6381 = vmatpush1.msra.mxu0 0.0
      %6382 = vmatprep.subr.mxu0 0.0
      %6383 = vmatpush1.msra.mxu0 0.0
      %6384 = vmatprep.subr.mxu0 0.0
      %6385 = vmatpush1.msra.mxu0 0.0
      %6386 = vmatprep.subr.mxu0 0.0
      %6387 = vmatpush1.msra.mxu0 0.0
      %6388 = vmatprep.subr.mxu0 0.0
      %6389 = vmatpush1.msra.mxu0 0.0
      %6390 = vmatprep.subr.mxu0 0.0
      %6391 = vmatpush1.msra.mxu0 0.0
      %6392 = vmatprep.subr.mxu0 0.0
      %6393 = vmatpush1.msra.mxu0 0.0
      %6394 = vmatprep.subr.mxu0 0.0
      %6395 = vmatpush1.msra.mxu0 0.0
      %6396 = vmatprep.subr.mxu0 0.0
      %6397 = vmatpush1.msra.mxu0 0.0
      %6398 = vmatprep.subr.mxu0 0.0
      %6399 = vmatpush1.msra.mxu0 0.0
      %6400 = vmatprep.subr.mxu0 0.0
      %6401 = vmatpush1.msra.mxu0 0.0
      %6402 = vmatprep.subr.mxu0 0.0
      %6403 = vmatpush1.msra.mxu0 0.0
      %6404 = vmatprep.mubr.f32.mxu0 0.0
      %6405 = vmatmul.mubr.f32.gmra.mrb[0].mxu0 %v6325
      %v6406 = vpop.f32.mrb[0].mxu0
      %v6407 = vadd.f32 0.0, %v6406
      %v6408 = vpop.f32.mrb[0].mxu0
      %6409 = vmatprep.mubr.f32.mxu0 0.0
      %6410 = vmatmul.mubr.f32.gmra.mrb[0].mxu0 %v6328
      %v6411 = vpop.f32.mrb[0].mxu0
      %v6412 = vadd.f32 0.0, %v6411
      %v6413 = vpop.f32.mrb[0].mxu0
      %6414 = vmatprep.mubr.f32.mxu0 0.0
      %6415 = vmatmul.mubr.f32.gmra.mrb[0].mxu0 %v6331
      %v6416 = vpop.f32.mrb[0].mxu0
      %v6417 = vadd.f32 0.0, %v6416
      %v6418 = vpop.f32.mrb[0].mxu0
      %6419 = vmatprep.mubr.f32.mxu0 0.0
      %6420 = vmatmul.mubr.f32.gmra.mrb[0].mxu0 %v6334
      %v6421 = vpop.f32.mrb[0].mxu0
      %v6422 = vadd.f32 0.0, %v6421
      %v6423 = vpop.f32.mrb[0].mxu0
      %6424 = vdwg.mxu0
      %6425 = vst [vmem:[#allocation2] sm:$0xff] 0.0
      %6426 = vst [vmem:[#allocation2 + $0x8] sm:$0xff] 0.0
      %6427 = vst.msk [vmem:[#allocation2 + $0x10] sm:$0xff] %vm1557, 0.0
      %6428 = vst [vmem:[#allocation2 + $0x18] sm:$0xff] 0.0
      %6429 = vst [vmem:[#allocation2 + $0x20] sm:$0xff] 0.0
      %6430 = vst.msk [vmem:[#allocation2 + $0x28] sm:$0xff] %vm1557, 0.0
      %6431 = vst [vmem:[#allocation2 + $0x30] sm:$0xff] 0.0
      %6432 = vst [vmem:[#allocation2 + $0x38] sm:$0xff] 0.0
      %6433 = vst.msk [vmem:[#allocation2 + $0x40] sm:$0xff] %vm1557, 0.0
      %6434 = vst [vmem:[#allocation2 + $0x48] sm:$0xff] 0.0
      %6435 = vst [vmem:[#allocation2 + $0x50] sm:$0xff] 0.0
      %6436 = vst.msk [vmem:[#allocation2 + $0x58] sm:$0xff] %vm1557, 0.0
      %6437 = vst [vmem:[#allocation2 + $0x60] sm:$0xff] 0.0
      %6438 = vst [vmem:[#allocation2 + $0x68] sm:$0xff] 0.0
      %6439 = vst.msk [vmem:[#allocation2 + $0x70] sm:$0xff] %vm1557, 0.0
      %6440 = vst [vmem:[#allocation2 + $0x78] sm:$0xff] 0.0
      %6441 = vst [vmem:[#allocation2 + $0x80] sm:$0xff] 0.0
      %6442 = vst.msk [vmem:[#allocation2 + $0x88] sm:$0xff] %vm1557, 0.0
      %6443 = vst [vmem:[#allocation2 + $0x90] sm:$0xff] 0.0
      %6444 = vst [vmem:[#allocation2 + $0x98] sm:$0xff] 0.0
      %6445 = vst.msk [vmem:[#allocation2 + $0xa0] sm:$0xff] %vm1557, 0.0
      %6446 = vst [vmem:[#allocation2 + $0xa8] sm:$0xff] 0.0
      %6447 = vst [vmem:[#allocation2 + $0xb0] sm:$0xff] 0.0
      %6448 = vst.msk [vmem:[#allocation2 + $0xb8] sm:$0xff] %vm1557, 0.0
      %6449 = vst [vmem:[#allocation2 + $0xc0] sm:$0xff] 0.0
      %6450 = vst [vmem:[#allocation2 + $0xc8] sm:$0xff] 0.0
      %6451 = vst.msk [vmem:[#allocation2 + $0xd0] sm:$0xff] %vm1557, 0.0
      %6452 = vst [vmem:[#allocation2 + $0xd8] sm:$0xff] 0.0
      %6453 = vst [vmem:[#allocation2 + $0xe0] sm:$0xff] 0.0
      %6454 = vst.msk [vmem:[#allocation2 + $0xe8] sm:$0xff] %vm1557, 0.0
      %6455 = vst [vmem:[#allocation2 + $0xf0] sm:$0xff] 0.0
      %6456 = vst [vmem:[#allocation2 + $0xf8] sm:$0xff] 0.0
      %6457 = vst.msk [vmem:[#allocation2 + $0x100] sm:$0xff] %vm1557, 0.0
      %6458 = vst [vmem:[#allocation2 + $0x108] sm:$0xff] 0.0
      %6459 = vst [vmem:[#allocation2 + $0x110] sm:$0xff] 0.0
      %6460 = vst.msk [vmem:[#allocation2 + $0x118] sm:$0xff] %vm1557, 0.0
      %6461 = vst [vmem:[#allocation2 + $0x120] sm:$0xff] 0.0
      %6462 = vst [vmem:[#allocation2 + $0x128] sm:$0xff] 0.0
      %6463 = vst.msk [vmem:[#allocation2 + $0x130] sm:$0xff] %vm1557, 0.0
      %6464 = vst [vmem:[#allocation2 + $0x138] sm:$0xff] 0.0
      %6465 = vst [vmem:[#allocation2 + $0x140] sm:$0xff] 0.0
      %6466 = vst.msk [vmem:[#allocation2 + $0x148] sm:$0xff] %vm1557, 0.0
      %6467 = vst [vmem:[#allocation2 + $0x150] sm:$0xff] 0.0
      %6468 = vst [vmem:[#allocation2 + $0x158] sm:$0xff] 0.0
      %6469 = vst.msk [vmem:[#allocation2 + $0x160] sm:$0xff] %vm1557, 0.0
      %6470 = vst [vmem:[#allocation2 + $0x168] sm:$0xff] 0.0
      %6471 = vst [vmem:[#allocation2 + $0x170] sm:$0xff] 0.0
      %6472 = vst.msk [vmem:[#allocation2 + $0x178] sm:$0xff] %vm1557, 0.0
      %6473 = vst [vmem:[#allocation2 + $0x180] sm:$0xff] 0.0
      %6474 = vst [vmem:[#allocation2 + $0x188] sm:$0xff] 0.0
      %6475 = vst.msk [vmem:[#allocation2 + $0x190] sm:$0xff] %vm1557, 0.0
      %6476 = vst [vmem:[#allocation2 + $0x198] sm:$0xff] 0.0
      %6477 = vst [vmem:[#allocation2 + $0x1a0] sm:$0xff] 0.0
      %6478 = vst.msk [vmem:[#allocation2 + $0x1a8] sm:$0xff] %vm1557, 0.0
      %6479 = vst [vmem:[#allocation2 + $0x1b0] sm:$0xff] 0.0
      %6480 = vst [vmem:[#allocation2 + $0x1b8] sm:$0xff] 0.0
      %6481 = vst.msk [vmem:[#allocation2 + $0x1c0] sm:$0xff] %vm1557, 0.0
      %6482 = vst [vmem:[#allocation2 + $0x1c8] sm:$0xff] 0.0
      %6483 = vst [vmem:[#allocation2 + $0x1d0] sm:$0xff] 0.0
      %6484 = vst.msk [vmem:[#allocation2 + $0x1d8] sm:$0xff] %vm1557, 0.0
      %6489 = vrot.lane.b32.xlu0 %v6407, 1
      %v6490 = vpop.permute.xlu0 %6489
      %6491 = vrot.lane.b32.xlu0 %v6412, 1
      %v6492 = vpop.permute.xlu0 %6491
      %6493 = vrot.lane.b32.xlu0 %v6417, 1
      %v6494 = vpop.permute.xlu0 %6493
      %6495 = vrot.lane.b32.xlu0 %v6422, 1
      %v6496 = vpop.permute.xlu0 %6495
      %vm6501 = vcmask 179208
      %6502 = vst.msk [vmem:[#allocation2] sm:$0xff] %vm6501, %v6490
      %6503 = vst.msk [vmem:[#allocation2 + $0x18] sm:$0xff] %vm6501, %v6492
      %6504 = vst.msk [vmem:[#allocation2 + $0x30] sm:$0xff] %vm6501, %v6494
      %6505 = vst.msk [vmem:[#allocation2 + $0x48] sm:$0xff] %vm6501, %v6496
      %vm6506 = vcmask 179200
      %6507 = vst.msk [vmem:[#allocation2 + $0x60] sm:$0xff] %vm6506, %v6407
      %6508 = vst.msk [vmem:[#allocation2 + $0x78] sm:$0xff] %vm6506, %v6412
      %6509 = vst.msk [vmem:[#allocation2 + $0x90] sm:$0xff] %vm6506, %v6417
      %6510 = vst.msk [vmem:[#allocation2 + $0xa8] sm:$0xff] %vm6506, %v6422
      %6511 = vrot.lane.b32.xlu0 %v6407, 127
      %v6512 = vpop.permute.xlu0 %6511
      %6513 = vrot.lane.b32.xlu0 %v6412, 127
      %v6514 = vpop.permute.xlu0 %6513
      %6515 = vrot.lane.b32.xlu0 %v6417, 127
      %v6516 = vpop.permute.xlu0 %6515
      %6517 = vrot.lane.b32.xlu0 %v6422, 127
      %v6518 = vpop.permute.xlu0 %6517
      %vm6523 = vcmask 171008
      %6524 = vst.msk [vmem:[#allocation2 + $0xc0] sm:$0xff] %vm6523, %v6512
      %6525 = vst.msk [vmem:[#allocation2 + $0xd8] sm:$0xff] %vm6523, %v6514
      %6526 = vst.msk [vmem:[#allocation2 + $0xf0] sm:$0xff] %vm6523, %v6516
      %6527 = vst.msk [vmem:[#allocation2 + $0x108] sm:$0xff] %vm6523, %v6518
      %v6528 = vld [vmem:[%s55] sm:$0xff]
      %v6529 = vld [vmem:[%s55 + $0x8] sm:$0xff]
      %v6530 = vld [vmem:[%s55 + $0x10] sm:$0xff]
      %v6531 = vld [vmem:[%s55 + $0x18] sm:$0xff]
      %v6532 = vld [vmem:[#allocation2] sm:$0xff]
      %v6533 = vld [vmem:[#allocation2 + $0x18] sm:$0xff]
      %v6534 = vld [vmem:[#allocation2 + $0x30] sm:$0xff]
      %v6535 = vld [vmem:[#allocation2 + $0x48] sm:$0xff]
      %v6536 = vld [vmem:[#allocation2 + $0x60] sm:$0xff]
      %v6537 = vld [vmem:[#allocation2 + $0x78] sm:$0xff]
      %v6538 = vld [vmem:[#allocation2 + $0x90] sm:$0xff]
      %v6539 = vld [vmem:[#allocation2 + $0xa8] sm:$0xff]
      %v6540 = vld [vmem:[#allocation2 + $0xc0] sm:$0xff]
      %v6541 = vld [vmem:[#allocation2 + $0xd8] sm:$0xff]
      %v6542 = vld [vmem:[#allocation2 + $0xf0] sm:$0xff]
      %v6543 = vld [vmem:[#allocation2 + $0x108] sm:$0xff]
      %v6544 = vld [vmem:[%s57] sm:$0xff]
      %v6545 = vld [vmem:[%s57 + $0x8] sm:$0xff]
      %v6546 = vld [vmem:[%s57 + $0x10] sm:$0xff]
      %v6547 = vld [vmem:[%s57 + $0x18] sm:$0xff]
      %6549 = vset.pattern.permute.xlu0 0
      %6550 = vperm.xlu0 %6549, %v6544
      %v6551 = vpop.permute.xlu0 %6550
      %6554 = vset.pattern.permute.xlu0 0
      %6555 = vperm.xlu0 %6554, %v6545
      %v6556 = vpop.permute.xlu0 %6555
      %6559 = vset.pattern.permute.xlu0 0
      %6560 = vperm.xlu0 %6559, %v6546
      %v6561 = vpop.permute.xlu0 %6560
      %6564 = vset.pattern.permute.xlu0 0
      %6565 = vperm.xlu0 %6564, %v6547
      %v6566 = vpop.permute.xlu0 %6565
      %v6569 = vsel %vm1557, %v6528, 0
      %v6572 = vsel %vm1557, %v6529, 0
      %v6575 = vsel %vm1557, %v6530, 0
      %v6578 = vsel %vm1557, %v6531, 0
      %6580 = vmatprep.subr.mxu0 0.0
      %6581 = vmatpush1.msra.mxu0 %v6532
      %6582 = vmatprep.subr.mxu0 0.0
      %6583 = vmatpush1.msra.mxu0 %v6533
      %6584 = vmatprep.subr.mxu0 0.0
      %6585 = vmatpush1.msra.mxu0 %v6534
      %6586 = vmatprep.subr.mxu0 0.0
      %6587 = vmatpush1.msra.mxu0 %v6535
      %6588 = vmatprep.subr.mxu0 0.0
      %6589 = vmatpush1.msra.mxu0 %v6536
      %6590 = vmatprep.subr.mxu0 0.0
      %6591 = vmatpush1.msra.mxu0 %v6537
      %6592 = vmatprep.subr.mxu0 0.0
      %6593 = vmatpush1.msra.mxu0 %v6538
      %6594 = vmatprep.subr.mxu0 0.0
      %6595 = vmatpush1.msra.mxu0 %v6539
      %6596 = vmatprep.subr.mxu0 0.0
      %6597 = vmatpush1.msra.mxu0 %v6540
      %6598 = vmatprep.subr.mxu0 0.0
      %6599 = vmatpush1.msra.mxu0 %v6541
      %6600 = vmatprep.subr.mxu0 0.0
      %6601 = vmatpush1.msra.mxu0 %v6542
      %6602 = vmatprep.subr.mxu0 0.0
      %6603 = vmatpush1.msra.mxu0 %v6543
      %6604 = vmatprep.subr.mxu0 0.0
      %6605 = vmatpush1.msra.mxu0 0.0
      %6606 = vmatprep.subr.mxu0 0.0
      %6607 = vmatpush1.msra.mxu0 0.0
      %6608 = vmatprep.subr.mxu0 0.0
      %6609 = vmatpush1.msra.mxu0 0.0
      %6610 = vmatprep.subr.mxu0 0.0
      %6611 = vmatpush1.msra.mxu0 0.0
      %6612 = vmatprep.subr.mxu0 0.0
      %6613 = vmatpush1.msra.mxu0 0.0
      %6614 = vmatprep.subr.mxu0 0.0
      %6615 = vmatpush1.msra.mxu0 0.0
      %6616 = vmatprep.subr.mxu0 0.0
      %6617 = vmatpush1.msra.mxu0 0.0
      %6618 = vmatprep.subr.mxu0 0.0
      %6619 = vmatpush1.msra.mxu0 0.0
      %6620 = vmatprep.subr.mxu0 0.0
      %6621 = vmatpush1.msra.mxu0 0.0
      %6622 = vmatprep.subr.mxu0 0.0
      %6623 = vmatpush1.msra.mxu0 0.0
      %6624 = vmatprep.subr.mxu0 0.0
      %6625 = vmatpush1.msra.mxu0 0.0
      %6626 = vmatprep.subr.mxu0 0.0
      %6627 = vmatpush1.msra.mxu0 0.0
      %6628 = vmatprep.subr.mxu0 0.0
      %6629 = vmatpush1.msra.mxu0 0.0
      %6630 = vmatprep.subr.mxu0 0.0
      %6631 = vmatpush1.msra.mxu0 0.0
      %6632 = vmatprep.subr.mxu0 0.0
      %6633 = vmatpush1.msra.mxu0 0.0
      %6634 = vmatprep.subr.mxu0 0.0
      %6635 = vmatpush1.msra.mxu0 0.0
      %6636 = vmatprep.subr.mxu0 0.0
      %6637 = vmatpush1.msra.mxu0 0.0
      %6638 = vmatprep.subr.mxu0 0.0
      %6639 = vmatpush1.msra.mxu0 0.0
      %6640 = vmatprep.subr.mxu0 0.0
      %6641 = vmatpush1.msra.mxu0 0.0
      %6642 = vmatprep.subr.mxu0 0.0
      %6643 = vmatpush1.msra.mxu0 0.0
      %6644 = vmatprep.mubr.f32.mxu0 0.0
      %6645 = vmatmul.mubr.f32.gmra.mrb[0].mxu0 %v6569
      %v6646 = vpop.f32.mrb[0].mxu0
      %v6647 = vadd.f32 %v6551, %v6646
      %v6648 = vpop.f32.mrb[0].mxu0
      %6649 = vmatprep.mubr.f32.mxu0 0.0
      %6650 = vmatmul.mubr.f32.gmra.mrb[0].mxu0 %v6572
      %v6651 = vpop.f32.mrb[0].mxu0
      %v6652 = vadd.f32 %v6556, %v6651
      %v6653 = vpop.f32.mrb[0].mxu0
      %6654 = vmatprep.mubr.f32.mxu0 0.0
      %6655 = vmatmul.mubr.f32.gmra.mrb[0].mxu0 %v6575
      %v6656 = vpop.f32.mrb[0].mxu0
      %v6657 = vadd.f32 %v6561, %v6656
      %v6658 = vpop.f32.mrb[0].mxu0
      %6659 = vmatprep.mubr.f32.mxu0 0.0
      %6660 = vmatmul.mubr.f32.gmra.mrb[0].mxu0 %v6578
      %v6661 = vpop.f32.mrb[0].mxu0
      %v6662 = vadd.f32 %v6566, %v6661
      %v6663 = vpop.f32.mrb[0].mxu0
      %6664 = vdwg.mxu0
      %v6665 = vmax.f32 %v6647, 0.0
      %v6666 = vmax.f32 %v6652, 0.0
      %v6667 = vmax.f32 %v6657, 0.0
      %v6668 = vmax.f32 %v6662, 0.0
      %6669 = vst [vmem:[#allocation2] sm:$0xff] 0.0
      %6670 = vst [vmem:[#allocation2 + $0x8] sm:$0xff] 0.0
      %6671 = vst.msk [vmem:[#allocation2 + $0x10] sm:$0xff] %vm1557, 0.0
      %6672 = vst [vmem:[#allocation2 + $0x18] sm:$0xff] 0.0
      %6673 = vst [vmem:[#allocation2 + $0x20] sm:$0xff] 0.0
      %6674 = vst.msk [vmem:[#allocation2 + $0x28] sm:$0xff] %vm1557, 0.0
      %6675 = vst [vmem:[#allocation2 + $0x30] sm:$0xff] 0.0
      %6676 = vst [vmem:[#allocation2 + $0x38] sm:$0xff] 0.0
      %6677 = vst.msk [vmem:[#allocation2 + $0x40] sm:$0xff] %vm1557, 0.0
      %6678 = vst [vmem:[#allocation2 + $0x48] sm:$0xff] 0.0
      %6679 = vst [vmem:[#allocation2 + $0x50] sm:$0xff] 0.0
      %6680 = vst.msk [vmem:[#allocation2 + $0x58] sm:$0xff] %vm1557, 0.0
      %6681 = vst [vmem:[#allocation2 + $0x60] sm:$0xff] 0.0
      %6682 = vst [vmem:[#allocation2 + $0x68] sm:$0xff] 0.0
      %6683 = vst.msk [vmem:[#allocation2 + $0x70] sm:$0xff] %vm1557, 0.0
      %6684 = vst [vmem:[#allocation2 + $0x78] sm:$0xff] 0.0
      %6685 = vst [vmem:[#allocation2 + $0x80] sm:$0xff] 0.0
      %6686 = vst.msk [vmem:[#allocation2 + $0x88] sm:$0xff] %vm1557, 0.0
      %6687 = vst [vmem:[#allocation2 + $0x90] sm:$0xff] 0.0
      %6688 = vst [vmem:[#allocation2 + $0x98] sm:$0xff] 0.0
      %6689 = vst.msk [vmem:[#allocation2 + $0xa0] sm:$0xff] %vm1557, 0.0
      %6690 = vst [vmem:[#allocation2 + $0xa8] sm:$0xff] 0.0
      %6691 = vst [vmem:[#allocation2 + $0xb0] sm:$0xff] 0.0
      %6692 = vst.msk [vmem:[#allocation2 + $0xb8] sm:$0xff] %vm1557, 0.0
      %6693 = vst [vmem:[#allocation2 + $0xc0] sm:$0xff] 0.0
      %6694 = vst [vmem:[#allocation2 + $0xc8] sm:$0xff] 0.0
      %6695 = vst.msk [vmem:[#allocation2 + $0xd0] sm:$0xff] %vm1557, 0.0
      %6696 = vst [vmem:[#allocation2 + $0xd8] sm:$0xff] 0.0
      %6697 = vst [vmem:[#allocation2 + $0xe0] sm:$0xff] 0.0
      %6698 = vst.msk [vmem:[#allocation2 + $0xe8] sm:$0xff] %vm1557, 0.0
      %6699 = vst [vmem:[#allocation2 + $0xf0] sm:$0xff] 0.0
      %6700 = vst [vmem:[#allocation2 + $0xf8] sm:$0xff] 0.0
      %6701 = vst.msk [vmem:[#allocation2 + $0x100] sm:$0xff] %vm1557, 0.0
      %6702 = vst [vmem:[#allocation2 + $0x108] sm:$0xff] 0.0
      %6703 = vst [vmem:[#allocation2 + $0x110] sm:$0xff] 0.0
      %6704 = vst.msk [vmem:[#allocation2 + $0x118] sm:$0xff] %vm1557, 0.0
      %6705 = vst [vmem:[#allocation2 + $0x120] sm:$0xff] 0.0
      %6706 = vst [vmem:[#allocation2 + $0x128] sm:$0xff] 0.0
      %6707 = vst.msk [vmem:[#allocation2 + $0x130] sm:$0xff] %vm1557, 0.0
      %6708 = vst [vmem:[#allocation2 + $0x138] sm:$0xff] 0.0
      %6709 = vst [vmem:[#allocation2 + $0x140] sm:$0xff] 0.0
      %6710 = vst.msk [vmem:[#allocation2 + $0x148] sm:$0xff] %vm1557, 0.0
      %6711 = vst [vmem:[#allocation2 + $0x150] sm:$0xff] 0.0
      %6712 = vst [vmem:[#allocation2 + $0x158] sm:$0xff] 0.0
      %6713 = vst.msk [vmem:[#allocation2 + $0x160] sm:$0xff] %vm1557, 0.0
      %6714 = vst [vmem:[#allocation2 + $0x168] sm:$0xff] 0.0
      %6715 = vst [vmem:[#allocation2 + $0x170] sm:$0xff] 0.0
      %6716 = vst.msk [vmem:[#allocation2 + $0x178] sm:$0xff] %vm1557, 0.0
      %6717 = vst [vmem:[#allocation2 + $0x180] sm:$0xff] 0.0
      %6718 = vst [vmem:[#allocation2 + $0x188] sm:$0xff] 0.0
      %6719 = vst.msk [vmem:[#allocation2 + $0x190] sm:$0xff] %vm1557, 0.0
      %6720 = vst [vmem:[#allocation2 + $0x198] sm:$0xff] 0.0
      %6721 = vst [vmem:[#allocation2 + $0x1a0] sm:$0xff] 0.0
      %6722 = vst.msk [vmem:[#allocation2 + $0x1a8] sm:$0xff] %vm1557, 0.0
      %6723 = vst [vmem:[#allocation2 + $0x1b0] sm:$0xff] 0.0
      %6724 = vst [vmem:[#allocation2 + $0x1b8] sm:$0xff] 0.0
      %6725 = vst.msk [vmem:[#allocation2 + $0x1c0] sm:$0xff] %vm1557, 0.0
      %6726 = vst [vmem:[#allocation2 + $0x1c8] sm:$0xff] 0.0
      %6727 = vst [vmem:[#allocation2 + $0x1d0] sm:$0xff] 0.0
      %6728 = vst.msk [vmem:[#allocation2 + $0x1d8] sm:$0xff] %vm1557, 0.0
      %6733 = vrot.lane.b32.xlu0 %v6665, 1
      %v6734 = vpop.permute.xlu0 %6733
      %6735 = vrot.lane.b32.xlu0 %v6666, 1
      %v6736 = vpop.permute.xlu0 %6735
      %6737 = vrot.lane.b32.xlu0 %v6667, 1
      %v6738 = vpop.permute.xlu0 %6737
      %6739 = vrot.lane.b32.xlu0 %v6668, 1
      %v6740 = vpop.permute.xlu0 %6739
      %6745 = vst.msk [vmem:[#allocation2] sm:$0xff] %vm6501, %v6734
      %6746 = vst.msk [vmem:[#allocation2 + $0x18] sm:$0xff] %vm6501, %v6736
      %6747 = vst.msk [vmem:[#allocation2 + $0x30] sm:$0xff] %vm6501, %v6738
      %6748 = vst.msk [vmem:[#allocation2 + $0x48] sm:$0xff] %vm6501, %v6740
      %6749 = vst.msk [vmem:[#allocation2 + $0x60] sm:$0xff] %vm6506, %v6665
      %6750 = vst.msk [vmem:[#allocation2 + $0x78] sm:$0xff] %vm6506, %v6666
      %6751 = vst.msk [vmem:[#allocation2 + $0x90] sm:$0xff] %vm6506, %v6667
      %6752 = vst.msk [vmem:[#allocation2 + $0xa8] sm:$0xff] %vm6506, %v6668
      %6753 = vrot.lane.b32.xlu0 %v6665, 127
      %v6754 = vpop.permute.xlu0 %6753
      %6755 = vrot.lane.b32.xlu0 %v6666, 127
      %v6756 = vpop.permute.xlu0 %6755
      %6757 = vrot.lane.b32.xlu0 %v6667, 127
      %v6758 = vpop.permute.xlu0 %6757
      %6759 = vrot.lane.b32.xlu0 %v6668, 127
      %v6760 = vpop.permute.xlu0 %6759
      %6765 = vst.msk [vmem:[#allocation2 + $0xc0] sm:$0xff] %vm6523, %v6754
      %6766 = vst.msk [vmem:[#allocation2 + $0xd8] sm:$0xff] %vm6523, %v6756
      %6767 = vst.msk [vmem:[#allocation2 + $0xf0] sm:$0xff] %vm6523, %v6758
      %6768 = vst.msk [vmem:[#allocation2 + $0x108] sm:$0xff] %vm6523, %v6760
      %v6769 = vld [vmem:[%s59] sm:$0xff]
      %v6770 = vld [vmem:[%s59 + $0x8] sm:$0xff]
      %v6771 = vld [vmem:[%s59 + $0x10] sm:$0xff]
      %v6772 = vld [vmem:[%s59 + $0x18] sm:$0xff]
      %v6773 = vld [vmem:[#allocation2] sm:$0xff]
      %v6774 = vld [vmem:[#allocation2 + $0x18] sm:$0xff]
      %v6775 = vld [vmem:[#allocation2 + $0x30] sm:$0xff]
      %v6776 = vld [vmem:[#allocation2 + $0x48] sm:$0xff]
      %v6777 = vld [vmem:[#allocation2 + $0x60] sm:$0xff]
      %v6778 = vld [vmem:[#allocation2 + $0x78] sm:$0xff]
      %v6779 = vld [vmem:[#allocation2 + $0x90] sm:$0xff]
      %v6780 = vld [vmem:[#allocation2 + $0xa8] sm:$0xff]
      %v6781 = vld [vmem:[#allocation2 + $0xc0] sm:$0xff]
      %v6782 = vld [vmem:[#allocation2 + $0xd8] sm:$0xff]
      %v6783 = vld [vmem:[#allocation2 + $0xf0] sm:$0xff]
      %v6784 = vld [vmem:[#allocation2 + $0x108] sm:$0xff]
      %v6785 = vld [vmem:[%s61] sm:$0xff]
      %v6786 = vld [vmem:[%s61 + $0x8] sm:$0xff]
      %v6787 = vld [vmem:[%s61 + $0x10] sm:$0xff]
      %v6788 = vld [vmem:[%s61 + $0x18] sm:$0xff]
      %6790 = vset.pattern.permute.xlu0 0
      %6791 = vperm.xlu0 %6790, %v6785
      %v6792 = vpop.permute.xlu0 %6791
      %6795 = vset.pattern.permute.xlu0 0
      %6796 = vperm.xlu0 %6795, %v6786
      %v6797 = vpop.permute.xlu0 %6796
      %6800 = vset.pattern.permute.xlu0 0
      %6801 = vperm.xlu0 %6800, %v6787
      %v6802 = vpop.permute.xlu0 %6801
      %6805 = vset.pattern.permute.xlu0 0
      %6806 = vperm.xlu0 %6805, %v6788
      %v6807 = vpop.permute.xlu0 %6806
      %v6810 = vsel %vm1557, %v6769, 0
      %v6813 = vsel %vm1557, %v6770, 0
      %v6816 = vsel %vm1557, %v6771, 0
      %v6819 = vsel %vm1557, %v6772, 0
      %6821 = vmatprep.subr.mxu0 0.0
      %6822 = vmatpush1.msra.mxu0 %v6773
      %6823 = vmatprep.subr.mxu0 0.0
      %6824 = vmatpush1.msra.mxu0 %v6774
      %6825 = vmatprep.subr.mxu0 0.0
      %6826 = vmatpush1.msra.mxu0 %v6775
      %6827 = vmatprep.subr.mxu0 0.0
      %6828 = vmatpush1.msra.mxu0 %v6776
      %6829 = vmatprep.subr.mxu0 0.0
      %6830 = vmatpush1.msra.mxu0 %v6777
      %6831 = vmatprep.subr.mxu0 0.0
      %6832 = vmatpush1.msra.mxu0 %v6778
      %6833 = vmatprep.subr.mxu0 0.0
      %6834 = vmatpush1.msra.mxu0 %v6779
      %6835 = vmatprep.subr.mxu0 0.0
      %6836 = vmatpush1.msra.mxu0 %v6780
      %6837 = vmatprep.subr.mxu0 0.0
      %6838 = vmatpush1.msra.mxu0 %v6781
      %6839 = vmatprep.subr.mxu0 0.0
      %6840 = vmatpush1.msra.mxu0 %v6782
      %6841 = vmatprep.subr.mxu0 0.0
      %6842 = vmatpush1.msra.mxu0 %v6783
      %6843 = vmatprep.subr.mxu0 0.0
      %6844 = vmatpush1.msra.mxu0 %v6784
      %6845 = vmatprep.subr.mxu0 0.0
      %6846 = vmatpush1.msra.mxu0 0.0
      %6847 = vmatprep.subr.mxu0 0.0
      %6848 = vmatpush1.msra.mxu0 0.0
      %6849 = vmatprep.subr.mxu0 0.0
      %6850 = vmatpush1.msra.mxu0 0.0
      %6851 = vmatprep.subr.mxu0 0.0
      %6852 = vmatpush1.msra.mxu0 0.0
      %6853 = vmatprep.subr.mxu0 0.0
      %6854 = vmatpush1.msra.mxu0 0.0
      %6855 = vmatprep.subr.mxu0 0.0
      %6856 = vmatpush1.msra.mxu0 0.0
      %6857 = vmatprep.subr.mxu0 0.0
      %6858 = vmatpush1.msra.mxu0 0.0
      %6859 = vmatprep.subr.mxu0 0.0
      %6860 = vmatpush1.msra.mxu0 0.0
      %6861 = vmatprep.subr.mxu0 0.0
      %6862 = vmatpush1.msra.mxu0 0.0
      %6863 = vmatprep.subr.mxu0 0.0
      %6864 = vmatpush1.msra.mxu0 0.0
      %6865 = vmatprep.subr.mxu0 0.0
      %6866 = vmatpush1.msra.mxu0 0.0
      %6867 = vmatprep.subr.mxu0 0.0
      %6868 = vmatpush1.msra.mxu0 0.0
      %6869 = vmatprep.subr.mxu0 0.0
      %6870 = vmatpush1.msra.mxu0 0.0
      %6871 = vmatprep.subr.mxu0 0.0
      %6872 = vmatpush1.msra.mxu0 0.0
      %6873 = vmatprep.subr.mxu0 0.0
      %6874 = vmatpush1.msra.mxu0 0.0
      %6875 = vmatprep.subr.mxu0 0.0
      %6876 = vmatpush1.msra.mxu0 0.0
      %6877 = vmatprep.subr.mxu0 0.0
      %6878 = vmatpush1.msra.mxu0 0.0
      %6879 = vmatprep.subr.mxu0 0.0
      %6880 = vmatpush1.msra.mxu0 0.0
      %6881 = vmatprep.subr.mxu0 0.0
      %6882 = vmatpush1.msra.mxu0 0.0
      %6883 = vmatprep.subr.mxu0 0.0
      %6884 = vmatpush1.msra.mxu0 0.0
      %6885 = vmatprep.mubr.f32.mxu0 0.0
      %6886 = vmatmul.mubr.f32.gmra.mrb[0].mxu0 %v6810
      %v6887 = vpop.f32.mrb[0].mxu0
      %v6888 = vadd.f32 %v6792, %v6887
      %v6889 = vpop.f32.mrb[0].mxu0
      %6890 = vmatprep.mubr.f32.mxu0 0.0
      %6891 = vmatmul.mubr.f32.gmra.mrb[0].mxu0 %v6813
      %v6892 = vpop.f32.mrb[0].mxu0
      %v6893 = vadd.f32 %v6797, %v6892
      %v6894 = vpop.f32.mrb[0].mxu0
      %6895 = vmatprep.mubr.f32.mxu0 0.0
      %6896 = vmatmul.mubr.f32.gmra.mrb[0].mxu0 %v6816
      %v6897 = vpop.f32.mrb[0].mxu0
      %v6898 = vadd.f32 %v6802, %v6897
      %v6899 = vpop.f32.mrb[0].mxu0
      %6900 = vmatprep.mubr.f32.mxu0 0.0
      %6901 = vmatmul.mubr.f32.gmra.mrb[0].mxu0 %v6819
      %v6902 = vpop.f32.mrb[0].mxu0
      %v6903 = vadd.f32 %v6807, %v6902
      %v6904 = vpop.f32.mrb[0].mxu0
      %6905 = vdwg.mxu0
      %v6906 = vadd.f32 %v6888, %v6407
      %v6907 = vadd.f32 %v6893, %v6412
      %v6908 = vadd.f32 %v6898, %v6417
      %v6909 = vadd.f32 %v6903, %v6422
      %v6910 = vmax.f32 %v6906, 0.0
      %v6911 = vmax.f32 %v6907, 0.0
      %v6912 = vmax.f32 %v6908, 0.0
      %v6913 = vmax.f32 %v6909, 0.0
      %v6914 = vld [vmem:[%s63] sm:$0x3]
      %v6915 = vld [vmem:[%s65] sm:$0x3]
      %6917 = vset.pattern.permute.xlu0 0
      %6918 = vperm.xlu0 %6917, %v6915
      %v6919 = vpop.permute.xlu0 %6918
      %v6922 = vsel %vm1962, %v6914, 0
      %6924 = vmatprep.subr.mxu0 0.0
      %6925 = vmatpush1.msra.mxu0 %v6910
      %6926 = vmatprep.subr.mxu0 0.0
      %6927 = vmatpush1.msra.mxu0 %v6911
      %6928 = vmatprep.subr.mxu0 0.0
      %6929 = vmatpush1.msra.mxu0 %v6912
      %6930 = vmatprep.subr.mxu0 0.0
      %6931 = vmatpush1.msra.mxu0 %v6913
      %6932 = vmatprep.subr.mxu0 0.0
      %6933 = vmatpush1.msra.mxu0 0.0
      %6934 = vmatprep.subr.mxu0 0.0
      %6935 = vmatpush1.msra.mxu0 0.0
      %6936 = vmatprep.subr.mxu0 0.0
      %6937 = vmatpush1.msra.mxu0 0.0
      %6938 = vmatprep.subr.mxu0 0.0
      %6939 = vmatpush1.msra.mxu0 0.0
      %6940 = vmatprep.subr.mxu0 0.0
      %6941 = vmatpush1.msra.mxu0 0.0
      %6942 = vmatprep.subr.mxu0 0.0
      %6943 = vmatpush1.msra.mxu0 0.0
      %6944 = vmatprep.subr.mxu0 0.0
      %6945 = vmatpush1.msra.mxu0 0.0
      %6946 = vmatprep.subr.mxu0 0.0
      %6947 = vmatpush1.msra.mxu0 0.0
      %6948 = vmatprep.subr.mxu0 0.0
      %6949 = vmatpush1.msra.mxu0 0.0
      %6950 = vmatprep.subr.mxu0 0.0
      %6951 = vmatpush1.msra.mxu0 0.0
      %6952 = vmatprep.subr.mxu0 0.0
      %6953 = vmatpush1.msra.mxu0 0.0
      %6954 = vmatprep.subr.mxu0 0.0
      %6955 = vmatpush1.msra.mxu0 0.0
      %6956 = vmatprep.subr.mxu0 0.0
      %6957 = vmatpush1.msra.mxu0 0.0
      %6958 = vmatprep.subr.mxu0 0.0
      %6959 = vmatpush1.msra.mxu0 0.0
      %6960 = vmatprep.subr.mxu0 0.0
      %6961 = vmatpush1.msra.mxu0 0.0
      %6962 = vmatprep.subr.mxu0 0.0
      %6963 = vmatpush1.msra.mxu0 0.0
      %6964 = vmatprep.subr.mxu0 0.0
      %6965 = vmatpush1.msra.mxu0 0.0
      %6966 = vmatprep.subr.mxu0 0.0
      %6967 = vmatpush1.msra.mxu0 0.0
      %6968 = vmatprep.subr.mxu0 0.0
      %6969 = vmatpush1.msra.mxu0 0.0
      %6970 = vmatprep.subr.mxu0 0.0
      %6971 = vmatpush1.msra.mxu0 0.0
      %6972 = vmatprep.subr.mxu0 0.0
      %6973 = vmatpush1.msra.mxu0 0.0
      %6974 = vmatprep.subr.mxu0 0.0
      %6975 = vmatpush1.msra.mxu0 0.0
      %6976 = vmatprep.subr.mxu0 0.0
      %6977 = vmatpush1.msra.mxu0 0.0
      %6978 = vmatprep.subr.mxu0 0.0
      %6979 = vmatpush1.msra.mxu0 0.0
      %6980 = vmatprep.subr.mxu0 0.0
      %6981 = vmatpush1.msra.mxu0 0.0
      %6982 = vmatprep.subr.mxu0 0.0
      %6983 = vmatpush1.msra.mxu0 0.0
      %6984 = vmatprep.subr.mxu0 0.0
      %6985 = vmatpush1.msra.mxu0 0.0
      %6986 = vmatprep.subr.mxu0 0.0
      %6987 = vmatpush1.msra.mxu0 0.0
      %6988 = vmatprep.mubr.f32.mxu0 0.0
      %6989 = vmatmul.mubr.f32.gmra.mrb[0].mxu0 %v6922
      %v6990 = vpop.f32.mrb[0].mxu0
      %v6991 = vadd.f32 %v6919, %v6990
      %v6992 = vpop.f32.mrb[0].mxu0
      %6993 = vdwg.mxu0
      %v6994 = vmax.f32 %v6991, 0.0
      %v6995 = vld [vmem:[%s67] sm:$0x3]
      %v6996 = vmul.f32 %v6994, %v6995
      %vm6997 = vcmask 173056
      %v6998 = vsel %vm6997, %v6996, 0.0
      %6999 = vadd.xlane.f32.xlu0 %v6998
      %v7000 = vpop.xlane.xlu0 %6999
      %vm7001 = vcmask 1041408
      %v7002 = vsel %vm7001, %v7000, 0.0
      %v7003 = vrot.slane %v7002, 4
      %v7004 = vadd.f32 %v7002, %v7003
      %v7005 = vrot.slane %v7004, 2
      %v7006 = vadd.f32 %v7004, %v7005
      %v7007 = vrot.slane %v7006, 1
      %v7008 = vadd.f32 %v7006, %v7007
      %v7009 = vld [vmem:[#allocation3] sm:$0x1]
      %v7010 = vadd.f32 %v7008, %v7009
      %vm7011 = vcmask 0
      %7012 = vst.msk [vmem:[%s1065] sm:$0x1] %vm7011, %v7010
      %p7013 = scmp.lt.s32.totalorder %s84, 1
      %s7014 = scalar_select %p7013, %s84, 1
      %s7015 = scalar_lea.vmem %s71, %s7014
      // Predicated region
      $region161: #{net_forward.1} parent=159 // pred_check
        %p7016 = pneg %p842
      $region162: #{net_forward.1} parent=159 // pred_check_branch
        %7018 = sbr.rel (%p7016) target = $region164
      $region163: #{net_forward.1} parent=159 // pred_region
        _
      $region164: #{net_forward.1} parent=159 // pred_fallthru
        _
    $region160: #{net_forward.1} parent=5 // pred_fallthru
      _
    %p7019 = scmp.le.s32.totalorder 2, %s79
    // Predicated region
    $region165: #{net_forward.1} parent=5 // pred_check
      %p7020 = pneg %p7019
    $region166: #{net_forward.1} parent=5 // pred_check_branch
      %7022 = sbr.rel (%p7020) target = $region168
    $region167: #{net_forward.1} parent=5 // pred_region
      %s7023 = ssub.s32 %s79, 2
      // Predicated region
      $region169: #{net_forward.1} parent=167 // pred_check
        %p7024 = pneg %p848
      $region170: #{net_forward.1} parent=167 // pred_check_branch
        %7026 = sbr.rel (%p7024) target = $region172
      $region171: #{net_forward.1} parent=167 // pred_region
        %p7027 = scmp.lt.s32.totalorder %s85, 1
        %s7028 = scalar_select %p7027, %s85, 1
        %s7029 = scalar_lea.vmem %s71, %s7028
      $region172: #{net_forward.1} parent=167 // pred_fallthru
        _
    $region168: #{net_forward.1} parent=5 // pred_fallthru
      _
  $region6: #{net_forward.1} parent=0 // loop_footer
    %s83 = sadd.s32 1, %s79
  $region7: #{net_forward.1} parent=0 // loop_footer_branch
    %78 = sbr.rel target = $region3
  $region8: #{net_forward.1} parent=0 // loop_exit
    _

</llo_original>
